<compile_context>
chip_gen: v6e
topology: v6e:2x2x1
jax: 0.10.0
libtpu: 0.0.40
codegen_flags: <defaults>
</compile_context>

<pallas_src>
import functools

import jax
import jax.numpy as jnp
from jax.experimental import pallas as pl
from jax.experimental.pallas import tpu as pltpu

IMAGENET_MEAN = jnp.asarray([0.485, 0.456, 0.406], dtype=jnp.float32)
IMAGENET_STD = jnp.asarray([0.229, 0.224, 0.225], dtype=jnp.float32)


# ---------------------------------------------------------------------------
# Kernel 1: stride-1 3x3 "same" conv.  Whole padded/flattened image per batch
# element stays in VMEM; 9 taps accumulated from contiguous row slices of the
# input Ref (no HBM im2col).  bf16 operands, f32 accumulate, f32 epilogue.
# ---------------------------------------------------------------------------

def _conv3x3_s1_kernel(x_ref, w_ref, b_ref, o_ref, *, Wp, M, Cout, relu):
    acc = jnp.zeros((M, Cout), jnp.float32)
    for t in range(9):
        kh, kw = divmod(t, 3)
        d = kh * Wp + kw                              # static flat offset
        patch = x_ref[0, d:d + M, :]                  # contiguous (M, Cin) slice
        acc = acc + jnp.dot(patch, w_ref[t], preferred_element_type=jnp.float32)
    acc = acc + b_ref[...]                            # (1, Cout) broadcast, f32
    if relu:
        acc = jnp.maximum(acc, 0.0)
    o_ref[0] = acc.astype(o_ref.dtype)


def conv3x3_s1(x, w9, b, *, relu):
    """x: (B,H,W,Cin); w9: (9,Cin,Cout) bf16; b: (1,Cout) f32 -> (B,H,W,Cout) bf16."""
    B, H, W, Cin = x.shape
    Cout = w9.shape[-1]
    Wp = W + 2
    # pad: 1 top / 2 bottom (extra bottom row keeps the last tap's flat slice in
    # bounds; it only ever feeds the 2 discarded columns), 1 left / right.
    xp = jnp.pad(x.astype(jnp.bfloat16), ((0, 0), (1, 2), (1, 1), (0, 0)))
    xf = xp.reshape(B, (H + 3) * Wp, Cin)
    M = H * Wp                                        # "wide" rows (2 junk cols/row)
    out = pl.pallas_call(
        functools.partial(_conv3x3_s1_kernel, Wp=Wp, M=M, Cout=Cout, relu=relu),
        out_shape=jax.ShapeDtypeStruct((B, M, Cout), jnp.bfloat16),
        grid=(B,),
        in_specs=[
            pl.BlockSpec((1, (H + 3) * Wp, Cin), lambda n: (n, 0, 0)),
            pl.BlockSpec((9, Cin, Cout), lambda n: (0, 0, 0)),
            pl.BlockSpec((1, Cout), lambda n: (0, 0)),
        ],
        out_specs=pl.BlockSpec((1, M, Cout), lambda n: (n, 0, 0)),
        compiler_params=pltpu.CompilerParams(dimension_semantics=("parallel",)),
    )(xf, w9, b)
    return out.reshape(B, H, Wp, Cout)[:, :, :W, :]


# ---------------------------------------------------------------------------
# Kernel 2: strided 3x3 conv (stem /4, layer2 /2).  Only the kept output pixels
# are computed: the 9 taps are gathered at *output* resolution in the wrapper;
# one grid step per batch element accumulates all 9 MXU matmuls in f32.
# ---------------------------------------------------------------------------

def _conv3x3_strided_kernel(x_ref, w_ref, b_ref, o_ref, *, relu):
    acc = None
    for t in range(9):
        p = jnp.dot(x_ref[t, 0], w_ref[t], preferred_element_type=jnp.float32)
        acc = p if acc is None else acc + p
    acc = acc + b_ref[...]
    if relu:
        acc = jnp.maximum(acc, 0.0)
    o_ref[0] = acc.astype(o_ref.dtype)


def conv3x3_strided(x, w9, b, stride, *, relu):
    """Equivalent to stride-1 'same' conv followed by [::stride, ::stride]."""
    B, H, W, Cin = x.shape
    Cout = w9.shape[-1]
    s = stride
    ho, wo = -(-H // s), -(-W // s)
    xp = jnp.pad(x.astype(jnp.bfloat16), ((0, 0), (1, 1), (1, 1), (0, 0)))
    taps = [xp[:, kh::s, kw::s, :][:, :ho, :wo, :]
            for kh in range(3) for kw in range(3)]
    tap_stack = jnp.stack(taps, axis=0).reshape(9, B, ho * wo, Cin)
    M = ho * wo
    out = pl.pallas_call(
        functools.partial(_conv3x3_strided_kernel, relu=relu),
        out_shape=jax.ShapeDtypeStruct((B, M, Cout), jnp.bfloat16),
        grid=(B,),
        in_specs=[
            pl.BlockSpec((9, 1, M, Cin), lambda n: (0, n, 0, 0)),
            pl.BlockSpec((9, Cin, Cout), lambda n: (0, 0, 0)),
            pl.BlockSpec((1, Cout), lambda n: (0, 0)),
        ],
        out_specs=pl.BlockSpec((1, M, Cout), lambda n: (n, 0, 0)),
        compiler_params=pltpu.CompilerParams(dimension_semantics=("parallel",)),
    )(tap_stack, w9, b)
    return out.reshape(B, ho, wo, Cout)


# ---------------------------------------------------------------------------
# Kernel 3: fused box-smooth + affine weight + resize of the mask as two small
# matmuls:   wm = bg + c * Av @ mask_pad @ AhT
# ---------------------------------------------------------------------------

def _mask_transform_kernel(x_ref, av_ref, aht_ref, o_ref, *, bg, c):
    x = x_ref[0]                                                      # (Hp, Wp)
    t = jnp.dot(av_ref[...], x, preferred_element_type=jnp.float32)   # (hs, Wp)
    y = jnp.dot(t, aht_ref[...], preferred_element_type=jnp.float32)  # (hs, ws)
    o_ref[0] = bg + c * y


def smooth_weight_mask(mpad, Av, AhT, bg, c):
    N, Hp, Wp = mpad.shape
    hs, ws = Av.shape[0], AhT.shape[1]
    return pl.pallas_call(
        functools.partial(_mask_transform_kernel, bg=float(bg), c=float(c)),
        out_shape=jax.ShapeDtypeStruct((N, hs, ws), jnp.float32),
        grid=(N,),
        in_specs=[
            pl.BlockSpec((1, Hp, Wp), lambda n: (n, 0, 0)),
            pl.BlockSpec((hs, Hp), lambda n: (0, 0)),
            pl.BlockSpec((Wp, ws), lambda n: (0, 0)),
        ],
        out_specs=pl.BlockSpec((1, hs, ws), lambda n: (n, 0, 0)),
        compiler_params=pltpu.CompilerParams(dimension_semantics=("parallel",)),
    )(mpad, Av, AhT)


# ---------------------------------------------------------------------------
# Kernel 4: tiled masked MSE reduction.  Two running sums accumulated in an
# SMEM output across an all-'arbitrary' (batch, row-tile) grid.
# ---------------------------------------------------------------------------

def _masked_mse_kernel(p_ref, t_ref, m_ref, o_ref):
    @pl.when((pl.program_id(0) == 0) & (pl.program_id(1) == 0))
    def _init():
        o_ref[0] = jnp.float32(0.0)
        o_ref[1] = jnp.float32(0.0)

    d = p_ref[0].astype(jnp.float32) - t_ref[0].astype(jnp.float32)   # (tm, C)
    w = m_ref[0]                                                      # (tm, 1)
    o_ref[0] += jnp.sum(d * d * w)       # sum_c (p-t)^2 * w, fused in one reduce
    o_ref[1] += jnp.sum(w)


def _pick_row_tile(M, cap=2048):
    if M <= cap:
        return M
    t = cap - (cap % 8)
    while t >= 8:
        if M % t == 0:
            return t
        t -= 8
    return M


def masked_mse_layer_loss(pf, tf, wm):
    """(sum_c (pf-tf)^2 * wm).sum() / wm.sum();  pf/tf: (N,M,C), wm: (N,M,1)."""
    N, M, C = pf.shape
    tm = _pick_row_tile(M)
    sums = pl.pallas_call(
        _masked_mse_kernel,
        out_shape=jax.ShapeDtypeStruct((2,), jnp.float32),
        grid=(N, M // tm),
        in_specs=[
            pl.BlockSpec((1, tm, C), lambda n, r: (n, r, 0)),
            pl.BlockSpec((1, tm, C), lambda n, r: (n, r, 0)),
            pl.BlockSpec((1, tm, 1), lambda n, r: (n, r, 0)),
        ],
        out_specs=pl.BlockSpec((2,), lambda n, r: (0,),
                               memory_space=pltpu.MemorySpace.SMEM),
        compiler_params=pltpu.CompilerParams(
            dimension_semantics=("arbitrary", "arbitrary")),
    )(pf, tf, wm)
    return sums[0] / sums[1]


# ---------------------------------------------------------------------------
# Glue: tiny constant matrices (box filter / interpolation), built once per call.
# ---------------------------------------------------------------------------

def _box_matrix(n, K):
    """(n, n+K-1) with B[i, j] = 1 iff i <= j < i + K (zero-padded box sum)."""
    i = jnp.arange(n)[:, None]
    j = jnp.arange(n + K - 1)[None, :]
    return ((j >= i) & (j < i + K)).astype(jnp.float32)


def _resize_matrix(n_out, n_in, mode):
    """Row-stochastic interpolation matrix matching F.interpolate semantics."""
    if mode == "nearest":
        src = jnp.floor(jnp.arange(n_out) * (n_in / n_out)).astype(jnp.int32)
        return jax.nn.one_hot(src, n_in, dtype=jnp.float32)
    # bilinear, align_corners=True
    if n_out == 1:
        src = jnp.zeros((1,), jnp.float32)
    else:
        src = jnp.arange(n_out, dtype=jnp.float32) * ((n_in - 1) / (n_out - 1))
    lo = jnp.floor(src).astype(jnp.int32)
    hi = jnp.minimum(lo + 1, n_in - 1)
    frac = src - lo.astype(jnp.float32)
    return ((1.0 - frac)[:, None] * jax.nn.one_hot(lo, n_in, dtype=jnp.float32)
            + frac[:, None] * jax.nn.one_hot(hi, n_in, dtype=jnp.float32))


# ---------------------------------------------------------------------------
# Module
# ---------------------------------------------------------------------------

class ResNetPLSmoothMasked:
    def __init__(self, channels=1, obj_weight=0.0, bg_weight=1.0, kernel_size=51,
                 key=jax.random.PRNGKey(42)):
        self.channels = channels
        self.obj_weight = float(obj_weight)
        self.bg_weight = float(bg_weight)
        self.kernel_size = kernel_size if kernel_size % 2 == 1 else kernel_size + 1
        self.interpolation_mode = "bilinear" if self.kernel_size > 1 else "nearest"

        # TODO(synk): pretrained resnet50dilated encoder (ModelBuilder + checkpoint)
        # is not reproducible in-script; deterministic synthetic multi-scale stack.
        layer_cfg = [(3, 8, 4), (8, 16, 1), (16, 32, 2), (32, 64, 1), (64, 64, 1)]
        ks = jax.random.split(key, len(layer_cfg))
        self.enc = []
        for k, (cin, cout, stride) in zip(ks, layer_cfg):
            w = jax.random.normal(k, (3, 3, cin, cout), jnp.float32) / jnp.sqrt(9.0 * cin)
            w9 = w.reshape(9, cin, cout).astype(jnp.bfloat16)   # tap-major (kh*3+kw)
            b = jnp.zeros((1, cout), jnp.float32)
            self.enc.append((w9, b, stride))

    def _encoder(self, x):
        """x: (B,H,W,3) normalized -> 4 multi-scale feature maps, bf16 NHWC."""
        feats = []
        h = x
        for i, (w9, b, stride) in enumerate(self.enc):
            if stride == 1:
                h = conv3x3_s1(h, w9, b, relu=True)
            else:
                h = conv3x3_strided(h, w9, b, stride, relu=True)
            if i >= 1:                       # stem output is not a returned feature
                feats.append(h)
        return feats

    def __call__(self, pred, target, input_mask):
        # pred/target: (N,3,H,W); input_mask: (N,channels,H,W)  -- NCHW like torch
        N = pred.shape[0]
        pred = jnp.transpose(pred, (0, 2, 3, 1)).astype(jnp.float32)
        target = jnp.transpose(target, (0, 2, 3, 1)).astype(jnp.float32)
        mask = jnp.transpose(input_mask, (0, 2, 3, 1)).astype(jnp.float32)

        pred = (pred - IMAGENET_MEAN) / IMAGENET_STD
        target = (target - IMAGENET_MEAN) / IMAGENET_STD

        # One fused encoder pass over [pred; target] (shared weights, 2x rows).
        feats = self._encoder(jnp.concatenate([pred, target], axis=0))

        # Mask pipeline: box-smooth + affine weight + resize == two small matmuls.
        K = self.kernel_size
        p = K // 2
        H, W = mask.shape[1], mask.shape[2]
        msum = jnp.sum(mask, axis=-1)                    # conv kernel sums channels
        mpad = jnp.pad(msum, ((0, 0), (p, p), (p, p)))   # (N, H+K-1, W+K-1)
        c = (self.obj_weight - self.bg_weight) / float(K * K)
        Bv = _box_matrix(H, K)
        Bh = _box_matrix(W, K)

        wm_cache = {}
        losses = []
        for f in feats:
            hf, wf, cf = f.shape[1], f.shape[2], f.shape[3]
            if (hf, wf) not in wm_cache:                 # hoisted: /8 shared by 3 layers
                Av = _resize_matrix(hf, H, self.interpolation_mode) @ Bv        # (hf, Hp)
                AhT = (_resize_matrix(wf, W, self.interpolation_mode) @ Bh).T   # (Wp, wf)
                wm = smooth_weight_mask(mpad, Av, AhT, self.bg_weight, c)
                wm_cache[(hf, wf)] = wm.reshape(N, hf * wf, 1)
            wm = wm_cache[(hf, wf)]
            pf = f[:N].reshape(N, hf * wf, cf)
            tf = f[N:].reshape(N, hf * wf, cf)
            losses.append(masked_mse_layer_loss(pf, tf, wm))
        return jnp.mean(jnp.stack(losses))


if __name__ == "__main__":
    key = jax.random.PRNGKey(0)
    k1, k2, k3 = jax.random.split(key, 3)
    N, C, H, W = 2, 3, 32, 32
    pred = jax.random.uniform(k1, (N, C, H, W), dtype=jnp.float32)
    target = jax.random.uniform(k2, (N, C, H, W), dtype=jnp.float32)
    input_mask = (jax.random.uniform(k3, (N, 1, H, W)) > 0.5).astype(jnp.float32)

    loss_mod = ResNetPLSmoothMasked(channels=1, obj_weight=0.0, bg_weight=1.0,
                                    kernel_size=5, key=jax.random.PRNGKey(42))
    loss = jax.jit(loss_mod.__call__)(pred, target, input_mask)
    jax.block_until_ready(loss)
    assert loss.shape == () and bool(jnp.isfinite(loss))
    print("KERNEL_OK")
</pallas_src>

<mosaic_0001>
module attributes {stable_mosaic.version = 11 : i64} {
  func.func @_conv3x3_strided_kernel(%arg0: i32, %arg1: memref<9x1x64x3xbf16, #tpu.memory_space<vmem>>, %arg2: memref<9x3x8xbf16, #tpu.memory_space<vmem>>, %arg3: memref<1x8xf32, #tpu.memory_space<vmem>>, %arg4: memref<1x64x8xbf16, #tpu.memory_space<vmem>>) attributes {dimension_semantics = [#tpu.dimension_semantics<parallel>], iteration_bounds = array<i64: 4>, scalar_prefetch = 0 : i64, scratch_operands = 0 : i64, tpu.core_type = #tpu.core_type<tc>, window_params = [{transform_indices = @transform_0, window_bounds = array<i64: 9, 1, 64, 3>}, {pipeline_mode = #tpu.pipeline_mode<synchronous>, transform_indices = @transform_1, window_bounds = array<i64: 9, 3, 8>}, {pipeline_mode = #tpu.pipeline_mode<synchronous>, transform_indices = @transform_2, window_bounds = array<i64: 1, 8>}, {transform_indices = @transform_3, window_bounds = array<i64: 1, 64, 8>}]} {
    %c0 = arith.constant 0 : index
    %c0_0 = arith.constant 0 : index
    %c0_1 = arith.constant 0 : index
    %c0_2 = arith.constant 0 : index
    %0 = vector.load %arg1[%c0, %c0_0, %c0_1, %c0_2] : memref<9x1x64x3xbf16, #tpu.memory_space<vmem>>, vector<1x1x64x3xbf16>
    %1 = vector.shape_cast %0 : vector<1x1x64x3xbf16> to vector<64x3xbf16>
    %c0_3 = arith.constant 0 : index
    %c0_4 = arith.constant 0 : index
    %c0_5 = arith.constant 0 : index
    %2 = vector.load %arg2[%c0_3, %c0_4, %c0_5] : memref<9x3x8xbf16, #tpu.memory_space<vmem>>, vector<1x3x8xbf16>
    %3 = vector.shape_cast %2 : vector<1x3x8xbf16> to vector<3x8xbf16>
    %cst = arith.constant dense<0.000000e+00> : vector<64x8xf32>
    %4 = tpu.matmul %1, %3, %cst {dimension_numbers = #tpu.dot_dimension_numbers<[1], [0], [0], [1], [0, 0, 1, 1], [], []>} : vector<64x3xbf16>, vector<3x8xbf16>, vector<64x8xf32> -> vector<64x8xf32>
    %c1 = arith.constant 1 : index
    %c0_6 = arith.constant 0 : index
    %c0_7 = arith.constant 0 : index
    %c0_8 = arith.constant 0 : index
    %5 = vector.load %arg1[%c1, %c0_6, %c0_7, %c0_8] : memref<9x1x64x3xbf16, #tpu.memory_space<vmem>>, vector<1x1x64x3xbf16>
    %6 = vector.shape_cast %5 : vector<1x1x64x3xbf16> to vector<64x3xbf16>
    %c1_9 = arith.constant 1 : index
    %c0_10 = arith.constant 0 : index
    %c0_11 = arith.constant 0 : index
    %7 = vector.load %arg2[%c1_9, %c0_10, %c0_11] : memref<9x3x8xbf16, #tpu.memory_space<vmem>>, vector<1x3x8xbf16>
    %8 = vector.shape_cast %7 : vector<1x3x8xbf16> to vector<3x8xbf16>
    %cst_12 = arith.constant dense<0.000000e+00> : vector<64x8xf32>
    %9 = tpu.matmul %6, %8, %cst_12 {dimension_numbers = #tpu.dot_dimension_numbers<[1], [0], [0], [1], [0, 0, 1, 1], [], []>} : vector<64x3xbf16>, vector<3x8xbf16>, vector<64x8xf32> -> vector<64x8xf32>
    %10 = arith.addf %4, %9 : vector<64x8xf32>
    %c2 = arith.constant 2 : index
    %c0_13 = arith.constant 0 : index
    %c0_14 = arith.constant 0 : index
    %c0_15 = arith.constant 0 : index
    %11 = vector.load %arg1[%c2, %c0_13, %c0_14, %c0_15] : memref<9x1x64x3xbf16, #tpu.memory_space<vmem>>, vector<1x1x64x3xbf16>
    %12 = vector.shape_cast %11 : vector<1x1x64x3xbf16> to vector<64x3xbf16>
    %c2_16 = arith.constant 2 : index
    %c0_17 = arith.constant 0 : index
    %c0_18 = arith.constant 0 : index
    %13 = vector.load %arg2[%c2_16, %c0_17, %c0_18] : memref<9x3x8xbf16, #tpu.memory_space<vmem>>, vector<1x3x8xbf16>
    %14 = vector.shape_cast %13 : vector<1x3x8xbf16> to vector<3x8xbf16>
    %cst_19 = arith.constant dense<0.000000e+00> : vector<64x8xf32>
    %15 = tpu.matmul %12, %14, %cst_19 {dimension_numbers = #tpu.dot_dimension_numbers<[1], [0], [0], [1], [0, 0, 1, 1], [], []>} : vector<64x3xbf16>, vector<3x8xbf16>, vector<64x8xf32> -> vector<64x8xf32>
    %16 = arith.addf %10, %15 : vector<64x8xf32>
    %c3 = arith.constant 3 : index
    %c0_20 = arith.constant 0 : index
    %c0_21 = arith.constant 0 : index
    %c0_22 = arith.constant 0 : index
    %17 = vector.load %arg1[%c3, %c0_20, %c0_21, %c0_22] : memref<9x1x64x3xbf16, #tpu.memory_space<vmem>>, vector<1x1x64x3xbf16>
    %18 = vector.shape_cast %17 : vector<1x1x64x3xbf16> to vector<64x3xbf16>
    %c3_23 = arith.constant 3 : index
    %c0_24 = arith.constant 0 : index
    %c0_25 = arith.constant 0 : index
    %19 = vector.load %arg2[%c3_23, %c0_24, %c0_25] : memref<9x3x8xbf16, #tpu.memory_space<vmem>>, vector<1x3x8xbf16>
    %20 = vector.shape_cast %19 : vector<1x3x8xbf16> to vector<3x8xbf16>
    %cst_26 = arith.constant dense<0.000000e+00> : vector<64x8xf32>
    %21 = tpu.matmul %18, %20, %cst_26 {dimension_numbers = #tpu.dot_dimension_numbers<[1], [0], [0], [1], [0, 0, 1, 1], [], []>} : vector<64x3xbf16>, vector<3x8xbf16>, vector<64x8xf32> -> vector<64x8xf32>
    %22 = arith.addf %16, %21 : vector<64x8xf32>
    %c4 = arith.constant 4 : index
    %c0_27 = arith.constant 0 : index
    %c0_28 = arith.constant 0 : index
    %c0_29 = arith.constant 0 : index
    %23 = vector.load %arg1[%c4, %c0_27, %c0_28, %c0_29] : memref<9x1x64x3xbf16, #tpu.memory_space<vmem>>, vector<1x1x64x3xbf16>
    %24 = vector.shape_cast %23 : vector<1x1x64x3xbf16> to vector<64x3xbf16>
    %c4_30 = arith.constant 4 : index
    %c0_31 = arith.constant 0 : index
    %c0_32 = arith.constant 0 : index
    %25 = vector.load %arg2[%c4_30, %c0_31, %c0_32] : memref<9x3x8xbf16, #tpu.memory_space<vmem>>, vector<1x3x8xbf16>
    %26 = vector.shape_cast %25 : vector<1x3x8xbf16> to vector<3x8xbf16>
    %cst_33 = arith.constant dense<0.000000e+00> : vector<64x8xf32>
    %27 = tpu.matmul %24, %26, %cst_33 {dimension_numbers = #tpu.dot_dimension_numbers<[1], [0], [0], [1], [0, 0, 1, 1], [], []>} : vector<64x3xbf16>, vector<3x8xbf16>, vector<64x8xf32> -> vector<64x8xf32>
    %28 = arith.addf %22, %27 : vector<64x8xf32>
    %c5 = arith.constant 5 : index
    %c0_34 = arith.constant 0 : index
    %c0_35 = arith.constant 0 : index
    %c0_36 = arith.constant 0 : index
    %29 = vector.load %arg1[%c5, %c0_34, %c0_35, %c0_36] : memref<9x1x64x3xbf16, #tpu.memory_space<vmem>>, vector<1x1x64x3xbf16>
    %30 = vector.shape_cast %29 : vector<1x1x64x3xbf16> to vector<64x3xbf16>
    %c5_37 = arith.constant 5 : index
    %c0_38 = arith.constant 0 : index
    %c0_39 = arith.constant 0 : index
    %31 = vector.load %arg2[%c5_37, %c0_38, %c0_39] : memref<9x3x8xbf16, #tpu.memory_space<vmem>>, vector<1x3x8xbf16>
    %32 = vector.shape_cast %31 : vector<1x3x8xbf16> to vector<3x8xbf16>
    %cst_40 = arith.constant dense<0.000000e+00> : vector<64x8xf32>
    %33 = tpu.matmul %30, %32, %cst_40 {dimension_numbers = #tpu.dot_dimension_numbers<[1], [0], [0], [1], [0, 0, 1, 1], [], []>} : vector<64x3xbf16>, vector<3x8xbf16>, vector<64x8xf32> -> vector<64x8xf32>
    %34 = arith.addf %28, %33 : vector<64x8xf32>
    %c6 = arith.constant 6 : index
    %c0_41 = arith.constant 0 : index
    %c0_42 = arith.constant 0 : index
    %c0_43 = arith.constant 0 : index
    %35 = vector.load %arg1[%c6, %c0_41, %c0_42, %c0_43] : memref<9x1x64x3xbf16, #tpu.memory_space<vmem>>, vector<1x1x64x3xbf16>
    %36 = vector.shape_cast %35 : vector<1x1x64x3xbf16> to vector<64x3xbf16>
    %c6_44 = arith.constant 6 : index
    %c0_45 = arith.constant 0 : index
    %c0_46 = arith.constant 0 : index
    %37 = vector.load %arg2[%c6_44, %c0_45, %c0_46] : memref<9x3x8xbf16, #tpu.memory_space<vmem>>, vector<1x3x8xbf16>
    %38 = vector.shape_cast %37 : vector<1x3x8xbf16> to vector<3x8xbf16>
    %cst_47 = arith.constant dense<0.000000e+00> : vector<64x8xf32>
    %39 = tpu.matmul %36, %38, %cst_47 {dimension_numbers = #tpu.dot_dimension_numbers<[1], [0], [0], [1], [0, 0, 1, 1], [], []>} : vector<64x3xbf16>, vector<3x8xbf16>, vector<64x8xf32> -> vector<64x8xf32>
    %40 = arith.addf %34, %39 : vector<64x8xf32>
    %c7 = arith.constant 7 : index
    %c0_48 = arith.constant 0 : index
    %c0_49 = arith.constant 0 : index
    %c0_50 = arith.constant 0 : index
    %41 = vector.load %arg1[%c7, %c0_48, %c0_49, %c0_50] : memref<9x1x64x3xbf16, #tpu.memory_space<vmem>>, vector<1x1x64x3xbf16>
    %42 = vector.shape_cast %41 : vector<1x1x64x3xbf16> to vector<64x3xbf16>
    %c7_51 = arith.constant 7 : index
    %c0_52 = arith.constant 0 : index
    %c0_53 = arith.constant 0 : index
    %43 = vector.load %arg2[%c7_51, %c0_52, %c0_53] : memref<9x3x8xbf16, #tpu.memory_space<vmem>>, vector<1x3x8xbf16>
    %44 = vector.shape_cast %43 : vector<1x3x8xbf16> to vector<3x8xbf16>
    %cst_54 = arith.constant dense<0.000000e+00> : vector<64x8xf32>
    %45 = tpu.matmul %42, %44, %cst_54 {dimension_numbers = #tpu.dot_dimension_numbers<[1], [0], [0], [1], [0, 0, 1, 1], [], []>} : vector<64x3xbf16>, vector<3x8xbf16>, vector<64x8xf32> -> vector<64x8xf32>
    %46 = arith.addf %40, %45 : vector<64x8xf32>
    %c8 = arith.constant 8 : index
    %c0_55 = arith.constant 0 : index
    %c0_56 = arith.constant 0 : index
    %c0_57 = arith.constant 0 : index
    %47 = vector.load %arg1[%c8, %c0_55, %c0_56, %c0_57] : memref<9x1x64x3xbf16, #tpu.memory_space<vmem>>, vector<1x1x64x3xbf16>
    %48 = vector.shape_cast %47 : vector<1x1x64x3xbf16> to vector<64x3xbf16>
    %c8_58 = arith.constant 8 : index
    %c0_59 = arith.constant 0 : index
    %c0_60 = arith.constant 0 : index
    %49 = vector.load %arg2[%c8_58, %c0_59, %c0_60] : memref<9x3x8xbf16, #tpu.memory_space<vmem>>, vector<1x3x8xbf16>
    %50 = vector.shape_cast %49 : vector<1x3x8xbf16> to vector<3x8xbf16>
    %cst_61 = arith.constant dense<0.000000e+00> : vector<64x8xf32>
    %51 = tpu.matmul %48, %50, %cst_61 {dimension_numbers = #tpu.dot_dimension_numbers<[1], [0], [0], [1], [0, 0, 1, 1], [], []>} : vector<64x3xbf16>, vector<3x8xbf16>, vector<64x8xf32> -> vector<64x8xf32>
    %52 = arith.addf %46, %51 : vector<64x8xf32>
    %c0_62 = arith.constant 0 : index
    %c0_63 = arith.constant 0 : index
    %53 = vector.load %arg3[%c0_62, %c0_63] : memref<1x8xf32, #tpu.memory_space<vmem>>, vector<1x8xf32>
    %54 = vector.broadcast %53 : vector<1x8xf32> to vector<64x8xf32>
    %55 = arith.addf %52, %54 : vector<64x8xf32>
    %cst_64 = arith.constant 0.000000e+00 : f32
    %56 = vector.broadcast %cst_64 : f32 to vector<64x8xf32>
    %57 = arith.maximumf %55, %56 : vector<64x8xf32>
    %58 = arith.truncf %57 : vector<64x8xf32> to vector<64x8xbf16>
    %c0_65 = arith.constant 0 : index
    %c0_66 = arith.constant 0 : index
    %c0_67 = arith.constant 0 : index
    %59 = vector.load %arg4[%c0_65, %c0_66, %c0_67] : memref<1x64x8xbf16, #tpu.memory_space<vmem>>, vector<1x64x8xbf16>
    %60 = vector.shape_cast %59 : vector<1x64x8xbf16> to vector<64x8xbf16>
    %61 = vector.shape_cast %58 : vector<64x8xbf16> to vector<1x64x8xbf16>
    tpu.vector_store %arg4[%c0_65, %c0_66, %c0_67], %61 {strides = array<i32>} : memref<1x64x8xbf16, #tpu.memory_space<vmem>>, vector<1x64x8xbf16>,
    return
  }
  func.func @transform_0(%arg0: i32) -> (i32, i32, i32, i32) {
    %c0_i32 = arith.constant 0 : i32
    %c0_i32_0 = arith.constant 0 : i32
    %c0_i32_1 = arith.constant 0 : i32
    %c0_i32_2 = arith.constant 0 : i32
    return %c0_i32, %arg0, %c0_i32_0, %c0_i32_1 : i32, i32, i32, i32
  }
  func.func @transform_1(%arg0: i32) -> (i32, i32, i32) {
    %c0_i32 = arith.constant 0 : i32
    %c0_i32_0 = arith.constant 0 : i32
    %c0_i32_1 = arith.constant 0 : i32
    %c0_i32_2 = arith.constant 0 : i32
    return %c0_i32, %c0_i32_0, %c0_i32_1 : i32, i32, i32
  }
  func.func @transform_2(%arg0: i32) -> (i32, i32) {
    %c0_i32 = arith.constant 0 : i32
    %c0_i32_0 = arith.constant 0 : i32
    %c0_i32_1 = arith.constant 0 : i32
    return %c0_i32, %c0_i32_0 : i32, i32
  }
  func.func @transform_3(%arg0: i32) -> (i32, i32, i32) {
    %c0_i32 = arith.constant 0 : i32
    %c0_i32_0 = arith.constant 0 : i32
    %c0_i32_1 = arith.constant 0 : i32
    return %arg0, %c0_i32, %c0_i32_0 : i32, i32, i32
  }
}

module attributes {stable_mosaic.version = 11 : i64} {
  func.func @_conv3x3_s1_kernel(%arg0: i32, %arg1: memref<1x110x8xbf16, #tpu.memory_space<vmem>>, %arg2: memref<9x8x16xbf16, #tpu.memory_space<vmem>>, %arg3: memref<1x16xf32, #tpu.memory_space<vmem>>, %arg4: memref<1x80x16xbf16, #tpu.memory_space<vmem>>) attributes {dimension_semantics = [#tpu.dimension_semantics<parallel>], iteration_bounds = array<i64: 4>, scalar_prefetch = 0 : i64, scratch_operands = 0 : i64, tpu.core_type = #tpu.core_type<tc>, window_params = [{transform_indices = @transform_0, window_bounds = array<i64: 1, 110, 8>}, {pipeline_mode = #tpu.pipeline_mode<synchronous>, transform_indices = @transform_1, window_bounds = array<i64: 9, 8, 16>}, {pipeline_mode = #tpu.pipeline_mode<synchronous>, transform_indices = @transform_2, window_bounds = array<i64: 1, 16>}, {transform_indices = @transform_3, window_bounds = array<i64: 1, 80, 16>}]} {
    %cst = arith.constant 0.000000e+00 : f32
    %0 = vector.broadcast %cst : f32 to vector<80x16xf32>
    %c0 = arith.constant 0 : index
    %c0_0 = arith.constant 0 : index
    %c0_1 = arith.constant 0 : index
    %1 = vector.load %arg1[%c0, %c0_0, %c0_1] : memref<1x110x8xbf16, #tpu.memory_space<vmem>>, vector<1x80x8xbf16>
    %2 = vector.shape_cast %1 : vector<1x80x8xbf16> to vector<80x8xbf16>
    %c0_2 = arith.constant 0 : index
    %c0_3 = arith.constant 0 : index
    %c0_4 = arith.constant 0 : index
    %3 = vector.load %arg2[%c0_2, %c0_3, %c0_4] : memref<9x8x16xbf16, #tpu.memory_space<vmem>>, vector<1x8x16xbf16>
    %4 = vector.shape_cast %3 : vector<1x8x16xbf16> to vector<8x16xbf16>
    %cst_5 = arith.constant dense<0.000000e+00> : vector<80x16xf32>
    %5 = tpu.matmul %2, %4, %cst_5 {dimension_numbers = #tpu.dot_dimension_numbers<[1], [0], [0], [1], [0, 0, 1, 1], [], []>} : vector<80x8xbf16>, vector<8x16xbf16>, vector<80x16xf32> -> vector<80x16xf32>
    %6 = arith.addf %0, %5 : vector<80x16xf32>
    %c0_6 = arith.constant 0 : index
    %c1 = arith.constant 1 : index
    %c0_7 = arith.constant 0 : index
    %7 = vector.load %arg1[%c0_6, %c1, %c0_7] : memref<1x110x8xbf16, #tpu.memory_space<vmem>>, vector<1x80x8xbf16>
    %8 = vector.shape_cast %7 : vector<1x80x8xbf16> to vector<80x8xbf16>
    %c1_8 = arith.constant 1 : index
    %c0_9 = arith.constant 0 : index
    %c0_10 = arith.constant 0 : index
    %9 = vector.load %arg2[%c1_8, %c0_9, %c0_10] : memref<9x8x16xbf16, #tpu.memory_space<vmem>>, vector<1x8x16xbf16>
    %10 = vector.shape_cast %9 : vector<1x8x16xbf16> to vector<8x16xbf16>
    %cst_11 = arith.constant dense<0.000000e+00> : vector<80x16xf32>
    %11 = tpu.matmul %8, %10, %cst_11 {dimension_numbers = #tpu.dot_dimension_numbers<[1], [0], [0], [1], [0, 0, 1, 1], [], []>} : vector<80x8xbf16>, vector<8x16xbf16>, vector<80x16xf32> -> vector<80x16xf32>
    %12 = arith.addf %6, %11 : vector<80x16xf32>
    %c0_12 = arith.constant 0 : index
    %c2 = arith.constant 2 : index
    %c0_13 = arith.constant 0 : index
    %13 = vector.load %arg1[%c0_12, %c2, %c0_13] : memref<1x110x8xbf16, #tpu.memory_space<vmem>>, vector<1x80x8xbf16>
    %14 = vector.shape_cast %13 : vector<1x80x8xbf16> to vector<80x8xbf16>
    %c2_14 = arith.constant 2 : index
    %c0_15 = arith.constant 0 : index
    %c0_16 = arith.constant 0 : index
    %15 = vector.load %arg2[%c2_14, %c0_15, %c0_16] : memref<9x8x16xbf16, #tpu.memory_space<vmem>>, vector<1x8x16xbf16>
    %16 = vector.shape_cast %15 : vector<1x8x16xbf16> to vector<8x16xbf16>
    %cst_17 = arith.constant dense<0.000000e+00> : vector<80x16xf32>
    %17 = tpu.matmul %14, %16, %cst_17 {dimension_numbers = #tpu.dot_dimension_numbers<[1], [0], [0], [1], [0, 0, 1, 1], [], []>} : vector<80x8xbf16>, vector<8x16xbf16>, vector<80x16xf32> -> vector<80x16xf32>
    %18 = arith.addf %12, %17 : vector<80x16xf32>
    %c0_18 = arith.constant 0 : index
    %c10 = arith.constant 10 : index
    %c0_19 = arith.constant 0 : index
    %19 = vector.load %arg1[%c0_18, %c10, %c0_19] : memref<1x110x8xbf16, #tpu.memory_space<vmem>>, vector<1x80x8xbf16>
    %20 = vector.shape_cast %19 : vector<1x80x8xbf16> to vector<80x8xbf16>
    %c3 = arith.constant 3 : index
    %c0_20 = arith.constant 0 : index
    %c0_21 = arith.constant 0 : index
    %21 = vector.load %arg2[%c3, %c0_20, %c0_21] : memref<9x8x16xbf16, #tpu.memory_space<vmem>>, vector<1x8x16xbf16>
    %22 = vector.shape_cast %21 : vector<1x8x16xbf16> to vector<8x16xbf16>
    %cst_22 = arith.constant dense<0.000000e+00> : vector<80x16xf32>
    %23 = tpu.matmul %20, %22, %cst_22 {dimension_numbers = #tpu.dot_dimension_numbers<[1], [0], [0], [1], [0, 0, 1, 1], [], []>} : vector<80x8xbf16>, vector<8x16xbf16>, vector<80x16xf32> -> vector<80x16xf32>
    %24 = arith.addf %18, %23 : vector<80x16xf32>
    %c0_23 = arith.constant 0 : index
    %c11 = arith.constant 11 : index
    %c0_24 = arith.constant 0 : index
    %25 = vector.load %arg1[%c0_23, %c11, %c0_24] : memref<1x110x8xbf16, #tpu.memory_space<vmem>>, vector<1x80x8xbf16>
    %26 = vector.shape_cast %25 : vector<1x80x8xbf16> to vector<80x8xbf16>
    %c4 = arith.constant 4 : index
    %c0_25 = arith.constant 0 : index
    %c0_26 = arith.constant 0 : index
    %27 = vector.load %arg2[%c4, %c0_25, %c0_26] : memref<9x8x16xbf16, #tpu.memory_space<vmem>>, vector<1x8x16xbf16>
    %28 = vector.shape_cast %27 : vector<1x8x16xbf16> to vector<8x16xbf16>
    %cst_27 = arith.constant dense<0.000000e+00> : vector<80x16xf32>
    %29 = tpu.matmul %26, %28, %cst_27 {dimension_numbers = #tpu.dot_dimension_numbers<[1], [0], [0], [1], [0, 0, 1, 1], [], []>} : vector<80x8xbf16>, vector<8x16xbf16>, vector<80x16xf32> -> vector<80x16xf32>
    %30 = arith.addf %24, %29 : vector<80x16xf32>
    %c0_28 = arith.constant 0 : index
    %c12 = arith.constant 12 : index
    %c0_29 = arith.constant 0 : index
    %31 = vector.load %arg1[%c0_28, %c12, %c0_29] : memref<1x110x8xbf16, #tpu.memory_space<vmem>>, vector<1x80x8xbf16>
    %32 = vector.shape_cast %31 : vector<1x80x8xbf16> to vector<80x8xbf16>
    %c5 = arith.constant 5 : index
    %c0_30 = arith.constant 0 : index
    %c0_31 = arith.constant 0 : index
    %33 = vector.load %arg2[%c5, %c0_30, %c0_31] : memref<9x8x16xbf16, #tpu.memory_space<vmem>>, vector<1x8x16xbf16>
    %34 = vector.shape_cast %33 : vector<1x8x16xbf16> to vector<8x16xbf16>
    %cst_32 = arith.constant dense<0.000000e+00> : vector<80x16xf32>
    %35 = tpu.matmul %32, %34, %cst_32 {dimension_numbers = #tpu.dot_dimension_numbers<[1], [0], [0], [1], [0, 0, 1, 1], [], []>} : vector<80x8xbf16>, vector<8x16xbf16>, vector<80x16xf32> -> vector<80x16xf32>
    %36 = arith.addf %30, %35 : vector<80x16xf32>
    %c0_33 = arith.constant 0 : index
    %c20 = arith.constant 20 : index
    %c0_34 = arith.constant 0 : index
    %37 = vector.load %arg1[%c0_33, %c20, %c0_34] : memref<1x110x8xbf16, #tpu.memory_space<vmem>>, vector<1x80x8xbf16>
    %38 = vector.shape_cast %37 : vector<1x80x8xbf16> to vector<80x8xbf16>
    %c6 = arith.constant 6 : index
    %c0_35 = arith.constant 0 : index
    %c0_36 = arith.constant 0 : index
    %39 = vector.load %arg2[%c6, %c0_35, %c0_36] : memref<9x8x16xbf16, #tpu.memory_space<vmem>>, vector<1x8x16xbf16>
    %40 = vector.shape_cast %39 : vector<1x8x16xbf16> to vector<8x16xbf16>
    %cst_37 = arith.constant dense<0.000000e+00> : vector<80x16xf32>
    %41 = tpu.matmul %38, %40, %cst_37 {dimension_numbers = #tpu.dot_dimension_numbers<[1], [0], [0], [1], [0, 0, 1, 1], [], []>} : vector<80x8xbf16>, vector<8x16xbf16>, vector<80x16xf32> -> vector<80x16xf32>
    %42 = arith.addf %36, %41 : vector<80x16xf32>
    %c0_38 = arith.constant 0 : index
    %c21 = arith.constant 21 : index
    %c0_39 = arith.constant 0 : index
    %43 = vector.load %arg1[%c0_38, %c21, %c0_39] : memref<1x110x8xbf16, #tpu.memory_space<vmem>>, vector<1x80x8xbf16>
    %44 = vector.shape_cast %43 : vector<1x80x8xbf16> to vector<80x8xbf16>
    %c7 = arith.constant 7 : index
    %c0_40 = arith.constant 0 : index
    %c0_41 = arith.constant 0 : index
    %45 = vector.load %arg2[%c7, %c0_40, %c0_41] : memref<9x8x16xbf16, #tpu.memory_space<vmem>>, vector<1x8x16xbf16>
    %46 = vector.shape_cast %45 : vector<1x8x16xbf16> to vector<8x16xbf16>
    %cst_42 = arith.constant dense<0.000000e+00> : vector<80x16xf32>
    %47 = tpu.matmul %44, %46, %cst_42 {dimension_numbers = #tpu.dot_dimension_numbers<[1], [0], [0], [1], [0, 0, 1, 1], [], []>} : vector<80x8xbf16>, vector<8x16xbf16>, vector<80x16xf32> -> vector<80x16xf32>
    %48 = arith.addf %42, %47 : vector<80x16xf32>
    %c0_43 = arith.constant 0 : index
    %c22 = arith.constant 22 : index
    %c0_44 = arith.constant 0 : index
    %49 = vector.load %arg1[%c0_43, %c22, %c0_44] : memref<1x110x8xbf16, #tpu.memory_space<vmem>>, vector<1x80x8xbf16>
    %50 = vector.shape_cast %49 : vector<1x80x8xbf16> to vector<80x8xbf16>
    %c8 = arith.constant 8 : index
    %c0_45 = arith.constant 0 : index
    %c0_46 = arith.constant 0 : index
    %51 = vector.load %arg2[%c8, %c0_45, %c0_46] : memref<9x8x16xbf16, #tpu.memory_space<vmem>>, vector<1x8x16xbf16>
    %52 = vector.shape_cast %51 : vector<1x8x16xbf16> to vector<8x16xbf16>
    %cst_47 = arith.constant dense<0.000000e+00> : vector<80x16xf32>
    %53 = tpu.matmul %50, %52, %cst_47 {dimension_numbers = #tpu.dot_dimension_numbers<[1], [0], [0], [1], [0, 0, 1, 1], [], []>} : vector<80x8xbf16>, vector<8x16xbf16>, vector<80x16xf32> -> vector<80x16xf32>
    %54 = arith.addf %48, %53 : vector<80x16xf32>
    %c0_48 = arith.constant 0 : index
    %c0_49 = arith.constant 0 : index
    %55 = vector.load %arg3[%c0_48, %c0_49] : memref<1x16xf32, #tpu.memory_space<vmem>>, vector<1x16xf32>
    %56 = vector.broadcast %55 : vector<1x16xf32> to vector<80x16xf32>
    %57 = arith.addf %54, %56 : vector<80x16xf32>
    %cst_50 = arith.constant 0.000000e+00 : f32
    %58 = vector.broadcast %cst_50 : f32 to vector<80x16xf32>
    %59 = arith.maximumf %57, %58 : vector<80x16xf32>
    %60 = arith.truncf %59 : vector<80x16xf32> to vector<80x16xbf16>
    %c0_51 = arith.constant 0 : index
    %c0_52 = arith.constant 0 : index
    %c0_53 = arith.constant 0 : index
    %61 = vector.load %arg4[%c0_51, %c0_52, %c0_53] : memref<1x80x16xbf16, #tpu.memory_space<vmem>>, vector<1x80x16xbf16>
    %62 = vector.shape_cast %61 : vector<1x80x16xbf16> to vector<80x16xbf16>
    %63 = vector.shape_cast %60 : vector<80x16xbf16> to vector<1x80x16xbf16>
    tpu.vector_store %arg4[%c0_51, %c0_52, %c0_53], %63 {strides = array<i32>} : memref<1x80x16xbf16, #tpu.memory_space<vmem>>, vector<1x80x16xbf16>,
    return
  }
  func.func @transform_0(%arg0: i32) -> (i32, i32, i32) {
    %c0_i32 = arith.constant 0 : i32
    %c0_i32_0 = arith.constant 0 : i32
    %c0_i32_1 = arith.constant 0 : i32
    return %arg0, %c0_i32, %c0_i32_0 : i32, i32, i32
  }
  func.func @transform_1(%arg0: i32) -> (i32, i32, i32) {
    %c0_i32 = arith.constant 0 : i32
    %c0_i32_0 = arith.constant 0 : i32
    %c0_i32_1 = arith.constant 0 : i32
    %c0_i32_2 = arith.constant 0 : i32
    return %c0_i32, %c0_i32_0, %c0_i32_1 : i32, i32, i32
  }
  func.func @transform_2(%arg0: i32) -> (i32, i32) {
    %c0_i32 = arith.constant 0 : i32
    %c0_i32_0 = arith.constant 0 : i32
    %c0_i32_1 = arith.constant 0 : i32
    return %c0_i32, %c0_i32_0 : i32, i32
  }
  func.func @transform_3(%arg0: i32) -> (i32, i32, i32) {
    %c0_i32 = arith.constant 0 : i32
    %c0_i32_0 = arith.constant 0 : i32
    %c0_i32_1 = arith.constant 0 : i32
    return %arg0, %c0_i32, %c0_i32_0 : i32, i32, i32
  }
}

module attributes {stable_mosaic.version = 11 : i64} {
  func.func @_mask_transform_kernel(%arg0: i32, %arg1: memref<1x36x36xf32, #tpu.memory_space<vmem>>, %arg2: memref<8x36xf32, #tpu.memory_space<vmem>>, %arg3: memref<36x8xf32, #tpu.memory_space<vmem>>, %arg4: memref<1x8x8xf32, #tpu.memory_space<vmem>>) attributes {dimension_semantics = [#tpu.dimension_semantics<parallel>], iteration_bounds = array<i64: 2>, scalar_prefetch = 0 : i64, scratch_operands = 0 : i64, tpu.core_type = #tpu.core_type<tc>, window_params = [{transform_indices = @transform_0, window_bounds = array<i64: 1, 36, 36>}, {pipeline_mode = #tpu.pipeline_mode<synchronous>, transform_indices = @transform_1, window_bounds = array<i64: 8, 36>}, {pipeline_mode = #tpu.pipeline_mode<synchronous>, transform_indices = @transform_2, window_bounds = array<i64: 36, 8>}, {transform_indices = @transform_3, window_bounds = array<i64: 1, 8, 8>}]} {
    %c0 = arith.constant 0 : index
    %c0_0 = arith.constant 0 : index
    %c0_1 = arith.constant 0 : index
    %0 = vector.load %arg1[%c0, %c0_0, %c0_1] : memref<1x36x36xf32, #tpu.memory_space<vmem>>, vector<1x36x36xf32>
    %1 = vector.shape_cast %0 : vector<1x36x36xf32> to vector<36x36xf32>
    %c0_2 = arith.constant 0 : index
    %c0_3 = arith.constant 0 : index
    %2 = vector.load %arg2[%c0_2, %c0_3] : memref<8x36xf32, #tpu.memory_space<vmem>>, vector<8x36xf32>
    %cst = arith.constant dense<0.000000e+00> : vector<8x36xf32>
    %3 = tpu.matmul %2, %1, %cst {dimension_numbers = #tpu.dot_dimension_numbers<[1], [0], [0], [1], [0, 0, 1, 1], [], []>} : vector<8x36xf32>, vector<36x36xf32>, vector<8x36xf32> -> vector<8x36xf32>
    %c0_4 = arith.constant 0 : index
    %c0_5 = arith.constant 0 : index
    %4 = vector.load %arg3[%c0_4, %c0_5] : memref<36x8xf32, #tpu.memory_space<vmem>>, vector<36x8xf32>
    %cst_6 = arith.constant dense<0.000000e+00> : vector<8x8xf32>
    %5 = tpu.matmul %3, %4, %cst_6 {dimension_numbers = #tpu.dot_dimension_numbers<[1], [0], [0], [1], [0, 0, 1, 1], [], []>} : vector<8x36xf32>, vector<36x8xf32>, vector<8x8xf32> -> vector<8x8xf32>
    %cst_7 = arith.constant -4.000000e-02 : f32
    %6 = vector.broadcast %cst_7 : f32 to vector<8x8xf32>
    %7 = arith.mulf %6, %5 : vector<8x8xf32>
    %cst_8 = arith.constant 1.000000e+00 : f32
    %8 = vector.broadcast %cst_8 : f32 to vector<8x8xf32>
    %9 = arith.addf %8, %7 : vector<8x8xf32>
    %c0_9 = arith.constant 0 : index
    %c0_10 = arith.constant 0 : index
    %c0_11 = arith.constant 0 : index
    %10 = vector.load %arg4[%c0_9, %c0_10, %c0_11] : memref<1x8x8xf32, #tpu.memory_space<vmem>>, vector<1x8x8xf32>
    %11 = vector.shape_cast %10 : vector<1x8x8xf32> to vector<8x8xf32>
    %12 = vector.shape_cast %9 : vector<8x8xf32> to vector<1x8x8xf32>
    tpu.vector_store %arg4[%c0_9, %c0_10, %c0_11], %12 {strides = array<i32>} : memref<1x8x8xf32, #tpu.memory_space<vmem>>, vector<1x8x8xf32>,
    return
  }
  func.func @transform_0(%arg0: i32) -> (i32, i32, i32) {
    %c0_i32 = arith.constant 0 : i32
    %c0_i32_0 = arith.constant 0 : i32
    %c0_i32_1 = arith.constant 0 : i32
    return %arg0, %c0_i32, %c0_i32_0 : i32, i32, i32
  }
  func.func @transform_1(%arg0: i32) -> (i32, i32) {
    %c0_i32 = arith.constant 0 : i32
    %c0_i32_0 = arith.constant 0 : i32
    %c0_i32_1 = arith.constant 0 : i32
    return %c0_i32, %c0_i32_0 : i32, i32
  }
  func.func @transform_2(%arg0: i32) -> (i32, i32) {
    %c0_i32 = arith.constant 0 : i32
    %c0_i32_0 = arith.constant 0 : i32
    %c0_i32_1 = arith.constant 0 : i32
    return %c0_i32, %c0_i32_0 : i32, i32
  }
  func.func @transform_3(%arg0: i32) -> (i32, i32, i32) {
    %c0_i32 = arith.constant 0 : i32
    %c0_i32_0 = arith.constant 0 : i32
    %c0_i32_1 = arith.constant 0 : i32
    return %arg0, %c0_i32, %c0_i32_0 : i32, i32, i32
  }
}

module attributes {stable_mosaic.version = 11 : i64} {
  func.func @_masked_mse_kernel(%arg0: i32, %arg1: i32, %arg2: memref<1x64x16xbf16, #tpu.memory_space<vmem>>, %arg3: memref<1x64x16xbf16, #tpu.memory_space<vmem>>, %arg4: memref<1x64x1xf32, #tpu.memory_space<vmem>>, %arg5: memref<2xf32, #tpu.memory_space<smem>>) attributes {dimension_semantics = [#tpu.dimension_semantics<arbitrary>, #tpu.dimension_semantics<arbitrary>], iteration_bounds = array<i64: 2, 1>, scalar_prefetch = 0 : i64, scratch_operands = 0 : i64, tpu.core_type = #tpu.core_type<tc>, window_params = [{transform_indices = @transform_0, window_bounds = array<i64: 1, 64, 16>}, {transform_indices = @transform_1, window_bounds = array<i64: 1, 64, 16>}, {transform_indices = @transform_2, window_bounds = array<i64: 1, 64, 1>}, {transform_indices = @transform_3, window_bounds = array<i64: 2>}]} {
    %c0_i32 = arith.constant 0 : i32
    %0 = arith.cmpi eq, %arg0, %c0_i32 : i32
    %c0_i32_0 = arith.constant 0 : i32
    %1 = arith.cmpi eq, %arg1, %c0_i32_0 : i32
    %2 = arith.andi %0, %1 : i1
    %3 = arith.extui %2 : i1 to i32
    %c0_i32_1 = arith.constant 0 : i32
    %4 = arith.cmpi ne, %3, %c0_i32_1 : i32
    scf.if %4 {
      %cst_14 = arith.constant 0.000000e+00 : f32
      %c0_15 = arith.constant 0 : index
      %31 = memref.load %arg5[%c0_15] : memref<2xf32, #tpu.memory_space<smem>>
      memref.store %cst_14, %arg5[%c0_15] : memref<2xf32, #tpu.memory_space<smem>>
      %cst_16 = arith.constant 0.000000e+00 : f32
      %c1_17 = arith.constant 1 : index
      %32 = memref.load %arg5[%c1_17] : memref<2xf32, #tpu.memory_space<smem>>
      memref.store %cst_16, %arg5[%c1_17] : memref<2xf32, #tpu.memory_space<smem>>
    } else {
    }
    %c0 = arith.constant 0 : index
    %c0_2 = arith.constant 0 : index
    %c0_3 = arith.constant 0 : index
    %5 = vector.load %arg2[%c0, %c0_2, %c0_3] : memref<1x64x16xbf16, #tpu.memory_space<vmem>>, vector<1x64x16xbf16>
    %6 = vector.shape_cast %5 : vector<1x64x16xbf16> to vector<64x16xbf16>
    %7 = arith.extf %6 : vector<64x16xbf16> to vector<64x16xf32>
    %c0_4 = arith.constant 0 : index
    %c0_5 = arith.constant 0 : index
    %c0_6 = arith.constant 0 : index
    %8 = vector.load %arg3[%c0_4, %c0_5, %c0_6] : memref<1x64x16xbf16, #tpu.memory_space<vmem>>, vector<1x64x16xbf16>
    %9 = vector.shape_cast %8 : vector<1x64x16xbf16> to vector<64x16xbf16>
    %10 = arith.extf %9 : vector<64x16xbf16> to vector<64x16xf32>
    %11 = arith.subf %7, %10 : vector<64x16xf32>
    %c0_7 = arith.constant 0 : index
    %c0_8 = arith.constant 0 : index
    %c0_9 = arith.constant 0 : index
    %12 = vector.load %arg4[%c0_7, %c0_8, %c0_9] : memref<1x64x1xf32, #tpu.memory_space<vmem>>, vector<1x64x1xf32>
    %13 = vector.shape_cast %12 : vector<1x64x1xf32> to vector<64x1xf32>
    %c0_10 = arith.constant 0 : index
    %14 = memref.load %arg5[%c0_10] : memref<2xf32, #tpu.memory_space<smem>>
    %15 = arith.mulf %11, %11 : vector<64x16xf32>
    %16 = vector.broadcast %13 : vector<64x1xf32> to vector<64x16xf32>
    %17 = arith.mulf %15, %16 : vector<64x16xf32>
    %18 = vector.shape_cast %17 : vector<64x16xf32> to vector<1x64x16xf32>
    %cst = arith.constant dense<0.000000e+00> : vector<1xf32>
    %19 = vector.multi_reduction <add>, %18, %cst [1, 2] : vector<1x64x16xf32> to vector<1xf32>
    %20 = vector.shape_cast %19 : vector<1xf32> to vector<1x1x1xf32>
    %21 = vector.extract %20[0, 0, 0] : f32 from vector<1x1x1xf32>
    %22 = arith.addf %14, %21 : f32
    %c0_11 = arith.constant 0 : index
    %23 = memref.load %arg5[%c0_11] : memref<2xf32, #tpu.memory_space<smem>>
    memref.store %22, %arg5[%c0_11] : memref<2xf32, #tpu.memory_space<smem>>
    %c1 = arith.constant 1 : index
    %24 = memref.load %arg5[%c1] : memref<2xf32, #tpu.memory_space<smem>>
    %25 = vector.shape_cast %13 : vector<64x1xf32> to vector<1x64x1xf32>
    %cst_12 = arith.constant dense<0.000000e+00> : vector<1xf32>
    %26 = vector.multi_reduction <add>, %25, %cst_12 [1, 2] : vector<1x64x1xf32> to vector<1xf32>
    %27 = vector.shape_cast %26 : vector<1xf32> to vector<1x1x1xf32>
    %28 = vector.extract %27[0, 0, 0] : f32 from vector<1x1x1xf32>
    %29 = arith.addf %24, %28 : f32
    %c1_13 = arith.constant 1 : index
    %30 = memref.load %arg5[%c1_13] : memref<2xf32, #tpu.memory_space<smem>>
    memref.store %29, %arg5[%c1_13] : memref<2xf32, #tpu.memory_space<smem>>
    return
  }
  func.func @transform_0(%arg0: i32, %arg1: i32) -> (i32, i32, i32) {
    %c0_i32 = arith.constant 0 : i32
    %c0_i32_0 = arith.constant 0 : i32
    return %arg0, %arg1, %c0_i32 : i32, i32, i32
  }
  func.func @transform_1(%arg0: i32, %arg1: i32) -> (i32, i32, i32) {
    %c0_i32 = arith.constant 0 : i32
    %c0_i32_0 = arith.constant 0 : i32
    return %arg0, %arg1, %c0_i32 : i32, i32, i32
  }
  func.func @transform_2(%arg0: i32, %arg1: i32) -> (i32, i32, i32) {
    %c0_i32 = arith.constant 0 : i32
    %c0_i32_0 = arith.constant 0 : i32
    return %arg0, %arg1, %c0_i32 : i32, i32, i32
  }
  func.func @transform_3(%arg0: i32, %arg1: i32) -> i32 {
    %c0_i32 = arith.constant 0 : i32
    %c0_i32_0 = arith.constant 0 : i32
    return %c0_i32 : i32
  }
}

module attributes {stable_mosaic.version = 11 : i64} {
  func.func @_conv3x3_strided_kernel(%arg0: i32, %arg1: memref<9x1x16x16xbf16, #tpu.memory_space<vmem>>, %arg2: memref<9x16x32xbf16, #tpu.memory_space<vmem>>, %arg3: memref<1x32xf32, #tpu.memory_space<vmem>>, %arg4: memref<1x16x32xbf16, #tpu.memory_space<vmem>>) attributes {dimension_semantics = [#tpu.dimension_semantics<parallel>], iteration_bounds = array<i64: 4>, scalar_prefetch = 0 : i64, scratch_operands = 0 : i64, tpu.core_type = #tpu.core_type<tc>, window_params = [{transform_indices = @transform_0, window_bounds = array<i64: 9, 1, 16, 16>}, {pipeline_mode = #tpu.pipeline_mode<synchronous>, transform_indices = @transform_1, window_bounds = array<i64: 9, 16, 32>}, {pipeline_mode = #tpu.pipeline_mode<synchronous>, transform_indices = @transform_2, window_bounds = array<i64: 1, 32>}, {transform_indices = @transform_3, window_bounds = array<i64: 1, 16, 32>}]} {
    %c0 = arith.constant 0 : index
    %c0_0 = arith.constant 0 : index
    %c0_1 = arith.constant 0 : index
    %c0_2 = arith.constant 0 : index
    %0 = vector.load %arg1[%c0, %c0_0, %c0_1, %c0_2] : memref<9x1x16x16xbf16, #tpu.memory_space<vmem>>, vector<1x1x16x16xbf16>
    %1 = vector.shape_cast %0 : vector<1x1x16x16xbf16> to vector<16x16xbf16>
    %c0_3 = arith.constant 0 : index
    %c0_4 = arith.constant 0 : index
    %c0_5 = arith.constant 0 : index
    %2 = vector.load %arg2[%c0_3, %c0_4, %c0_5] : memref<9x16x32xbf16, #tpu.memory_space<vmem>>, vector<1x16x32xbf16>
    %3 = vector.shape_cast %2 : vector<1x16x32xbf16> to vector<16x32xbf16>
    %cst = arith.constant dense<0.000000e+00> : vector<16x32xf32>
    %4 = tpu.matmul %1, %3, %cst {dimension_numbers = #tpu.dot_dimension_numbers<[1], [0], [0], [1], [0, 0, 1, 1], [], []>} : vector<16x16xbf16>, vector<16x32xbf16>, vector<16x32xf32> -> vector<16x32xf32>
    %c1 = arith.constant 1 : index
    %c0_6 = arith.constant 0 : index
    %c0_7 = arith.constant 0 : index
    %c0_8 = arith.constant 0 : index
    %5 = vector.load %arg1[%c1, %c0_6, %c0_7, %c0_8] : memref<9x1x16x16xbf16, #tpu.memory_space<vmem>>, vector<1x1x16x16xbf16>
    %6 = vector.shape_cast %5 : vector<1x1x16x16xbf16> to vector<16x16xbf16>
    %c1_9 = arith.constant 1 : index
    %c0_10 = arith.constant 0 : index
    %c0_11 = arith.constant 0 : index
    %7 = vector.load %arg2[%c1_9, %c0_10, %c0_11] : memref<9x16x32xbf16, #tpu.memory_space<vmem>>, vector<1x16x32xbf16>
    %8 = vector.shape_cast %7 : vector<1x16x32xbf16> to vector<16x32xbf16>
    %cst_12 = arith.constant dense<0.000000e+00> : vector<16x32xf32>
    %9 = tpu.matmul %6, %8, %cst_12 {dimension_numbers = #tpu.dot_dimension_numbers<[1], [0], [0], [1], [0, 0, 1, 1], [], []>} : vector<16x16xbf16>, vector<16x32xbf16>, vector<16x32xf32> -> vector<16x32xf32>
    %10 = arith.addf %4, %9 : vector<16x32xf32>
    %c2 = arith.constant 2 : index
    %c0_13 = arith.constant 0 : index
    %c0_14 = arith.constant 0 : index
    %c0_15 = arith.constant 0 : index
    %11 = vector.load %arg1[%c2, %c0_13, %c0_14, %c0_15] : memref<9x1x16x16xbf16, #tpu.memory_space<vmem>>, vector<1x1x16x16xbf16>
    %12 = vector.shape_cast %11 : vector<1x1x16x16xbf16> to vector<16x16xbf16>
    %c2_16 = arith.constant 2 : index
    %c0_17 = arith.constant 0 : index
    %c0_18 = arith.constant 0 : index
    %13 = vector.load %arg2[%c2_16, %c0_17, %c0_18] : memref<9x16x32xbf16, #tpu.memory_space<vmem>>, vector<1x16x32xbf16>
    %14 = vector.shape_cast %13 : vector<1x16x32xbf16> to vector<16x32xbf16>
    %cst_19 = arith.constant dense<0.000000e+00> : vector<16x32xf32>
    %15 = tpu.matmul %12, %14, %cst_19 {dimension_numbers = #tpu.dot_dimension_numbers<[1], [0], [0], [1], [0, 0, 1, 1], [], []>} : vector<16x16xbf16>, vector<16x32xbf16>, vector<16x32xf32> -> vector<16x32xf32>
    %16 = arith.addf %10, %15 : vector<16x32xf32>
    %c3 = arith.constant 3 : index
    %c0_20 = arith.constant 0 : index
    %c0_21 = arith.constant 0 : index
    %c0_22 = arith.constant 0 : index
    %17 = vector.load %arg1[%c3, %c0_20, %c0_21, %c0_22] : memref<9x1x16x16xbf16, #tpu.memory_space<vmem>>, vector<1x1x16x16xbf16>
    %18 = vector.shape_cast %17 : vector<1x1x16x16xbf16> to vector<16x16xbf16>
    %c3_23 = arith.constant 3 : index
    %c0_24 = arith.constant 0 : index
    %c0_25 = arith.constant 0 : index
    %19 = vector.load %arg2[%c3_23, %c0_24, %c0_25] : memref<9x16x32xbf16, #tpu.memory_space<vmem>>, vector<1x16x32xbf16>
    %20 = vector.shape_cast %19 : vector<1x16x32xbf16> to vector<16x32xbf16>
    %cst_26 = arith.constant dense<0.000000e+00> : vector<16x32xf32>
    %21 = tpu.matmul %18, %20, %cst_26 {dimension_numbers = #tpu.dot_dimension_numbers<[1], [0], [0], [1], [0, 0, 1, 1], [], []>} : vector<16x16xbf16>, vector<16x32xbf16>, vector<16x32xf32> -> vector<16x32xf32>
    %22 = arith.addf %16, %21 : vector<16x32xf32>
    %c4 = arith.constant 4 : index
    %c0_27 = arith.constant 0 : index
    %c0_28 = arith.constant 0 : index
    %c0_29 = arith.constant 0 : index
    %23 = vector.load %arg1[%c4, %c0_27, %c0_28, %c0_29] : memref<9x1x16x16xbf16, #tpu.memory_space<vmem>>, vector<1x1x16x16xbf16>
    %24 = vector.shape_cast %23 : vector<1x1x16x16xbf16> to vector<16x16xbf16>
    %c4_30 = arith.constant 4 : index
    %c0_31 = arith.constant 0 : index
    %c0_32 = arith.constant 0 : index
    %25 = vector.load %arg2[%c4_30, %c0_31, %c0_32] : memref<9x16x32xbf16, #tpu.memory_space<vmem>>, vector<1x16x32xbf16>
    %26 = vector.shape_cast %25 : vector<1x16x32xbf16> to vector<16x32xbf16>
    %cst_33 = arith.constant dense<0.000000e+00> : vector<16x32xf32>
    %27 = tpu.matmul %24, %26, %cst_33 {dimension_numbers = #tpu.dot_dimension_numbers<[1], [0], [0], [1], [0, 0, 1, 1], [], []>} : vector<16x16xbf16>, vector<16x32xbf16>, vector<16x32xf32> -> vector<16x32xf32>
    %28 = arith.addf %22, %27 : vector<16x32xf32>
    %c5 = arith.constant 5 : index
    %c0_34 = arith.constant 0 : index
    %c0_35 = arith.constant 0 : index
    %c0_36 = arith.constant 0 : index
    %29 = vector.load %arg1[%c5, %c0_34, %c0_35, %c0_36] : memref<9x1x16x16xbf16, #tpu.memory_space<vmem>>, vector<1x1x16x16xbf16>
    %30 = vector.shape_cast %29 : vector<1x1x16x16xbf16> to vector<16x16xbf16>
    %c5_37 = arith.constant 5 : index
    %c0_38 = arith.constant 0 : index
    %c0_39 = arith.constant 0 : index
    %31 = vector.load %arg2[%c5_37, %c0_38, %c0_39] : memref<9x16x32xbf16, #tpu.memory_space<vmem>>, vector<1x16x32xbf16>
    %32 = vector.shape_cast %31 : vector<1x16x32xbf16> to vector<16x32xbf16>
    %cst_40 = arith.constant dense<0.000000e+00> : vector<16x32xf32>
    %33 = tpu.matmul %30, %32, %cst_40 {dimension_numbers = #tpu.dot_dimension_numbers<[1], [0], [0], [1], [0, 0, 1, 1], [], []>} : vector<16x16xbf16>, vector<16x32xbf16>, vector<16x32xf32> -> vector<16x32xf32>
    %34 = arith.addf %28, %33 : vector<16x32xf32>
    %c6 = arith.constant 6 : index
    %c0_41 = arith.constant 0 : index
    %c0_42 = arith.constant 0 : index
    %c0_43 = arith.constant 0 : index
    %35 = vector.load %arg1[%c6, %c0_41, %c0_42, %c0_43] : memref<9x1x16x16xbf16, #tpu.memory_space<vmem>>, vector<1x1x16x16xbf16>
    %36 = vector.shape_cast %35 : vector<1x1x16x16xbf16> to vector<16x16xbf16>
    %c6_44 = arith.constant 6 : index
    %c0_45 = arith.constant 0 : index
    %c0_46 = arith.constant 0 : index
    %37 = vector.load %arg2[%c6_44, %c0_45, %c0_46] : memref<9x16x32xbf16, #tpu.memory_space<vmem>>, vector<1x16x32xbf16>
    %38 = vector.shape_cast %37 : vector<1x16x32xbf16> to vector<16x32xbf16>
    %cst_47 = arith.constant dense<0.000000e+00> : vector<16x32xf32>
    %39 = tpu.matmul %36, %38, %cst_47 {dimension_numbers = #tpu.dot_dimension_numbers<[1], [0], [0], [1], [0, 0, 1, 1], [], []>} : vector<16x16xbf16>, vector<16x32xbf16>, vector<16x32xf32> -> vector<16x32xf32>
    %40 = arith.addf %34, %39 : vector<16x32xf32>
    %c7 = arith.constant 7 : index
    %c0_48 = arith.constant 0 : index
    %c0_49 = arith.constant 0 : index
    %c0_50 = arith.constant 0 : index
    %41 = vector.load %arg1[%c7, %c0_48, %c0_49, %c0_50] : memref<9x1x16x16xbf16, #tpu.memory_space<vmem>>, vector<1x1x16x16xbf16>
    %42 = vector.shape_cast %41 : vector<1x1x16x16xbf16> to vector<16x16xbf16>
    %c7_51 = arith.constant 7 : index
    %c0_52 = arith.constant 0 : index
    %c0_53 = arith.constant 0 : index
    %43 = vector.load %arg2[%c7_51, %c0_52, %c0_53] : memref<9x16x32xbf16, #tpu.memory_space<vmem>>, vector<1x16x32xbf16>
    %44 = vector.shape_cast %43 : vector<1x16x32xbf16> to vector<16x32xbf16>
    %cst_54 = arith.constant dense<0.000000e+00> : vector<16x32xf32>
    %45 = tpu.matmul %42, %44, %cst_54 {dimension_numbers = #tpu.dot_dimension_numbers<[1], [0], [0], [1], [0, 0, 1, 1], [], []>} : vector<16x16xbf16>, vector<16x32xbf16>, vector<16x32xf32> -> vector<16x32xf32>
    %46 = arith.addf %40, %45 : vector<16x32xf32>
    %c8 = arith.constant 8 : index
    %c0_55 = arith.constant 0 : index
    %c0_56 = arith.constant 0 : index
    %c0_57 = arith.constant 0 : index
    %47 = vector.load %arg1[%c8, %c0_55, %c0_56, %c0_57] : memref<9x1x16x16xbf16, #tpu.memory_space<vmem>>, vector<1x1x16x16xbf16>
    %48 = vector.shape_cast %47 : vector<1x1x16x16xbf16> to vector<16x16xbf16>
    %c8_58 = arith.constant 8 : index
    %c0_59 = arith.constant 0 : index
    %c0_60 = arith.constant 0 : index
    %49 = vector.load %arg2[%c8_58, %c0_59, %c0_60] : memref<9x16x32xbf16, #tpu.memory_space<vmem>>, vector<1x16x32xbf16>
    %50 = vector.shape_cast %49 : vector<1x16x32xbf16> to vector<16x32xbf16>
    %cst_61 = arith.constant dense<0.000000e+00> : vector<16x32xf32>
    %51 = tpu.matmul %48, %50, %cst_61 {dimension_numbers = #tpu.dot_dimension_numbers<[1], [0], [0], [1], [0, 0, 1, 1], [], []>} : vector<16x16xbf16>, vector<16x32xbf16>, vector<16x32xf32> -> vector<16x32xf32>
    %52 = arith.addf %46, %51 : vector<16x32xf32>
    %c0_62 = arith.constant 0 : index
    %c0_63 = arith.constant 0 : index
    %53 = vector.load %arg3[%c0_62, %c0_63] : memref<1x32xf32, #tpu.memory_space<vmem>>, vector<1x32xf32>
    %54 = vector.broadcast %53 : vector<1x32xf32> to vector<16x32xf32>
    %55 = arith.addf %52, %54 : vector<16x32xf32>
    %cst_64 = arith.constant 0.000000e+00 : f32
    %56 = vector.broadcast %cst_64 : f32 to vector<16x32xf32>
    %57 = arith.maximumf %55, %56 : vector<16x32xf32>
    %58 = arith.truncf %57 : vector<16x32xf32> to vector<16x32xbf16>
    %c0_65 = arith.constant 0 : index
    %c0_66 = arith.constant 0 : index
    %c0_67 = arith.constant 0 : index
    %59 = vector.load %arg4[%c0_65, %c0_66, %c0_67] : memref<1x16x32xbf16, #tpu.memory_space<vmem>>, vector<1x16x32xbf16>
    %60 = vector.shape_cast %59 : vector<1x16x32xbf16> to vector<16x32xbf16>
    %61 = vector.shape_cast %58 : vector<16x32xbf16> to vector<1x16x32xbf16>
    tpu.vector_store %arg4[%c0_65, %c0_66, %c0_67], %61 {strides = array<i32>} : memref<1x16x32xbf16, #tpu.memory_space<vmem>>, vector<1x16x32xbf16>,
    return
  }
  func.func @transform_0(%arg0: i32) -> (i32, i32, i32, i32) {
    %c0_i32 = arith.constant 0 : i32
    %c0_i32_0 = arith.constant 0 : i32
    %c0_i32_1 = arith.constant 0 : i32
    %c0_i32_2 = arith.constant 0 : i32
    return %c0_i32, %arg0, %c0_i32_0, %c0_i32_1 : i32, i32, i32, i32
  }
  func.func @transform_1(%arg0: i32) -> (i32, i32, i32) {
    %c0_i32 = arith.constant 0 : i32
    %c0_i32_0 = arith.constant 0 : i32
    %c0_i32_1 = arith.constant 0 : i32
    %c0_i32_2 = arith.constant 0 : i32
    return %c0_i32, %c0_i32_0, %c0_i32_1 : i32, i32, i32
  }
  func.func @transform_2(%arg0: i32) -> (i32, i32) {
    %c0_i32 = arith.constant 0 : i32
    %c0_i32_0 = arith.constant 0 : i32
    %c0_i32_1 = arith.constant 0 : i32
    return %c0_i32, %c0_i32_0 : i32, i32
  }
  func.func @transform_3(%arg0: i32) -> (i32, i32, i32) {
    %c0_i32 = arith.constant 0 : i32
    %c0_i32_0 = arith.constant 0 : i32
    %c0_i32_1 = arith.constant 0 : i32
    return %arg0, %c0_i32, %c0_i32_0 : i32, i32, i32
  }
}

module attributes {stable_mosaic.version = 11 : i64} {
  func.func @_mask_transform_kernel(%arg0: i32, %arg1: memref<1x36x36xf32, #tpu.memory_space<vmem>>, %arg2: memref<4x36xf32, #tpu.memory_space<vmem>>, %arg3: memref<36x4xf32, #tpu.memory_space<vmem>>, %arg4: memref<1x4x4xf32, #tpu.memory_space<vmem>>) attributes {dimension_semantics = [#tpu.dimension_semantics<parallel>], iteration_bounds = array<i64: 2>, scalar_prefetch = 0 : i64, scratch_operands = 0 : i64, tpu.core_type = #tpu.core_type<tc>, window_params = [{transform_indices = @transform_0, window_bounds = array<i64: 1, 36, 36>}, {pipeline_mode = #tpu.pipeline_mode<synchronous>, transform_indices = @transform_1, window_bounds = array<i64: 4, 36>}, {pipeline_mode = #tpu.pipeline_mode<synchronous>, transform_indices = @transform_2, window_bounds = array<i64: 36, 4>}, {transform_indices = @transform_3, window_bounds = array<i64: 1, 4, 4>}]} {
    %c0 = arith.constant 0 : index
    %c0_0 = arith.constant 0 : index
    %c0_1 = arith.constant 0 : index
    %0 = vector.load %arg1[%c0, %c0_0, %c0_1] : memref<1x36x36xf32, #tpu.memory_space<vmem>>, vector<1x36x36xf32>
    %1 = vector.shape_cast %0 : vector<1x36x36xf32> to vector<36x36xf32>
    %c0_2 = arith.constant 0 : index
    %c0_3 = arith.constant 0 : index
    %2 = vector.load %arg2[%c0_2, %c0_3] : memref<4x36xf32, #tpu.memory_space<vmem>>, vector<4x36xf32>
    %cst = arith.constant dense<0.000000e+00> : vector<4x36xf32>
    %3 = tpu.matmul %2, %1, %cst {dimension_numbers = #tpu.dot_dimension_numbers<[1], [0], [0], [1], [0, 0, 1, 1], [], []>} : vector<4x36xf32>, vector<36x36xf32>, vector<4x36xf32> -> vector<4x36xf32>
    %c0_4 = arith.constant 0 : index
    %c0_5 = arith.constant 0 : index
    %4 = vector.load %arg3[%c0_4, %c0_5] : memref<36x4xf32, #tpu.memory_space<vmem>>, vector<36x4xf32>
    %cst_6 = arith.constant dense<0.000000e+00> : vector<4x4xf32>
    %5 = tpu.matmul %3, %4, %cst_6 {dimension_numbers = #tpu.dot_dimension_numbers<[1], [0], [0], [1], [0, 0, 1, 1], [], []>} : vector<4x36xf32>, vector<36x4xf32>, vector<4x4xf32> -> vector<4x4xf32>
    %cst_7 = arith.constant -4.000000e-02 : f32
    %6 = vector.broadcast %cst_7 : f32 to vector<4x4xf32>
    %7 = arith.mulf %6, %5 : vector<4x4xf32>
    %cst_8 = arith.constant 1.000000e+00 : f32
    %8 = vector.broadcast %cst_8 : f32 to vector<4x4xf32>
    %9 = arith.addf %8, %7 : vector<4x4xf32>
    %c0_9 = arith.constant 0 : index
    %c0_10 = arith.constant 0 : index
    %c0_11 = arith.constant 0 : index
    %10 = vector.load %arg4[%c0_9, %c0_10, %c0_11] : memref<1x4x4xf32, #tpu.memory_space<vmem>>, vector<1x4x4xf32>
    %11 = vector.shape_cast %10 : vector<1x4x4xf32> to vector<4x4xf32>
    %12 = vector.shape_cast %9 : vector<4x4xf32> to vector<1x4x4xf32>
    tpu.vector_store %arg4[%c0_9, %c0_10, %c0_11], %12 {strides = array<i32>} : memref<1x4x4xf32, #tpu.memory_space<vmem>>, vector<1x4x4xf32>,
    return
  }
  func.func @transform_0(%arg0: i32) -> (i32, i32, i32) {
    %c0_i32 = arith.constant 0 : i32
    %c0_i32_0 = arith.constant 0 : i32
    %c0_i32_1 = arith.constant 0 : i32
    return %arg0, %c0_i32, %c0_i32_0 : i32, i32, i32
  }
  func.func @transform_1(%arg0: i32) -> (i32, i32) {
    %c0_i32 = arith.constant 0 : i32
    %c0_i32_0 = arith.constant 0 : i32
    %c0_i32_1 = arith.constant 0 : i32
    return %c0_i32, %c0_i32_0 : i32, i32
  }
  func.func @transform_2(%arg0: i32) -> (i32, i32) {
    %c0_i32 = arith.constant 0 : i32
    %c0_i32_0 = arith.constant 0 : i32
    %c0_i32_1 = arith.constant 0 : i32
    return %c0_i32, %c0_i32_0 : i32, i32
  }
  func.func @transform_3(%arg0: i32) -> (i32, i32, i32) {
    %c0_i32 = arith.constant 0 : i32
    %c0_i32_0 = arith.constant 0 : i32
    %c0_i32_1 = arith.constant 0 : i32
    return %arg0, %c0_i32, %c0_i32_0 : i32, i32, i32
  }
}

module attributes {stable_mosaic.version = 11 : i64} {
  func.func @_masked_mse_kernel(%arg0: i32, %arg1: i32, %arg2: memref<1x16x32xbf16, #tpu.memory_space<vmem>>, %arg3: memref<1x16x32xbf16, #tpu.memory_space<vmem>>, %arg4: memref<1x16x1xf32, #tpu.memory_space<vmem>>, %arg5: memref<2xf32, #tpu.memory_space<smem>>) attributes {dimension_semantics = [#tpu.dimension_semantics<arbitrary>, #tpu.dimension_semantics<arbitrary>], iteration_bounds = array<i64: 2, 1>, scalar_prefetch = 0 : i64, scratch_operands = 0 : i64, tpu.core_type = #tpu.core_type<tc>, window_params = [{transform_indices = @transform_0, window_bounds = array<i64: 1, 16, 32>}, {transform_indices = @transform_1, window_bounds = array<i64: 1, 16, 32>}, {transform_indices = @transform_2, window_bounds = array<i64: 1, 16, 1>}, {transform_indices = @transform_3, window_bounds = array<i64: 2>}]} {
    %c0_i32 = arith.constant 0 : i32
    %0 = arith.cmpi eq, %arg0, %c0_i32 : i32
    %c0_i32_0 = arith.constant 0 : i32
    %1 = arith.cmpi eq, %arg1, %c0_i32_0 : i32
    %2 = arith.andi %0, %1 : i1
    %3 = arith.extui %2 : i1 to i32
    %c0_i32_1 = arith.constant 0 : i32
    %4 = arith.cmpi ne, %3, %c0_i32_1 : i32
    scf.if %4 {
      %cst_14 = arith.constant 0.000000e+00 : f32
      %c0_15 = arith.constant 0 : index
      %31 = memref.load %arg5[%c0_15] : memref<2xf32, #tpu.memory_space<smem>>
      memref.store %cst_14, %arg5[%c0_15] : memref<2xf32, #tpu.memory_space<smem>>
      %cst_16 = arith.constant 0.000000e+00 : f32
      %c1_17 = arith.constant 1 : index
      %32 = memref.load %arg5[%c1_17] : memref<2xf32, #tpu.memory_space<smem>>
      memref.store %cst_16, %arg5[%c1_17] : memref<2xf32, #tpu.memory_space<smem>>
    } else {
    }
    %c0 = arith.constant 0 : index
    %c0_2 = arith.constant 0 : index
    %c0_3 = arith.constant 0 : index
    %5 = vector.load %arg2[%c0, %c0_2, %c0_3] : memref<1x16x32xbf16, #tpu.memory_space<vmem>>, vector<1x16x32xbf16>
    %6 = vector.shape_cast %5 : vector<1x16x32xbf16> to vector<16x32xbf16>
    %7 = arith.extf %6 : vector<16x32xbf16> to vector<16x32xf32>
    %c0_4 = arith.constant 0 : index
    %c0_5 = arith.constant 0 : index
    %c0_6 = arith.constant 0 : index
    %8 = vector.load %arg3[%c0_4, %c0_5, %c0_6] : memref<1x16x32xbf16, #tpu.memory_space<vmem>>, vector<1x16x32xbf16>
    %9 = vector.shape_cast %8 : vector<1x16x32xbf16> to vector<16x32xbf16>
    %10 = arith.extf %9 : vector<16x32xbf16> to vector<16x32xf32>
    %11 = arith.subf %7, %10 : vector<16x32xf32>
    %c0_7 = arith.constant 0 : index
    %c0_8 = arith.constant 0 : index
    %c0_9 = arith.constant 0 : index
    %12 = vector.load %arg4[%c0_7, %c0_8, %c0_9] : memref<1x16x1xf32, #tpu.memory_space<vmem>>, vector<1x16x1xf32>
    %13 = vector.shape_cast %12 : vector<1x16x1xf32> to vector<16x1xf32>
    %c0_10 = arith.constant 0 : index
    %14 = memref.load %arg5[%c0_10] : memref<2xf32, #tpu.memory_space<smem>>
    %15 = arith.mulf %11, %11 : vector<16x32xf32>
    %16 = vector.broadcast %13 : vector<16x1xf32> to vector<16x32xf32>
    %17 = arith.mulf %15, %16 : vector<16x32xf32>
    %18 = vector.shape_cast %17 : vector<16x32xf32> to vector<1x16x32xf32>
    %cst = arith.constant dense<0.000000e+00> : vector<1xf32>
    %19 = vector.multi_reduction <add>, %18, %cst [1, 2] : vector<1x16x32xf32> to vector<1xf32>
    %20 = vector.shape_cast %19 : vector<1xf32> to vector<1x1x1xf32>
    %21 = vector.extract %20[0, 0, 0] : f32 from vector<1x1x1xf32>
    %22 = arith.addf %14, %21 : f32
    %c0_11 = arith.constant 0 : index
    %23 = memref.load %arg5[%c0_11] : memref<2xf32, #tpu.memory_space<smem>>
    memref.store %22, %arg5[%c0_11] : memref<2xf32, #tpu.memory_space<smem>>
    %c1 = arith.constant 1 : index
    %24 = memref.load %arg5[%c1] : memref<2xf32, #tpu.memory_space<smem>>
    %25 = vector.shape_cast %13 : vector<16x1xf32> to vector<1x16x1xf32>
    %cst_12 = arith.constant dense<0.000000e+00> : vector<1xf32>
    %26 = vector.multi_reduction <add>, %25, %cst_12 [1, 2] : vector<1x16x1xf32> to vector<1xf32>
    %27 = vector.shape_cast %26 : vector<1xf32> to vector<1x1x1xf32>
    %28 = vector.extract %27[0, 0, 0] : f32 from vector<1x1x1xf32>
    %29 = arith.addf %24, %28 : f32
    %c1_13 = arith.constant 1 : index
    %30 = memref.load %arg5[%c1_13] : memref<2xf32, #tpu.memory_space<smem>>
    memref.store %29, %arg5[%c1_13] : memref<2xf32, #tpu.memory_space<smem>>
    return
  }
  func.func @transform_0(%arg0: i32, %arg1: i32) -> (i32, i32, i32) {
    %c0_i32 = arith.constant 0 : i32
    %c0_i32_0 = arith.constant 0 : i32
    return %arg0, %arg1, %c0_i32 : i32, i32, i32
  }
  func.func @transform_1(%arg0: i32, %arg1: i32) -> (i32, i32, i32) {
    %c0_i32 = arith.constant 0 : i32
    %c0_i32_0 = arith.constant 0 : i32
    return %arg0, %arg1, %c0_i32 : i32, i32, i32
  }
  func.func @transform_2(%arg0: i32, %arg1: i32) -> (i32, i32, i32) {
    %c0_i32 = arith.constant 0 : i32
    %c0_i32_0 = arith.constant 0 : i32
    return %arg0, %arg1, %c0_i32 : i32, i32, i32
  }
  func.func @transform_3(%arg0: i32, %arg1: i32) -> i32 {
    %c0_i32 = arith.constant 0 : i32
    %c0_i32_0 = arith.constant 0 : i32
    return %c0_i32 : i32
  }
}

module attributes {stable_mosaic.version = 11 : i64} {
  func.func @_conv3x3_s1_kernel(%arg0: i32, %arg1: memref<1x42x32xbf16, #tpu.memory_space<vmem>>, %arg2: memref<9x32x64xbf16, #tpu.memory_space<vmem>>, %arg3: memref<1x64xf32, #tpu.memory_space<vmem>>, %arg4: memref<1x24x64xbf16, #tpu.memory_space<vmem>>) attributes {dimension_semantics = [#tpu.dimension_semantics<parallel>], iteration_bounds = array<i64: 4>, scalar_prefetch = 0 : i64, scratch_operands = 0 : i64, tpu.core_type = #tpu.core_type<tc>, window_params = [{transform_indices = @transform_0, window_bounds = array<i64: 1, 42, 32>}, {pipeline_mode = #tpu.pipeline_mode<synchronous>, transform_indices = @transform_1, window_bounds = array<i64: 9, 32, 64>}, {pipeline_mode = #tpu.pipeline_mode<synchronous>, transform_indices = @transform_2, window_bounds = array<i64: 1, 64>}, {transform_indices = @transform_3, window_bounds = array<i64: 1, 24, 64>}]} {
    %cst = arith.constant 0.000000e+00 : f32
    %0 = vector.broadcast %cst : f32 to vector<24x64xf32>
    %c0 = arith.constant 0 : index
    %c0_0 = arith.constant 0 : index
    %c0_1 = arith.constant 0 : index
    %1 = vector.load %arg1[%c0, %c0_0, %c0_1] : memref<1x42x32xbf16, #tpu.memory_space<vmem>>, vector<1x24x32xbf16>
    %2 = vector.shape_cast %1 : vector<1x24x32xbf16> to vector<24x32xbf16>
    %c0_2 = arith.constant 0 : index
    %c0_3 = arith.constant 0 : index
    %c0_4 = arith.constant 0 : index
    %3 = vector.load %arg2[%c0_2, %c0_3, %c0_4] : memref<9x32x64xbf16, #tpu.memory_space<vmem>>, vector<1x32x64xbf16>
    %4 = vector.shape_cast %3 : vector<1x32x64xbf16> to vector<32x64xbf16>
    %cst_5 = arith.constant dense<0.000000e+00> : vector<24x64xf32>
    %5 = tpu.matmul %2, %4, %cst_5 {dimension_numbers = #tpu.dot_dimension_numbers<[1], [0], [0], [1], [0, 0, 1, 1], [], []>} : vector<24x32xbf16>, vector<32x64xbf16>, vector<24x64xf32> -> vector<24x64xf32>
    %6 = arith.addf %0, %5 : vector<24x64xf32>
    %c0_6 = arith.constant 0 : index
    %c1 = arith.constant 1 : index
    %c0_7 = arith.constant 0 : index
    %7 = vector.load %arg1[%c0_6, %c1, %c0_7] : memref<1x42x32xbf16, #tpu.memory_space<vmem>>, vector<1x24x32xbf16>
    %8 = vector.shape_cast %7 : vector<1x24x32xbf16> to vector<24x32xbf16>
    %c1_8 = arith.constant 1 : index
    %c0_9 = arith.constant 0 : index
    %c0_10 = arith.constant 0 : index
    %9 = vector.load %arg2[%c1_8, %c0_9, %c0_10] : memref<9x32x64xbf16, #tpu.memory_space<vmem>>, vector<1x32x64xbf16>
    %10 = vector.shape_cast %9 : vector<1x32x64xbf16> to vector<32x64xbf16>
    %cst_11 = arith.constant dense<0.000000e+00> : vector<24x64xf32>
    %11 = tpu.matmul %8, %10, %cst_11 {dimension_numbers = #tpu.dot_dimension_numbers<[1], [0], [0], [1], [0, 0, 1, 1], [], []>} : vector<24x32xbf16>, vector<32x64xbf16>, vector<24x64xf32> -> vector<24x64xf32>
    %12 = arith.addf %6, %11 : vector<24x64xf32>
    %c0_12 = arith.constant 0 : index
    %c2 = arith.constant 2 : index
    %c0_13 = arith.constant 0 : index
    %13 = vector.load %arg1[%c0_12, %c2, %c0_13] : memref<1x42x32xbf16, #tpu.memory_space<vmem>>, vector<1x24x32xbf16>
    %14 = vector.shape_cast %13 : vector<1x24x32xbf16> to vector<24x32xbf16>
    %c2_14 = arith.constant 2 : index
    %c0_15 = arith.constant 0 : index
    %c0_16 = arith.constant 0 : index
    %15 = vector.load %arg2[%c2_14, %c0_15, %c0_16] : memref<9x32x64xbf16, #tpu.memory_space<vmem>>, vector<1x32x64xbf16>
    %16 = vector.shape_cast %15 : vector<1x32x64xbf16> to vector<32x64xbf16>
    %cst_17 = arith.constant dense<0.000000e+00> : vector<24x64xf32>
    %17 = tpu.matmul %14, %16, %cst_17 {dimension_numbers = #tpu.dot_dimension_numbers<[1], [0], [0], [1], [0, 0, 1, 1], [], []>} : vector<24x32xbf16>, vector<32x64xbf16>, vector<24x64xf32> -> vector<24x64xf32>
    %18 = arith.addf %12, %17 : vector<24x64xf32>
    %c0_18 = arith.constant 0 : index
    %c6 = arith.constant 6 : index
    %c0_19 = arith.constant 0 : index
    %19 = vector.load %arg1[%c0_18, %c6, %c0_19] : memref<1x42x32xbf16, #tpu.memory_space<vmem>>, vector<1x24x32xbf16>
    %20 = vector.shape_cast %19 : vector<1x24x32xbf16> to vector<24x32xbf16>
    %c3 = arith.constant 3 : index
    %c0_20 = arith.constant 0 : index
    %c0_21 = arith.constant 0 : index
    %21 = vector.load %arg2[%c3, %c0_20, %c0_21] : memref<9x32x64xbf16, #tpu.memory_space<vmem>>, vector<1x32x64xbf16>
    %22 = vector.shape_cast %21 : vector<1x32x64xbf16> to vector<32x64xbf16>
    %cst_22 = arith.constant dense<0.000000e+00> : vector<24x64xf32>
    %23 = tpu.matmul %20, %22, %cst_22 {dimension_numbers = #tpu.dot_dimension_numbers<[1], [0], [0], [1], [0, 0, 1, 1], [], []>} : vector<24x32xbf16>, vector<32x64xbf16>, vector<24x64xf32> -> vector<24x64xf32>
    %24 = arith.addf %18, %23 : vector<24x64xf32>
    %c0_23 = arith.constant 0 : index
    %c7 = arith.constant 7 : index
    %c0_24 = arith.constant 0 : index
    %25 = vector.load %arg1[%c0_23, %c7, %c0_24] : memref<1x42x32xbf16, #tpu.memory_space<vmem>>, vector<1x24x32xbf16>
    %26 = vector.shape_cast %25 : vector<1x24x32xbf16> to vector<24x32xbf16>
    %c4 = arith.constant 4 : index
    %c0_25 = arith.constant 0 : index
    %c0_26 = arith.constant 0 : index
    %27 = vector.load %arg2[%c4, %c0_25, %c0_26] : memref<9x32x64xbf16, #tpu.memory_space<vmem>>, vector<1x32x64xbf16>
    %28 = vector.shape_cast %27 : vector<1x32x64xbf16> to vector<32x64xbf16>
    %cst_27 = arith.constant dense<0.000000e+00> : vector<24x64xf32>
    %29 = tpu.matmul %26, %28, %cst_27 {dimension_numbers = #tpu.dot_dimension_numbers<[1], [0], [0], [1], [0, 0, 1, 1], [], []>} : vector<24x32xbf16>, vector<32x64xbf16>, vector<24x64xf32> -> vector<24x64xf32>
    %30 = arith.addf %24, %29 : vector<24x64xf32>
    %c0_28 = arith.constant 0 : index
    %c8 = arith.constant 8 : index
    %c0_29 = arith.constant 0 : index
    %31 = vector.load %arg1[%c0_28, %c8, %c0_29] : memref<1x42x32xbf16, #tpu.memory_space<vmem>>, vector<1x24x32xbf16>
    %32 = vector.shape_cast %31 : vector<1x24x32xbf16> to vector<24x32xbf16>
    %c5 = arith.constant 5 : index
    %c0_30 = arith.constant 0 : index
    %c0_31 = arith.constant 0 : index
    %33 = vector.load %arg2[%c5, %c0_30, %c0_31] : memref<9x32x64xbf16, #tpu.memory_space<vmem>>, vector<1x32x64xbf16>
    %34 = vector.shape_cast %33 : vector<1x32x64xbf16> to vector<32x64xbf16>
    %cst_32 = arith.constant dense<0.000000e+00> : vector<24x64xf32>
    %35 = tpu.matmul %32, %34, %cst_32 {dimension_numbers = #tpu.dot_dimension_numbers<[1], [0], [0], [1], [0, 0, 1, 1], [], []>} : vector<24x32xbf16>, vector<32x64xbf16>, vector<24x64xf32> -> vector<24x64xf32>
    %36 = arith.addf %30, %35 : vector<24x64xf32>
    %c0_33 = arith.constant 0 : index
    %c12 = arith.constant 12 : index
    %c0_34 = arith.constant 0 : index
    %37 = vector.load %arg1[%c0_33, %c12, %c0_34] : memref<1x42x32xbf16, #tpu.memory_space<vmem>>, vector<1x24x32xbf16>
    %38 = vector.shape_cast %37 : vector<1x24x32xbf16> to vector<24x32xbf16>
    %c6_35 = arith.constant 6 : index
    %c0_36 = arith.constant 0 : index
    %c0_37 = arith.constant 0 : index
    %39 = vector.load %arg2[%c6_35, %c0_36, %c0_37] : memref<9x32x64xbf16, #tpu.memory_space<vmem>>, vector<1x32x64xbf16>
    %40 = vector.shape_cast %39 : vector<1x32x64xbf16> to vector<32x64xbf16>
    %cst_38 = arith.constant dense<0.000000e+00> : vector<24x64xf32>
    %41 = tpu.matmul %38, %40, %cst_38 {dimension_numbers = #tpu.dot_dimension_numbers<[1], [0], [0], [1], [0, 0, 1, 1], [], []>} : vector<24x32xbf16>, vector<32x64xbf16>, vector<24x64xf32> -> vector<24x64xf32>
    %42 = arith.addf %36, %41 : vector<24x64xf32>
    %c0_39 = arith.constant 0 : index
    %c13 = arith.constant 13 : index
    %c0_40 = arith.constant 0 : index
    %43 = vector.load %arg1[%c0_39, %c13, %c0_40] : memref<1x42x32xbf16, #tpu.memory_space<vmem>>, vector<1x24x32xbf16>
    %44 = vector.shape_cast %43 : vector<1x24x32xbf16> to vector<24x32xbf16>
    %c7_41 = arith.constant 7 : index
    %c0_42 = arith.constant 0 : index
    %c0_43 = arith.constant 0 : index
    %45 = vector.load %arg2[%c7_41, %c0_42, %c0_43] : memref<9x32x64xbf16, #tpu.memory_space<vmem>>, vector<1x32x64xbf16>
    %46 = vector.shape_cast %45 : vector<1x32x64xbf16> to vector<32x64xbf16>
    %cst_44 = arith.constant dense<0.000000e+00> : vector<24x64xf32>
    %47 = tpu.matmul %44, %46, %cst_44 {dimension_numbers = #tpu.dot_dimension_numbers<[1], [0], [0], [1], [0, 0, 1, 1], [], []>} : vector<24x32xbf16>, vector<32x64xbf16>, vector<24x64xf32> -> vector<24x64xf32>
    %48 = arith.addf %42, %47 : vector<24x64xf32>
    %c0_45 = arith.constant 0 : index
    %c14 = arith.constant 14 : index
    %c0_46 = arith.constant 0 : index
    %49 = vector.load %arg1[%c0_45, %c14, %c0_46] : memref<1x42x32xbf16, #tpu.memory_space<vmem>>, vector<1x24x32xbf16>
    %50 = vector.shape_cast %49 : vector<1x24x32xbf16> to vector<24x32xbf16>
    %c8_47 = arith.constant 8 : index
    %c0_48 = arith.constant 0 : index
    %c0_49 = arith.constant 0 : index
    %51 = vector.load %arg2[%c8_47, %c0_48, %c0_49] : memref<9x32x64xbf16, #tpu.memory_space<vmem>>, vector<1x32x64xbf16>
    %52 = vector.shape_cast %51 : vector<1x32x64xbf16> to vector<32x64xbf16>
    %cst_50 = arith.constant dense<0.000000e+00> : vector<24x64xf32>
    %53 = tpu.matmul %50, %52, %cst_50 {dimension_numbers = #tpu.dot_dimension_numbers<[1], [0], [0], [1], [0, 0, 1, 1], [], []>} : vector<24x32xbf16>, vector<32x64xbf16>, vector<24x64xf32> -> vector<24x64xf32>
    %54 = arith.addf %48, %53 : vector<24x64xf32>
    %c0_51 = arith.constant 0 : index
    %c0_52 = arith.constant 0 : index
    %55 = vector.load %arg3[%c0_51, %c0_52] : memref<1x64xf32, #tpu.memory_space<vmem>>, vector<1x64xf32>
    %56 = vector.broadcast %55 : vector<1x64xf32> to vector<24x64xf32>
    %57 = arith.addf %54, %56 : vector<24x64xf32>
    %cst_53 = arith.constant 0.000000e+00 : f32
    %58 = vector.broadcast %cst_53 : f32 to vector<24x64xf32>
    %59 = arith.maximumf %57, %58 : vector<24x64xf32>
    %60 = arith.truncf %59 : vector<24x64xf32> to vector<24x64xbf16>
    %c0_54 = arith.constant 0 : index
    %c0_55 = arith.constant 0 : index
    %c0_56 = arith.constant 0 : index
    %61 = vector.load %arg4[%c0_54, %c0_55, %c0_56] : memref<1x24x64xbf16, #tpu.memory_space<vmem>>, vector<1x24x64xbf16>
    %62 = vector.shape_cast %61 : vector<1x24x64xbf16> to vector<24x64xbf16>
    %63 = vector.shape_cast %60 : vector<24x64xbf16> to vector<1x24x64xbf16>
    tpu.vector_store %arg4[%c0_54, %c0_55, %c0_56], %63 {strides = array<i32>} : memref<1x24x64xbf16, #tpu.memory_space<vmem>>, vector<1x24x64xbf16>,
    return
  }
  func.func @transform_0(%arg0: i32) -> (i32, i32, i32) {
    %c0_i32 = arith.constant 0 : i32
    %c0_i32_0 = arith.constant 0 : i32
    %c0_i32_1 = arith.constant 0 : i32
    return %arg0, %c0_i32, %c0_i32_0 : i32, i32, i32
  }
  func.func @transform_1(%arg0: i32) -> (i32, i32, i32) {
    %c0_i32 = arith.constant 0 : i32
    %c0_i32_0 = arith.constant 0 : i32
    %c0_i32_1 = arith.constant 0 : i32
    %c0_i32_2 = arith.constant 0 : i32
    return %c0_i32, %c0_i32_0, %c0_i32_1 : i32, i32, i32
  }
  func.func @transform_2(%arg0: i32) -> (i32, i32) {
    %c0_i32 = arith.constant 0 : i32
    %c0_i32_0 = arith.constant 0 : i32
    %c0_i32_1 = arith.constant 0 : i32
    return %c0_i32, %c0_i32_0 : i32, i32
  }
  func.func @transform_3(%arg0: i32) -> (i32, i32, i32) {
    %c0_i32 = arith.constant 0 : i32
    %c0_i32_0 = arith.constant 0 : i32
    %c0_i32_1 = arith.constant 0 : i32
    return %arg0, %c0_i32, %c0_i32_0 : i32, i32, i32
  }
}

module attributes {stable_mosaic.version = 11 : i64} {
  func.func @_masked_mse_kernel(%arg0: i32, %arg1: i32, %arg2: memref<1x16x64xbf16, #tpu.memory_space<vmem>>, %arg3: memref<1x16x64xbf16, #tpu.memory_space<vmem>>, %arg4: memref<1x16x1xf32, #tpu.memory_space<vmem>>, %arg5: memref<2xf32, #tpu.memory_space<smem>>) attributes {dimension_semantics = [#tpu.dimension_semantics<arbitrary>, #tpu.dimension_semantics<arbitrary>], iteration_bounds = array<i64: 2, 1>, scalar_prefetch = 0 : i64, scratch_operands = 0 : i64, tpu.core_type = #tpu.core_type<tc>, window_params = [{transform_indices = @transform_0, window_bounds = array<i64: 1, 16, 64>}, {transform_indices = @transform_1, window_bounds = array<i64: 1, 16, 64>}, {transform_indices = @transform_2, window_bounds = array<i64: 1, 16, 1>}, {transform_indices = @transform_3, window_bounds = array<i64: 2>}]} {
    %c0_i32 = arith.constant 0 : i32
    %0 = arith.cmpi eq, %arg0, %c0_i32 : i32
    %c0_i32_0 = arith.constant 0 : i32
    %1 = arith.cmpi eq, %arg1, %c0_i32_0 : i32
    %2 = arith.andi %0, %1 : i1
    %3 = arith.extui %2 : i1 to i32
    %c0_i32_1 = arith.constant 0 : i32
    %4 = arith.cmpi ne, %3, %c0_i32_1 : i32
    scf.if %4 {
      %cst_14 = arith.constant 0.000000e+00 : f32
      %c0_15 = arith.constant 0 : index
      %31 = memref.load %arg5[%c0_15] : memref<2xf32, #tpu.memory_space<smem>>
      memref.store %cst_14, %arg5[%c0_15] : memref<2xf32, #tpu.memory_space<smem>>
      %cst_16 = arith.constant 0.000000e+00 : f32
      %c1_17 = arith.constant 1 : index
      %32 = memref.load %arg5[%c1_17] : memref<2xf32, #tpu.memory_space<smem>>
      memref.store %cst_16, %arg5[%c1_17] : memref<2xf32, #tpu.memory_space<smem>>
    } else {
    }
    %c0 = arith.constant 0 : index
    %c0_2 = arith.constant 0 : index
    %c0_3 = arith.constant 0 : index
    %5 = vector.load %arg2[%c0, %c0_2, %c0_3] : memref<1x16x64xbf16, #tpu.memory_space<vmem>>, vector<1x16x64xbf16>
    %6 = vector.shape_cast %5 : vector<1x16x64xbf16> to vector<16x64xbf16>
    %7 = arith.extf %6 : vector<16x64xbf16> to vector<16x64xf32>
    %c0_4 = arith.constant 0 : index
    %c0_5 = arith.constant 0 : index
    %c0_6 = arith.constant 0 : index
    %8 = vector.load %arg3[%c0_4, %c0_5, %c0_6] : memref<1x16x64xbf16, #tpu.memory_space<vmem>>, vector<1x16x64xbf16>
    %9 = vector.shape_cast %8 : vector<1x16x64xbf16> to vector<16x64xbf16>
    %10 = arith.extf %9 : vector<16x64xbf16> to vector<16x64xf32>
    %11 = arith.subf %7, %10 : vector<16x64xf32>
    %c0_7 = arith.constant 0 : index
    %c0_8 = arith.constant 0 : index
    %c0_9 = arith.constant 0 : index
    %12 = vector.load %arg4[%c0_7, %c0_8, %c0_9] : memref<1x16x1xf32, #tpu.memory_space<vmem>>, vector<1x16x1xf32>
    %13 = vector.shape_cast %12 : vector<1x16x1xf32> to vector<16x1xf32>
    %c0_10 = arith.constant 0 : index
    %14 = memref.load %arg5[%c0_10] : memref<2xf32, #tpu.memory_space<smem>>
    %15 = arith.mulf %11, %11 : vector<16x64xf32>
    %16 = vector.broadcast %13 : vector<16x1xf32> to vector<16x64xf32>
    %17 = arith.mulf %15, %16 : vector<16x64xf32>
    %18 = vector.shape_cast %17 : vector<16x64xf32> to vector<1x16x64xf32>
    %cst = arith.constant dense<0.000000e+00> : vector<1xf32>
    %19 = vector.multi_reduction <add>, %18, %cst [1, 2] : vector<1x16x64xf32> to vector<1xf32>
    %20 = vector.shape_cast %19 : vector<1xf32> to vector<1x1x1xf32>
    %21 = vector.extract %20[0, 0, 0] : f32 from vector<1x1x1xf32>
    %22 = arith.addf %14, %21 : f32
    %c0_11 = arith.constant 0 : index
    %23 = memref.load %arg5[%c0_11] : memref<2xf32, #tpu.memory_space<smem>>
    memref.store %22, %arg5[%c0_11] : memref<2xf32, #tpu.memory_space<smem>>
    %c1 = arith.constant 1 : index
    %24 = memref.load %arg5[%c1] : memref<2xf32, #tpu.memory_space<smem>>
    %25 = vector.shape_cast %13 : vector<16x1xf32> to vector<1x16x1xf32>
    %cst_12 = arith.constant dense<0.000000e+00> : vector<1xf32>
    %26 = vector.multi_reduction <add>, %25, %cst_12 [1, 2] : vector<1x16x1xf32> to vector<1xf32>
    %27 = vector.shape_cast %26 : vector<1xf32> to vector<1x1x1xf32>
    %28 = vector.extract %27[0, 0, 0] : f32 from vector<1x1x1xf32>
    %29 = arith.addf %24, %28 : f32
    %c1_13 = arith.constant 1 : index
    %30 = memref.load %arg5[%c1_13] : memref<2xf32, #tpu.memory_space<smem>>
    memref.store %29, %arg5[%c1_13] : memref<2xf32, #tpu.memory_space<smem>>
    return
  }
  func.func @transform_0(%arg0: i32, %arg1: i32) -> (i32, i32, i32) {
    %c0_i32 = arith.constant 0 : i32
    %c0_i32_0 = arith.constant 0 : i32
    return %arg0, %arg1, %c0_i32 : i32, i32, i32
  }
  func.func @transform_1(%arg0: i32, %arg1: i32) -> (i32, i32, i32) {
    %c0_i32 = arith.constant 0 : i32
    %c0_i32_0 = arith.constant 0 : i32
    return %arg0, %arg1, %c0_i32 : i32, i32, i32
  }
  func.func @transform_2(%arg0: i32, %arg1: i32) -> (i32, i32, i32) {
    %c0_i32 = arith.constant 0 : i32
    %c0_i32_0 = arith.constant 0 : i32
    return %arg0, %arg1, %c0_i32 : i32, i32, i32
  }
  func.func @transform_3(%arg0: i32, %arg1: i32) -> i32 {
    %c0_i32 = arith.constant 0 : i32
    %c0_i32_0 = arith.constant 0 : i32
    return %c0_i32 : i32
  }
}

module attributes {stable_mosaic.version = 11 : i64} {
  func.func @_conv3x3_s1_kernel(%arg0: i32, %arg1: memref<1x42x64xbf16, #tpu.memory_space<vmem>>, %arg2: memref<9x64x64xbf16, #tpu.memory_space<vmem>>, %arg3: memref<1x64xf32, #tpu.memory_space<vmem>>, %arg4: memref<1x24x64xbf16, #tpu.memory_space<vmem>>) attributes {dimension_semantics = [#tpu.dimension_semantics<parallel>], iteration_bounds = array<i64: 4>, scalar_prefetch = 0 : i64, scratch_operands = 0 : i64, tpu.core_type = #tpu.core_type<tc>, window_params = [{transform_indices = @transform_0, window_bounds = array<i64: 1, 42, 64>}, {pipeline_mode = #tpu.pipeline_mode<synchronous>, transform_indices = @transform_1, window_bounds = array<i64: 9, 64, 64>}, {pipeline_mode = #tpu.pipeline_mode<synchronous>, transform_indices = @transform_2, window_bounds = array<i64: 1, 64>}, {transform_indices = @transform_3, window_bounds = array<i64: 1, 24, 64>}]} {
    %cst = arith.constant 0.000000e+00 : f32
    %0 = vector.broadcast %cst : f32 to vector<24x64xf32>
    %c0 = arith.constant 0 : index
    %c0_0 = arith.constant 0 : index
    %c0_1 = arith.constant 0 : index
    %1 = vector.load %arg1[%c0, %c0_0, %c0_1] : memref<1x42x64xbf16, #tpu.memory_space<vmem>>, vector<1x24x64xbf16>
    %2 = vector.shape_cast %1 : vector<1x24x64xbf16> to vector<24x64xbf16>
    %c0_2 = arith.constant 0 : index
    %c0_3 = arith.constant 0 : index
    %c0_4 = arith.constant 0 : index
    %3 = vector.load %arg2[%c0_2, %c0_3, %c0_4] : memref<9x64x64xbf16, #tpu.memory_space<vmem>>, vector<1x64x64xbf16>
    %4 = vector.shape_cast %3 : vector<1x64x64xbf16> to vector<64x64xbf16>
    %cst_5 = arith.constant dense<0.000000e+00> : vector<24x64xf32>
    %5 = tpu.matmul %2, %4, %cst_5 {dimension_numbers = #tpu.dot_dimension_numbers<[1], [0], [0], [1], [0, 0, 1, 1], [], []>} : vector<24x64xbf16>, vector<64x64xbf16>, vector<24x64xf32> -> vector<24x64xf32>
    %6 = arith.addf %0, %5 : vector<24x64xf32>
    %c0_6 = arith.constant 0 : index
    %c1 = arith.constant 1 : index
    %c0_7 = arith.constant 0 : index
    %7 = vector.load %arg1[%c0_6, %c1, %c0_7] : memref<1x42x64xbf16, #tpu.memory_space<vmem>>, vector<1x24x64xbf16>
    %8 = vector.shape_cast %7 : vector<1x24x64xbf16> to vector<24x64xbf16>
    %c1_8 = arith.constant 1 : index
    %c0_9 = arith.constant 0 : index
    %c0_10 = arith.constant 0 : index
    %9 = vector.load %arg2[%c1_8, %c0_9, %c0_10] : memref<9x64x64xbf16, #tpu.memory_space<vmem>>, vector<1x64x64xbf16>
    %10 = vector.shape_cast %9 : vector<1x64x64xbf16> to vector<64x64xbf16>
    %cst_11 = arith.constant dense<0.000000e+00> : vector<24x64xf32>
    %11 = tpu.matmul %8, %10, %cst_11 {dimension_numbers = #tpu.dot_dimension_numbers<[1], [0], [0], [1], [0, 0, 1, 1], [], []>} : vector<24x64xbf16>, vector<64x64xbf16>, vector<24x64xf32> -> vector<24x64xf32>
    %12 = arith.addf %6, %11 : vector<24x64xf32>
    %c0_12 = arith.constant 0 : index
    %c2 = arith.constant 2 : index
    %c0_13 = arith.constant 0 : index
    %13 = vector.load %arg1[%c0_12, %c2, %c0_13] : memref<1x42x64xbf16, #tpu.memory_space<vmem>>, vector<1x24x64xbf16>
    %14 = vector.shape_cast %13 : vector<1x24x64xbf16> to vector<24x64xbf16>
    %c2_14 = arith.constant 2 : index
    %c0_15 = arith.constant 0 : index
    %c0_16 = arith.constant 0 : index
    %15 = vector.load %arg2[%c2_14, %c0_15, %c0_16] : memref<9x64x64xbf16, #tpu.memory_space<vmem>>, vector<1x64x64xbf16>
    %16 = vector.shape_cast %15 : vector<1x64x64xbf16> to vector<64x64xbf16>
    %cst_17 = arith.constant dense<0.000000e+00> : vector<24x64xf32>
    %17 = tpu.matmul %14, %16, %cst_17 {dimension_numbers = #tpu.dot_dimension_numbers<[1], [0], [0], [1], [0, 0, 1, 1], [], []>} : vector<24x64xbf16>, vector<64x64xbf16>, vector<24x64xf32> -> vector<24x64xf32>
    %18 = arith.addf %12, %17 : vector<24x64xf32>
    %c0_18 = arith.constant 0 : index
    %c6 = arith.constant 6 : index
    %c0_19 = arith.constant 0 : index
    %19 = vector.load %arg1[%c0_18, %c6, %c0_19] : memref<1x42x64xbf16, #tpu.memory_space<vmem>>, vector<1x24x64xbf16>
    %20 = vector.shape_cast %19 : vector<1x24x64xbf16> to vector<24x64xbf16>
    %c3 = arith.constant 3 : index
    %c0_20 = arith.constant 0 : index
    %c0_21 = arith.constant 0 : index
    %21 = vector.load %arg2[%c3, %c0_20, %c0_21] : memref<9x64x64xbf16, #tpu.memory_space<vmem>>, vector<1x64x64xbf16>
    %22 = vector.shape_cast %21 : vector<1x64x64xbf16> to vector<64x64xbf16>
    %cst_22 = arith.constant dense<0.000000e+00> : vector<24x64xf32>
    %23 = tpu.matmul %20, %22, %cst_22 {dimension_numbers = #tpu.dot_dimension_numbers<[1], [0], [0], [1], [0, 0, 1, 1], [], []>} : vector<24x64xbf16>, vector<64x64xbf16>, vector<24x64xf32> -> vector<24x64xf32>
    %24 = arith.addf %18, %23 : vector<24x64xf32>
    %c0_23 = arith.constant 0 : index
    %c7 = arith.constant 7 : index
    %c0_24 = arith.constant 0 : index
    %25 = vector.load %arg1[%c0_23, %c7, %c0_24] : memref<1x42x64xbf16, #tpu.memory_space<vmem>>, vector<1x24x64xbf16>
    %26 = vector.shape_cast %25 : vector<1x24x64xbf16> to vector<24x64xbf16>
    %c4 = arith.constant 4 : index
    %c0_25 = arith.constant 0 : index
    %c0_26 = arith.constant 0 : index
    %27 = vector.load %arg2[%c4, %c0_25, %c0_26] : memref<9x64x64xbf16, #tpu.memory_space<vmem>>, vector<1x64x64xbf16>
    %28 = vector.shape_cast %27 : vector<1x64x64xbf16> to vector<64x64xbf16>
    %cst_27 = arith.constant dense<0.000000e+00> : vector<24x64xf32>
    %29 = tpu.matmul %26, %28, %cst_27 {dimension_numbers = #tpu.dot_dimension_numbers<[1], [0], [0], [1], [0, 0, 1, 1], [], []>} : vector<24x64xbf16>, vector<64x64xbf16>, vector<24x64xf32> -> vector<24x64xf32>
    %30 = arith.addf %24, %29 : vector<24x64xf32>
    %c0_28 = arith.constant 0 : index
    %c8 = arith.constant 8 : index
    %c0_29 = arith.constant 0 : index
    %31 = vector.load %arg1[%c0_28, %c8, %c0_29] : memref<1x42x64xbf16, #tpu.memory_space<vmem>>, vector<1x24x64xbf16>
    %32 = vector.shape_cast %31 : vector<1x24x64xbf16> to vector<24x64xbf16>
    %c5 = arith.constant 5 : index
    %c0_30 = arith.constant 0 : index
    %c0_31 = arith.constant 0 : index
    %33 = vector.load %arg2[%c5, %c0_30, %c0_31] : memref<9x64x64xbf16, #tpu.memory_space<vmem>>, vector<1x64x64xbf16>
    %34 = vector.shape_cast %33 : vector<1x64x64xbf16> to vector<64x64xbf16>
    %cst_32 = arith.constant dense<0.000000e+00> : vector<24x64xf32>
    %35 = tpu.matmul %32, %34, %cst_32 {dimension_numbers = #tpu.dot_dimension_numbers<[1], [0], [0], [1], [0, 0, 1, 1], [], []>} : vector<24x64xbf16>, vector<64x64xbf16>, vector<24x64xf32> -> vector<24x64xf32>
    %36 = arith.addf %30, %35 : vector<24x64xf32>
    %c0_33 = arith.constant 0 : index
    %c12 = arith.constant 12 : index
    %c0_34 = arith.constant 0 : index
    %37 = vector.load %arg1[%c0_33, %c12, %c0_34] : memref<1x42x64xbf16, #tpu.memory_space<vmem>>, vector<1x24x64xbf16>
    %38 = vector.shape_cast %37 : vector<1x24x64xbf16> to vector<24x64xbf16>
    %c6_35 = arith.constant 6 : index
    %c0_36 = arith.constant 0 : index
    %c0_37 = arith.constant 0 : index
    %39 = vector.load %arg2[%c6_35, %c0_36, %c0_37] : memref<9x64x64xbf16, #tpu.memory_space<vmem>>, vector<1x64x64xbf16>
    %40 = vector.shape_cast %39 : vector<1x64x64xbf16> to vector<64x64xbf16>
    %cst_38 = arith.constant dense<0.000000e+00> : vector<24x64xf32>
    %41 = tpu.matmul %38, %40, %cst_38 {dimension_numbers = #tpu.dot_dimension_numbers<[1], [0], [0], [1], [0, 0, 1, 1], [], []>} : vector<24x64xbf16>, vector<64x64xbf16>, vector<24x64xf32> -> vector<24x64xf32>
    %42 = arith.addf %36, %41 : vector<24x64xf32>
    %c0_39 = arith.constant 0 : index
    %c13 = arith.constant 13 : index
    %c0_40 = arith.constant 0 : index
    %43 = vector.load %arg1[%c0_39, %c13, %c0_40] : memref<1x42x64xbf16, #tpu.memory_space<vmem>>, vector<1x24x64xbf16>
    %44 = vector.shape_cast %43 : vector<1x24x64xbf16> to vector<24x64xbf16>
    %c7_41 = arith.constant 7 : index
    %c0_42 = arith.constant 0 : index
    %c0_43 = arith.constant 0 : index
    %45 = vector.load %arg2[%c7_41, %c0_42, %c0_43] : memref<9x64x64xbf16, #tpu.memory_space<vmem>>, vector<1x64x64xbf16>
    %46 = vector.shape_cast %45 : vector<1x64x64xbf16> to vector<64x64xbf16>
    %cst_44 = arith.constant dense<0.000000e+00> : vector<24x64xf32>
    %47 = tpu.matmul %44, %46, %cst_44 {dimension_numbers = #tpu.dot_dimension_numbers<[1], [0], [0], [1], [0, 0, 1, 1], [], []>} : vector<24x64xbf16>, vector<64x64xbf16>, vector<24x64xf32> -> vector<24x64xf32>
    %48 = arith.addf %42, %47 : vector<24x64xf32>
    %c0_45 = arith.constant 0 : index
    %c14 = arith.constant 14 : index
    %c0_46 = arith.constant 0 : index
    %49 = vector.load %arg1[%c0_45, %c14, %c0_46] : memref<1x42x64xbf16, #tpu.memory_space<vmem>>, vector<1x24x64xbf16>
    %50 = vector.shape_cast %49 : vector<1x24x64xbf16> to vector<24x64xbf16>
    %c8_47 = arith.constant 8 : index
    %c0_48 = arith.constant 0 : index
    %c0_49 = arith.constant 0 : index
    %51 = vector.load %arg2[%c8_47, %c0_48, %c0_49] : memref<9x64x64xbf16, #tpu.memory_space<vmem>>, vector<1x64x64xbf16>
    %52 = vector.shape_cast %51 : vector<1x64x64xbf16> to vector<64x64xbf16>
    %cst_50 = arith.constant dense<0.000000e+00> : vector<24x64xf32>
    %53 = tpu.matmul %50, %52, %cst_50 {dimension_numbers = #tpu.dot_dimension_numbers<[1], [0], [0], [1], [0, 0, 1, 1], [], []>} : vector<24x64xbf16>, vector<64x64xbf16>, vector<24x64xf32> -> vector<24x64xf32>
    %54 = arith.addf %48, %53 : vector<24x64xf32>
    %c0_51 = arith.constant 0 : index
    %c0_52 = arith.constant 0 : index
    %55 = vector.load %arg3[%c0_51, %c0_52] : memref<1x64xf32, #tpu.memory_space<vmem>>, vector<1x64xf32>
    %56 = vector.broadcast %55 : vector<1x64xf32> to vector<24x64xf32>
    %57 = arith.addf %54, %56 : vector<24x64xf32>
    %cst_53 = arith.constant 0.000000e+00 : f32
    %58 = vector.broadcast %cst_53 : f32 to vector<24x64xf32>
    %59 = arith.maximumf %57, %58 : vector<24x64xf32>
    %60 = arith.truncf %59 : vector<24x64xf32> to vector<24x64xbf16>
    %c0_54 = arith.constant 0 : index
    %c0_55 = arith.constant 0 : index
    %c0_56 = arith.constant 0 : index
    %61 = vector.load %arg4[%c0_54, %c0_55, %c0_56] : memref<1x24x64xbf16, #tpu.memory_space<vmem>>, vector<1x24x64xbf16>
    %62 = vector.shape_cast %61 : vector<1x24x64xbf16> to vector<24x64xbf16>
    %63 = vector.shape_cast %60 : vector<24x64xbf16> to vector<1x24x64xbf16>
    tpu.vector_store %arg4[%c0_54, %c0_55, %c0_56], %63 {strides = array<i32>} : memref<1x24x64xbf16, #tpu.memory_space<vmem>>, vector<1x24x64xbf16>,
    return
  }
  func.func @transform_0(%arg0: i32) -> (i32, i32, i32) {
    %c0_i32 = arith.constant 0 : i32
    %c0_i32_0 = arith.constant 0 : i32
    %c0_i32_1 = arith.constant 0 : i32
    return %arg0, %c0_i32, %c0_i32_0 : i32, i32, i32
  }
  func.func @transform_1(%arg0: i32) -> (i32, i32, i32) {
    %c0_i32 = arith.constant 0 : i32
    %c0_i32_0 = arith.constant 0 : i32
    %c0_i32_1 = arith.constant 0 : i32
    %c0_i32_2 = arith.constant 0 : i32
    return %c0_i32, %c0_i32_0, %c0_i32_1 : i32, i32, i32
  }
  func.func @transform_2(%arg0: i32) -> (i32, i32) {
    %c0_i32 = arith.constant 0 : i32
    %c0_i32_0 = arith.constant 0 : i32
    %c0_i32_1 = arith.constant 0 : i32
    return %c0_i32, %c0_i32_0 : i32, i32
  }
  func.func @transform_3(%arg0: i32) -> (i32, i32, i32) {
    %c0_i32 = arith.constant 0 : i32
    %c0_i32_0 = arith.constant 0 : i32
    %c0_i32_1 = arith.constant 0 : i32
    return %arg0, %c0_i32, %c0_i32_0 : i32, i32, i32
  }
}

</mosaic_0001>

<llo_original>
// kernel: a_call__.11
$region0: #{a_call__.11}
  #allocation0 [shape = 'u32[]', space=smem, size = 0x4, offset = 0x4, fixed_abs, tag = 'smem constant byte address 0x4 - core index']
  #allocation1 [shape = 'u32[144,128]{1,0:T(1,128)}', space=vmem, size = 0x12000, scoped, tag = 'internal scratch']
  %s0 = inlined_call_operand.vmem [shape: bf16[9,4,64,3], index: 0, kind: input, shape index: {}]
  %s1 = inlined_call_operand.vmem [shape: bf16[9,3,8], index: 1, kind: input, shape index: {}]
  %s2 = inlined_call_operand.vmem [shape: f32[1,8], index: 2, kind: input, shape index: {}]
  %s3 = inlined_call_operand.vmem [shape: bf16[4,64,8], index: 3, kind: output, shape index: {}]
  %s4 = sld [smem:[#allocation0]]
  $region86: #{a_call__.11} parent=0
    _
  %s6 = ssub.s32 1, %s4
  %s7 = scalar_select 0, %s6, %s4
  $region1: #{a_call__.11} parent=0
    #allocation2 [shape = 'u8[294912]{0}', space=vmem, size = 0x48000, scoped, tag = 'input window, operand 0']
    loop: start=0, step=1, limit=6
    $region2: #{a_call__.11} parent=1 // loop_pre_header
      _
    $region3: #{a_call__.11} parent=1 // loop_header
      %s9 = sphi 0, %s13
      %p10 = scmp.ge.s32.totalorder %s9, 6
      %s19 = sphi 0, %s21
      %s22 = sphi 0, %s19
      %s23 = sphi 0, %s22
      %s39 = sphi 0, %s23
      %s43 = sphi 0, %s43
      %s45 = sphi 0, %s43
      %s46 = sphi 0, %s45
      %s60 = sphi 0, %s46
      %s64 = sphi 0, %s64
      %s66 = sphi 0, %s64
      %s67 = sphi 0, %s66
      %s81 = sphi 0, %s67
      %s87 = sphi 0, %s89
      %s90 = sphi 0, %s87
      %s91 = sphi 0, %s90
      %s107 = sphi 0, %s91
    $region4: #{a_call__.11} parent=1 // loop_header_branch
      %12 = sbr.rel (%p10) target = $region8
    $region5: #{a_call__.11} parent=1 // loop_body
      %s14 = ssub.s32 %s9, 1
      %s15 = ssub.s32 %s9, 2
      %s16 = sadd.s32 %s9, 1
      %s17 = ssub.s32 %s9, %s16
      %p18 = scmp.eq.s32.totalorder %s17, 0
      %s20 = sadd.s32 %s19, 1
      %s21 = scalar_select %p18, %s19, %s20
      %p24 = pneg %p18
      %p25 = scmp.eq.s32.totalorder %s9, 3
      %p26 = por %p24, %p25
      %p27 = scmp.ne.s32.totalorder %s19, %s22
      %p28 = scmp.eq.s32.totalorder %s9, 0
      %p29 = por %p27, %p28
      %p30 = scmp.ne.s32.totalorder %s19, %s22
      %p31 = scmp.eq.s32.totalorder %s14, 3
      %p32 = por %p30, %p31
      %p33 = scmp.ne.s32.totalorder %s22, %s23
      %p34 = scmp.eq.s32.totalorder %s14, 0
      %p35 = por %p33, %p34
      %p36 = scmp.ne.s32.totalorder %s22, %s23
      %p37 = scmp.eq.s32.totalorder %s15, 3
      %p38 = por %p36, %p37
      %p40 = scmp.ne.s32.totalorder %s23, %s39
      %p41 = scmp.eq.s32.totalorder %s15, 0
      %p42 = por %p40, %p41
      %s44 = sadd.s32 %s43, 1
      %p47 = scmp.eq.s32.totalorder %s9, 3
      %p48 = scmp.ne.s32.totalorder %s43, %s45
      %p49 = scmp.eq.s32.totalorder %s9, 0
      %p50 = por %p48, %p49
      %p51 = scmp.ne.s32.totalorder %s43, %s45
      %p52 = scmp.eq.s32.totalorder %s14, 3
      %p53 = por %p51, %p52
      %p54 = scmp.ne.s32.totalorder %s45, %s46
      %p55 = scmp.eq.s32.totalorder %s14, 0
      %p56 = por %p54, %p55
      %p57 = scmp.ne.s32.totalorder %s45, %s46
      %p58 = scmp.eq.s32.totalorder %s15, 3
      %p59 = por %p57, %p58
      %p61 = scmp.ne.s32.totalorder %s46, %s60
      %p62 = scmp.eq.s32.totalorder %s15, 0
      %p63 = por %p61, %p62
      %s65 = sadd.s32 %s64, 1
      %p68 = scmp.eq.s32.totalorder %s9, 3
      %p69 = scmp.ne.s32.totalorder %s64, %s66
      %p70 = scmp.eq.s32.totalorder %s9, 0
      %p71 = por %p69, %p70
      %p72 = scmp.ne.s32.totalorder %s64, %s66
      %p73 = scmp.eq.s32.totalorder %s14, 3
      %p74 = por %p72, %p73
      %p75 = scmp.ne.s32.totalorder %s66, %s67
      %p76 = scmp.eq.s32.totalorder %s14, 0
      %p77 = por %p75, %p76
      %p78 = scmp.ne.s32.totalorder %s66, %s67
      %p79 = scmp.eq.s32.totalorder %s15, 3
      %p80 = por %p78, %p79
      %p82 = scmp.ne.s32.totalorder %s67, %s81
      %p83 = scmp.eq.s32.totalorder %s15, 0
      %p84 = por %p82, %p83
      %s85 = ssub.s32 %s9, %s16
      %p86 = scmp.eq.s32.totalorder %s85, 0
      %s88 = sadd.s32 %s87, 1
      %s89 = scalar_select %p86, %s87, %s88
      %p92 = pneg %p86
      %p93 = scmp.eq.s32.totalorder %s9, 3
      %p94 = por %p92, %p93
      %p95 = scmp.ne.s32.totalorder %s87, %s90
      %p96 = scmp.eq.s32.totalorder %s9, 0
      %p97 = por %p95, %p96
      %p98 = scmp.ne.s32.totalorder %s87, %s90
      %p99 = scmp.eq.s32.totalorder %s14, 3
      %p100 = por %p98, %p99
      %p101 = scmp.ne.s32.totalorder %s90, %s91
      %p102 = scmp.eq.s32.totalorder %s14, 0
      %p103 = por %p101, %p102
      %p104 = scmp.ne.s32.totalorder %s90, %s91
      %p105 = scmp.eq.s32.totalorder %s15, 3
      %p106 = por %p104, %p105
      %p108 = scmp.ne.s32.totalorder %s91, %s107
      %p109 = scmp.eq.s32.totalorder %s15, 0
      %p110 = por %p108, %p109
      %p111 = scmp.le.s32.totalorder 1, %s9
      %p112 = scmp.lt.s32.totalorder %s9, 5
      %p113 = pnand %p111, %p112
      %p114 = pneg %p113
      // Predicated region
      $region9: #{a_call__.11} parent=5 // pred_check
        _
      $region10: #{a_call__.11} parent=5 // pred_check_branch
        %116 = sbr.rel (%p113) target = $region12
      $region11: #{a_call__.11} parent=5 // pred_region
        %s117 = ssub.s32 %s9, 1
        // Predicated region
        $region13: #{a_call__.11} parent=11 // pred_check
          %p118 = pneg %p56
        $region14: #{a_call__.11} parent=11 // pred_check_branch
          %120 = sbr.rel (%p118) target = $region16
        $region15: #{a_call__.11} parent=11 // pred_region
          _
        $region16: #{a_call__.11} parent=11 // pred_fallthru
          _
        // Predicated region
        $region17: #{a_call__.11} parent=11 // pred_check
          %p121 = pneg %p77
        $region18: #{a_call__.11} parent=11 // pred_check_branch
          %123 = sbr.rel (%p121) target = $region20
        $region19: #{a_call__.11} parent=11 // pred_region
          _
        $region20: #{a_call__.11} parent=11 // pred_fallthru
          _
      $region12: #{a_call__.11} parent=5 // pred_fallthru
        _
      %p124 = scmp.lt.s32.totalorder %s9, 4
      // Predicated region
      $region21: #{a_call__.11} parent=5 // pred_check
        %p125 = pneg %p124
      $region22: #{a_call__.11} parent=5 // pred_check_branch
        %127 = sbr.rel (%p125) target = $region24
      $region23: #{a_call__.11} parent=5 // pred_region
        // Predicated region
        $region25: #{a_call__.11} parent=23 // pred_check
          %p128 = pneg %p29
        $region26: #{a_call__.11} parent=23 // pred_check_branch
          %130 = sbr.rel (%p128) target = $region28
        $region27: #{a_call__.11} parent=23 // pred_region
          %s131 = sand.u32 %s19, 1
          %s132 = sand.u32 %s19, 1
          %s133 = smul.addr %s132, 288
          %s134 = scalar_lea.vmem [#allocation2], %s133
          %s135 = smul.addr %s9, 8
          %s136 = smul.addr %s135, 4
          %s137 = scalar_lea.vmem %s0, %s136
          // Predicated region
          $region29: #{a_call__.11} parent=27 // pred_check
            _
          $region30: #{a_call__.11} parent=27 // pred_check_branch
            %139 = sbr.rel (0) target = $region32
          $region31: #{a_call__.11} parent=27 // pred_region
            // Predicated region
            $region33: #{a_call__.11} parent=31 // pred_check
              _
            $region34: #{a_call__.11} parent=31 // pred_check_branch
              %141 = sbr.rel target = $region36
            $region35: #{a_call__.11} parent=31 // pred_region
              // Predicated region
              $region48: #{a_call__.11} parent=35 // pred_check
                _
              $region49: #{a_call__.11} parent=35 // pred_check_branch
                %299 = sbr.rel (0) target = $region51
              $region50: #{a_call__.11} parent=35 // pred_region
                loop: start=0, step=1, limit=1
                $region52: #{a_call__.11} parent=50 // loop_pre_header
                  _
                $region53: #{a_call__.11} parent=50 // loop_header
                  %s301 = sphi 0, %s305
                  %p302 = scmp.ge.s32.totalorder %s301, 1
                  %s306 = sphi %s137, %s137
                  %s307 = sphi %s134, %s134
                $region54: #{a_call__.11} parent=50 // loop_header_branch
                  %304 = sbr.rel (%p302) target = $region58
                $region55: #{a_call__.11} parent=50 // loop_body
                  _
                $region56: #{a_call__.11} parent=50 // loop_footer
                  %s305 = sadd.s32 1, %s301
                $region57: #{a_call__.11} parent=50 // loop_footer_branch
                  %300 = sbr.rel target = $region53
                $region58: #{a_call__.11} parent=50 // loop_exit
                  _
                %s309 = ssub.s32 16, 1
                loop: start=0, step=1, limit=1
                $region59: #{a_call__.11} parent=50 // loop_pre_header
                  _
                $region60: #{a_call__.11} parent=50 // loop_header
                  %s311 = sphi 0, %s315
                  %p312 = scmp.ge.s32.totalorder %s311, 1
                  %s316 = sphi %s137, %s137
                  %s317 = sphi %s134, %s134
                $region61: #{a_call__.11} parent=50 // loop_header_branch
                  %314 = sbr.rel (%p312) target = $region65
                $region62: #{a_call__.11} parent=50 // loop_body
                  %v318 = vld [vmem:[%s316] sm:%s309]
                  %319 = vst [vmem:[%s317] sm:%s309] %v318
                  %v320 = vld [vmem:[%s316 + $0x4] sm:%s309]
                  %321 = vst [vmem:[%s317 + $0x4] sm:%s309] %v320
                  %v322 = vld [vmem:[%s316 + $0x8] sm:%s309]
                  %323 = vst [vmem:[%s317 + $0x8] sm:%s309] %v322
                  %v324 = vld [vmem:[%s316 + $0xc] sm:%s309]
                  %325 = vst [vmem:[%s317 + $0xc] sm:%s309] %v324
                  %v326 = vld [vmem:[%s316 + $0x10] sm:%s309]
                  %327 = vst [vmem:[%s317 + $0x10] sm:%s309] %v326
                  %v328 = vld [vmem:[%s316 + $0x14] sm:%s309]
                  %329 = vst [vmem:[%s317 + $0x14] sm:%s309] %v328
                  %v330 = vld [vmem:[%s316 + $0x18] sm:%s309]
                  %331 = vst [vmem:[%s317 + $0x18] sm:%s309] %v330
                  %v332 = vld [vmem:[%s316 + $0x1c] sm:%s309]
                  %333 = vst [vmem:[%s317 + $0x1c] sm:%s309] %v332
                  %v334 = vld [vmem:[%s316 + $0x80] sm:%s309]
                  %335 = vst [vmem:[%s317 + $0x20] sm:%s309] %v334
                  %v336 = vld [vmem:[%s316 + $0x84] sm:%s309]
                  %337 = vst [vmem:[%s317 + $0x24] sm:%s309] %v336
                  %v338 = vld [vmem:[%s316 + $0x88] sm:%s309]
                  %339 = vst [vmem:[%s317 + $0x28] sm:%s309] %v338
                  %v340 = vld [vmem:[%s316 + $0x8c] sm:%s309]
                  %341 = vst [vmem:[%s317 + $0x2c] sm:%s309] %v340
                  %v342 = vld [vmem:[%s316 + $0x90] sm:%s309]
                  %343 = vst [vmem:[%s317 + $0x30] sm:%s309] %v342
                  %v344 = vld [vmem:[%s316 + $0x94] sm:%s309]
                  %345 = vst [vmem:[%s317 + $0x34] sm:%s309] %v344
                  %v346 = vld [vmem:[%s316 + $0x98] sm:%s309]
                  %347 = vst [vmem:[%s317 + $0x38] sm:%s309] %v346
                  %v348 = vld [vmem:[%s316 + $0x9c] sm:%s309]
                  %349 = vst [vmem:[%s317 + $0x3c] sm:%s309] %v348
                  %v350 = vld [vmem:[%s316 + $0x100] sm:%s309]
                  %351 = vst [vmem:[%s317 + $0x40] sm:%s309] %v350
                  %v352 = vld [vmem:[%s316 + $0x104] sm:%s309]
                  %353 = vst [vmem:[%s317 + $0x44] sm:%s309] %v352
                  %v354 = vld [vmem:[%s316 + $0x108] sm:%s309]
                  %355 = vst [vmem:[%s317 + $0x48] sm:%s309] %v354
                  %v356 = vld [vmem:[%s316 + $0x10c] sm:%s309]
                  %357 = vst [vmem:[%s317 + $0x4c] sm:%s309] %v356
                  %v358 = vld [vmem:[%s316 + $0x110] sm:%s309]
                  %359 = vst [vmem:[%s317 + $0x50] sm:%s309] %v358
                  %v360 = vld [vmem:[%s316 + $0x114] sm:%s309]
                  %361 = vst [vmem:[%s317 + $0x54] sm:%s309] %v360
                  %v362 = vld [vmem:[%s316 + $0x118] sm:%s309]
                  %363 = vst [vmem:[%s317 + $0x58] sm:%s309] %v362
                  %v364 = vld [vmem:[%s316 + $0x11c] sm:%s309]
                  %365 = vst [vmem:[%s317 + $0x5c] sm:%s309] %v364
                  %v366 = vld [vmem:[%s316 + $0x180] sm:%s309]
                  %367 = vst [vmem:[%s317 + $0x60] sm:%s309] %v366
                  %v368 = vld [vmem:[%s316 + $0x184] sm:%s309]
                  %369 = vst [vmem:[%s317 + $0x64] sm:%s309] %v368
                  %v370 = vld [vmem:[%s316 + $0x188] sm:%s309]
                  %371 = vst [vmem:[%s317 + $0x68] sm:%s309] %v370
                  %v372 = vld [vmem:[%s316 + $0x18c] sm:%s309]
                  %373 = vst [vmem:[%s317 + $0x6c] sm:%s309] %v372
                  %v374 = vld [vmem:[%s316 + $0x190] sm:%s309]
                  %375 = vst [vmem:[%s317 + $0x70] sm:%s309] %v374
                  %v376 = vld [vmem:[%s316 + $0x194] sm:%s309]
                  %377 = vst [vmem:[%s317 + $0x74] sm:%s309] %v376
                  %v378 = vld [vmem:[%s316 + $0x198] sm:%s309]
                  %379 = vst [vmem:[%s317 + $0x78] sm:%s309] %v378
                  %v380 = vld [vmem:[%s316 + $0x19c] sm:%s309]
                  %381 = vst [vmem:[%s317 + $0x7c] sm:%s309] %v380
                  %v382 = vld [vmem:[%s316 + $0x200] sm:%s309]
                  %383 = vst [vmem:[%s317 + $0x80] sm:%s309] %v382
                  %v384 = vld [vmem:[%s316 + $0x204] sm:%s309]
                  %385 = vst [vmem:[%s317 + $0x84] sm:%s309] %v384
                  %v386 = vld [vmem:[%s316 + $0x208] sm:%s309]
                  %387 = vst [vmem:[%s317 + $0x88] sm:%s309] %v386
                  %v388 = vld [vmem:[%s316 + $0x20c] sm:%s309]
                  %389 = vst [vmem:[%s317 + $0x8c] sm:%s309] %v388
                  %v390 = vld [vmem:[%s316 + $0x210] sm:%s309]
                  %391 = vst [vmem:[%s317 + $0x90] sm:%s309] %v390
                  %v392 = vld [vmem:[%s316 + $0x214] sm:%s309]
                  %393 = vst [vmem:[%s317 + $0x94] sm:%s309] %v392
                  %v394 = vld [vmem:[%s316 + $0x218] sm:%s309]
                  %395 = vst [vmem:[%s317 + $0x98] sm:%s309] %v394
                  %v396 = vld [vmem:[%s316 + $0x21c] sm:%s309]
                  %397 = vst [vmem:[%s317 + $0x9c] sm:%s309] %v396
                  %v398 = vld [vmem:[%s316 + $0x280] sm:%s309]
                  %399 = vst [vmem:[%s317 + $0xa0] sm:%s309] %v398
                  %v400 = vld [vmem:[%s316 + $0x284] sm:%s309]
                  %401 = vst [vmem:[%s317 + $0xa4] sm:%s309] %v400
                  %v402 = vld [vmem:[%s316 + $0x288] sm:%s309]
                  %403 = vst [vmem:[%s317 + $0xa8] sm:%s309] %v402
                  %v404 = vld [vmem:[%s316 + $0x28c] sm:%s309]
                  %405 = vst [vmem:[%s317 + $0xac] sm:%s309] %v404
                  %v406 = vld [vmem:[%s316 + $0x290] sm:%s309]
                  %407 = vst [vmem:[%s317 + $0xb0] sm:%s309] %v406
                  %v408 = vld [vmem:[%s316 + $0x294] sm:%s309]
                  %409 = vst [vmem:[%s317 + $0xb4] sm:%s309] %v408
                  %v410 = vld [vmem:[%s316 + $0x298] sm:%s309]
                  %411 = vst [vmem:[%s317 + $0xb8] sm:%s309] %v410
                  %v412 = vld [vmem:[%s316 + $0x29c] sm:%s309]
                  %413 = vst [vmem:[%s317 + $0xbc] sm:%s309] %v412
                  %v414 = vld [vmem:[%s316 + $0x300] sm:%s309]
                  %415 = vst [vmem:[%s317 + $0xc0] sm:%s309] %v414
                  %v416 = vld [vmem:[%s316 + $0x304] sm:%s309]
                  %417 = vst [vmem:[%s317 + $0xc4] sm:%s309] %v416
                  %v418 = vld [vmem:[%s316 + $0x308] sm:%s309]
                  %419 = vst [vmem:[%s317 + $0xc8] sm:%s309] %v418
                  %v420 = vld [vmem:[%s316 + $0x30c] sm:%s309]
                  %421 = vst [vmem:[%s317 + $0xcc] sm:%s309] %v420
                  %v422 = vld [vmem:[%s316 + $0x310] sm:%s309]
                  %423 = vst [vmem:[%s317 + $0xd0] sm:%s309] %v422
                  %v424 = vld [vmem:[%s316 + $0x314] sm:%s309]
                  %425 = vst [vmem:[%s317 + $0xd4] sm:%s309] %v424
                  %v426 = vld [vmem:[%s316 + $0x318] sm:%s309]
                  %427 = vst [vmem:[%s317 + $0xd8] sm:%s309] %v426
                  %v428 = vld [vmem:[%s316 + $0x31c] sm:%s309]
                  %429 = vst [vmem:[%s317 + $0xdc] sm:%s309] %v428
                  %v430 = vld [vmem:[%s316 + $0x380] sm:%s309]
                  %431 = vst [vmem:[%s317 + $0xe0] sm:%s309] %v430
                  %v432 = vld [vmem:[%s316 + $0x384] sm:%s309]
                  %433 = vst [vmem:[%s317 + $0xe4] sm:%s309] %v432
                  %v434 = vld [vmem:[%s316 + $0x388] sm:%s309]
                  %435 = vst [vmem:[%s317 + $0xe8] sm:%s309] %v434
                  %v436 = vld [vmem:[%s316 + $0x38c] sm:%s309]
                  %437 = vst [vmem:[%s317 + $0xec] sm:%s309] %v436
                  %v438 = vld [vmem:[%s316 + $0x390] sm:%s309]
                  %439 = vst [vmem:[%s317 + $0xf0] sm:%s309] %v438
                  %v440 = vld [vmem:[%s316 + $0x394] sm:%s309]
                  %441 = vst [vmem:[%s317 + $0xf4] sm:%s309] %v440
                  %v442 = vld [vmem:[%s316 + $0x398] sm:%s309]
                  %443 = vst [vmem:[%s317 + $0xf8] sm:%s309] %v442
                  %v444 = vld [vmem:[%s316 + $0x39c] sm:%s309]
                  %445 = vst [vmem:[%s317 + $0xfc] sm:%s309] %v444
                  %v446 = vld [vmem:[%s316 + $0x400] sm:%s309]
                  %447 = vst [vmem:[%s317 + $0x100] sm:%s309] %v446
                  %v448 = vld [vmem:[%s316 + $0x404] sm:%s309]
                  %449 = vst [vmem:[%s317 + $0x104] sm:%s309] %v448
                  %v450 = vld [vmem:[%s316 + $0x408] sm:%s309]
                  %451 = vst [vmem:[%s317 + $0x108] sm:%s309] %v450
                  %v452 = vld [vmem:[%s316 + $0x40c] sm:%s309]
                  %453 = vst [vmem:[%s317 + $0x10c] sm:%s309] %v452
                  %v454 = vld [vmem:[%s316 + $0x410] sm:%s309]
                  %455 = vst [vmem:[%s317 + $0x110] sm:%s309] %v454
                  %v456 = vld [vmem:[%s316 + $0x414] sm:%s309]
                  %457 = vst [vmem:[%s317 + $0x114] sm:%s309] %v456
                  %v458 = vld [vmem:[%s316 + $0x418] sm:%s309]
                  %459 = vst [vmem:[%s317 + $0x118] sm:%s309] %v458
                  %v460 = vld [vmem:[%s316 + $0x41c] sm:%s309]
                  %461 = vst [vmem:[%s317 + $0x11c] sm:%s309] %v460
                $region63: #{a_call__.11} parent=50 // loop_footer
                  %s315 = sadd.s32 1, %s311
                $region64: #{a_call__.11} parent=50 // loop_footer_branch
                  %310 = sbr.rel target = $region60
                $region65: #{a_call__.11} parent=50 // loop_exit
                  _
              $region51: #{a_call__.11} parent=35 // pred_fallthru
                _
            $region36: #{a_call__.11} parent=31 // pred_fallthru
              _
            // Predicated region
            $region37: #{a_call__.11} parent=31 // pred_check
              _
            $region38: #{a_call__.11} parent=31 // pred_check_branch
              %143 = sbr.rel (0) target = $region40
            $region39: #{a_call__.11} parent=31 // pred_region
              %s145 = ssub.s32 16, 1
              loop: start=0, step=1, limit=1
              $region41: #{a_call__.11} parent=39 // loop_pre_header
                _
              $region42: #{a_call__.11} parent=39 // loop_header
                %s147 = sphi 0, %s151
                %p148 = scmp.ge.s32.totalorder %s147, 1
                %s152 = sphi %s137, %s137
                %s153 = sphi %s134, %s134
              $region43: #{a_call__.11} parent=39 // loop_header_branch
                %150 = sbr.rel (%p148) target = $region47
              $region44: #{a_call__.11} parent=39 // loop_body
                %v154 = vld [vmem:[%s152] sm:%s145]
                %155 = vst [vmem:[%s153] sm:%s145] %v154
                %v156 = vld [vmem:[%s152 + $0x4] sm:%s145]
                %157 = vst [vmem:[%s153 + $0x4] sm:%s145] %v156
                %v158 = vld [vmem:[%s152 + $0x8] sm:%s145]
                %159 = vst [vmem:[%s153 + $0x8] sm:%s145] %v158
                %v160 = vld [vmem:[%s152 + $0xc] sm:%s145]
                %161 = vst [vmem:[%s153 + $0xc] sm:%s145] %v160
                %v162 = vld [vmem:[%s152 + $0x10] sm:%s145]
                %163 = vst [vmem:[%s153 + $0x10] sm:%s145] %v162
                %v164 = vld [vmem:[%s152 + $0x14] sm:%s145]
                %165 = vst [vmem:[%s153 + $0x14] sm:%s145] %v164
                %v166 = vld [vmem:[%s152 + $0x18] sm:%s145]
                %167 = vst [vmem:[%s153 + $0x18] sm:%s145] %v166
                %v168 = vld [vmem:[%s152 + $0x1c] sm:%s145]
                %169 = vst [vmem:[%s153 + $0x1c] sm:%s145] %v168
                %v170 = vld [vmem:[%s152 + $0x80] sm:%s145]
                %171 = vst [vmem:[%s153 + $0x20] sm:%s145] %v170
                %v172 = vld [vmem:[%s152 + $0x84] sm:%s145]
                %173 = vst [vmem:[%s153 + $0x24] sm:%s145] %v172
                %v174 = vld [vmem:[%s152 + $0x88] sm:%s145]
                %175 = vst [vmem:[%s153 + $0x28] sm:%s145] %v174
                %v176 = vld [vmem:[%s152 + $0x8c] sm:%s145]
                %177 = vst [vmem:[%s153 + $0x2c] sm:%s145] %v176
                %v178 = vld [vmem:[%s152 + $0x90] sm:%s145]
                %179 = vst [vmem:[%s153 + $0x30] sm:%s145] %v178
                %v180 = vld [vmem:[%s152 + $0x94] sm:%s145]
                %181 = vst [vmem:[%s153 + $0x34] sm:%s145] %v180
                %v182 = vld [vmem:[%s152 + $0x98] sm:%s145]
                %183 = vst [vmem:[%s153 + $0x38] sm:%s145] %v182
                %v184 = vld [vmem:[%s152 + $0x9c] sm:%s145]
                %185 = vst [vmem:[%s153 + $0x3c] sm:%s145] %v184
                %v186 = vld [vmem:[%s152 + $0x100] sm:%s145]
                %187 = vst [vmem:[%s153 + $0x40] sm:%s145] %v186
                %v188 = vld [vmem:[%s152 + $0x104] sm:%s145]
                %189 = vst [vmem:[%s153 + $0x44] sm:%s145] %v188
                %v190 = vld [vmem:[%s152 + $0x108] sm:%s145]
                %191 = vst [vmem:[%s153 + $0x48] sm:%s145] %v190
                %v192 = vld [vmem:[%s152 + $0x10c] sm:%s145]
                %193 = vst [vmem:[%s153 + $0x4c] sm:%s145] %v192
                %v194 = vld [vmem:[%s152 + $0x110] sm:%s145]
                %195 = vst [vmem:[%s153 + $0x50] sm:%s145] %v194
                %v196 = vld [vmem:[%s152 + $0x114] sm:%s145]
                %197 = vst [vmem:[%s153 + $0x54] sm:%s145] %v196
                %v198 = vld [vmem:[%s152 + $0x118] sm:%s145]
                %199 = vst [vmem:[%s153 + $0x58] sm:%s145] %v198
                %v200 = vld [vmem:[%s152 + $0x11c] sm:%s145]
                %201 = vst [vmem:[%s153 + $0x5c] sm:%s145] %v200
                %v202 = vld [vmem:[%s152 + $0x180] sm:%s145]
                %203 = vst [vmem:[%s153 + $0x60] sm:%s145] %v202
                %v204 = vld [vmem:[%s152 + $0x184] sm:%s145]
                %205 = vst [vmem:[%s153 + $0x64] sm:%s145] %v204
                %v206 = vld [vmem:[%s152 + $0x188] sm:%s145]
                %207 = vst [vmem:[%s153 + $0x68] sm:%s145] %v206
                %v208 = vld [vmem:[%s152 + $0x18c] sm:%s145]
                %209 = vst [vmem:[%s153 + $0x6c] sm:%s145] %v208
                %v210 = vld [vmem:[%s152 + $0x190] sm:%s145]
                %211 = vst [vmem:[%s153 + $0x70] sm:%s145] %v210
                %v212 = vld [vmem:[%s152 + $0x194] sm:%s145]
                %213 = vst [vmem:[%s153 + $0x74] sm:%s145] %v212
                %v214 = vld [vmem:[%s152 + $0x198] sm:%s145]
                %215 = vst [vmem:[%s153 + $0x78] sm:%s145] %v214
                %v216 = vld [vmem:[%s152 + $0x19c] sm:%s145]
                %217 = vst [vmem:[%s153 + $0x7c] sm:%s145] %v216
                %v218 = vld [vmem:[%s152 + $0x200] sm:%s145]
                %219 = vst [vmem:[%s153 + $0x80] sm:%s145] %v218
                %v220 = vld [vmem:[%s152 + $0x204] sm:%s145]
                %221 = vst [vmem:[%s153 + $0x84] sm:%s145] %v220
                %v222 = vld [vmem:[%s152 + $0x208] sm:%s145]
                %223 = vst [vmem:[%s153 + $0x88] sm:%s145] %v222
                %v224 = vld [vmem:[%s152 + $0x20c] sm:%s145]
                %225 = vst [vmem:[%s153 + $0x8c] sm:%s145] %v224
                %v226 = vld [vmem:[%s152 + $0x210] sm:%s145]
                %227 = vst [vmem:[%s153 + $0x90] sm:%s145] %v226
                %v228 = vld [vmem:[%s152 + $0x214] sm:%s145]
                %229 = vst [vmem:[%s153 + $0x94] sm:%s145] %v228
                %v230 = vld [vmem:[%s152 + $0x218] sm:%s145]
                %231 = vst [vmem:[%s153 + $0x98] sm:%s145] %v230
                %v232 = vld [vmem:[%s152 + $0x21c] sm:%s145]
                %233 = vst [vmem:[%s153 + $0x9c] sm:%s145] %v232
                %v234 = vld [vmem:[%s152 + $0x280] sm:%s145]
                %235 = vst [vmem:[%s153 + $0xa0] sm:%s145] %v234
                %v236 = vld [vmem:[%s152 + $0x284] sm:%s145]
                %237 = vst [vmem:[%s153 + $0xa4] sm:%s145] %v236
                %v238 = vld [vmem:[%s152 + $0x288] sm:%s145]
                %239 = vst [vmem:[%s153 + $0xa8] sm:%s145] %v238
                %v240 = vld [vmem:[%s152 + $0x28c] sm:%s145]
                %241 = vst [vmem:[%s153 + $0xac] sm:%s145] %v240
                %v242 = vld [vmem:[%s152 + $0x290] sm:%s145]
                %243 = vst [vmem:[%s153 + $0xb0] sm:%s145] %v242
                %v244 = vld [vmem:[%s152 + $0x294] sm:%s145]
                %245 = vst [vmem:[%s153 + $0xb4] sm:%s145] %v244
                %v246 = vld [vmem:[%s152 + $0x298] sm:%s145]
                %247 = vst [vmem:[%s153 + $0xb8] sm:%s145] %v246
                %v248 = vld [vmem:[%s152 + $0x29c] sm:%s145]
                %249 = vst [vmem:[%s153 + $0xbc] sm:%s145] %v248
                %v250 = vld [vmem:[%s152 + $0x300] sm:%s145]
                %251 = vst [vmem:[%s153 + $0xc0] sm:%s145] %v250
                %v252 = vld [vmem:[%s152 + $0x304] sm:%s145]
                %253 = vst [vmem:[%s153 + $0xc4] sm:%s145] %v252
                %v254 = vld [vmem:[%s152 + $0x308] sm:%s145]
                %255 = vst [vmem:[%s153 + $0xc8] sm:%s145] %v254
                %v256 = vld [vmem:[%s152 + $0x30c] sm:%s145]
                %257 = vst [vmem:[%s153 + $0xcc] sm:%s145] %v256
                %v258 = vld [vmem:[%s152 + $0x310] sm:%s145]
                %259 = vst [vmem:[%s153 + $0xd0] sm:%s145] %v258
                %v260 = vld [vmem:[%s152 + $0x314] sm:%s145]
                %261 = vst [vmem:[%s153 + $0xd4] sm:%s145] %v260
                %v262 = vld [vmem:[%s152 + $0x318] sm:%s145]
                %263 = vst [vmem:[%s153 + $0xd8] sm:%s145] %v262
                %v264 = vld [vmem:[%s152 + $0x31c] sm:%s145]
                %265 = vst [vmem:[%s153 + $0xdc] sm:%s145] %v264
                %v266 = vld [vmem:[%s152 + $0x380] sm:%s145]
                %267 = vst [vmem:[%s153 + $0xe0] sm:%s145] %v266
                %v268 = vld [vmem:[%s152 + $0x384] sm:%s145]
                %269 = vst [vmem:[%s153 + $0xe4] sm:%s145] %v268
                %v270 = vld [vmem:[%s152 + $0x388] sm:%s145]
                %271 = vst [vmem:[%s153 + $0xe8] sm:%s145] %v270
                %v272 = vld [vmem:[%s152 + $0x38c] sm:%s145]
                %273 = vst [vmem:[%s153 + $0xec] sm:%s145] %v272
                %v274 = vld [vmem:[%s152 + $0x390] sm:%s145]
                %275 = vst [vmem:[%s153 + $0xf0] sm:%s145] %v274
                %v276 = vld [vmem:[%s152 + $0x394] sm:%s145]
                %277 = vst [vmem:[%s153 + $0xf4] sm:%s145] %v276
                %v278 = vld [vmem:[%s152 + $0x398] sm:%s145]
                %279 = vst [vmem:[%s153 + $0xf8] sm:%s145] %v278
                %v280 = vld [vmem:[%s152 + $0x39c] sm:%s145]
                %281 = vst [vmem:[%s153 + $0xfc] sm:%s145] %v280
                %v282 = vld [vmem:[%s152 + $0x400] sm:%s145]
                %283 = vst [vmem:[%s153 + $0x100] sm:%s145] %v282
                %v284 = vld [vmem:[%s152 + $0x404] sm:%s145]
                %285 = vst [vmem:[%s153 + $0x104] sm:%s145] %v284
                %v286 = vld [vmem:[%s152 + $0x408] sm:%s145]
                %287 = vst [vmem:[%s153 + $0x108] sm:%s145] %v286
                %v288 = vld [vmem:[%s152 + $0x40c] sm:%s145]
                %289 = vst [vmem:[%s153 + $0x10c] sm:%s145] %v288
                %v290 = vld [vmem:[%s152 + $0x410] sm:%s145]
                %291 = vst [vmem:[%s153 + $0x110] sm:%s145] %v290
                %v292 = vld [vmem:[%s152 + $0x414] sm:%s145]
                %293 = vst [vmem:[%s153 + $0x114] sm:%s145] %v292
                %v294 = vld [vmem:[%s152 + $0x418] sm:%s145]
                %295 = vst [vmem:[%s153 + $0x118] sm:%s145] %v294
                %v296 = vld [vmem:[%s152 + $0x41c] sm:%s145]
                %297 = vst [vmem:[%s153 + $0x11c] sm:%s145] %v296
              $region45: #{a_call__.11} parent=39 // loop_footer
                %s151 = sadd.s32 1, %s147
              $region46: #{a_call__.11} parent=39 // loop_footer_branch
                %146 = sbr.rel target = $region42
              $region47: #{a_call__.11} parent=39 // loop_exit
                _
            $region40: #{a_call__.11} parent=31 // pred_fallthru
              _
          $region32: #{a_call__.11} parent=27 // pred_fallthru
            _
          %462 = vnop
        $region28: #{a_call__.11} parent=23 // pred_fallthru
          _
      $region24: #{a_call__.11} parent=5 // pred_fallthru
        _
      %p463 = scmp.le.s32.totalorder 1, %s9
      %p464 = scmp.lt.s32.totalorder %s9, 5
      %p465 = pnand %p463, %p464
      %p466 = pneg %p465
      // Predicated region
      $region66: #{a_call__.11} parent=5 // pred_check
        _
      $region67: #{a_call__.11} parent=5 // pred_check_branch
        %468 = sbr.rel (%p465) target = $region69
      $region68: #{a_call__.11} parent=5 // pred_region
        %s469 = ssub.s32 %s9, 1
        %s470 = sand.u32 %s22, 1
        %s471 = sand.u32 %s22, 1
        %s472 = smul.addr %s471, 288
        %s473 = scalar_lea.vmem [#allocation2], %s472
        // Predicated region
        $region70: #{a_call__.11} parent=68 // pred_check
          %p474 = pneg %p35
        $region71: #{a_call__.11} parent=68 // pred_check_branch
          %476 = sbr.rel (%p474) target = $region73
        $region72: #{a_call__.11} parent=68 // pred_region
          _
        $region73: #{a_call__.11} parent=68 // pred_fallthru
          _
        %s477 = sand.u32 %s22, 1
        %s478 = sand.u32 %s22, 1
        %s479 = smul.addr %s478, 288
        %s480 = scalar_lea.vmem [#allocation2], %s479
        %p481 = pneg %p35
        %p482 = pneg %p32
        %p483 = pneg %p56
        %p484 = pneg %p53
        %p485 = pneg %p77
        %p486 = pneg %p74
        %p487 = pneg %p103
        %p488 = pneg %p100
        %p489 = scmp.lt.s32.totalorder %s14, 3
        %s490 = scalar_select %p489, %s14, 3
        %s491 = smul.addr %s490, 8
        %s492 = smul.addr %s491, 4
        %s493 = scalar_lea.vmem %s3, %s492
        %p494 = scmp.lt.s32.totalorder %s14, 3
        %s495 = scalar_select %p494, %s14, 3
        %s496 = smul.addr %s495, 8
        %s497 = smul.addr %s496, 4
        %s498 = scalar_lea.vmem %s3, %s497
        %v500 = vld [vmem:[%s473] sm:$0xf]
        %v501 = vld [vmem:[%s473 + $0x4] sm:$0xf]
        %v502 = vld [vmem:[%s473 + $0x8] sm:$0xf]
        %v503 = vld [vmem:[%s473 + $0xc] sm:$0xf]
        %v504 = vld [vmem:[%s473 + $0x10] sm:$0xf]
        %v505 = vld [vmem:[%s473 + $0x14] sm:$0xf]
        %v506 = vld [vmem:[%s473 + $0x18] sm:$0xf]
        %v507 = vld [vmem:[%s473 + $0x1c] sm:$0xf]
        %v508 = vld [vmem:[%s1] sm:$0x3]
        %s509 = scalar_lea.vmem %s473, 32 [#allocation2]
        %v510 = vld [vmem:[%s509] sm:$0xf]
        %v511 = vld [vmem:[%s509 + $0x4] sm:$0xf]
        %v512 = vld [vmem:[%s509 + $0x8] sm:$0xf]
        %v513 = vld [vmem:[%s509 + $0xc] sm:$0xf]
        %v514 = vld [vmem:[%s509 + $0x10] sm:$0xf]
        %v515 = vld [vmem:[%s509 + $0x14] sm:$0xf]
        %v516 = vld [vmem:[%s509 + $0x18] sm:$0xf]
        %v517 = vld [vmem:[%s509 + $0x1c] sm:$0xf]
        %s518 = scalar_lea.vmem %s1, 2
        %v519 = vld [vmem:[%s518] sm:$0x3]
        %v528 = vunpack.c.l.b16 %v510
        %v529 = vunpack.c.l.b16 %v511
        %v530 = vunpack.c.l.b16 %v512
        %v531 = vunpack.c.l.b16 %v513
        %v532 = vunpack.c.l.b16 %v514
        %v533 = vunpack.c.l.b16 %v515
        %v534 = vunpack.c.l.b16 %v516
        %v535 = vunpack.c.l.b16 %v517
        %v536 = vpack.c.b16 %v529, %v528
        %v537 = vpack.c.b16 %v531, %v530
        %v538 = vpack.c.b16 %v533, %v532
        %v539 = vpack.c.b16 %v535, %v534
        %vm540 = vcmask 23552
        %v542 = vsel %vm540, %v536, 0
        %v545 = vsel %vm540, %v537, 0
        %v548 = vsel %vm540, %v538, 0
        %v551 = vsel %vm540, %v539, 0
        %vm553 = vcmask 1040384
        %vm554 = vcmask 1041408
        %v555 = vsel %vm553, 4294967295, 65535
        %v556 = vsel %vm554, %v555, 0
        %v558 = vand.u32 %v519, %v556
        %560 = vmatprep.subr.bf16.mxu0 0
        %561 = vmatpush1.bf16.msra.mxu0 0
        %562 = vmatprep.subr.bf16.mxu0 0
        %563 = vmatpush1.bf16.msra.mxu0 0
        %564 = vmatprep.subr.bf16.mxu0 0
        %565 = vmatpush1.bf16.msra.mxu0 0
        %566 = vmatprep.subr.bf16.mxu0 0
        %567 = vmatpush1.bf16.msra.mxu0 0
        %568 = vmatprep.subr.bf16.mxu0 0
        %569 = vmatpush1.bf16.msra.mxu0 0
        %570 = vmatprep.subr.bf16.mxu0 0
        %571 = vmatpush1.bf16.msra.mxu0 0
        %572 = vmatprep.subr.bf16.mxu0 0
        %573 = vmatpush1.bf16.msra.mxu0 0
        %574 = vmatprep.subr.bf16.mxu0 0
        %575 = vmatpush1.bf16.msra.mxu0 %v558
        %576 = vmatprep.subr.bf16.mxu0 0
        %577 = vmatpush2.bf16.msra.mxu0 0
        %578 = vmatprep.subr.bf16.mxu0 0
        %579 = vmatpush2.bf16.msra.mxu0 0
        %580 = vmatprep.subr.bf16.mxu0 0
        %581 = vmatpush2.bf16.msra.mxu0 0
        %582 = vmatprep.subr.bf16.mxu0 0
        %583 = vmatpush2.bf16.msra.mxu0 0
        %584 = vmatprep.subr.bf16.mxu0 0
        %585 = vmatpush2.bf16.msra.mxu0 0
        %586 = vmatprep.subr.bf16.mxu0 0
        %587 = vmatpush2.bf16.msra.mxu0 0
        %588 = vmatprep.subr.bf16.mxu0 0
        %589 = vmatpush2.bf16.msra.mxu0 0
        %590 = vmatprep.subr.bf16.mxu0 0
        %591 = vmatpush2.bf16.msra.mxu0 0
        %592 = vmatprep.mubr.bf16.mxu0 0
        %593 = vmatmul.mubr.bf16.gmra.mxu0 %v542
        %v594 = vpop.f32.mrf.mxu0
        %v595 = vadd.f32 0.0, %v594
        %v596 = vpop.f32.mrf.mxu0
        %v597 = vpop.f32.mrf.mxu0
        %v598 = vadd.f32 0.0, %v597
        %v599 = vpop.f32.mrf.mxu0
        %600 = vmatprep.mubr.bf16.mxu0 0
        %601 = vmatmul.mubr.bf16.gmra.mxu0 %v545
        %v602 = vpop.f32.mrf.mxu0
        %v603 = vadd.f32 0.0, %v602
        %v604 = vpop.f32.mrf.mxu0
        %v605 = vpop.f32.mrf.mxu0
        %v606 = vadd.f32 0.0, %v605
        %v607 = vpop.f32.mrf.mxu0
        %608 = vmatprep.mubr.bf16.mxu0 0
        %609 = vmatmul.mubr.bf16.gmra.mxu0 %v548
        %v610 = vpop.f32.mrf.mxu0
        %v611 = vadd.f32 0.0, %v610
        %v612 = vpop.f32.mrf.mxu0
        %v613 = vpop.f32.mrf.mxu0
        %v614 = vadd.f32 0.0, %v613
        %v615 = vpop.f32.mrf.mxu0
        %616 = vmatprep.mubr.bf16.mxu0 0
        %617 = vmatmul.mubr.bf16.gmra.mxu0 %v551
        %v618 = vpop.f32.mrf.mxu0
        %v619 = vadd.f32 0.0, %v618
        %v620 = vpop.f32.mrf.mxu0
        %v621 = vpop.f32.mrf.mxu0
        %v622 = vadd.f32 0.0, %v621
        %v623 = vpop.f32.mrf.mxu0
        %624 = vdwg.mxu0
        %v633 = vunpack.c.l.b16 %v500
        %v634 = vunpack.c.l.b16 %v501
        %v635 = vunpack.c.l.b16 %v502
        %v636 = vunpack.c.l.b16 %v503
        %v637 = vunpack.c.l.b16 %v504
        %v638 = vunpack.c.l.b16 %v505
        %v639 = vunpack.c.l.b16 %v506
        %v640 = vunpack.c.l.b16 %v507
        %v641 = vpack.c.b16 %v634, %v633
        %v642 = vpack.c.b16 %v636, %v635
        %v643 = vpack.c.b16 %v638, %v637
        %v644 = vpack.c.b16 %v640, %v639
        %v646 = vsel %vm540, %v641, 0
        %v649 = vsel %vm540, %v642, 0
        %v652 = vsel %vm540, %v643, 0
        %v655 = vsel %vm540, %v644, 0
        %v658 = vand.u32 %v508, %v556
        %660 = vmatprep.subr.bf16.mxu0 0
        %661 = vmatpush1.bf16.msra.mxu0 0
        %662 = vmatprep.subr.bf16.mxu0 0
        %663 = vmatpush1.bf16.msra.mxu0 0
        %664 = vmatprep.subr.bf16.mxu0 0
        %665 = vmatpush1.bf16.msra.mxu0 0
        %666 = vmatprep.subr.bf16.mxu0 0
        %667 = vmatpush1.bf16.msra.mxu0 0
        %668 = vmatprep.subr.bf16.mxu0 0
        %669 = vmatpush1.bf16.msra.mxu0 0
        %670 = vmatprep.subr.bf16.mxu0 0
        %671 = vmatpush1.bf16.msra.mxu0 0
        %672 = vmatprep.subr.bf16.mxu0 0
        %673 = vmatpush1.bf16.msra.mxu0 0
        %674 = vmatprep.subr.bf16.mxu0 0
        %675 = vmatpush1.bf16.msra.mxu0 %v658
        %676 = vmatprep.subr.bf16.mxu0 0
        %677 = vmatpush2.bf16.msra.mxu0 0
        %678 = vmatprep.subr.bf16.mxu0 0
        %679 = vmatpush2.bf16.msra.mxu0 0
        %680 = vmatprep.subr.bf16.mxu0 0
        %681 = vmatpush2.bf16.msra.mxu0 0
        %682 = vmatprep.subr.bf16.mxu0 0
        %683 = vmatpush2.bf16.msra.mxu0 0
        %684 = vmatprep.subr.bf16.mxu0 0
        %685 = vmatpush2.bf16.msra.mxu0 0
        %686 = vmatprep.subr.bf16.mxu0 0
        %687 = vmatpush2.bf16.msra.mxu0 0
        %688 = vmatprep.subr.bf16.mxu0 0
        %689 = vmatpush2.bf16.msra.mxu0 0
        %690 = vmatprep.subr.bf16.mxu0 0
        %691 = vmatpush2.bf16.msra.mxu0 0
        %692 = vmatprep.mubr.bf16.mxu0 0
        %693 = vmatmul.mubr.bf16.gmra.mxu0 %v646
        %v694 = vpop.f32.mrf.mxu0
        %v695 = vadd.f32 %v595, %v694
        %v696 = vpop.f32.mrf.mxu0
        %v697 = vpop.f32.mrf.mxu0
        %v698 = vadd.f32 %v598, %v697
        %v699 = vpop.f32.mrf.mxu0
        %700 = vmatprep.mubr.bf16.mxu0 0
        %701 = vmatmul.mubr.bf16.gmra.mxu0 %v649
        %v702 = vpop.f32.mrf.mxu0
        %v703 = vadd.f32 %v603, %v702
        %v704 = vpop.f32.mrf.mxu0
        %v705 = vpop.f32.mrf.mxu0
        %v706 = vadd.f32 %v606, %v705
        %v707 = vpop.f32.mrf.mxu0
        %708 = vmatprep.mubr.bf16.mxu0 0
        %709 = vmatmul.mubr.bf16.gmra.mxu0 %v652
        %v710 = vpop.f32.mrf.mxu0
        %v711 = vadd.f32 %v611, %v710
        %v712 = vpop.f32.mrf.mxu0
        %v713 = vpop.f32.mrf.mxu0
        %v714 = vadd.f32 %v614, %v713
        %v715 = vpop.f32.mrf.mxu0
        %716 = vmatprep.mubr.bf16.mxu0 0
        %717 = vmatmul.mubr.bf16.gmra.mxu0 %v655
        %v718 = vpop.f32.mrf.mxu0
        %v719 = vadd.f32 %v619, %v718
        %v720 = vpop.f32.mrf.mxu0
        %v721 = vpop.f32.mrf.mxu0
        %v722 = vadd.f32 %v622, %v721
        %v723 = vpop.f32.mrf.mxu0
        %724 = vdwg.mxu0
        %s725 = scalar_lea.vmem %s473, 64 [#allocation2]
        %v726 = vld [vmem:[%s725] sm:$0xf]
        %v727 = vld [vmem:[%s725 + $0x4] sm:$0xf]
        %v728 = vld [vmem:[%s725 + $0x8] sm:$0xf]
        %v729 = vld [vmem:[%s725 + $0xc] sm:$0xf]
        %v730 = vld [vmem:[%s725 + $0x10] sm:$0xf]
        %v731 = vld [vmem:[%s725 + $0x14] sm:$0xf]
        %v732 = vld [vmem:[%s725 + $0x18] sm:$0xf]
        %v733 = vld [vmem:[%s725 + $0x1c] sm:$0xf]
        %s734 = scalar_lea.vmem %s1, 4
        %v735 = vld [vmem:[%s734] sm:$0x3]
        %v744 = vunpack.c.l.b16 %v726
        %v745 = vunpack.c.l.b16 %v727
        %v746 = vunpack.c.l.b16 %v728
        %v747 = vunpack.c.l.b16 %v729
        %v748 = vunpack.c.l.b16 %v730
        %v749 = vunpack.c.l.b16 %v731
        %v750 = vunpack.c.l.b16 %v732
        %v751 = vunpack.c.l.b16 %v733
        %v752 = vpack.c.b16 %v745, %v744
        %v753 = vpack.c.b16 %v747, %v746
        %v754 = vpack.c.b16 %v749, %v748
        %v755 = vpack.c.b16 %v751, %v750
        %v757 = vsel %vm540, %v752, 0
        %v760 = vsel %vm540, %v753, 0
        %v763 = vsel %vm540, %v754, 0
        %v766 = vsel %vm540, %v755, 0
        %v769 = vand.u32 %v735, %v556
        %771 = vmatprep.subr.bf16.mxu0 0
        %772 = vmatpush1.bf16.msra.mxu0 0
        %773 = vmatprep.subr.bf16.mxu0 0
        %774 = vmatpush1.bf16.msra.mxu0 0
        %775 = vmatprep.subr.bf16.mxu0 0
        %776 = vmatpush1.bf16.msra.mxu0 0
        %777 = vmatprep.subr.bf16.mxu0 0
        %778 = vmatpush1.bf16.msra.mxu0 0
        %779 = vmatprep.subr.bf16.mxu0 0
        %780 = vmatpush1.bf16.msra.mxu0 0
        %781 = vmatprep.subr.bf16.mxu0 0
        %782 = vmatpush1.bf16.msra.mxu0 0
        %783 = vmatprep.subr.bf16.mxu0 0
        %784 = vmatpush1.bf16.msra.mxu0 0
        %785 = vmatprep.subr.bf16.mxu0 0
        %786 = vmatpush1.bf16.msra.mxu0 %v769
        %787 = vmatprep.subr.bf16.mxu0 0
        %788 = vmatpush2.bf16.msra.mxu0 0
        %789 = vmatprep.subr.bf16.mxu0 0
        %790 = vmatpush2.bf16.msra.mxu0 0
        %791 = vmatprep.subr.bf16.mxu0 0
        %792 = vmatpush2.bf16.msra.mxu0 0
        %793 = vmatprep.subr.bf16.mxu0 0
        %794 = vmatpush2.bf16.msra.mxu0 0
        %795 = vmatprep.subr.bf16.mxu0 0
        %796 = vmatpush2.bf16.msra.mxu0 0
        %797 = vmatprep.subr.bf16.mxu0 0
        %798 = vmatpush2.bf16.msra.mxu0 0
        %799 = vmatprep.subr.bf16.mxu0 0
        %800 = vmatpush2.bf16.msra.mxu0 0
        %801 = vmatprep.subr.bf16.mxu0 0
        %802 = vmatpush2.bf16.msra.mxu0 0
        %803 = vmatprep.mubr.bf16.mxu0 0
        %804 = vmatmul.mubr.bf16.gmra.mxu0 %v757
        %v805 = vpop.f32.mrf.mxu0
        %v806 = vadd.f32 0.0, %v805
        %v807 = vpop.f32.mrf.mxu0
        %v808 = vpop.f32.mrf.mxu0
        %v809 = vadd.f32 0.0, %v808
        %v810 = vpop.f32.mrf.mxu0
        %811 = vmatprep.mubr.bf16.mxu0 0
        %812 = vmatmul.mubr.bf16.gmra.mxu0 %v760
        %v813 = vpop.f32.mrf.mxu0
        %v814 = vadd.f32 0.0, %v813
        %v815 = vpop.f32.mrf.mxu0
        %v816 = vpop.f32.mrf.mxu0
        %v817 = vadd.f32 0.0, %v816
        %v818 = vpop.f32.mrf.mxu0
        %819 = vmatprep.mubr.bf16.mxu0 0
        %820 = vmatmul.mubr.bf16.gmra.mxu0 %v763
        %v821 = vpop.f32.mrf.mxu0
        %v822 = vadd.f32 0.0, %v821
        %v823 = vpop.f32.mrf.mxu0
        %v824 = vpop.f32.mrf.mxu0
        %v825 = vadd.f32 0.0, %v824
        %v826 = vpop.f32.mrf.mxu0
        %827 = vmatprep.mubr.bf16.mxu0 0
        %828 = vmatmul.mubr.bf16.gmra.mxu0 %v766
        %v829 = vpop.f32.mrf.mxu0
        %v830 = vadd.f32 0.0, %v829
        %v831 = vpop.f32.mrf.mxu0
        %v832 = vpop.f32.mrf.mxu0
        %v833 = vadd.f32 0.0, %v832
        %v834 = vpop.f32.mrf.mxu0
        %835 = vdwg.mxu0
        %v836 = vadd.f32 %v695, %v806
        %v837 = vadd.f32 %v698, %v809
        %v838 = vadd.f32 %v703, %v814
        %v839 = vadd.f32 %v706, %v817
        %v840 = vadd.f32 %v711, %v822
        %v841 = vadd.f32 %v714, %v825
        %v842 = vadd.f32 %v719, %v830
        %v843 = vadd.f32 %v722, %v833
        %s844 = scalar_lea.vmem %s473, 96 [#allocation2]
        %v845 = vld [vmem:[%s844] sm:$0xf]
        %v846 = vld [vmem:[%s844 + $0x4] sm:$0xf]
        %v847 = vld [vmem:[%s844 + $0x8] sm:$0xf]
        %v848 = vld [vmem:[%s844 + $0xc] sm:$0xf]
        %v849 = vld [vmem:[%s844 + $0x10] sm:$0xf]
        %v850 = vld [vmem:[%s844 + $0x14] sm:$0xf]
        %v851 = vld [vmem:[%s844 + $0x18] sm:$0xf]
        %v852 = vld [vmem:[%s844 + $0x1c] sm:$0xf]
        %s853 = scalar_lea.vmem %s1, 6
        %v854 = vld [vmem:[%s853] sm:$0x3]
        %v863 = vunpack.c.l.b16 %v845
        %v864 = vunpack.c.l.b16 %v846
        %v865 = vunpack.c.l.b16 %v847
        %v866 = vunpack.c.l.b16 %v848
        %v867 = vunpack.c.l.b16 %v849
        %v868 = vunpack.c.l.b16 %v850
        %v869 = vunpack.c.l.b16 %v851
        %v870 = vunpack.c.l.b16 %v852
        %v871 = vpack.c.b16 %v864, %v863
        %v872 = vpack.c.b16 %v866, %v865
        %v873 = vpack.c.b16 %v868, %v867
        %v874 = vpack.c.b16 %v870, %v869
        %v876 = vsel %vm540, %v871, 0
        %v879 = vsel %vm540, %v872, 0
        %v882 = vsel %vm540, %v873, 0
        %v885 = vsel %vm540, %v874, 0
        %v888 = vand.u32 %v854, %v556
        %890 = vmatprep.subr.bf16.mxu0 0
        %891 = vmatpush1.bf16.msra.mxu0 0
        %892 = vmatprep.subr.bf16.mxu0 0
        %893 = vmatpush1.bf16.msra.mxu0 0
        %894 = vmatprep.subr.bf16.mxu0 0
        %895 = vmatpush1.bf16.msra.mxu0 0
        %896 = vmatprep.subr.bf16.mxu0 0
        %897 = vmatpush1.bf16.msra.mxu0 0
        %898 = vmatprep.subr.bf16.mxu0 0
        %899 = vmatpush1.bf16.msra.mxu0 0
        %900 = vmatprep.subr.bf16.mxu0 0
        %901 = vmatpush1.bf16.msra.mxu0 0
        %902 = vmatprep.subr.bf16.mxu0 0
        %903 = vmatpush1.bf16.msra.mxu0 0
        %904 = vmatprep.subr.bf16.mxu0 0
        %905 = vmatpush1.bf16.msra.mxu0 %v888
        %906 = vmatprep.subr.bf16.mxu0 0
        %907 = vmatpush2.bf16.msra.mxu0 0
        %908 = vmatprep.subr.bf16.mxu0 0
        %909 = vmatpush2.bf16.msra.mxu0 0
        %910 = vmatprep.subr.bf16.mxu0 0
        %911 = vmatpush2.bf16.msra.mxu0 0
        %912 = vmatprep.subr.bf16.mxu0 0
        %913 = vmatpush2.bf16.msra.mxu0 0
        %914 = vmatprep.subr.bf16.mxu0 0
        %915 = vmatpush2.bf16.msra.mxu0 0
        %916 = vmatprep.subr.bf16.mxu0 0
        %917 = vmatpush2.bf16.msra.mxu0 0
        %918 = vmatprep.subr.bf16.mxu0 0
        %919 = vmatpush2.bf16.msra.mxu0 0
        %920 = vmatprep.subr.bf16.mxu0 0
        %921 = vmatpush2.bf16.msra.mxu0 0
        %922 = vmatprep.mubr.bf16.mxu0 0
        %923 = vmatmul.mubr.bf16.gmra.mxu0 %v876
        %v924 = vpop.f32.mrf.mxu0
        %v925 = vadd.f32 0.0, %v924
        %v926 = vpop.f32.mrf.mxu0
        %v927 = vpop.f32.mrf.mxu0
        %v928 = vadd.f32 0.0, %v927
        %v929 = vpop.f32.mrf.mxu0
        %930 = vmatprep.mubr.bf16.mxu0 0
        %931 = vmatmul.mubr.bf16.gmra.mxu0 %v879
        %v932 = vpop.f32.mrf.mxu0
        %v933 = vadd.f32 0.0, %v932
        %v934 = vpop.f32.mrf.mxu0
        %v935 = vpop.f32.mrf.mxu0
        %v936 = vadd.f32 0.0, %v935
        %v937 = vpop.f32.mrf.mxu0
        %938 = vmatprep.mubr.bf16.mxu0 0
        %939 = vmatmul.mubr.bf16.gmra.mxu0 %v882
        %v940 = vpop.f32.mrf.mxu0
        %v941 = vadd.f32 0.0, %v940
        %v942 = vpop.f32.mrf.mxu0
        %v943 = vpop.f32.mrf.mxu0
        %v944 = vadd.f32 0.0, %v943
        %v945 = vpop.f32.mrf.mxu0
        %946 = vmatprep.mubr.bf16.mxu0 0
        %947 = vmatmul.mubr.bf16.gmra.mxu0 %v885
        %v948 = vpop.f32.mrf.mxu0
        %v949 = vadd.f32 0.0, %v948
        %v950 = vpop.f32.mrf.mxu0
        %v951 = vpop.f32.mrf.mxu0
        %v952 = vadd.f32 0.0, %v951
        %v953 = vpop.f32.mrf.mxu0
        %954 = vdwg.mxu0
        %v955 = vadd.f32 %v836, %v925
        %v956 = vadd.f32 %v837, %v928
        %v957 = vadd.f32 %v838, %v933
        %v958 = vadd.f32 %v839, %v936
        %v959 = vadd.f32 %v840, %v941
        %v960 = vadd.f32 %v841, %v944
        %v961 = vadd.f32 %v842, %v949
        %v962 = vadd.f32 %v843, %v952
        %s963 = scalar_lea.vmem %s473, 128 [#allocation2]
        %v964 = vld [vmem:[%s963] sm:$0xf]
        %v965 = vld [vmem:[%s963 + $0x4] sm:$0xf]
        %v966 = vld [vmem:[%s963 + $0x8] sm:$0xf]
        %v967 = vld [vmem:[%s963 + $0xc] sm:$0xf]
        %v968 = vld [vmem:[%s963 + $0x10] sm:$0xf]
        %v969 = vld [vmem:[%s963 + $0x14] sm:$0xf]
        %v970 = vld [vmem:[%s963 + $0x18] sm:$0xf]
        %v971 = vld [vmem:[%s963 + $0x1c] sm:$0xf]
        %s972 = scalar_lea.vmem %s1, 8
        %v973 = vld [vmem:[%s972] sm:$0x3]
        %v982 = vunpack.c.l.b16 %v964
        %v983 = vunpack.c.l.b16 %v965
        %v984 = vunpack.c.l.b16 %v966
        %v985 = vunpack.c.l.b16 %v967
        %v986 = vunpack.c.l.b16 %v968
        %v987 = vunpack.c.l.b16 %v969
        %v988 = vunpack.c.l.b16 %v970
        %v989 = vunpack.c.l.b16 %v971
        %v990 = vpack.c.b16 %v983, %v982
        %v991 = vpack.c.b16 %v985, %v984
        %v992 = vpack.c.b16 %v987, %v986
        %v993 = vpack.c.b16 %v989, %v988
        %v995 = vsel %vm540, %v990, 0
        %v998 = vsel %vm540, %v991, 0
        %v1001 = vsel %vm540, %v992, 0
        %v1004 = vsel %vm540, %v993, 0
        %v1007 = vand.u32 %v973, %v556
        %1009 = vmatprep.subr.bf16.mxu0 0
        %1010 = vmatpush1.bf16.msra.mxu0 0
        %1011 = vmatprep.subr.bf16.mxu0 0
        %1012 = vmatpush1.bf16.msra.mxu0 0
        %1013 = vmatprep.subr.bf16.mxu0 0
        %1014 = vmatpush1.bf16.msra.mxu0 0
        %1015 = vmatprep.subr.bf16.mxu0 0
        %1016 = vmatpush1.bf16.msra.mxu0 0
        %1017 = vmatprep.subr.bf16.mxu0 0
        %1018 = vmatpush1.bf16.msra.mxu0 0
        %1019 = vmatprep.subr.bf16.mxu0 0
        %1020 = vmatpush1.bf16.msra.mxu0 0
        %1021 = vmatprep.subr.bf16.mxu0 0
        %1022 = vmatpush1.bf16.msra.mxu0 0
        %1023 = vmatprep.subr.bf16.mxu0 0
        %1024 = vmatpush1.bf16.msra.mxu0 %v1007
        %1025 = vmatprep.subr.bf16.mxu0 0
        %1026 = vmatpush2.bf16.msra.mxu0 0
        %1027 = vmatprep.subr.bf16.mxu0 0
        %1028 = vmatpush2.bf16.msra.mxu0 0
        %1029 = vmatprep.subr.bf16.mxu0 0
        %1030 = vmatpush2.bf16.msra.mxu0 0
        %1031 = vmatprep.subr.bf16.mxu0 0
        %1032 = vmatpush2.bf16.msra.mxu0 0
        %1033 = vmatprep.subr.bf16.mxu0 0
        %1034 = vmatpush2.bf16.msra.mxu0 0
        %1035 = vmatprep.subr.bf16.mxu0 0
        %1036 = vmatpush2.bf16.msra.mxu0 0
        %1037 = vmatprep.subr.bf16.mxu0 0
        %1038 = vmatpush2.bf16.msra.mxu0 0
        %1039 = vmatprep.subr.bf16.mxu0 0
        %1040 = vmatpush2.bf16.msra.mxu0 0
        %1041 = vmatprep.mubr.bf16.mxu0 0
        %1042 = vmatmul.mubr.bf16.gmra.mxu0 %v995
        %v1043 = vpop.f32.mrf.mxu0
        %v1044 = vadd.f32 0.0, %v1043
        %v1045 = vpop.f32.mrf.mxu0
        %v1046 = vpop.f32.mrf.mxu0
        %v1047 = vadd.f32 0.0, %v1046
        %v1048 = vpop.f32.mrf.mxu0
        %1049 = vmatprep.mubr.bf16.mxu0 0
        %1050 = vmatmul.mubr.bf16.gmra.mxu0 %v998
        %v1051 = vpop.f32.mrf.mxu0
        %v1052 = vadd.f32 0.0, %v1051
        %v1053 = vpop.f32.mrf.mxu0
        %v1054 = vpop.f32.mrf.mxu0
        %v1055 = vadd.f32 0.0, %v1054
        %v1056 = vpop.f32.mrf.mxu0
        %1057 = vmatprep.mubr.bf16.mxu0 0
        %1058 = vmatmul.mubr.bf16.gmra.mxu0 %v1001
        %v1059 = vpop.f32.mrf.mxu0
        %v1060 = vadd.f32 0.0, %v1059
        %v1061 = vpop.f32.mrf.mxu0
        %v1062 = vpop.f32.mrf.mxu0
        %v1063 = vadd.f32 0.0, %v1062
        %v1064 = vpop.f32.mrf.mxu0
        %1065 = vmatprep.mubr.bf16.mxu0 0
        %1066 = vmatmul.mubr.bf16.gmra.mxu0 %v1004
        %v1067 = vpop.f32.mrf.mxu0
        %v1068 = vadd.f32 0.0, %v1067
        %v1069 = vpop.f32.mrf.mxu0
        %v1070 = vpop.f32.mrf.mxu0
        %v1071 = vadd.f32 0.0, %v1070
        %v1072 = vpop.f32.mrf.mxu0
        %1073 = vdwg.mxu0
        %v1074 = vadd.f32 %v955, %v1044
        %v1075 = vadd.f32 %v956, %v1047
        %v1076 = vadd.f32 %v957, %v1052
        %v1077 = vadd.f32 %v958, %v1055
        %v1078 = vadd.f32 %v959, %v1060
        %v1079 = vadd.f32 %v960, %v1063
        %v1080 = vadd.f32 %v961, %v1068
        %v1081 = vadd.f32 %v962, %v1071
        %s1082 = scalar_lea.vmem %s473, 160 [#allocation2]
        %v1083 = vld [vmem:[%s1082] sm:$0xf]
        %v1084 = vld [vmem:[%s1082 + $0x4] sm:$0xf]
        %v1085 = vld [vmem:[%s1082 + $0x8] sm:$0xf]
        %v1086 = vld [vmem:[%s1082 + $0xc] sm:$0xf]
        %v1087 = vld [vmem:[%s1082 + $0x10] sm:$0xf]
        %v1088 = vld [vmem:[%s1082 + $0x14] sm:$0xf]
        %v1089 = vld [vmem:[%s1082 + $0x18] sm:$0xf]
        %v1090 = vld [vmem:[%s1082 + $0x1c] sm:$0xf]
        %s1091 = scalar_lea.vmem %s1, 10
        %v1092 = vld [vmem:[%s1091] sm:$0x3]
        %v1101 = vunpack.c.l.b16 %v1083
        %v1102 = vunpack.c.l.b16 %v1084
        %v1103 = vunpack.c.l.b16 %v1085
        %v1104 = vunpack.c.l.b16 %v1086
        %v1105 = vunpack.c.l.b16 %v1087
        %v1106 = vunpack.c.l.b16 %v1088
        %v1107 = vunpack.c.l.b16 %v1089
        %v1108 = vunpack.c.l.b16 %v1090
        %v1109 = vpack.c.b16 %v1102, %v1101
        %v1110 = vpack.c.b16 %v1104, %v1103
        %v1111 = vpack.c.b16 %v1106, %v1105
        %v1112 = vpack.c.b16 %v1108, %v1107
        %v1114 = vsel %vm540, %v1109, 0
        %v1117 = vsel %vm540, %v1110, 0
        %v1120 = vsel %vm540, %v1111, 0
        %v1123 = vsel %vm540, %v1112, 0
        %v1126 = vand.u32 %v1092, %v556
        %1128 = vmatprep.subr.bf16.mxu0 0
        %1129 = vmatpush1.bf16.msra.mxu0 0
        %1130 = vmatprep.subr.bf16.mxu0 0
        %1131 = vmatpush1.bf16.msra.mxu0 0
        %1132 = vmatprep.subr.bf16.mxu0 0
        %1133 = vmatpush1.bf16.msra.mxu0 0
        %1134 = vmatprep.subr.bf16.mxu0 0
        %1135 = vmatpush1.bf16.msra.mxu0 0
        %1136 = vmatprep.subr.bf16.mxu0 0
        %1137 = vmatpush1.bf16.msra.mxu0 0
        %1138 = vmatprep.subr.bf16.mxu0 0
        %1139 = vmatpush1.bf16.msra.mxu0 0
        %1140 = vmatprep.subr.bf16.mxu0 0
        %1141 = vmatpush1.bf16.msra.mxu0 0
        %1142 = vmatprep.subr.bf16.mxu0 0
        %1143 = vmatpush1.bf16.msra.mxu0 %v1126
        %1144 = vmatprep.subr.bf16.mxu0 0
        %1145 = vmatpush2.bf16.msra.mxu0 0
        %1146 = vmatprep.subr.bf16.mxu0 0
        %1147 = vmatpush2.bf16.msra.mxu0 0
        %1148 = vmatprep.subr.bf16.mxu0 0
        %1149 = vmatpush2.bf16.msra.mxu0 0
        %1150 = vmatprep.subr.bf16.mxu0 0
        %1151 = vmatpush2.bf16.msra.mxu0 0
        %1152 = vmatprep.subr.bf16.mxu0 0
        %1153 = vmatpush2.bf16.msra.mxu0 0
        %1154 = vmatprep.subr.bf16.mxu0 0
        %1155 = vmatpush2.bf16.msra.mxu0 0
        %1156 = vmatprep.subr.bf16.mxu0 0
        %1157 = vmatpush2.bf16.msra.mxu0 0
        %1158 = vmatprep.subr.bf16.mxu0 0
        %1159 = vmatpush2.bf16.msra.mxu0 0
        %1160 = vmatprep.mubr.bf16.mxu0 0
        %1161 = vmatmul.mubr.bf16.gmra.mxu0 %v1114
        %v1162 = vpop.f32.mrf.mxu0
        %v1163 = vadd.f32 0.0, %v1162
        %v1164 = vpop.f32.mrf.mxu0
        %v1165 = vpop.f32.mrf.mxu0
        %v1166 = vadd.f32 0.0, %v1165
        %v1167 = vpop.f32.mrf.mxu0
        %1168 = vmatprep.mubr.bf16.mxu0 0
        %1169 = vmatmul.mubr.bf16.gmra.mxu0 %v1117
        %v1170 = vpop.f32.mrf.mxu0
        %v1171 = vadd.f32 0.0, %v1170
        %v1172 = vpop.f32.mrf.mxu0
        %v1173 = vpop.f32.mrf.mxu0
        %v1174 = vadd.f32 0.0, %v1173
        %v1175 = vpop.f32.mrf.mxu0
        %1176 = vmatprep.mubr.bf16.mxu0 0
        %1177 = vmatmul.mubr.bf16.gmra.mxu0 %v1120
        %v1178 = vpop.f32.mrf.mxu0
        %v1179 = vadd.f32 0.0, %v1178
        %v1180 = vpop.f32.mrf.mxu0
        %v1181 = vpop.f32.mrf.mxu0
        %v1182 = vadd.f32 0.0, %v1181
        %v1183 = vpop.f32.mrf.mxu0
        %1184 = vmatprep.mubr.bf16.mxu0 0
        %1185 = vmatmul.mubr.bf16.gmra.mxu0 %v1123
        %v1186 = vpop.f32.mrf.mxu0
        %v1187 = vadd.f32 0.0, %v1186
        %v1188 = vpop.f32.mrf.mxu0
        %v1189 = vpop.f32.mrf.mxu0
        %v1190 = vadd.f32 0.0, %v1189
        %v1191 = vpop.f32.mrf.mxu0
        %1192 = vdwg.mxu0
        %v1193 = vadd.f32 %v1074, %v1163
        %v1194 = vadd.f32 %v1075, %v1166
        %v1195 = vadd.f32 %v1076, %v1171
        %v1196 = vadd.f32 %v1077, %v1174
        %v1197 = vadd.f32 %v1078, %v1179
        %v1198 = vadd.f32 %v1079, %v1182
        %v1199 = vadd.f32 %v1080, %v1187
        %v1200 = vadd.f32 %v1081, %v1190
        %s1201 = scalar_lea.vmem %s473, 192 [#allocation2]
        %v1202 = vld [vmem:[%s1201] sm:$0xf]
        %v1203 = vld [vmem:[%s1201 + $0x4] sm:$0xf]
        %v1204 = vld [vmem:[%s1201 + $0x8] sm:$0xf]
        %v1205 = vld [vmem:[%s1201 + $0xc] sm:$0xf]
        %v1206 = vld [vmem:[%s1201 + $0x10] sm:$0xf]
        %v1207 = vld [vmem:[%s1201 + $0x14] sm:$0xf]
        %v1208 = vld [vmem:[%s1201 + $0x18] sm:$0xf]
        %v1209 = vld [vmem:[%s1201 + $0x1c] sm:$0xf]
        %s1210 = scalar_lea.vmem %s1, 12
        %v1211 = vld [vmem:[%s1210] sm:$0x3]
        %v1220 = vunpack.c.l.b16 %v1202
        %v1221 = vunpack.c.l.b16 %v1203
        %v1222 = vunpack.c.l.b16 %v1204
        %v1223 = vunpack.c.l.b16 %v1205
        %v1224 = vunpack.c.l.b16 %v1206
        %v1225 = vunpack.c.l.b16 %v1207
        %v1226 = vunpack.c.l.b16 %v1208
        %v1227 = vunpack.c.l.b16 %v1209
        %v1228 = vpack.c.b16 %v1221, %v1220
        %v1229 = vpack.c.b16 %v1223, %v1222
        %v1230 = vpack.c.b16 %v1225, %v1224
        %v1231 = vpack.c.b16 %v1227, %v1226
        %v1233 = vsel %vm540, %v1228, 0
        %v1236 = vsel %vm540, %v1229, 0
        %v1239 = vsel %vm540, %v1230, 0
        %v1242 = vsel %vm540, %v1231, 0
        %v1245 = vand.u32 %v1211, %v556
        %1247 = vmatprep.subr.bf16.mxu0 0
        %1248 = vmatpush1.bf16.msra.mxu0 0
        %1249 = vmatprep.subr.bf16.mxu0 0
        %1250 = vmatpush1.bf16.msra.mxu0 0
        %1251 = vmatprep.subr.bf16.mxu0 0
        %1252 = vmatpush1.bf16.msra.mxu0 0
        %1253 = vmatprep.subr.bf16.mxu0 0
        %1254 = vmatpush1.bf16.msra.mxu0 0
        %1255 = vmatprep.subr.bf16.mxu0 0
        %1256 = vmatpush1.bf16.msra.mxu0 0
        %1257 = vmatprep.subr.bf16.mxu0 0
        %1258 = vmatpush1.bf16.msra.mxu0 0
        %1259 = vmatprep.subr.bf16.mxu0 0
        %1260 = vmatpush1.bf16.msra.mxu0 0
        %1261 = vmatprep.subr.bf16.mxu0 0
        %1262 = vmatpush1.bf16.msra.mxu0 %v1245
        %1263 = vmatprep.subr.bf16.mxu0 0
        %1264 = vmatpush2.bf16.msra.mxu0 0
        %1265 = vmatprep.subr.bf16.mxu0 0
        %1266 = vmatpush2.bf16.msra.mxu0 0
        %1267 = vmatprep.subr.bf16.mxu0 0
        %1268 = vmatpush2.bf16.msra.mxu0 0
        %1269 = vmatprep.subr.bf16.mxu0 0
        %1270 = vmatpush2.bf16.msra.mxu0 0
        %1271 = vmatprep.subr.bf16.mxu0 0
        %1272 = vmatpush2.bf16.msra.mxu0 0
        %1273 = vmatprep.subr.bf16.mxu0 0
        %1274 = vmatpush2.bf16.msra.mxu0 0
        %1275 = vmatprep.subr.bf16.mxu0 0
        %1276 = vmatpush2.bf16.msra.mxu0 0
        %1277 = vmatprep.subr.bf16.mxu0 0
        %1278 = vmatpush2.bf16.msra.mxu0 0
        %1279 = vmatprep.mubr.bf16.mxu0 0
        %1280 = vmatmul.mubr.bf16.gmra.mxu0 %v1233
        %v1281 = vpop.f32.mrf.mxu0
        %v1282 = vadd.f32 0.0, %v1281
        %v1283 = vpop.f32.mrf.mxu0
        %v1284 = vpop.f32.mrf.mxu0
        %v1285 = vadd.f32 0.0, %v1284
        %v1286 = vpop.f32.mrf.mxu0
        %1287 = vmatprep.mubr.bf16.mxu0 0
        %1288 = vmatmul.mubr.bf16.gmra.mxu0 %v1236
        %v1289 = vpop.f32.mrf.mxu0
        %v1290 = vadd.f32 0.0, %v1289
        %v1291 = vpop.f32.mrf.mxu0
        %v1292 = vpop.f32.mrf.mxu0
        %v1293 = vadd.f32 0.0, %v1292
        %v1294 = vpop.f32.mrf.mxu0
        %1295 = vmatprep.mubr.bf16.mxu0 0
        %1296 = vmatmul.mubr.bf16.gmra.mxu0 %v1239
        %v1297 = vpop.f32.mrf.mxu0
        %v1298 = vadd.f32 0.0, %v1297
        %v1299 = vpop.f32.mrf.mxu0
        %v1300 = vpop.f32.mrf.mxu0
        %v1301 = vadd.f32 0.0, %v1300
        %v1302 = vpop.f32.mrf.mxu0
        %1303 = vmatprep.mubr.bf16.mxu0 0
        %1304 = vmatmul.mubr.bf16.gmra.mxu0 %v1242
        %v1305 = vpop.f32.mrf.mxu0
        %v1306 = vadd.f32 0.0, %v1305
        %v1307 = vpop.f32.mrf.mxu0
        %v1308 = vpop.f32.mrf.mxu0
        %v1309 = vadd.f32 0.0, %v1308
        %v1310 = vpop.f32.mrf.mxu0
        %1311 = vdwg.mxu0
        %v1312 = vadd.f32 %v1193, %v1282
        %v1313 = vadd.f32 %v1194, %v1285
        %v1314 = vadd.f32 %v1195, %v1290
        %v1315 = vadd.f32 %v1196, %v1293
        %v1316 = vadd.f32 %v1197, %v1298
        %v1317 = vadd.f32 %v1198, %v1301
        %v1318 = vadd.f32 %v1199, %v1306
        %v1319 = vadd.f32 %v1200, %v1309
        %s1320 = scalar_lea.vmem %s473, 224 [#allocation2]
        %v1321 = vld [vmem:[%s1320] sm:$0xf]
        %v1322 = vld [vmem:[%s1320 + $0x4] sm:$0xf]
        %v1323 = vld [vmem:[%s1320 + $0x8] sm:$0xf]
        %v1324 = vld [vmem:[%s1320 + $0xc] sm:$0xf]
        %v1325 = vld [vmem:[%s1320 + $0x10] sm:$0xf]
        %v1326 = vld [vmem:[%s1320 + $0x14] sm:$0xf]
        %v1327 = vld [vmem:[%s1320 + $0x18] sm:$0xf]
        %v1328 = vld [vmem:[%s1320 + $0x1c] sm:$0xf]
        %s1329 = scalar_lea.vmem %s1, 14
        %v1330 = vld [vmem:[%s1329] sm:$0x3]
        %v1339 = vunpack.c.l.b16 %v1321
        %v1340 = vunpack.c.l.b16 %v1322
        %v1341 = vunpack.c.l.b16 %v1323
        %v1342 = vunpack.c.l.b16 %v1324
        %v1343 = vunpack.c.l.b16 %v1325
        %v1344 = vunpack.c.l.b16 %v1326
        %v1345 = vunpack.c.l.b16 %v1327
        %v1346 = vunpack.c.l.b16 %v1328
        %v1347 = vpack.c.b16 %v1340, %v1339
        %v1348 = vpack.c.b16 %v1342, %v1341
        %v1349 = vpack.c.b16 %v1344, %v1343
        %v1350 = vpack.c.b16 %v1346, %v1345
        %v1352 = vsel %vm540, %v1347, 0
        %v1355 = vsel %vm540, %v1348, 0
        %v1358 = vsel %vm540, %v1349, 0
        %v1361 = vsel %vm540, %v1350, 0
        %v1364 = vand.u32 %v1330, %v556
        %1366 = vmatprep.subr.bf16.mxu0 0
        %1367 = vmatpush1.bf16.msra.mxu0 0
        %1368 = vmatprep.subr.bf16.mxu0 0
        %1369 = vmatpush1.bf16.msra.mxu0 0
        %1370 = vmatprep.subr.bf16.mxu0 0
        %1371 = vmatpush1.bf16.msra.mxu0 0
        %1372 = vmatprep.subr.bf16.mxu0 0
        %1373 = vmatpush1.bf16.msra.mxu0 0
        %1374 = vmatprep.subr.bf16.mxu0 0
        %1375 = vmatpush1.bf16.msra.mxu0 0
        %1376 = vmatprep.subr.bf16.mxu0 0
        %1377 = vmatpush1.bf16.msra.mxu0 0
        %1378 = vmatprep.subr.bf16.mxu0 0
        %1379 = vmatpush1.bf16.msra.mxu0 0
        %1380 = vmatprep.subr.bf16.mxu0 0
        %1381 = vmatpush1.bf16.msra.mxu0 %v1364
        %1382 = vmatprep.subr.bf16.mxu0 0
        %1383 = vmatpush2.bf16.msra.mxu0 0
        %1384 = vmatprep.subr.bf16.mxu0 0
        %1385 = vmatpush2.bf16.msra.mxu0 0
        %1386 = vmatprep.subr.bf16.mxu0 0
        %1387 = vmatpush2.bf16.msra.mxu0 0
        %1388 = vmatprep.subr.bf16.mxu0 0
        %1389 = vmatpush2.bf16.msra.mxu0 0
        %1390 = vmatprep.subr.bf16.mxu0 0
        %1391 = vmatpush2.bf16.msra.mxu0 0
        %1392 = vmatprep.subr.bf16.mxu0 0
        %1393 = vmatpush2.bf16.msra.mxu0 0
        %1394 = vmatprep.subr.bf16.mxu0 0
        %1395 = vmatpush2.bf16.msra.mxu0 0
        %1396 = vmatprep.subr.bf16.mxu0 0
        %1397 = vmatpush2.bf16.msra.mxu0 0
        %1398 = vmatprep.mubr.bf16.mxu0 0
        %1399 = vmatmul.mubr.bf16.gmra.mxu0 %v1352
        %v1400 = vpop.f32.mrf.mxu0
        %v1401 = vadd.f32 0.0, %v1400
        %v1402 = vpop.f32.mrf.mxu0
        %v1403 = vpop.f32.mrf.mxu0
        %v1404 = vadd.f32 0.0, %v1403
        %v1405 = vpop.f32.mrf.mxu0
        %1406 = vmatprep.mubr.bf16.mxu0 0
        %1407 = vmatmul.mubr.bf16.gmra.mxu0 %v1355
        %v1408 = vpop.f32.mrf.mxu0
        %v1409 = vadd.f32 0.0, %v1408
        %v1410 = vpop.f32.mrf.mxu0
        %v1411 = vpop.f32.mrf.mxu0
        %v1412 = vadd.f32 0.0, %v1411
        %v1413 = vpop.f32.mrf.mxu0
        %1414 = vmatprep.mubr.bf16.mxu0 0
        %1415 = vmatmul.mubr.bf16.gmra.mxu0 %v1358
        %v1416 = vpop.f32.mrf.mxu0
        %v1417 = vadd.f32 0.0, %v1416
        %v1418 = vpop.f32.mrf.mxu0
        %v1419 = vpop.f32.mrf.mxu0
        %v1420 = vadd.f32 0.0, %v1419
        %v1421 = vpop.f32.mrf.mxu0
        %1422 = vmatprep.mubr.bf16.mxu0 0
        %1423 = vmatmul.mubr.bf16.gmra.mxu0 %v1361
        %v1424 = vpop.f32.mrf.mxu0
        %v1425 = vadd.f32 0.0, %v1424
        %v1426 = vpop.f32.mrf.mxu0
        %v1427 = vpop.f32.mrf.mxu0
        %v1428 = vadd.f32 0.0, %v1427
        %v1429 = vpop.f32.mrf.mxu0
        %1430 = vdwg.mxu0
        %v1431 = vadd.f32 %v1312, %v1401
        %v1432 = vadd.f32 %v1313, %v1404
        %v1433 = vadd.f32 %v1314, %v1409
        %v1434 = vadd.f32 %v1315, %v1412
        %v1435 = vadd.f32 %v1316, %v1417
        %v1436 = vadd.f32 %v1317, %v1420
        %v1437 = vadd.f32 %v1318, %v1425
        %v1438 = vadd.f32 %v1319, %v1428
        %s1439 = scalar_lea.vmem %s473, 256 [#allocation2]
        %v1440 = vld [vmem:[%s1439] sm:$0xf]
        %v1441 = vld [vmem:[%s1439 + $0x4] sm:$0xf]
        %v1442 = vld [vmem:[%s1439 + $0x8] sm:$0xf]
        %v1443 = vld [vmem:[%s1439 + $0xc] sm:$0xf]
        %v1444 = vld [vmem:[%s1439 + $0x10] sm:$0xf]
        %v1445 = vld [vmem:[%s1439 + $0x14] sm:$0xf]
        %v1446 = vld [vmem:[%s1439 + $0x18] sm:$0xf]
        %v1447 = vld [vmem:[%s1439 + $0x1c] sm:$0xf]
        %s1448 = scalar_lea.vmem %s1, 16
        %v1449 = vld [vmem:[%s1448] sm:$0x3]
        %v1458 = vunpack.c.l.b16 %v1440
        %v1459 = vunpack.c.l.b16 %v1441
        %v1460 = vunpack.c.l.b16 %v1442
        %v1461 = vunpack.c.l.b16 %v1443
        %v1462 = vunpack.c.l.b16 %v1444
        %v1463 = vunpack.c.l.b16 %v1445
        %v1464 = vunpack.c.l.b16 %v1446
        %v1465 = vunpack.c.l.b16 %v1447
        %v1466 = vpack.c.b16 %v1459, %v1458
        %v1467 = vpack.c.b16 %v1461, %v1460
        %v1468 = vpack.c.b16 %v1463, %v1462
        %v1469 = vpack.c.b16 %v1465, %v1464
        %v1471 = vsel %vm540, %v1466, 0
        %v1474 = vsel %vm540, %v1467, 0
        %v1477 = vsel %vm540, %v1468, 0
        %v1480 = vsel %vm540, %v1469, 0
        %v1483 = vand.u32 %v1449, %v556
        %1485 = vmatprep.subr.bf16.mxu0 0
        %1486 = vmatpush1.bf16.msra.mxu0 0
        %1487 = vmatprep.subr.bf16.mxu0 0
        %1488 = vmatpush1.bf16.msra.mxu0 0
        %1489 = vmatprep.subr.bf16.mxu0 0
        %1490 = vmatpush1.bf16.msra.mxu0 0
        %1491 = vmatprep.subr.bf16.mxu0 0
        %1492 = vmatpush1.bf16.msra.mxu0 0
        %1493 = vmatprep.subr.bf16.mxu0 0
        %1494 = vmatpush1.bf16.msra.mxu0 0
        %1495 = vmatprep.subr.bf16.mxu0 0
        %1496 = vmatpush1.bf16.msra.mxu0 0
        %1497 = vmatprep.subr.bf16.mxu0 0
        %1498 = vmatpush1.bf16.msra.mxu0 0
        %1499 = vmatprep.subr.bf16.mxu0 0
        %1500 = vmatpush1.bf16.msra.mxu0 %v1483
        %1501 = vmatprep.subr.bf16.mxu0 0
        %1502 = vmatpush2.bf16.msra.mxu0 0
        %1503 = vmatprep.subr.bf16.mxu0 0
        %1504 = vmatpush2.bf16.msra.mxu0 0
        %1505 = vmatprep.subr.bf16.mxu0 0
        %1506 = vmatpush2.bf16.msra.mxu0 0
        %1507 = vmatprep.subr.bf16.mxu0 0
        %1508 = vmatpush2.bf16.msra.mxu0 0
        %1509 = vmatprep.subr.bf16.mxu0 0
        %1510 = vmatpush2.bf16.msra.mxu0 0
        %1511 = vmatprep.subr.bf16.mxu0 0
        %1512 = vmatpush2.bf16.msra.mxu0 0
        %1513 = vmatprep.subr.bf16.mxu0 0
        %1514 = vmatpush2.bf16.msra.mxu0 0
        %1515 = vmatprep.subr.bf16.mxu0 0
        %1516 = vmatpush2.bf16.msra.mxu0 0
        %1517 = vmatprep.mubr.bf16.mxu0 0
        %1518 = vmatmul.mubr.bf16.gmra.mxu0 %v1471
        %v1519 = vpop.f32.mrf.mxu0
        %v1520 = vadd.f32 0.0, %v1519
        %v1521 = vpop.f32.mrf.mxu0
        %v1522 = vpop.f32.mrf.mxu0
        %v1523 = vadd.f32 0.0, %v1522
        %v1524 = vpop.f32.mrf.mxu0
        %1525 = vmatprep.mubr.bf16.mxu0 0
        %1526 = vmatmul.mubr.bf16.gmra.mxu0 %v1474
        %v1527 = vpop.f32.mrf.mxu0
        %v1528 = vadd.f32 0.0, %v1527
        %v1529 = vpop.f32.mrf.mxu0
        %v1530 = vpop.f32.mrf.mxu0
        %v1531 = vadd.f32 0.0, %v1530
        %v1532 = vpop.f32.mrf.mxu0
        %1533 = vmatprep.mubr.bf16.mxu0 0
        %1534 = vmatmul.mubr.bf16.gmra.mxu0 %v1477
        %v1535 = vpop.f32.mrf.mxu0
        %v1536 = vadd.f32 0.0, %v1535
        %v1537 = vpop.f32.mrf.mxu0
        %v1538 = vpop.f32.mrf.mxu0
        %v1539 = vadd.f32 0.0, %v1538
        %v1540 = vpop.f32.mrf.mxu0
        %1541 = vmatprep.mubr.bf16.mxu0 0
        %1542 = vmatmul.mubr.bf16.gmra.mxu0 %v1480
        %v1543 = vpop.f32.mrf.mxu0
        %v1544 = vadd.f32 0.0, %v1543
        %v1545 = vpop.f32.mrf.mxu0
        %v1546 = vpop.f32.mrf.mxu0
        %v1547 = vadd.f32 0.0, %v1546
        %v1548 = vpop.f32.mrf.mxu0
        %1549 = vdwg.mxu0
        %v1550 = vadd.f32 %v1431, %v1520
        %v1551 = vadd.f32 %v1432, %v1523
        %v1552 = vadd.f32 %v1433, %v1528
        %v1553 = vadd.f32 %v1434, %v1531
        %v1554 = vadd.f32 %v1435, %v1536
        %v1555 = vadd.f32 %v1436, %v1539
        %v1556 = vadd.f32 %v1437, %v1544
        %v1557 = vadd.f32 %v1438, %v1547
        %v1558 = vld [vmem:[%s2] sm:$0x1]
        %v1560 = vlaneseq
        %v1561 = vshrl.u32 %v1560, 7
        %v1562 = vsub.s32 0, %v1561
        %v1563 = vrot.slane %v1558, %v1562
        %v1565 = vadd.f32 %v1550, %v1563
        %v1566 = vadd.f32 %v1551, %v1563
        %v1567 = vadd.f32 %v1552, %v1563
        %v1568 = vadd.f32 %v1553, %v1563
        %v1569 = vadd.f32 %v1554, %v1563
        %v1570 = vadd.f32 %v1555, %v1563
        %v1571 = vadd.f32 %v1556, %v1563
        %v1572 = vadd.f32 %v1557, %v1563
        %v1573 = vmax.f32 %v1565, 0.0
        %v1574 = vmax.f32 %v1566, 0.0
        %v1575 = vmax.f32 %v1567, 0.0
        %v1576 = vmax.f32 %v1568, 0.0
        %v1577 = vmax.f32 %v1569, 0.0
        %v1578 = vmax.f32 %v1570, 0.0
        %v1579 = vmax.f32 %v1571, 0.0
        %v1580 = vmax.f32 %v1572, 0.0
        %v1581 = vpack.c.bf16 %v1574, %v1573
        %v1582 = vpack.c.bf16 %v1576, %v1575
        %v1583 = vpack.c.bf16 %v1578, %v1577
        %v1584 = vpack.c.bf16 %v1580, %v1579
        %v1589 = vunpack.c.l.b16 %v1581
        %v1590 = vunpack.c.h.b16 %v1581
        %v1591 = vunpack.c.l.b16 %v1582
        %v1592 = vunpack.c.h.b16 %v1582
        %v1593 = vunpack.c.l.b16 %v1583
        %v1594 = vunpack.c.h.b16 %v1583
        %v1595 = vunpack.c.l.b16 %v1584
        %v1596 = vunpack.c.h.b16 %v1584
        %v1597 = vpack.c.b16 %v1589, %v1589
        %v1598 = vpack.c.b16 %v1590, %v1590
        %v1599 = vpack.c.b16 %v1591, %v1591
        %v1600 = vpack.c.b16 %v1592, %v1592
        %v1601 = vpack.c.b16 %v1593, %v1593
        %v1602 = vpack.c.b16 %v1594, %v1594
        %v1603 = vpack.c.b16 %v1595, %v1595
        %v1604 = vpack.c.b16 %v1596, %v1596
        %vm1613 = vcmask 60416
        %1614 = vst.msk [vmem:[%s498] sm:$0xf] %vm1613, %v1597
        %1615 = vst.msk [vmem:[%s498 + $0x4] sm:$0xf] %vm1613, %v1598
        %1616 = vst.msk [vmem:[%s498 + $0x8] sm:$0xf] %vm1613, %v1599
        %1617 = vst.msk [vmem:[%s498 + $0xc] sm:$0xf] %vm1613, %v1600
        %1618 = vst.msk [vmem:[%s498 + $0x10] sm:$0xf] %vm1613, %v1601
        %1619 = vst.msk [vmem:[%s498 + $0x14] sm:$0xf] %vm1613, %v1602
        %1620 = vst.msk [vmem:[%s498 + $0x18] sm:$0xf] %vm1613, %v1603
        %1621 = vst.msk [vmem:[%s498 + $0x1c] sm:$0xf] %vm1613, %v1604
        %p1622 = scmp.lt.s32.totalorder %s14, 3
        %s1623 = scalar_select %p1622, %s14, 3
        %s1624 = smul.addr %s1623, 8
        %s1625 = smul.addr %s1624, 4
        %s1626 = scalar_lea.vmem %s3, %s1625
        // Predicated region
        $region74: #{a_call__.11} parent=68 // pred_check
          %p1627 = pneg %p100
        $region75: #{a_call__.11} parent=68 // pred_check_branch
          %1629 = sbr.rel (%p1627) target = $region77
        $region76: #{a_call__.11} parent=68 // pred_region
          _
        $region77: #{a_call__.11} parent=68 // pred_fallthru
          _
      $region69: #{a_call__.11} parent=5 // pred_fallthru
        _
      %p1630 = scmp.le.s32.totalorder 2, %s9
      // Predicated region
      $region78: #{a_call__.11} parent=5 // pred_check
        %p1631 = pneg %p1630
      $region79: #{a_call__.11} parent=5 // pred_check_branch
        %1633 = sbr.rel (%p1631) target = $region81
      $region80: #{a_call__.11} parent=5 // pred_region
        %s1634 = ssub.s32 %s9, 2
        // Predicated region
        $region82: #{a_call__.11} parent=80 // pred_check
          %p1635 = pneg %p106
        $region83: #{a_call__.11} parent=80 // pred_check_branch
          %1637 = sbr.rel (%p1635) target = $region85
        $region84: #{a_call__.11} parent=80 // pred_region
          %p1638 = scmp.lt.s32.totalorder %s15, 3
          %s1639 = scalar_select %p1638, %s15, 3
          %s1640 = smul.addr %s1639, 8
          %s1641 = smul.addr %s1640, 4
          %s1642 = scalar_lea.vmem %s3, %s1641
        $region85: #{a_call__.11} parent=80 // pred_fallthru
          _
      $region81: #{a_call__.11} parent=5 // pred_fallthru
        _
    $region6: #{a_call__.11} parent=1 // loop_footer
      %s13 = sadd.s32 1, %s9
    $region7: #{a_call__.11} parent=1 // loop_footer_branch
      %8 = sbr.rel target = $region3
    $region8: #{a_call__.11} parent=1 // loop_exit
      _

// kernel: a_call__.16
$region0: #{a_call__.16}
  #allocation0 [shape = 'u32[]', space=smem, size = 0x4, offset = 0x4, fixed_abs, tag = 'smem constant byte address 0x4 - core index']
  #allocation1 [shape = 'u32[144,128]{1,0:T(1,128)}', space=vmem, size = 0x12000, scoped, tag = 'internal scratch']
  %s0 = inlined_call_operand.vmem [shape: f32[2,36,36], index: 0, kind: input, shape index: {}]
  %s1 = inlined_call_operand.vmem [shape: f32[8,36], index: 1, kind: input, shape index: {}]
  %s2 = inlined_call_operand.vmem [shape: f32[36,8], index: 2, kind: input, shape index: {}]
  %s3 = inlined_call_operand.vmem [shape: f32[2,8,8], index: 3, kind: output, shape index: {}]
  %s4 = sld [smem:[#allocation0]]
  $region45: #{a_call__.16} parent=0
    _
  %s6 = ssub.s32 1, %s4
  %s7 = scalar_select 0, %s6, %s4
  loop: start=0, step=1, limit=4
  $region2: #{a_call__.16} parent=0 // loop_pre_header
    _
  $region3: #{a_call__.16} parent=0 // loop_header
    %s9 = sphi 0, %s13
    %p10 = scmp.ge.s32.totalorder %s9, 4
    %s19 = sphi 0, %s21
    %s22 = sphi 0, %s19
    %s23 = sphi 0, %s22
    %s39 = sphi 0, %s23
    %s43 = sphi 0, %s43
    %s45 = sphi 0, %s43
    %s46 = sphi 0, %s45
    %s60 = sphi 0, %s46
    %s64 = sphi 0, %s64
    %s66 = sphi 0, %s64
    %s67 = sphi 0, %s66
    %s81 = sphi 0, %s67
    %s87 = sphi 0, %s89
    %s90 = sphi 0, %s87
    %s91 = sphi 0, %s90
    %s107 = sphi 0, %s91
  $region4: #{a_call__.16} parent=0 // loop_header_branch
    %12 = sbr.rel (%p10) target = $region8
  $region5: #{a_call__.16} parent=0 // loop_body
    %s14 = ssub.s32 %s9, 1
    %s15 = ssub.s32 %s9, 2
    %s16 = sadd.s32 %s9, 1
    %s17 = ssub.s32 %s9, %s16
    %p18 = scmp.eq.s32.totalorder %s17, 0
    %s20 = sadd.s32 %s19, 1
    %s21 = scalar_select %p18, %s19, %s20
    %p24 = pneg %p18
    %p25 = scmp.eq.s32.totalorder %s9, 1
    %p26 = por %p24, %p25
    %p27 = scmp.ne.s32.totalorder %s19, %s22
    %p28 = scmp.eq.s32.totalorder %s9, 0
    %p29 = por %p27, %p28
    %p30 = scmp.ne.s32.totalorder %s19, %s22
    %p31 = scmp.eq.s32.totalorder %s14, 1
    %p32 = por %p30, %p31
    %p33 = scmp.ne.s32.totalorder %s22, %s23
    %p34 = scmp.eq.s32.totalorder %s14, 0
    %p35 = por %p33, %p34
    %p36 = scmp.ne.s32.totalorder %s22, %s23
    %p37 = scmp.eq.s32.totalorder %s15, 1
    %p38 = por %p36, %p37
    %p40 = scmp.ne.s32.totalorder %s23, %s39
    %p41 = scmp.eq.s32.totalorder %s15, 0
    %p42 = por %p40, %p41
    %s44 = sadd.s32 %s43, 1
    %p47 = scmp.eq.s32.totalorder %s9, 1
    %p48 = scmp.ne.s32.totalorder %s43, %s45
    %p49 = scmp.eq.s32.totalorder %s9, 0
    %p50 = por %p48, %p49
    %p51 = scmp.ne.s32.totalorder %s43, %s45
    %p52 = scmp.eq.s32.totalorder %s14, 1
    %p53 = por %p51, %p52
    %p54 = scmp.ne.s32.totalorder %s45, %s46
    %p55 = scmp.eq.s32.totalorder %s14, 0
    %p56 = por %p54, %p55
    %p57 = scmp.ne.s32.totalorder %s45, %s46
    %p58 = scmp.eq.s32.totalorder %s15, 1
    %p59 = por %p57, %p58
    %p61 = scmp.ne.s32.totalorder %s46, %s60
    %p62 = scmp.eq.s32.totalorder %s15, 0
    %p63 = por %p61, %p62
    %s65 = sadd.s32 %s64, 1
    %p68 = scmp.eq.s32.totalorder %s9, 1
    %p69 = scmp.ne.s32.totalorder %s64, %s66
    %p70 = scmp.eq.s32.totalorder %s9, 0
    %p71 = por %p69, %p70
    %p72 = scmp.ne.s32.totalorder %s64, %s66
    %p73 = scmp.eq.s32.totalorder %s14, 1
    %p74 = por %p72, %p73
    %p75 = scmp.ne.s32.totalorder %s66, %s67
    %p76 = scmp.eq.s32.totalorder %s14, 0
    %p77 = por %p75, %p76
    %p78 = scmp.ne.s32.totalorder %s66, %s67
    %p79 = scmp.eq.s32.totalorder %s15, 1
    %p80 = por %p78, %p79
    %p82 = scmp.ne.s32.totalorder %s67, %s81
    %p83 = scmp.eq.s32.totalorder %s15, 0
    %p84 = por %p82, %p83
    %s85 = ssub.s32 %s9, %s16
    %p86 = scmp.eq.s32.totalorder %s85, 0
    %s88 = sadd.s32 %s87, 1
    %s89 = scalar_select %p86, %s87, %s88
    %p92 = pneg %p86
    %p93 = scmp.eq.s32.totalorder %s9, 1
    %p94 = por %p92, %p93
    %p95 = scmp.ne.s32.totalorder %s87, %s90
    %p96 = scmp.eq.s32.totalorder %s9, 0
    %p97 = por %p95, %p96
    %p98 = scmp.ne.s32.totalorder %s87, %s90
    %p99 = scmp.eq.s32.totalorder %s14, 1
    %p100 = por %p98, %p99
    %p101 = scmp.ne.s32.totalorder %s90, %s91
    %p102 = scmp.eq.s32.totalorder %s14, 0
    %p103 = por %p101, %p102
    %p104 = scmp.ne.s32.totalorder %s90, %s91
    %p105 = scmp.eq.s32.totalorder %s15, 1
    %p106 = por %p104, %p105
    %p108 = scmp.ne.s32.totalorder %s91, %s107
    %p109 = scmp.eq.s32.totalorder %s15, 0
    %p110 = por %p108, %p109
    %p111 = scmp.le.s32.totalorder 1, %s9
    %p112 = scmp.lt.s32.totalorder %s9, 3
    %p113 = pnand %p111, %p112
    %p114 = pneg %p113
    // Predicated region
    $region9: #{a_call__.16} parent=5 // pred_check
      _
    $region10: #{a_call__.16} parent=5 // pred_check_branch
      %116 = sbr.rel (%p113) target = $region12
    $region11: #{a_call__.16} parent=5 // pred_region
      %s117 = ssub.s32 %s9, 1
      // Predicated region
      $region13: #{a_call__.16} parent=11 // pred_check
        %p118 = pneg %p56
      $region14: #{a_call__.16} parent=11 // pred_check_branch
        %120 = sbr.rel (%p118) target = $region16
      $region15: #{a_call__.16} parent=11 // pred_region
        _
      $region16: #{a_call__.16} parent=11 // pred_fallthru
        _
      // Predicated region
      $region17: #{a_call__.16} parent=11 // pred_check
        %p121 = pneg %p77
      $region18: #{a_call__.16} parent=11 // pred_check_branch
        %123 = sbr.rel (%p121) target = $region20
      $region19: #{a_call__.16} parent=11 // pred_region
        _
      $region20: #{a_call__.16} parent=11 // pred_fallthru
        _
    $region12: #{a_call__.16} parent=5 // pred_fallthru
      _
    %p124 = scmp.lt.s32.totalorder %s9, 2
    // Predicated region
    $region21: #{a_call__.16} parent=5 // pred_check
      %p125 = pneg %p124
    $region22: #{a_call__.16} parent=5 // pred_check_branch
      %127 = sbr.rel (%p125) target = $region24
    $region23: #{a_call__.16} parent=5 // pred_region
      // Predicated region
      $region25: #{a_call__.16} parent=23 // pred_check
        %p128 = pneg %p29
      $region26: #{a_call__.16} parent=23 // pred_check_branch
        %130 = sbr.rel (%p128) target = $region28
      $region27: #{a_call__.16} parent=23 // pred_region
        %p131 = scmp.lt.s32.totalorder %s9, 1
        %s132 = scalar_select %p131, %s9, 1
        %s133 = smul.addr %s132, 5
        %s134 = smul.addr %s133, 8
        %s135 = scalar_lea.vmem %s0, %s134
      $region28: #{a_call__.16} parent=23 // pred_fallthru
        _
    $region24: #{a_call__.16} parent=5 // pred_fallthru
      _
    %p136 = scmp.le.s32.totalorder 1, %s9
    %p137 = scmp.lt.s32.totalorder %s9, 3
    %p138 = pnand %p136, %p137
    %p139 = pneg %p138
    // Predicated region
    $region29: #{a_call__.16} parent=5 // pred_check
      _
    $region30: #{a_call__.16} parent=5 // pred_check_branch
      %141 = sbr.rel (%p138) target = $region32
    $region31: #{a_call__.16} parent=5 // pred_region
      %s142 = ssub.s32 %s9, 1
      %p143 = scmp.lt.s32.totalorder %s14, 1
      %s144 = scalar_select %p143, %s14, 1
      %s145 = smul.addr %s144, 5
      %s146 = smul.addr %s145, 8
      %s147 = scalar_lea.vmem %s0, %s146
      %p148 = pneg %p35
      %p149 = pneg %p32
      %p150 = pneg %p56
      %p151 = pneg %p53
      %p152 = pneg %p77
      %p153 = pneg %p74
      %p154 = pneg %p103
      %p155 = pneg %p100
      %p156 = scmp.lt.s32.totalorder %s14, 1
      %s157 = scalar_select %p156, %s14, 1
      %s158 = smul.addr %s157, 8
      %s159 = scalar_lea.vmem %s3, %s158
      %p160 = scmp.lt.s32.totalorder %s14, 1
      %s161 = scalar_select %p160, %s14, 1
      %s162 = smul.addr %s161, 5
      %s163 = smul.addr %s162, 8
      %s164 = scalar_lea.vmem %s0, %s163
      %p165 = scmp.lt.s32.totalorder %s14, 1
      %s166 = scalar_select %p165, %s14, 1
      %s167 = smul.addr %s166, 8
      %s168 = scalar_lea.vmem %s3, %s167
      %v169 = vld [vmem:[%s164] sm:$0xff]
      %v170 = vld [vmem:[%s164 + $0x8] sm:$0xff]
      %v171 = vld [vmem:[%s164 + $0x10] sm:$0xff]
      %v172 = vld [vmem:[%s164 + $0x18] sm:$0xff]
      %v173 = vld [vmem:[%s164 + $0x20] sm:$0xf]
      %v174 = vld [vmem:[%s1] sm:$0xff]
      %vm175 = vcmask 293888
      %v177 = vsel %vm175, %v174, 0
      %vm179 = vcmask 1043456
      %v181 = vsel %vm179, %v173, 0
      %183 = vmatprep.subr.mxu0 0.0
      %184 = vmatpush1.msra.mxu0 0.0
      %185 = vmatprep.subr.mxu0 0.0
      %186 = vmatpush1.msra.mxu0 0.0
      %187 = vmatprep.subr.mxu0 0.0
      %188 = vmatpush1.msra.mxu0 0.0
      %189 = vmatprep.subr.mxu0 0.0
      %190 = vmatpush1.msra.mxu0 0.0
      %191 = vmatprep.subr.mxu0 0.0
      %192 = vmatpush1.msra.mxu0 0.0
      %193 = vmatprep.subr.mxu0 0.0
      %194 = vmatpush1.msra.mxu0 0.0
      %195 = vmatprep.subr.mxu0 0.0
      %196 = vmatpush1.msra.mxu0 0.0
      %197 = vmatprep.subr.mxu0 0.0
      %198 = vmatpush1.msra.mxu0 0.0
      %199 = vmatprep.subr.mxu0 0.0
      %200 = vmatpush1.msra.mxu0 0.0
      %201 = vmatprep.subr.mxu0 0.0
      %202 = vmatpush1.msra.mxu0 0.0
      %203 = vmatprep.subr.mxu0 0.0
      %204 = vmatpush1.msra.mxu0 0.0
      %205 = vmatprep.subr.mxu0 0.0
      %206 = vmatpush1.msra.mxu0 %v181
      %207 = vmatprep.subr.mxu0 0.0
      %208 = vmatpush1.msra.mxu0 %v172
      %209 = vmatprep.subr.mxu0 0.0
      %210 = vmatpush1.msra.mxu0 %v171
      %211 = vmatprep.subr.mxu0 0.0
      %212 = vmatpush1.msra.mxu0 %v170
      %213 = vmatprep.subr.mxu0 0.0
      %214 = vmatpush1.msra.mxu0 %v169
      %215 = vmatprep.subr.mxu0 0.0
      %216 = vmatpush2.msra.mxu0 0.0
      %217 = vmatprep.subr.mxu0 0.0
      %218 = vmatpush2.msra.mxu0 0.0
      %219 = vmatprep.subr.mxu0 0.0
      %220 = vmatpush2.msra.mxu0 0.0
      %221 = vmatprep.subr.mxu0 0.0
      %222 = vmatpush2.msra.mxu0 0.0
      %223 = vmatprep.subr.mxu0 0.0
      %224 = vmatpush2.msra.mxu0 0.0
      %225 = vmatprep.subr.mxu0 0.0
      %226 = vmatpush2.msra.mxu0 0.0
      %227 = vmatprep.subr.mxu0 0.0
      %228 = vmatpush2.msra.mxu0 0.0
      %229 = vmatprep.subr.mxu0 0.0
      %230 = vmatpush2.msra.mxu0 0.0
      %231 = vmatprep.subr.mxu0 0.0
      %232 = vmatpush2.msra.mxu0 0.0
      %233 = vmatprep.subr.mxu0 0.0
      %234 = vmatpush2.msra.mxu0 0.0
      %235 = vmatprep.subr.mxu0 0.0
      %236 = vmatpush2.msra.mxu0 0.0
      %237 = vmatprep.subr.mxu0 0.0
      %238 = vmatpush2.msra.mxu0 0.0
      %239 = vmatprep.subr.mxu0 0.0
      %240 = vmatpush2.msra.mxu0 0.0
      %241 = vmatprep.subr.mxu0 0.0
      %242 = vmatpush2.msra.mxu0 0.0
      %243 = vmatprep.subr.mxu0 0.0
      %244 = vmatpush2.msra.mxu0 0.0
      %245 = vmatprep.subr.mxu0 0.0
      %246 = vmatpush2.msra.mxu0 0.0
      %247 = vmatprep.mubr.f32.mxu0 0.0
      %248 = vmatmul.mubr.f32.gmra.mxu0 %v177
      %v249 = vpop.f32.mrf.mxu0
      %v250 = vadd.f32 0.0, %v249
      %v251 = vpop.f32.mrf.mxu0
      %252 = vdwg.mxu0
      %v253 = vld [vmem:[%s2] sm:$0xff]
      %v254 = vld [vmem:[%s2 + $0x8] sm:$0xff]
      %v255 = vld [vmem:[%s2 + $0x10] sm:$0xff]
      %v256 = vld [vmem:[%s2 + $0x18] sm:$0xff]
      %v257 = vld [vmem:[%s2 + $0x20] sm:$0xf]
      %v259 = vsel %vm175, %v250, 0
      %v262 = vsel %vm179, %v257, 0
      %264 = vmatprep.subr.mxu0 0.0
      %265 = vmatpush1.msra.mxu0 0.0
      %266 = vmatprep.subr.mxu0 0.0
      %267 = vmatpush1.msra.mxu0 0.0
      %268 = vmatprep.subr.mxu0 0.0
      %269 = vmatpush1.msra.mxu0 0.0
      %270 = vmatprep.subr.mxu0 0.0
      %271 = vmatpush1.msra.mxu0 0.0
      %272 = vmatprep.subr.mxu0 0.0
      %273 = vmatpush1.msra.mxu0 0.0
      %274 = vmatprep.subr.mxu0 0.0
      %275 = vmatpush1.msra.mxu0 0.0
      %276 = vmatprep.subr.mxu0 0.0
      %277 = vmatpush1.msra.mxu0 0.0
      %278 = vmatprep.subr.mxu0 0.0
      %279 = vmatpush1.msra.mxu0 0.0
      %280 = vmatprep.subr.mxu0 0.0
      %281 = vmatpush1.msra.mxu0 0.0
      %282 = vmatprep.subr.mxu0 0.0
      %283 = vmatpush1.msra.mxu0 0.0
      %284 = vmatprep.subr.mxu0 0.0
      %285 = vmatpush1.msra.mxu0 0.0
      %286 = vmatprep.subr.mxu0 0.0
      %287 = vmatpush1.msra.mxu0 %v262
      %288 = vmatprep.subr.mxu0 0.0
      %289 = vmatpush1.msra.mxu0 %v256
      %290 = vmatprep.subr.mxu0 0.0
      %291 = vmatpush1.msra.mxu0 %v255
      %292 = vmatprep.subr.mxu0 0.0
      %293 = vmatpush1.msra.mxu0 %v254
      %294 = vmatprep.subr.mxu0 0.0
      %295 = vmatpush1.msra.mxu0 %v253
      %296 = vmatprep.subr.mxu0 0.0
      %297 = vmatpush2.msra.mxu0 0.0
      %298 = vmatprep.subr.mxu0 0.0
      %299 = vmatpush2.msra.mxu0 0.0
      %300 = vmatprep.subr.mxu0 0.0
      %301 = vmatpush2.msra.mxu0 0.0
      %302 = vmatprep.subr.mxu0 0.0
      %303 = vmatpush2.msra.mxu0 0.0
      %304 = vmatprep.subr.mxu0 0.0
      %305 = vmatpush2.msra.mxu0 0.0
      %306 = vmatprep.subr.mxu0 0.0
      %307 = vmatpush2.msra.mxu0 0.0
      %308 = vmatprep.subr.mxu0 0.0
      %309 = vmatpush2.msra.mxu0 0.0
      %310 = vmatprep.subr.mxu0 0.0
      %311 = vmatpush2.msra.mxu0 0.0
      %312 = vmatprep.subr.mxu0 0.0
      %313 = vmatpush2.msra.mxu0 0.0
      %314 = vmatprep.subr.mxu0 0.0
      %315 = vmatpush2.msra.mxu0 0.0
      %316 = vmatprep.subr.mxu0 0.0
      %317 = vmatpush2.msra.mxu0 0.0
      %318 = vmatprep.subr.mxu0 0.0
      %319 = vmatpush2.msra.mxu0 0.0
      %320 = vmatprep.subr.mxu0 0.0
      %321 = vmatpush2.msra.mxu0 0.0
      %322 = vmatprep.subr.mxu0 0.0
      %323 = vmatpush2.msra.mxu0 0.0
      %324 = vmatprep.subr.mxu0 0.0
      %325 = vmatpush2.msra.mxu0 0.0
      %326 = vmatprep.subr.mxu0 0.0
      %327 = vmatpush2.msra.mxu0 0.0
      %328 = vmatprep.mubr.f32.mxu0 0.0
      %329 = vmatmul.mubr.f32.gmra.mxu0 %v259
      %v330 = vpop.f32.mrf.mxu0
      %v331 = vadd.f32 0.0, %v330
      %v332 = vpop.f32.mrf.mxu0
      %333 = vdwg.mxu0
      %v334 = vmul.f32 %v331, -0.04
      %v335 = vadd.f32 %v334, 1.0
      %vm336 = vcmask 64512
      %337 = vst.msk [vmem:[%s168] sm:$0xff] %vm336, %v335
      %p338 = scmp.lt.s32.totalorder %s14, 1
      %s339 = scalar_select %p338, %s14, 1
      %s340 = smul.addr %s339, 8
      %s341 = scalar_lea.vmem %s3, %s340
      // Predicated region
      $region33: #{a_call__.16} parent=31 // pred_check
        %p342 = pneg %p100
      $region34: #{a_call__.16} parent=31 // pred_check_branch
        %344 = sbr.rel (%p342) target = $region36
      $region35: #{a_call__.16} parent=31 // pred_region
        _
      $region36: #{a_call__.16} parent=31 // pred_fallthru
        _
    $region32: #{a_call__.16} parent=5 // pred_fallthru
      _
    %p345 = scmp.le.s32.totalorder 2, %s9
    // Predicated region
    $region37: #{a_call__.16} parent=5 // pred_check
      %p346 = pneg %p345
    $region38: #{a_call__.16} parent=5 // pred_check_branch
      %348 = sbr.rel (%p346) target = $region40
    $region39: #{a_call__.16} parent=5 // pred_region
      %s349 = ssub.s32 %s9, 2
      // Predicated region
      $region41: #{a_call__.16} parent=39 // pred_check
        %p350 = pneg %p106
      $region42: #{a_call__.16} parent=39 // pred_check_branch
        %352 = sbr.rel (%p350) target = $region44
      $region43: #{a_call__.16} parent=39 // pred_region
        %p353 = scmp.lt.s32.totalorder %s15, 1
        %s354 = scalar_select %p353, %s15, 1
        %s355 = smul.addr %s354, 8
        %s356 = scalar_lea.vmem %s3, %s355
      $region44: #{a_call__.16} parent=39 // pred_fallthru
        _
    $region40: #{a_call__.16} parent=5 // pred_fallthru
      _
  $region6: #{a_call__.16} parent=0 // loop_footer
    %s13 = sadd.s32 1, %s9
  $region7: #{a_call__.16} parent=0 // loop_footer_branch
    %8 = sbr.rel target = $region3
  $region8: #{a_call__.16} parent=0 // loop_exit
    _

// kernel: a_call__.12
$region0: #{a_call__.12}
  #allocation0 [shape = 'u32[]', space=smem, size = 0x4, offset = 0x4, fixed_abs, tag = 'smem constant byte address 0x4 - core index']
  #allocation1 [shape = 'u32[144,128]{1,0:T(1,128)}', space=vmem, size = 0x12000, scoped, tag = 'internal scratch']
  %s0 = inlined_call_operand.vmem [shape: bf16[4,110,8], index: 0, kind: input, shape index: {}]
  %s1 = inlined_call_operand.vmem [shape: bf16[9,8,16], index: 1, kind: input, shape index: {}]
  %s2 = inlined_call_operand.vmem [shape: f32[1,16], index: 2, kind: input, shape index: {}]
  %s3 = inlined_call_operand.vmem [shape: bf16[4,80,16], index: 3, kind: output, shape index: {}]
  %s4 = sld [smem:[#allocation0]]
  $region45: #{a_call__.12} parent=0
    _
  %s6 = ssub.s32 1, %s4
  %s7 = scalar_select 0, %s6, %s4
  loop: start=0, step=1, limit=6
  $region2: #{a_call__.12} parent=0 // loop_pre_header
    _
  $region3: #{a_call__.12} parent=0 // loop_header
    %s9 = sphi 0, %s13
    %p10 = scmp.ge.s32.totalorder %s9, 6
    %s19 = sphi 0, %s21
    %s22 = sphi 0, %s19
    %s23 = sphi 0, %s22
    %s39 = sphi 0, %s23
    %s43 = sphi 0, %s43
    %s45 = sphi 0, %s43
    %s46 = sphi 0, %s45
    %s60 = sphi 0, %s46
    %s64 = sphi 0, %s64
    %s66 = sphi 0, %s64
    %s67 = sphi 0, %s66
    %s81 = sphi 0, %s67
    %s87 = sphi 0, %s89
    %s90 = sphi 0, %s87
    %s91 = sphi 0, %s90
    %s107 = sphi 0, %s91
  $region4: #{a_call__.12} parent=0 // loop_header_branch
    %12 = sbr.rel (%p10) target = $region8
  $region5: #{a_call__.12} parent=0 // loop_body
    %s14 = ssub.s32 %s9, 1
    %s15 = ssub.s32 %s9, 2
    %s16 = sadd.s32 %s9, 1
    %s17 = ssub.s32 %s9, %s16
    %p18 = scmp.eq.s32.totalorder %s17, 0
    %s20 = sadd.s32 %s19, 1
    %s21 = scalar_select %p18, %s19, %s20
    %p24 = pneg %p18
    %p25 = scmp.eq.s32.totalorder %s9, 3
    %p26 = por %p24, %p25
    %p27 = scmp.ne.s32.totalorder %s19, %s22
    %p28 = scmp.eq.s32.totalorder %s9, 0
    %p29 = por %p27, %p28
    %p30 = scmp.ne.s32.totalorder %s19, %s22
    %p31 = scmp.eq.s32.totalorder %s14, 3
    %p32 = por %p30, %p31
    %p33 = scmp.ne.s32.totalorder %s22, %s23
    %p34 = scmp.eq.s32.totalorder %s14, 0
    %p35 = por %p33, %p34
    %p36 = scmp.ne.s32.totalorder %s22, %s23
    %p37 = scmp.eq.s32.totalorder %s15, 3
    %p38 = por %p36, %p37
    %p40 = scmp.ne.s32.totalorder %s23, %s39
    %p41 = scmp.eq.s32.totalorder %s15, 0
    %p42 = por %p40, %p41
    %s44 = sadd.s32 %s43, 1
    %p47 = scmp.eq.s32.totalorder %s9, 3
    %p48 = scmp.ne.s32.totalorder %s43, %s45
    %p49 = scmp.eq.s32.totalorder %s9, 0
    %p50 = por %p48, %p49
    %p51 = scmp.ne.s32.totalorder %s43, %s45
    %p52 = scmp.eq.s32.totalorder %s14, 3
    %p53 = por %p51, %p52
    %p54 = scmp.ne.s32.totalorder %s45, %s46
    %p55 = scmp.eq.s32.totalorder %s14, 0
    %p56 = por %p54, %p55
    %p57 = scmp.ne.s32.totalorder %s45, %s46
    %p58 = scmp.eq.s32.totalorder %s15, 3
    %p59 = por %p57, %p58
    %p61 = scmp.ne.s32.totalorder %s46, %s60
    %p62 = scmp.eq.s32.totalorder %s15, 0
    %p63 = por %p61, %p62
    %s65 = sadd.s32 %s64, 1
    %p68 = scmp.eq.s32.totalorder %s9, 3
    %p69 = scmp.ne.s32.totalorder %s64, %s66
    %p70 = scmp.eq.s32.totalorder %s9, 0
    %p71 = por %p69, %p70
    %p72 = scmp.ne.s32.totalorder %s64, %s66
    %p73 = scmp.eq.s32.totalorder %s14, 3
    %p74 = por %p72, %p73
    %p75 = scmp.ne.s32.totalorder %s66, %s67
    %p76 = scmp.eq.s32.totalorder %s14, 0
    %p77 = por %p75, %p76
    %p78 = scmp.ne.s32.totalorder %s66, %s67
    %p79 = scmp.eq.s32.totalorder %s15, 3
    %p80 = por %p78, %p79
    %p82 = scmp.ne.s32.totalorder %s67, %s81
    %p83 = scmp.eq.s32.totalorder %s15, 0
    %p84 = por %p82, %p83
    %s85 = ssub.s32 %s9, %s16
    %p86 = scmp.eq.s32.totalorder %s85, 0
    %s88 = sadd.s32 %s87, 1
    %s89 = scalar_select %p86, %s87, %s88
    %p92 = pneg %p86
    %p93 = scmp.eq.s32.totalorder %s9, 3
    %p94 = por %p92, %p93
    %p95 = scmp.ne.s32.totalorder %s87, %s90
    %p96 = scmp.eq.s32.totalorder %s9, 0
    %p97 = por %p95, %p96
    %p98 = scmp.ne.s32.totalorder %s87, %s90
    %p99 = scmp.eq.s32.totalorder %s14, 3
    %p100 = por %p98, %p99
    %p101 = scmp.ne.s32.totalorder %s90, %s91
    %p102 = scmp.eq.s32.totalorder %s14, 0
    %p103 = por %p101, %p102
    %p104 = scmp.ne.s32.totalorder %s90, %s91
    %p105 = scmp.eq.s32.totalorder %s15, 3
    %p106 = por %p104, %p105
    %p108 = scmp.ne.s32.totalorder %s91, %s107
    %p109 = scmp.eq.s32.totalorder %s15, 0
    %p110 = por %p108, %p109
    %p111 = scmp.le.s32.totalorder 1, %s9
    %p112 = scmp.lt.s32.totalorder %s9, 5
    %p113 = pnand %p111, %p112
    %p114 = pneg %p113
    // Predicated region
    $region9: #{a_call__.12} parent=5 // pred_check
      _
    $region10: #{a_call__.12} parent=5 // pred_check_branch
      %116 = sbr.rel (%p113) target = $region12
    $region11: #{a_call__.12} parent=5 // pred_region
      %s117 = ssub.s32 %s9, 1
      // Predicated region
      $region13: #{a_call__.12} parent=11 // pred_check
        %p118 = pneg %p56
      $region14: #{a_call__.12} parent=11 // pred_check_branch
        %120 = sbr.rel (%p118) target = $region16
      $region15: #{a_call__.12} parent=11 // pred_region
        _
      $region16: #{a_call__.12} parent=11 // pred_fallthru
        _
      // Predicated region
      $region17: #{a_call__.12} parent=11 // pred_check
        %p121 = pneg %p77
      $region18: #{a_call__.12} parent=11 // pred_check_branch
        %123 = sbr.rel (%p121) target = $region20
      $region19: #{a_call__.12} parent=11 // pred_region
        _
      $region20: #{a_call__.12} parent=11 // pred_fallthru
        _
    $region12: #{a_call__.12} parent=5 // pred_fallthru
      _
    %p124 = scmp.lt.s32.totalorder %s9, 4
    // Predicated region
    $region21: #{a_call__.12} parent=5 // pred_check
      %p125 = pneg %p124
    $region22: #{a_call__.12} parent=5 // pred_check_branch
      %127 = sbr.rel (%p125) target = $region24
    $region23: #{a_call__.12} parent=5 // pred_region
      // Predicated region
      $region25: #{a_call__.12} parent=23 // pred_check
        %p128 = pneg %p29
      $region26: #{a_call__.12} parent=23 // pred_check_branch
        %130 = sbr.rel (%p128) target = $region28
      $region27: #{a_call__.12} parent=23 // pred_region
        %p131 = scmp.lt.s32.totalorder %s9, 3
        %s132 = scalar_select %p131, %s9, 3
        %s133 = smul.addr %s132, 14
        %s134 = smul.addr %s133, 4
        %s135 = scalar_lea.vmem %s0, %s134
      $region28: #{a_call__.12} parent=23 // pred_fallthru
        _
    $region24: #{a_call__.12} parent=5 // pred_fallthru
      _
    %p136 = scmp.le.s32.totalorder 1, %s9
    %p137 = scmp.lt.s32.totalorder %s9, 5
    %p138 = pnand %p136, %p137
    %p139 = pneg %p138
    // Predicated region
    $region29: #{a_call__.12} parent=5 // pred_check
      _
    $region30: #{a_call__.12} parent=5 // pred_check_branch
      %141 = sbr.rel (%p138) target = $region32
    $region31: #{a_call__.12} parent=5 // pred_region
      %s142 = ssub.s32 %s9, 1
      %p143 = scmp.lt.s32.totalorder %s14, 3
      %s144 = scalar_select %p143, %s14, 3
      %s145 = smul.addr %s144, 14
      %s146 = smul.addr %s145, 4
      %s147 = scalar_lea.vmem %s0, %s146
      %p148 = pneg %p35
      %p149 = pneg %p32
      %p150 = pneg %p56
      %p151 = pneg %p53
      %p152 = pneg %p77
      %p153 = pneg %p74
      %p154 = pneg %p103
      %p155 = pneg %p100
      %p156 = scmp.lt.s32.totalorder %s14, 3
      %s157 = scalar_select %p156, %s14, 3
      %s158 = smul.addr %s157, 10
      %s159 = smul.addr %s158, 4
      %s160 = scalar_lea.vmem %s3, %s159
      %p161 = scmp.lt.s32.totalorder %s14, 3
      %s162 = scalar_select %p161, %s14, 3
      %s163 = smul.addr %s162, 14
      %s164 = smul.addr %s163, 4
      %s165 = scalar_lea.vmem %s0, %s164
      %p166 = scmp.lt.s32.totalorder %s14, 3
      %s167 = scalar_select %p166, %s14, 3
      %s168 = smul.addr %s167, 10
      %s169 = smul.addr %s168, 4
      %s170 = scalar_lea.vmem %s3, %s169
      %v172 = vld [vmem:[%s165] sm:$0xf]
      %v173 = vld [vmem:[%s165 + $0x4] sm:$0xf]
      %v174 = vld [vmem:[%s165 + $0x8] sm:$0xf]
      %v175 = vld [vmem:[%s165 + $0xc] sm:$0xf]
      %v176 = vld [vmem:[%s165 + $0x10] sm:$0xf]
      %v177 = vld [vmem:[%s165 + $0x14] sm:$0xf]
      %v178 = vld [vmem:[%s165 + $0x18] sm:$0xf]
      %v179 = vld [vmem:[%s165 + $0x1c] sm:$0xf]
      %v180 = vld [vmem:[%s165 + $0x20] sm:$0xf]
      %v181 = vld [vmem:[%s165 + $0x24] sm:$0xf]
      %v182 = vld [vmem:[%s1] sm:$0xf]
      %v183 = vld [vmem:[%s165 + $0x28] sm:$0x1]
      %s184 = scalar_lea.vmem %s1, 4
      %v185 = vld [vmem:[%s184] sm:$0xf]
      %v197 = vunpack.c.l.b16 %v172
      %v198 = vunpack.c.l.b16 %v173
      %v199 = vunpack.c.l.b16 %v174
      %v200 = vunpack.c.l.b16 %v175
      %v201 = vunpack.c.l.b16 %v176
      %v202 = vunpack.c.l.b16 %v177
      %v203 = vunpack.c.l.b16 %v178
      %v204 = vunpack.c.l.b16 %v179
      %v205 = vunpack.c.l.b16 %v180
      %v206 = vunpack.c.l.b16 %v181
      %v207 = vunpack.c.l.b16 %v183
      %v208 = vpack.c.b16 %v198, %v197
      %v209 = vpack.c.b16 %v200, %v199
      %v210 = vpack.c.b16 %v202, %v201
      %v211 = vpack.c.b16 %v204, %v203
      %v212 = vpack.c.b16 %v206, %v205
      %v213 = vpack.c.b16 %v207, %v207
      %vm214 = vsmask.f32 7424
      %v216 = vshrl.u32 %v208, 16
      %v218 = vshll.u32 %v208, 16
      %v220 = vrot.slane %v218, 1
      %v221 = vor.u32 %v216, %v220
      %v223 = vshll.u32 %v209, 16
      %v225 = vrot.slane %v223, 1
      %v226 = vsel %vm214, %v221, %v225
      %v227 = vshrl.u32 %v209, 16
      %v229 = vor.u32 %v227, %v225
      %v231 = vshll.u32 %v210, 16
      %v233 = vrot.slane %v231, 1
      %v234 = vsel %vm214, %v229, %v233
      %v235 = vshrl.u32 %v210, 16
      %v237 = vor.u32 %v235, %v233
      %v239 = vshll.u32 %v211, 16
      %v241 = vrot.slane %v239, 1
      %v242 = vsel %vm214, %v237, %v241
      %v243 = vshrl.u32 %v211, 16
      %v245 = vor.u32 %v243, %v241
      %v247 = vshll.u32 %v212, 16
      %v249 = vrot.slane %v247, 1
      %v250 = vsel %vm214, %v245, %v249
      %v251 = vshrl.u32 %v212, 16
      %v253 = vor.u32 %v251, %v249
      %v255 = vshll.u32 %v213, 16
      %v257 = vrot.slane %v255, 1
      %v258 = vsel %vm214, %v253, %v257
      %vm259 = vcmask 64512
      %v261 = vsel %vm259, %v226, 0
      %v264 = vsel %vm259, %v234, 0
      %v267 = vsel %vm259, %v242, 0
      %v270 = vsel %vm259, %v250, 0
      %v273 = vsel %vm259, %v258, 0
      %vm275 = vcmask 1043456
      %v277 = vsel %vm275, %v185, 0
      %279 = vmatprep.subr.bf16.mxu0 0
      %280 = vmatpush1.bf16.msra.mxu0 0
      %281 = vmatprep.subr.bf16.mxu0 0
      %282 = vmatpush1.bf16.msra.mxu0 0
      %283 = vmatprep.subr.bf16.mxu0 0
      %284 = vmatpush1.bf16.msra.mxu0 0
      %285 = vmatprep.subr.bf16.mxu0 0
      %286 = vmatpush1.bf16.msra.mxu0 0
      %287 = vmatprep.subr.bf16.mxu0 0
      %288 = vmatpush1.bf16.msra.mxu0 0
      %289 = vmatprep.subr.bf16.mxu0 0
      %290 = vmatpush1.bf16.msra.mxu0 0
      %291 = vmatprep.subr.bf16.mxu0 0
      %292 = vmatpush1.bf16.msra.mxu0 0
      %293 = vmatprep.subr.bf16.mxu0 0
      %294 = vmatpush1.bf16.msra.mxu0 %v277
      %295 = vmatprep.subr.bf16.mxu0 0
      %296 = vmatpush2.bf16.msra.mxu0 0
      %297 = vmatprep.subr.bf16.mxu0 0
      %298 = vmatpush2.bf16.msra.mxu0 0
      %299 = vmatprep.subr.bf16.mxu0 0
      %300 = vmatpush2.bf16.msra.mxu0 0
      %301 = vmatprep.subr.bf16.mxu0 0
      %302 = vmatpush2.bf16.msra.mxu0 0
      %303 = vmatprep.subr.bf16.mxu0 0
      %304 = vmatpush2.bf16.msra.mxu0 0
      %305 = vmatprep.subr.bf16.mxu0 0
      %306 = vmatpush2.bf16.msra.mxu0 0
      %307 = vmatprep.subr.bf16.mxu0 0
      %308 = vmatpush2.bf16.msra.mxu0 0
      %309 = vmatprep.subr.bf16.mxu0 0
      %310 = vmatpush2.bf16.msra.mxu0 0
      %311 = vmatprep.mubr.bf16.mxu0 0
      %312 = vmatmul.mubr.bf16.gmra.mxu0 %v261
      %v313 = vpop.f32.mrf.mxu0
      %v314 = vadd.f32 0.0, %v313
      %v315 = vpop.f32.mrf.mxu0
      %v316 = vpop.f32.mrf.mxu0
      %v317 = vadd.f32 0.0, %v316
      %v318 = vpop.f32.mrf.mxu0
      %319 = vmatprep.mubr.bf16.mxu0 0
      %320 = vmatmul.mubr.bf16.gmra.mxu0 %v264
      %v321 = vpop.f32.mrf.mxu0
      %v322 = vadd.f32 0.0, %v321
      %v323 = vpop.f32.mrf.mxu0
      %v324 = vpop.f32.mrf.mxu0
      %v325 = vadd.f32 0.0, %v324
      %v326 = vpop.f32.mrf.mxu0
      %327 = vmatprep.mubr.bf16.mxu0 0
      %328 = vmatmul.mubr.bf16.gmra.mxu0 %v267
      %v329 = vpop.f32.mrf.mxu0
      %v330 = vadd.f32 0.0, %v329
      %v331 = vpop.f32.mrf.mxu0
      %v332 = vpop.f32.mrf.mxu0
      %v333 = vadd.f32 0.0, %v332
      %v334 = vpop.f32.mrf.mxu0
      %335 = vmatprep.mubr.bf16.mxu0 0
      %336 = vmatmul.mubr.bf16.gmra.mxu0 %v270
      %v337 = vpop.f32.mrf.mxu0
      %v338 = vadd.f32 0.0, %v337
      %v339 = vpop.f32.mrf.mxu0
      %v340 = vpop.f32.mrf.mxu0
      %v341 = vadd.f32 0.0, %v340
      %v342 = vpop.f32.mrf.mxu0
      %343 = vmatprep.mubr.bf16.mxu0 0
      %344 = vmatmul.mubr.bf16.gmra.mxu0 %v273
      %v345 = vpop.f32.mrf.mxu0
      %v346 = vadd.f32 0.0, %v345
      %v347 = vpop.f32.mrf.mxu0
      %v348 = vpop.f32.mrf.mxu0
      %v349 = vadd.f32 0.0, %v348
      %v350 = vpop.f32.mrf.mxu0
      %351 = vdwg.mxu0
      %v352 = vsel %vm259, %v208, 0
      %v354 = vsel %vm259, %v209, 0
      %v356 = vsel %vm259, %v210, 0
      %v358 = vsel %vm259, %v211, 0
      %v360 = vsel %vm259, %v212, 0
      %v363 = vsel %vm275, %v182, 0
      %365 = vmatprep.subr.bf16.mxu0 0
      %366 = vmatpush1.bf16.msra.mxu0 0
      %367 = vmatprep.subr.bf16.mxu0 0
      %368 = vmatpush1.bf16.msra.mxu0 0
      %369 = vmatprep.subr.bf16.mxu0 0
      %370 = vmatpush1.bf16.msra.mxu0 0
      %371 = vmatprep.subr.bf16.mxu0 0
      %372 = vmatpush1.bf16.msra.mxu0 0
      %373 = vmatprep.subr.bf16.mxu0 0
      %374 = vmatpush1.bf16.msra.mxu0 0
      %375 = vmatprep.subr.bf16.mxu0 0
      %376 = vmatpush1.bf16.msra.mxu0 0
      %377 = vmatprep.subr.bf16.mxu0 0
      %378 = vmatpush1.bf16.msra.mxu0 0
      %379 = vmatprep.subr.bf16.mxu0 0
      %380 = vmatpush1.bf16.msra.mxu0 %v363
      %381 = vmatprep.subr.bf16.mxu0 0
      %382 = vmatpush2.bf16.msra.mxu0 0
      %383 = vmatprep.subr.bf16.mxu0 0
      %384 = vmatpush2.bf16.msra.mxu0 0
      %385 = vmatprep.subr.bf16.mxu0 0
      %386 = vmatpush2.bf16.msra.mxu0 0
      %387 = vmatprep.subr.bf16.mxu0 0
      %388 = vmatpush2.bf16.msra.mxu0 0
      %389 = vmatprep.subr.bf16.mxu0 0
      %390 = vmatpush2.bf16.msra.mxu0 0
      %391 = vmatprep.subr.bf16.mxu0 0
      %392 = vmatpush2.bf16.msra.mxu0 0
      %393 = vmatprep.subr.bf16.mxu0 0
      %394 = vmatpush2.bf16.msra.mxu0 0
      %395 = vmatprep.subr.bf16.mxu0 0
      %396 = vmatpush2.bf16.msra.mxu0 0
      %397 = vmatprep.mubr.bf16.mxu0 0
      %398 = vmatmul.mubr.bf16.gmra.mxu0 %v352
      %v399 = vpop.f32.mrf.mxu0
      %v400 = vadd.f32 %v314, %v399
      %v401 = vpop.f32.mrf.mxu0
      %v402 = vpop.f32.mrf.mxu0
      %v403 = vadd.f32 %v317, %v402
      %v404 = vpop.f32.mrf.mxu0
      %405 = vmatprep.mubr.bf16.mxu0 0
      %406 = vmatmul.mubr.bf16.gmra.mxu0 %v354
      %v407 = vpop.f32.mrf.mxu0
      %v408 = vadd.f32 %v322, %v407
      %v409 = vpop.f32.mrf.mxu0
      %v410 = vpop.f32.mrf.mxu0
      %v411 = vadd.f32 %v325, %v410
      %v412 = vpop.f32.mrf.mxu0
      %413 = vmatprep.mubr.bf16.mxu0 0
      %414 = vmatmul.mubr.bf16.gmra.mxu0 %v356
      %v415 = vpop.f32.mrf.mxu0
      %v416 = vadd.f32 %v330, %v415
      %v417 = vpop.f32.mrf.mxu0
      %v418 = vpop.f32.mrf.mxu0
      %v419 = vadd.f32 %v333, %v418
      %v420 = vpop.f32.mrf.mxu0
      %421 = vmatprep.mubr.bf16.mxu0 0
      %422 = vmatmul.mubr.bf16.gmra.mxu0 %v358
      %v423 = vpop.f32.mrf.mxu0
      %v424 = vadd.f32 %v338, %v423
      %v425 = vpop.f32.mrf.mxu0
      %v426 = vpop.f32.mrf.mxu0
      %v427 = vadd.f32 %v341, %v426
      %v428 = vpop.f32.mrf.mxu0
      %429 = vmatprep.mubr.bf16.mxu0 0
      %430 = vmatmul.mubr.bf16.gmra.mxu0 %v360
      %v431 = vpop.f32.mrf.mxu0
      %v432 = vadd.f32 %v346, %v431
      %v433 = vpop.f32.mrf.mxu0
      %v434 = vpop.f32.mrf.mxu0
      %v435 = vadd.f32 %v349, %v434
      %v436 = vpop.f32.mrf.mxu0
      %437 = vdwg.mxu0
      %v438 = vld [vmem:[%s165] sm:$0xe]
      %s439 = scalar_lea.vmem %s1, 8
      %v440 = vld [vmem:[%s439] sm:$0xf]
      %v442 = vunpack.c.l.b16 %v438
      %v443 = vpack.c.b16 %v198, %v442
      %vm444 = vcmask 1046528
      %v445 = vrot.slane %v443, 1
      %v446 = vrot.slane %v209, 1
      %v447 = vsel %vm444, %v445, %v446
      %v448 = vrot.slane %v210, 1
      %v449 = vsel %vm444, %v446, %v448
      %v450 = vrot.slane %v211, 1
      %v451 = vsel %vm444, %v448, %v450
      %v452 = vrot.slane %v212, 1
      %v453 = vsel %vm444, %v450, %v452
      %v454 = vrot.slane %v213, 1
      %v455 = vsel %vm444, %v452, %v454
      %v457 = vsel %vm259, %v447, 0
      %v460 = vsel %vm259, %v449, 0
      %v463 = vsel %vm259, %v451, 0
      %v466 = vsel %vm259, %v453, 0
      %v469 = vsel %vm259, %v455, 0
      %v472 = vsel %vm275, %v440, 0
      %474 = vmatprep.subr.bf16.mxu0 0
      %475 = vmatpush1.bf16.msra.mxu0 0
      %476 = vmatprep.subr.bf16.mxu0 0
      %477 = vmatpush1.bf16.msra.mxu0 0
      %478 = vmatprep.subr.bf16.mxu0 0
      %479 = vmatpush1.bf16.msra.mxu0 0
      %480 = vmatprep.subr.bf16.mxu0 0
      %481 = vmatpush1.bf16.msra.mxu0 0
      %482 = vmatprep.subr.bf16.mxu0 0
      %483 = vmatpush1.bf16.msra.mxu0 0
      %484 = vmatprep.subr.bf16.mxu0 0
      %485 = vmatpush1.bf16.msra.mxu0 0
      %486 = vmatprep.subr.bf16.mxu0 0
      %487 = vmatpush1.bf16.msra.mxu0 0
      %488 = vmatprep.subr.bf16.mxu0 0
      %489 = vmatpush1.bf16.msra.mxu0 %v472
      %490 = vmatprep.subr.bf16.mxu0 0
      %491 = vmatpush2.bf16.msra.mxu0 0
      %492 = vmatprep.subr.bf16.mxu0 0
      %493 = vmatpush2.bf16.msra.mxu0 0
      %494 = vmatprep.subr.bf16.mxu0 0
      %495 = vmatpush2.bf16.msra.mxu0 0
      %496 = vmatprep.subr.bf16.mxu0 0
      %497 = vmatpush2.bf16.msra.mxu0 0
      %498 = vmatprep.subr.bf16.mxu0 0
      %499 = vmatpush2.bf16.msra.mxu0 0
      %500 = vmatprep.subr.bf16.mxu0 0
      %501 = vmatpush2.bf16.msra.mxu0 0
      %502 = vmatprep.subr.bf16.mxu0 0
      %503 = vmatpush2.bf16.msra.mxu0 0
      %504 = vmatprep.subr.bf16.mxu0 0
      %505 = vmatpush2.bf16.msra.mxu0 0
      %506 = vmatprep.mubr.bf16.mxu0 0
      %507 = vmatmul.mubr.bf16.gmra.mxu0 %v457
      %v508 = vpop.f32.mrf.mxu0
      %v509 = vadd.f32 0.0, %v508
      %v510 = vpop.f32.mrf.mxu0
      %v511 = vpop.f32.mrf.mxu0
      %v512 = vadd.f32 0.0, %v511
      %v513 = vpop.f32.mrf.mxu0
      %514 = vmatprep.mubr.bf16.mxu0 0
      %515 = vmatmul.mubr.bf16.gmra.mxu0 %v460
      %v516 = vpop.f32.mrf.mxu0
      %v517 = vadd.f32 0.0, %v516
      %v518 = vpop.f32.mrf.mxu0
      %v519 = vpop.f32.mrf.mxu0
      %v520 = vadd.f32 0.0, %v519
      %v521 = vpop.f32.mrf.mxu0
      %522 = vmatprep.mubr.bf16.mxu0 0
      %523 = vmatmul.mubr.bf16.gmra.mxu0 %v463
      %v524 = vpop.f32.mrf.mxu0
      %v525 = vadd.f32 0.0, %v524
      %v526 = vpop.f32.mrf.mxu0
      %v527 = vpop.f32.mrf.mxu0
      %v528 = vadd.f32 0.0, %v527
      %v529 = vpop.f32.mrf.mxu0
      %530 = vmatprep.mubr.bf16.mxu0 0
      %531 = vmatmul.mubr.bf16.gmra.mxu0 %v466
      %v532 = vpop.f32.mrf.mxu0
      %v533 = vadd.f32 0.0, %v532
      %v534 = vpop.f32.mrf.mxu0
      %v535 = vpop.f32.mrf.mxu0
      %v536 = vadd.f32 0.0, %v535
      %v537 = vpop.f32.mrf.mxu0
      %538 = vmatprep.mubr.bf16.mxu0 0
      %539 = vmatmul.mubr.bf16.gmra.mxu0 %v469
      %v540 = vpop.f32.mrf.mxu0
      %v541 = vadd.f32 0.0, %v540
      %v542 = vpop.f32.mrf.mxu0
      %v543 = vpop.f32.mrf.mxu0
      %v544 = vadd.f32 0.0, %v543
      %v545 = vpop.f32.mrf.mxu0
      %546 = vdwg.mxu0
      %v547 = vadd.f32 %v400, %v509
      %v548 = vadd.f32 %v403, %v512
      %v549 = vadd.f32 %v408, %v517
      %v550 = vadd.f32 %v411, %v520
      %v551 = vadd.f32 %v416, %v525
      %v552 = vadd.f32 %v419, %v528
      %v553 = vadd.f32 %v424, %v533
      %v554 = vadd.f32 %v427, %v536
      %v555 = vadd.f32 %v432, %v541
      %v556 = vadd.f32 %v435, %v544
      %v557 = vld [vmem:[%s165 + $0x4] sm:$0xe]
      %v558 = vld [vmem:[%s165 + $0x8] sm:$0xf]
      %v559 = vld [vmem:[%s165 + $0xc] sm:$0xf]
      %v560 = vld [vmem:[%s165 + $0x10] sm:$0xf]
      %v561 = vld [vmem:[%s165 + $0x14] sm:$0xf]
      %v562 = vld [vmem:[%s165 + $0x18] sm:$0xf]
      %v563 = vld [vmem:[%s165 + $0x1c] sm:$0xf]
      %v564 = vld [vmem:[%s165 + $0x20] sm:$0xf]
      %v565 = vld [vmem:[%s165 + $0x24] sm:$0xf]
      %v566 = vld [vmem:[%s165 + $0x28] sm:$0xf]
      %v567 = vld [vmem:[%s165 + $0x2c] sm:$0x1]
      %s568 = scalar_lea.vmem %s1, 12
      %v569 = vld [vmem:[%s568] sm:$0xf]
      %v581 = vunpack.c.l.b16 %v557
      %v582 = vunpack.c.l.b16 %v558
      %v583 = vunpack.c.l.b16 %v559
      %v584 = vunpack.c.l.b16 %v560
      %v585 = vunpack.c.l.b16 %v561
      %v586 = vunpack.c.l.b16 %v562
      %v587 = vunpack.c.l.b16 %v563
      %v588 = vunpack.c.l.b16 %v564
      %v589 = vunpack.c.l.b16 %v565
      %v590 = vunpack.c.l.b16 %v566
      %v591 = vunpack.c.l.b16 %v567
      %v592 = vpack.c.b16 %v582, %v581
      %v593 = vpack.c.b16 %v584, %v583
      %v594 = vpack.c.b16 %v586, %v585
      %v595 = vpack.c.b16 %v588, %v587
      %v596 = vpack.c.b16 %v590, %v589
      %v597 = vpack.c.b16 %v591, %v591
      %v598 = vrot.slane %v592, 1
      %v599 = vrot.slane %v593, 1
      %v600 = vsel %vm444, %v598, %v599
      %v601 = vrot.slane %v594, 1
      %v602 = vsel %vm444, %v599, %v601
      %v603 = vrot.slane %v595, 1
      %v604 = vsel %vm444, %v601, %v603
      %v605 = vrot.slane %v596, 1
      %v606 = vsel %vm444, %v603, %v605
      %v607 = vrot.slane %v597, 1
      %v608 = vsel %vm444, %v605, %v607
      %v610 = vsel %vm259, %v600, 0
      %v613 = vsel %vm259, %v602, 0
      %v616 = vsel %vm259, %v604, 0
      %v619 = vsel %vm259, %v606, 0
      %v622 = vsel %vm259, %v608, 0
      %v625 = vsel %vm275, %v569, 0
      %627 = vmatprep.subr.bf16.mxu0 0
      %628 = vmatpush1.bf16.msra.mxu0 0
      %629 = vmatprep.subr.bf16.mxu0 0
      %630 = vmatpush1.bf16.msra.mxu0 0
      %631 = vmatprep.subr.bf16.mxu0 0
      %632 = vmatpush1.bf16.msra.mxu0 0
      %633 = vmatprep.subr.bf16.mxu0 0
      %634 = vmatpush1.bf16.msra.mxu0 0
      %635 = vmatprep.subr.bf16.mxu0 0
      %636 = vmatpush1.bf16.msra.mxu0 0
      %637 = vmatprep.subr.bf16.mxu0 0
      %638 = vmatpush1.bf16.msra.mxu0 0
      %639 = vmatprep.subr.bf16.mxu0 0
      %640 = vmatpush1.bf16.msra.mxu0 0
      %641 = vmatprep.subr.bf16.mxu0 0
      %642 = vmatpush1.bf16.msra.mxu0 %v625
      %643 = vmatprep.subr.bf16.mxu0 0
      %644 = vmatpush2.bf16.msra.mxu0 0
      %645 = vmatprep.subr.bf16.mxu0 0
      %646 = vmatpush2.bf16.msra.mxu0 0
      %647 = vmatprep.subr.bf16.mxu0 0
      %648 = vmatpush2.bf16.msra.mxu0 0
      %649 = vmatprep.subr.bf16.mxu0 0
      %650 = vmatpush2.bf16.msra.mxu0 0
      %651 = vmatprep.subr.bf16.mxu0 0
      %652 = vmatpush2.bf16.msra.mxu0 0
      %653 = vmatprep.subr.bf16.mxu0 0
      %654 = vmatpush2.bf16.msra.mxu0 0
      %655 = vmatprep.subr.bf16.mxu0 0
      %656 = vmatpush2.bf16.msra.mxu0 0
      %657 = vmatprep.subr.bf16.mxu0 0
      %658 = vmatpush2.bf16.msra.mxu0 0
      %659 = vmatprep.mubr.bf16.mxu0 0
      %660 = vmatmul.mubr.bf16.gmra.mxu0 %v610
      %v661 = vpop.f32.mrf.mxu0
      %v662 = vadd.f32 0.0, %v661
      %v663 = vpop.f32.mrf.mxu0
      %v664 = vpop.f32.mrf.mxu0
      %v665 = vadd.f32 0.0, %v664
      %v666 = vpop.f32.mrf.mxu0
      %667 = vmatprep.mubr.bf16.mxu0 0
      %668 = vmatmul.mubr.bf16.gmra.mxu0 %v613
      %v669 = vpop.f32.mrf.mxu0
      %v670 = vadd.f32 0.0, %v669
      %v671 = vpop.f32.mrf.mxu0
      %v672 = vpop.f32.mrf.mxu0
      %v673 = vadd.f32 0.0, %v672
      %v674 = vpop.f32.mrf.mxu0
      %675 = vmatprep.mubr.bf16.mxu0 0
      %676 = vmatmul.mubr.bf16.gmra.mxu0 %v616
      %v677 = vpop.f32.mrf.mxu0
      %v678 = vadd.f32 0.0, %v677
      %v679 = vpop.f32.mrf.mxu0
      %v680 = vpop.f32.mrf.mxu0
      %v681 = vadd.f32 0.0, %v680
      %v682 = vpop.f32.mrf.mxu0
      %683 = vmatprep.mubr.bf16.mxu0 0
      %684 = vmatmul.mubr.bf16.gmra.mxu0 %v619
      %v685 = vpop.f32.mrf.mxu0
      %v686 = vadd.f32 0.0, %v685
      %v687 = vpop.f32.mrf.mxu0
      %v688 = vpop.f32.mrf.mxu0
      %v689 = vadd.f32 0.0, %v688
      %v690 = vpop.f32.mrf.mxu0
      %691 = vmatprep.mubr.bf16.mxu0 0
      %692 = vmatmul.mubr.bf16.gmra.mxu0 %v622
      %v693 = vpop.f32.mrf.mxu0
      %v694 = vadd.f32 0.0, %v693
      %v695 = vpop.f32.mrf.mxu0
      %v696 = vpop.f32.mrf.mxu0
      %v697 = vadd.f32 0.0, %v696
      %v698 = vpop.f32.mrf.mxu0
      %699 = vdwg.mxu0
      %v700 = vadd.f32 %v547, %v662
      %v701 = vadd.f32 %v548, %v665
      %v702 = vadd.f32 %v549, %v670
      %v703 = vadd.f32 %v550, %v673
      %v704 = vadd.f32 %v551, %v678
      %v705 = vadd.f32 %v552, %v681
      %v706 = vadd.f32 %v553, %v686
      %v707 = vadd.f32 %v554, %v689
      %v708 = vadd.f32 %v555, %v694
      %v709 = vadd.f32 %v556, %v697
      %v710 = vld [vmem:[%s165 + $0x2c] sm:$0x3]
      %s711 = scalar_lea.vmem %s1, 16
      %v712 = vld [vmem:[%s711] sm:$0xf]
      %v714 = vunpack.c.l.b16 %v710
      %v715 = vpack.c.b16 %v714, %v714
      %vm716 = vsmask.f32 6400
      %v718 = vshrl.u32 %v592, 16
      %v720 = vrot.slane %v718, 1
      %v721 = vshll.u32 %v592, 16
      %v723 = vrot.slane %v721, 2
      %v724 = vor.u32 %v720, %v723
      %v726 = vshrl.u32 %v593, 16
      %v728 = vrot.slane %v726, 1
      %v729 = vshll.u32 %v593, 16
      %v731 = vrot.slane %v729, 2
      %v732 = vor.u32 %v728, %v731
      %v733 = vsel %vm716, %v724, %v732
      %v735 = vshrl.u32 %v594, 16
      %v737 = vrot.slane %v735, 1
      %v738 = vshll.u32 %v594, 16
      %v740 = vrot.slane %v738, 2
      %v741 = vor.u32 %v737, %v740
      %v742 = vsel %vm716, %v732, %v741
      %v744 = vshrl.u32 %v595, 16
      %v746 = vrot.slane %v744, 1
      %v747 = vshll.u32 %v595, 16
      %v749 = vrot.slane %v747, 2
      %v750 = vor.u32 %v746, %v749
      %v751 = vsel %vm716, %v741, %v750
      %v753 = vshrl.u32 %v596, 16
      %v755 = vrot.slane %v753, 1
      %v756 = vshll.u32 %v596, 16
      %v758 = vrot.slane %v756, 2
      %v759 = vor.u32 %v755, %v758
      %v760 = vsel %vm716, %v750, %v759
      %v762 = vshrl.u32 %v715, 16
      %v764 = vrot.slane %v762, 1
      %v765 = vshll.u32 %v715, 16
      %v767 = vrot.slane %v765, 2
      %v768 = vor.u32 %v764, %v767
      %v769 = vsel %vm716, %v759, %v768
      %v771 = vsel %vm259, %v733, 0
      %v774 = vsel %vm259, %v742, 0
      %v777 = vsel %vm259, %v751, 0
      %v780 = vsel %vm259, %v760, 0
      %v783 = vsel %vm259, %v769, 0
      %v786 = vsel %vm275, %v712, 0
      %788 = vmatprep.subr.bf16.mxu0 0
      %789 = vmatpush1.bf16.msra.mxu0 0
      %790 = vmatprep.subr.bf16.mxu0 0
      %791 = vmatpush1.bf16.msra.mxu0 0
      %792 = vmatprep.subr.bf16.mxu0 0
      %793 = vmatpush1.bf16.msra.mxu0 0
      %794 = vmatprep.subr.bf16.mxu0 0
      %795 = vmatpush1.bf16.msra.mxu0 0
      %796 = vmatprep.subr.bf16.mxu0 0
      %797 = vmatpush1.bf16.msra.mxu0 0
      %798 = vmatprep.subr.bf16.mxu0 0
      %799 = vmatpush1.bf16.msra.mxu0 0
      %800 = vmatprep.subr.bf16.mxu0 0
      %801 = vmatpush1.bf16.msra.mxu0 0
      %802 = vmatprep.subr.bf16.mxu0 0
      %803 = vmatpush1.bf16.msra.mxu0 %v786
      %804 = vmatprep.subr.bf16.mxu0 0
      %805 = vmatpush2.bf16.msra.mxu0 0
      %806 = vmatprep.subr.bf16.mxu0 0
      %807 = vmatpush2.bf16.msra.mxu0 0
      %808 = vmatprep.subr.bf16.mxu0 0
      %809 = vmatpush2.bf16.msra.mxu0 0
      %810 = vmatprep.subr.bf16.mxu0 0
      %811 = vmatpush2.bf16.msra.mxu0 0
      %812 = vmatprep.subr.bf16.mxu0 0
      %813 = vmatpush2.bf16.msra.mxu0 0
      %814 = vmatprep.subr.bf16.mxu0 0
      %815 = vmatpush2.bf16.msra.mxu0 0
      %816 = vmatprep.subr.bf16.mxu0 0
      %817 = vmatpush2.bf16.msra.mxu0 0
      %818 = vmatprep.subr.bf16.mxu0 0
      %819 = vmatpush2.bf16.msra.mxu0 0
      %820 = vmatprep.mubr.bf16.mxu0 0
      %821 = vmatmul.mubr.bf16.gmra.mxu0 %v771
      %v822 = vpop.f32.mrf.mxu0
      %v823 = vadd.f32 0.0, %v822
      %v824 = vpop.f32.mrf.mxu0
      %v825 = vpop.f32.mrf.mxu0
      %v826 = vadd.f32 0.0, %v825
      %v827 = vpop.f32.mrf.mxu0
      %828 = vmatprep.mubr.bf16.mxu0 0
      %829 = vmatmul.mubr.bf16.gmra.mxu0 %v774
      %v830 = vpop.f32.mrf.mxu0
      %v831 = vadd.f32 0.0, %v830
      %v832 = vpop.f32.mrf.mxu0
      %v833 = vpop.f32.mrf.mxu0
      %v834 = vadd.f32 0.0, %v833
      %v835 = vpop.f32.mrf.mxu0
      %836 = vmatprep.mubr.bf16.mxu0 0
      %837 = vmatmul.mubr.bf16.gmra.mxu0 %v777
      %v838 = vpop.f32.mrf.mxu0
      %v839 = vadd.f32 0.0, %v838
      %v840 = vpop.f32.mrf.mxu0
      %v841 = vpop.f32.mrf.mxu0
      %v842 = vadd.f32 0.0, %v841
      %v843 = vpop.f32.mrf.mxu0
      %844 = vmatprep.mubr.bf16.mxu0 0
      %845 = vmatmul.mubr.bf16.gmra.mxu0 %v780
      %v846 = vpop.f32.mrf.mxu0
      %v847 = vadd.f32 0.0, %v846
      %v848 = vpop.f32.mrf.mxu0
      %v849 = vpop.f32.mrf.mxu0
      %v850 = vadd.f32 0.0, %v849
      %v851 = vpop.f32.mrf.mxu0
      %852 = vmatprep.mubr.bf16.mxu0 0
      %853 = vmatmul.mubr.bf16.gmra.mxu0 %v783
      %v854 = vpop.f32.mrf.mxu0
      %v855 = vadd.f32 0.0, %v854
      %v856 = vpop.f32.mrf.mxu0
      %v857 = vpop.f32.mrf.mxu0
      %v858 = vadd.f32 0.0, %v857
      %v859 = vpop.f32.mrf.mxu0
      %860 = vdwg.mxu0
      %v861 = vadd.f32 %v700, %v823
      %v862 = vadd.f32 %v701, %v826
      %v863 = vadd.f32 %v702, %v831
      %v864 = vadd.f32 %v703, %v834
      %v865 = vadd.f32 %v704, %v839
      %v866 = vadd.f32 %v705, %v842
      %v867 = vadd.f32 %v706, %v847
      %v868 = vadd.f32 %v707, %v850
      %v869 = vadd.f32 %v708, %v855
      %v870 = vadd.f32 %v709, %v858
      %v871 = vld [vmem:[%s165 + $0x4] sm:$0xc]
      %s872 = scalar_lea.vmem %s1, 20
      %v873 = vld [vmem:[%s872] sm:$0xf]
      %v875 = vunpack.c.l.b16 %v871
      %v876 = vpack.c.b16 %v582, %v875
      %vm877 = vcmask 1045504
      %v878 = vrot.slane %v876, 2
      %v879 = vrot.slane %v593, 2
      %v880 = vsel %vm877, %v878, %v879
      %v881 = vrot.slane %v594, 2
      %v882 = vsel %vm877, %v879, %v881
      %v883 = vrot.slane %v595, 2
      %v884 = vsel %vm877, %v881, %v883
      %v885 = vrot.slane %v596, 2
      %v886 = vsel %vm877, %v883, %v885
      %v887 = vrot.slane %v715, 2
      %v888 = vsel %vm877, %v885, %v887
      %v890 = vsel %vm259, %v880, 0
      %v893 = vsel %vm259, %v882, 0
      %v896 = vsel %vm259, %v884, 0
      %v899 = vsel %vm259, %v886, 0
      %v902 = vsel %vm259, %v888, 0
      %v905 = vsel %vm275, %v873, 0
      %907 = vmatprep.subr.bf16.mxu0 0
      %908 = vmatpush1.bf16.msra.mxu0 0
      %909 = vmatprep.subr.bf16.mxu0 0
      %910 = vmatpush1.bf16.msra.mxu0 0
      %911 = vmatprep.subr.bf16.mxu0 0
      %912 = vmatpush1.bf16.msra.mxu0 0
      %913 = vmatprep.subr.bf16.mxu0 0
      %914 = vmatpush1.bf16.msra.mxu0 0
      %915 = vmatprep.subr.bf16.mxu0 0
      %916 = vmatpush1.bf16.msra.mxu0 0
      %917 = vmatprep.subr.bf16.mxu0 0
      %918 = vmatpush1.bf16.msra.mxu0 0
      %919 = vmatprep.subr.bf16.mxu0 0
      %920 = vmatpush1.bf16.msra.mxu0 0
      %921 = vmatprep.subr.bf16.mxu0 0
      %922 = vmatpush1.bf16.msra.mxu0 %v905
      %923 = vmatprep.subr.bf16.mxu0 0
      %924 = vmatpush2.bf16.msra.mxu0 0
      %925 = vmatprep.subr.bf16.mxu0 0
      %926 = vmatpush2.bf16.msra.mxu0 0
      %927 = vmatprep.subr.bf16.mxu0 0
      %928 = vmatpush2.bf16.msra.mxu0 0
      %929 = vmatprep.subr.bf16.mxu0 0
      %930 = vmatpush2.bf16.msra.mxu0 0
      %931 = vmatprep.subr.bf16.mxu0 0
      %932 = vmatpush2.bf16.msra.mxu0 0
      %933 = vmatprep.subr.bf16.mxu0 0
      %934 = vmatpush2.bf16.msra.mxu0 0
      %935 = vmatprep.subr.bf16.mxu0 0
      %936 = vmatpush2.bf16.msra.mxu0 0
      %937 = vmatprep.subr.bf16.mxu0 0
      %938 = vmatpush2.bf16.msra.mxu0 0
      %939 = vmatprep.mubr.bf16.mxu0 0
      %940 = vmatmul.mubr.bf16.gmra.mxu0 %v890
      %v941 = vpop.f32.mrf.mxu0
      %v942 = vadd.f32 0.0, %v941
      %v943 = vpop.f32.mrf.mxu0
      %v944 = vpop.f32.mrf.mxu0
      %v945 = vadd.f32 0.0, %v944
      %v946 = vpop.f32.mrf.mxu0
      %947 = vmatprep.mubr.bf16.mxu0 0
      %948 = vmatmul.mubr.bf16.gmra.mxu0 %v893
      %v949 = vpop.f32.mrf.mxu0
      %v950 = vadd.f32 0.0, %v949
      %v951 = vpop.f32.mrf.mxu0
      %v952 = vpop.f32.mrf.mxu0
      %v953 = vadd.f32 0.0, %v952
      %v954 = vpop.f32.mrf.mxu0
      %955 = vmatprep.mubr.bf16.mxu0 0
      %956 = vmatmul.mubr.bf16.gmra.mxu0 %v896
      %v957 = vpop.f32.mrf.mxu0
      %v958 = vadd.f32 0.0, %v957
      %v959 = vpop.f32.mrf.mxu0
      %v960 = vpop.f32.mrf.mxu0
      %v961 = vadd.f32 0.0, %v960
      %v962 = vpop.f32.mrf.mxu0
      %963 = vmatprep.mubr.bf16.mxu0 0
      %964 = vmatmul.mubr.bf16.gmra.mxu0 %v899
      %v965 = vpop.f32.mrf.mxu0
      %v966 = vadd.f32 0.0, %v965
      %v967 = vpop.f32.mrf.mxu0
      %v968 = vpop.f32.mrf.mxu0
      %v969 = vadd.f32 0.0, %v968
      %v970 = vpop.f32.mrf.mxu0
      %971 = vmatprep.mubr.bf16.mxu0 0
      %972 = vmatmul.mubr.bf16.gmra.mxu0 %v902
      %v973 = vpop.f32.mrf.mxu0
      %v974 = vadd.f32 0.0, %v973
      %v975 = vpop.f32.mrf.mxu0
      %v976 = vpop.f32.mrf.mxu0
      %v977 = vadd.f32 0.0, %v976
      %v978 = vpop.f32.mrf.mxu0
      %979 = vdwg.mxu0
      %v980 = vadd.f32 %v861, %v942
      %v981 = vadd.f32 %v862, %v945
      %v982 = vadd.f32 %v863, %v950
      %v983 = vadd.f32 %v864, %v953
      %v984 = vadd.f32 %v865, %v958
      %v985 = vadd.f32 %v866, %v961
      %v986 = vadd.f32 %v867, %v966
      %v987 = vadd.f32 %v868, %v969
      %v988 = vadd.f32 %v869, %v974
      %v989 = vadd.f32 %v870, %v977
      %v990 = vld [vmem:[%s165 + $0x8] sm:$0xc]
      %v991 = vld [vmem:[%s165 + $0xc] sm:$0xf]
      %v992 = vld [vmem:[%s165 + $0x10] sm:$0xf]
      %v993 = vld [vmem:[%s165 + $0x14] sm:$0xf]
      %v994 = vld [vmem:[%s165 + $0x18] sm:$0xf]
      %v995 = vld [vmem:[%s165 + $0x1c] sm:$0xf]
      %v996 = vld [vmem:[%s165 + $0x20] sm:$0xf]
      %v997 = vld [vmem:[%s165 + $0x24] sm:$0xf]
      %v998 = vld [vmem:[%s165 + $0x28] sm:$0xf]
      %v999 = vld [vmem:[%s165 + $0x2c] sm:$0xf]
      %v1000 = vld [vmem:[%s165 + $0x30] sm:$0x3]
      %s1001 = scalar_lea.vmem %s1, 24
      %v1002 = vld [vmem:[%s1001] sm:$0xf]
      %v1014 = vunpack.c.l.b16 %v990
      %v1015 = vunpack.c.l.b16 %v991
      %v1016 = vunpack.c.l.b16 %v992
      %v1017 = vunpack.c.l.b16 %v993
      %v1018 = vunpack.c.l.b16 %v994
      %v1019 = vunpack.c.l.b16 %v995
      %v1020 = vunpack.c.l.b16 %v996
      %v1021 = vunpack.c.l.b16 %v997
      %v1022 = vunpack.c.l.b16 %v998
      %v1023 = vunpack.c.l.b16 %v999
      %v1024 = vunpack.c.l.b16 %v1000
      %v1025 = vpack.c.b16 %v1015, %v1014
      %v1026 = vpack.c.b16 %v1017, %v1016
      %v1027 = vpack.c.b16 %v1019, %v1018
      %v1028 = vpack.c.b16 %v1021, %v1020
      %v1029 = vpack.c.b16 %v1023, %v1022
      %v1030 = vpack.c.b16 %v1024, %v1024
      %v1031 = vrot.slane %v1025, 2
      %v1032 = vrot.slane %v1026, 2
      %v1033 = vsel %vm877, %v1031, %v1032
      %v1034 = vrot.slane %v1027, 2
      %v1035 = vsel %vm877, %v1032, %v1034
      %v1036 = vrot.slane %v1028, 2
      %v1037 = vsel %vm877, %v1034, %v1036
      %v1038 = vrot.slane %v1029, 2
      %v1039 = vsel %vm877, %v1036, %v1038
      %v1040 = vrot.slane %v1030, 2
      %v1041 = vsel %vm877, %v1038, %v1040
      %v1043 = vsel %vm259, %v1033, 0
      %v1046 = vsel %vm259, %v1035, 0
      %v1049 = vsel %vm259, %v1037, 0
      %v1052 = vsel %vm259, %v1039, 0
      %v1055 = vsel %vm259, %v1041, 0
      %v1058 = vsel %vm275, %v1002, 0
      %1060 = vmatprep.subr.bf16.mxu0 0
      %1061 = vmatpush1.bf16.msra.mxu0 0
      %1062 = vmatprep.subr.bf16.mxu0 0
      %1063 = vmatpush1.bf16.msra.mxu0 0
      %1064 = vmatprep.subr.bf16.mxu0 0
      %1065 = vmatpush1.bf16.msra.mxu0 0
      %1066 = vmatprep.subr.bf16.mxu0 0
      %1067 = vmatpush1.bf16.msra.mxu0 0
      %1068 = vmatprep.subr.bf16.mxu0 0
      %1069 = vmatpush1.bf16.msra.mxu0 0
      %1070 = vmatprep.subr.bf16.mxu0 0
      %1071 = vmatpush1.bf16.msra.mxu0 0
      %1072 = vmatprep.subr.bf16.mxu0 0
      %1073 = vmatpush1.bf16.msra.mxu0 0
      %1074 = vmatprep.subr.bf16.mxu0 0
      %1075 = vmatpush1.bf16.msra.mxu0 %v1058
      %1076 = vmatprep.subr.bf16.mxu0 0
      %1077 = vmatpush2.bf16.msra.mxu0 0
      %1078 = vmatprep.subr.bf16.mxu0 0
      %1079 = vmatpush2.bf16.msra.mxu0 0
      %1080 = vmatprep.subr.bf16.mxu0 0
      %1081 = vmatpush2.bf16.msra.mxu0 0
      %1082 = vmatprep.subr.bf16.mxu0 0
      %1083 = vmatpush2.bf16.msra.mxu0 0
      %1084 = vmatprep.subr.bf16.mxu0 0
      %1085 = vmatpush2.bf16.msra.mxu0 0
      %1086 = vmatprep.subr.bf16.mxu0 0
      %1087 = vmatpush2.bf16.msra.mxu0 0
      %1088 = vmatprep.subr.bf16.mxu0 0
      %1089 = vmatpush2.bf16.msra.mxu0 0
      %1090 = vmatprep.subr.bf16.mxu0 0
      %1091 = vmatpush2.bf16.msra.mxu0 0
      %1092 = vmatprep.mubr.bf16.mxu0 0
      %1093 = vmatmul.mubr.bf16.gmra.mxu0 %v1043
      %v1094 = vpop.f32.mrf.mxu0
      %v1095 = vadd.f32 0.0, %v1094
      %v1096 = vpop.f32.mrf.mxu0
      %v1097 = vpop.f32.mrf.mxu0
      %v1098 = vadd.f32 0.0, %v1097
      %v1099 = vpop.f32.mrf.mxu0
      %1100 = vmatprep.mubr.bf16.mxu0 0
      %1101 = vmatmul.mubr.bf16.gmra.mxu0 %v1046
      %v1102 = vpop.f32.mrf.mxu0
      %v1103 = vadd.f32 0.0, %v1102
      %v1104 = vpop.f32.mrf.mxu0
      %v1105 = vpop.f32.mrf.mxu0
      %v1106 = vadd.f32 0.0, %v1105
      %v1107 = vpop.f32.mrf.mxu0
      %1108 = vmatprep.mubr.bf16.mxu0 0
      %1109 = vmatmul.mubr.bf16.gmra.mxu0 %v1049
      %v1110 = vpop.f32.mrf.mxu0
      %v1111 = vadd.f32 0.0, %v1110
      %v1112 = vpop.f32.mrf.mxu0
      %v1113 = vpop.f32.mrf.mxu0
      %v1114 = vadd.f32 0.0, %v1113
      %v1115 = vpop.f32.mrf.mxu0
      %1116 = vmatprep.mubr.bf16.mxu0 0
      %1117 = vmatmul.mubr.bf16.gmra.mxu0 %v1052
      %v1118 = vpop.f32.mrf.mxu0
      %v1119 = vadd.f32 0.0, %v1118
      %v1120 = vpop.f32.mrf.mxu0
      %v1121 = vpop.f32.mrf.mxu0
      %v1122 = vadd.f32 0.0, %v1121
      %v1123 = vpop.f32.mrf.mxu0
      %1124 = vmatprep.mubr.bf16.mxu0 0
      %1125 = vmatmul.mubr.bf16.gmra.mxu0 %v1055
      %v1126 = vpop.f32.mrf.mxu0
      %v1127 = vadd.f32 0.0, %v1126
      %v1128 = vpop.f32.mrf.mxu0
      %v1129 = vpop.f32.mrf.mxu0
      %v1130 = vadd.f32 0.0, %v1129
      %v1131 = vpop.f32.mrf.mxu0
      %1132 = vdwg.mxu0
      %v1133 = vadd.f32 %v980, %v1095
      %v1134 = vadd.f32 %v981, %v1098
      %v1135 = vadd.f32 %v982, %v1103
      %v1136 = vadd.f32 %v983, %v1106
      %v1137 = vadd.f32 %v984, %v1111
      %v1138 = vadd.f32 %v985, %v1114
      %v1139 = vadd.f32 %v986, %v1119
      %v1140 = vadd.f32 %v987, %v1122
      %v1141 = vadd.f32 %v988, %v1127
      %v1142 = vadd.f32 %v989, %v1130
      %v1143 = vld [vmem:[%s165 + $0x30] sm:$0x7]
      %s1144 = scalar_lea.vmem %s1, 28
      %v1145 = vld [vmem:[%s1144] sm:$0xf]
      %v1147 = vunpack.c.l.b16 %v1143
      %v1148 = vpack.c.b16 %v1147, %v1147
      %vm1149 = vsmask.f32 5376
      %v1151 = vshrl.u32 %v1025, 16
      %v1153 = vrot.slane %v1151, 2
      %v1154 = vshll.u32 %v1025, 16
      %v1156 = vrot.slane %v1154, 3
      %v1157 = vor.u32 %v1153, %v1156
      %v1159 = vshrl.u32 %v1026, 16
      %v1161 = vrot.slane %v1159, 2
      %v1162 = vshll.u32 %v1026, 16
      %v1164 = vrot.slane %v1162, 3
      %v1165 = vor.u32 %v1161, %v1164
      %v1166 = vsel %vm1149, %v1157, %v1165
      %v1168 = vshrl.u32 %v1027, 16
      %v1170 = vrot.slane %v1168, 2
      %v1171 = vshll.u32 %v1027, 16
      %v1173 = vrot.slane %v1171, 3
      %v1174 = vor.u32 %v1170, %v1173
      %v1175 = vsel %vm1149, %v1165, %v1174
      %v1177 = vshrl.u32 %v1028, 16
      %v1179 = vrot.slane %v1177, 2
      %v1180 = vshll.u32 %v1028, 16
      %v1182 = vrot.slane %v1180, 3
      %v1183 = vor.u32 %v1179, %v1182
      %v1184 = vsel %vm1149, %v1174, %v1183
      %v1186 = vshrl.u32 %v1029, 16
      %v1188 = vrot.slane %v1186, 2
      %v1189 = vshll.u32 %v1029, 16
      %v1191 = vrot.slane %v1189, 3
      %v1192 = vor.u32 %v1188, %v1191
      %v1193 = vsel %vm1149, %v1183, %v1192
      %v1195 = vshrl.u32 %v1148, 16
      %v1197 = vrot.slane %v1195, 2
      %v1198 = vshll.u32 %v1148, 16
      %v1200 = vrot.slane %v1198, 3
      %v1201 = vor.u32 %v1197, %v1200
      %v1202 = vsel %vm1149, %v1192, %v1201
      %v1204 = vsel %vm259, %v1166, 0
      %v1207 = vsel %vm259, %v1175, 0
      %v1210 = vsel %vm259, %v1184, 0
      %v1213 = vsel %vm259, %v1193, 0
      %v1216 = vsel %vm259, %v1202, 0
      %v1219 = vsel %vm275, %v1145, 0
      %1221 = vmatprep.subr.bf16.mxu0 0
      %1222 = vmatpush1.bf16.msra.mxu0 0
      %1223 = vmatprep.subr.bf16.mxu0 0
      %1224 = vmatpush1.bf16.msra.mxu0 0
      %1225 = vmatprep.subr.bf16.mxu0 0
      %1226 = vmatpush1.bf16.msra.mxu0 0
      %1227 = vmatprep.subr.bf16.mxu0 0
      %1228 = vmatpush1.bf16.msra.mxu0 0
      %1229 = vmatprep.subr.bf16.mxu0 0
      %1230 = vmatpush1.bf16.msra.mxu0 0
      %1231 = vmatprep.subr.bf16.mxu0 0
      %1232 = vmatpush1.bf16.msra.mxu0 0
      %1233 = vmatprep.subr.bf16.mxu0 0
      %1234 = vmatpush1.bf16.msra.mxu0 0
      %1235 = vmatprep.subr.bf16.mxu0 0
      %1236 = vmatpush1.bf16.msra.mxu0 %v1219
      %1237 = vmatprep.subr.bf16.mxu0 0
      %1238 = vmatpush2.bf16.msra.mxu0 0
      %1239 = vmatprep.subr.bf16.mxu0 0
      %1240 = vmatpush2.bf16.msra.mxu0 0
      %1241 = vmatprep.subr.bf16.mxu0 0
      %1242 = vmatpush2.bf16.msra.mxu0 0
      %1243 = vmatprep.subr.bf16.mxu0 0
      %1244 = vmatpush2.bf16.msra.mxu0 0
      %1245 = vmatprep.subr.bf16.mxu0 0
      %1246 = vmatpush2.bf16.msra.mxu0 0
      %1247 = vmatprep.subr.bf16.mxu0 0
      %1248 = vmatpush2.bf16.msra.mxu0 0
      %1249 = vmatprep.subr.bf16.mxu0 0
      %1250 = vmatpush2.bf16.msra.mxu0 0
      %1251 = vmatprep.subr.bf16.mxu0 0
      %1252 = vmatpush2.bf16.msra.mxu0 0
      %1253 = vmatprep.mubr.bf16.mxu0 0
      %1254 = vmatmul.mubr.bf16.gmra.mxu0 %v1204
      %v1255 = vpop.f32.mrf.mxu0
      %v1256 = vadd.f32 0.0, %v1255
      %v1257 = vpop.f32.mrf.mxu0
      %v1258 = vpop.f32.mrf.mxu0
      %v1259 = vadd.f32 0.0, %v1258
      %v1260 = vpop.f32.mrf.mxu0
      %1261 = vmatprep.mubr.bf16.mxu0 0
      %1262 = vmatmul.mubr.bf16.gmra.mxu0 %v1207
      %v1263 = vpop.f32.mrf.mxu0
      %v1264 = vadd.f32 0.0, %v1263
      %v1265 = vpop.f32.mrf.mxu0
      %v1266 = vpop.f32.mrf.mxu0
      %v1267 = vadd.f32 0.0, %v1266
      %v1268 = vpop.f32.mrf.mxu0
      %1269 = vmatprep.mubr.bf16.mxu0 0
      %1270 = vmatmul.mubr.bf16.gmra.mxu0 %v1210
      %v1271 = vpop.f32.mrf.mxu0
      %v1272 = vadd.f32 0.0, %v1271
      %v1273 = vpop.f32.mrf.mxu0
      %v1274 = vpop.f32.mrf.mxu0
      %v1275 = vadd.f32 0.0, %v1274
      %v1276 = vpop.f32.mrf.mxu0
      %1277 = vmatprep.mubr.bf16.mxu0 0
      %1278 = vmatmul.mubr.bf16.gmra.mxu0 %v1213
      %v1279 = vpop.f32.mrf.mxu0
      %v1280 = vadd.f32 0.0, %v1279
      %v1281 = vpop.f32.mrf.mxu0
      %v1282 = vpop.f32.mrf.mxu0
      %v1283 = vadd.f32 0.0, %v1282
      %v1284 = vpop.f32.mrf.mxu0
      %1285 = vmatprep.mubr.bf16.mxu0 0
      %1286 = vmatmul.mubr.bf16.gmra.mxu0 %v1216
      %v1287 = vpop.f32.mrf.mxu0
      %v1288 = vadd.f32 0.0, %v1287
      %v1289 = vpop.f32.mrf.mxu0
      %v1290 = vpop.f32.mrf.mxu0
      %v1291 = vadd.f32 0.0, %v1290
      %v1292 = vpop.f32.mrf.mxu0
      %1293 = vdwg.mxu0
      %v1294 = vadd.f32 %v1133, %v1256
      %v1295 = vadd.f32 %v1134, %v1259
      %v1296 = vadd.f32 %v1135, %v1264
      %v1297 = vadd.f32 %v1136, %v1267
      %v1298 = vadd.f32 %v1137, %v1272
      %v1299 = vadd.f32 %v1138, %v1275
      %v1300 = vadd.f32 %v1139, %v1280
      %v1301 = vadd.f32 %v1140, %v1283
      %v1302 = vadd.f32 %v1141, %v1288
      %v1303 = vadd.f32 %v1142, %v1291
      %v1304 = vld [vmem:[%s165 + $0x8] sm:$0x8]
      %s1305 = scalar_lea.vmem %s1, 32
      %v1306 = vld [vmem:[%s1305] sm:$0xf]
      %v1308 = vunpack.c.l.b16 %v1304
      %v1309 = vpack.c.b16 %v1015, %v1308
      %vm1310 = vcmask 1044480
      %v1311 = vrot.slane %v1309, 3
      %v1312 = vrot.slane %v1026, 3
      %v1313 = vsel %vm1310, %v1311, %v1312
      %v1314 = vrot.slane %v1027, 3
      %v1315 = vsel %vm1310, %v1312, %v1314
      %v1316 = vrot.slane %v1028, 3
      %v1317 = vsel %vm1310, %v1314, %v1316
      %v1318 = vrot.slane %v1029, 3
      %v1319 = vsel %vm1310, %v1316, %v1318
      %v1320 = vrot.slane %v1148, 3
      %v1321 = vsel %vm1310, %v1318, %v1320
      %v1323 = vsel %vm259, %v1313, 0
      %v1326 = vsel %vm259, %v1315, 0
      %v1329 = vsel %vm259, %v1317, 0
      %v1332 = vsel %vm259, %v1319, 0
      %v1335 = vsel %vm259, %v1321, 0
      %v1338 = vsel %vm275, %v1306, 0
      %1340 = vmatprep.subr.bf16.mxu0 0
      %1341 = vmatpush1.bf16.msra.mxu0 0
      %1342 = vmatprep.subr.bf16.mxu0 0
      %1343 = vmatpush1.bf16.msra.mxu0 0
      %1344 = vmatprep.subr.bf16.mxu0 0
      %1345 = vmatpush1.bf16.msra.mxu0 0
      %1346 = vmatprep.subr.bf16.mxu0 0
      %1347 = vmatpush1.bf16.msra.mxu0 0
      %1348 = vmatprep.subr.bf16.mxu0 0
      %1349 = vmatpush1.bf16.msra.mxu0 0
      %1350 = vmatprep.subr.bf16.mxu0 0
      %1351 = vmatpush1.bf16.msra.mxu0 0
      %1352 = vmatprep.subr.bf16.mxu0 0
      %1353 = vmatpush1.bf16.msra.mxu0 0
      %1354 = vmatprep.subr.bf16.mxu0 0
      %1355 = vmatpush1.bf16.msra.mxu0 %v1338
      %1356 = vmatprep.subr.bf16.mxu0 0
      %1357 = vmatpush2.bf16.msra.mxu0 0
      %1358 = vmatprep.subr.bf16.mxu0 0
      %1359 = vmatpush2.bf16.msra.mxu0 0
      %1360 = vmatprep.subr.bf16.mxu0 0
      %1361 = vmatpush2.bf16.msra.mxu0 0
      %1362 = vmatprep.subr.bf16.mxu0 0
      %1363 = vmatpush2.bf16.msra.mxu0 0
      %1364 = vmatprep.subr.bf16.mxu0 0
      %1365 = vmatpush2.bf16.msra.mxu0 0
      %1366 = vmatprep.subr.bf16.mxu0 0
      %1367 = vmatpush2.bf16.msra.mxu0 0
      %1368 = vmatprep.subr.bf16.mxu0 0
      %1369 = vmatpush2.bf16.msra.mxu0 0
      %1370 = vmatprep.subr.bf16.mxu0 0
      %1371 = vmatpush2.bf16.msra.mxu0 0
      %1372 = vmatprep.mubr.bf16.mxu0 0
      %1373 = vmatmul.mubr.bf16.gmra.mxu0 %v1323
      %v1374 = vpop.f32.mrf.mxu0
      %v1375 = vadd.f32 0.0, %v1374
      %v1376 = vpop.f32.mrf.mxu0
      %v1377 = vpop.f32.mrf.mxu0
      %v1378 = vadd.f32 0.0, %v1377
      %v1379 = vpop.f32.mrf.mxu0
      %1380 = vmatprep.mubr.bf16.mxu0 0
      %1381 = vmatmul.mubr.bf16.gmra.mxu0 %v1326
      %v1382 = vpop.f32.mrf.mxu0
      %v1383 = vadd.f32 0.0, %v1382
      %v1384 = vpop.f32.mrf.mxu0
      %v1385 = vpop.f32.mrf.mxu0
      %v1386 = vadd.f32 0.0, %v1385
      %v1387 = vpop.f32.mrf.mxu0
      %1388 = vmatprep.mubr.bf16.mxu0 0
      %1389 = vmatmul.mubr.bf16.gmra.mxu0 %v1329
      %v1390 = vpop.f32.mrf.mxu0
      %v1391 = vadd.f32 0.0, %v1390
      %v1392 = vpop.f32.mrf.mxu0
      %v1393 = vpop.f32.mrf.mxu0
      %v1394 = vadd.f32 0.0, %v1393
      %v1395 = vpop.f32.mrf.mxu0
      %1396 = vmatprep.mubr.bf16.mxu0 0
      %1397 = vmatmul.mubr.bf16.gmra.mxu0 %v1332
      %v1398 = vpop.f32.mrf.mxu0
      %v1399 = vadd.f32 0.0, %v1398
      %v1400 = vpop.f32.mrf.mxu0
      %v1401 = vpop.f32.mrf.mxu0
      %v1402 = vadd.f32 0.0, %v1401
      %v1403 = vpop.f32.mrf.mxu0
      %1404 = vmatprep.mubr.bf16.mxu0 0
      %1405 = vmatmul.mubr.bf16.gmra.mxu0 %v1335
      %v1406 = vpop.f32.mrf.mxu0
      %v1407 = vadd.f32 0.0, %v1406
      %v1408 = vpop.f32.mrf.mxu0
      %v1409 = vpop.f32.mrf.mxu0
      %v1410 = vadd.f32 0.0, %v1409
      %v1411 = vpop.f32.mrf.mxu0
      %1412 = vdwg.mxu0
      %v1413 = vadd.f32 %v1294, %v1375
      %v1414 = vadd.f32 %v1295, %v1378
      %v1415 = vadd.f32 %v1296, %v1383
      %v1416 = vadd.f32 %v1297, %v1386
      %v1417 = vadd.f32 %v1298, %v1391
      %v1418 = vadd.f32 %v1299, %v1394
      %v1419 = vadd.f32 %v1300, %v1399
      %v1420 = vadd.f32 %v1301, %v1402
      %v1421 = vadd.f32 %v1302, %v1407
      %v1422 = vadd.f32 %v1303, %v1410
      %v1423 = vld [vmem:[%s2] sm:$0x1]
      %v1425 = vlaneseq
      %v1426 = vshrl.u32 %v1425, 7
      %v1427 = vsub.s32 0, %v1426
      %v1428 = vrot.slane %v1423, %v1427
      %v1430 = vadd.f32 %v1413, %v1428
      %v1431 = vadd.f32 %v1414, %v1428
      %v1432 = vadd.f32 %v1415, %v1428
      %v1433 = vadd.f32 %v1416, %v1428
      %v1434 = vadd.f32 %v1417, %v1428
      %v1435 = vadd.f32 %v1418, %v1428
      %v1436 = vadd.f32 %v1419, %v1428
      %v1437 = vadd.f32 %v1420, %v1428
      %v1438 = vadd.f32 %v1421, %v1428
      %v1439 = vadd.f32 %v1422, %v1428
      %v1440 = vmax.f32 %v1430, 0.0
      %v1441 = vmax.f32 %v1431, 0.0
      %v1442 = vmax.f32 %v1432, 0.0
      %v1443 = vmax.f32 %v1433, 0.0
      %v1444 = vmax.f32 %v1434, 0.0
      %v1445 = vmax.f32 %v1435, 0.0
      %v1446 = vmax.f32 %v1436, 0.0
      %v1447 = vmax.f32 %v1437, 0.0
      %v1448 = vmax.f32 %v1438, 0.0
      %v1449 = vmax.f32 %v1439, 0.0
      %v1450 = vpack.c.bf16 %v1441, %v1440
      %v1451 = vpack.c.bf16 %v1443, %v1442
      %v1452 = vpack.c.bf16 %v1445, %v1444
      %v1453 = vpack.c.bf16 %v1447, %v1446
      %v1454 = vpack.c.bf16 %v1449, %v1448
      %v1460 = vunpack.c.l.b16 %v1450
      %v1461 = vunpack.c.h.b16 %v1450
      %v1462 = vunpack.c.l.b16 %v1451
      %v1463 = vunpack.c.h.b16 %v1451
      %v1464 = vunpack.c.l.b16 %v1452
      %v1465 = vunpack.c.h.b16 %v1452
      %v1466 = vunpack.c.l.b16 %v1453
      %v1467 = vunpack.c.h.b16 %v1453
      %v1468 = vunpack.c.l.b16 %v1454
      %v1469 = vunpack.c.h.b16 %v1454
      %v1470 = vpack.c.b16 %v1460, %v1460
      %v1471 = vpack.c.b16 %v1461, %v1461
      %v1472 = vpack.c.b16 %v1462, %v1462
      %v1473 = vpack.c.b16 %v1463, %v1463
      %v1474 = vpack.c.b16 %v1464, %v1464
      %v1475 = vpack.c.b16 %v1465, %v1465
      %v1476 = vpack.c.b16 %v1466, %v1466
      %v1477 = vpack.c.b16 %v1467, %v1467
      %v1478 = vpack.c.b16 %v1468, %v1468
      %v1479 = vpack.c.b16 %v1469, %v1469
      %vm1490 = vcmask 125952
      %1491 = vst.msk [vmem:[%s170] sm:$0xf] %vm1490, %v1470
      %1492 = vst.msk [vmem:[%s170 + $0x4] sm:$0xf] %vm1490, %v1471
      %1493 = vst.msk [vmem:[%s170 + $0x8] sm:$0xf] %vm1490, %v1472
      %1494 = vst.msk [vmem:[%s170 + $0xc] sm:$0xf] %vm1490, %v1473
      %1495 = vst.msk [vmem:[%s170 + $0x10] sm:$0xf] %vm1490, %v1474
      %1496 = vst.msk [vmem:[%s170 + $0x14] sm:$0xf] %vm1490, %v1475
      %1497 = vst.msk [vmem:[%s170 + $0x18] sm:$0xf] %vm1490, %v1476
      %1498 = vst.msk [vmem:[%s170 + $0x1c] sm:$0xf] %vm1490, %v1477
      %1499 = vst.msk [vmem:[%s170 + $0x20] sm:$0xf] %vm1490, %v1478
      %1500 = vst.msk [vmem:[%s170 + $0x24] sm:$0xf] %vm1490, %v1479
      %p1501 = scmp.lt.s32.totalorder %s14, 3
      %s1502 = scalar_select %p1501, %s14, 3
      %s1503 = smul.addr %s1502, 10
      %s1504 = smul.addr %s1503, 4
      %s1505 = scalar_lea.vmem %s3, %s1504
      // Predicated region
      $region33: #{a_call__.12} parent=31 // pred_check
        %p1506 = pneg %p100
      $region34: #{a_call__.12} parent=31 // pred_check_branch
        %1508 = sbr.rel (%p1506) target = $region36
      $region35: #{a_call__.12} parent=31 // pred_region
        _
      $region36: #{a_call__.12} parent=31 // pred_fallthru
        _
    $region32: #{a_call__.12} parent=5 // pred_fallthru
      _
    %p1509 = scmp.le.s32.totalorder 2, %s9
    // Predicated region
    $region37: #{a_call__.12} parent=5 // pred_check
      %p1510 = pneg %p1509
    $region38: #{a_call__.12} parent=5 // pred_check_branch
      %1512 = sbr.rel (%p1510) target = $region40
    $region39: #{a_call__.12} parent=5 // pred_region
      %s1513 = ssub.s32 %s9, 2
      // Predicated region
      $region41: #{a_call__.12} parent=39 // pred_check
        %p1514 = pneg %p106
      $region42: #{a_call__.12} parent=39 // pred_check_branch
        %1516 = sbr.rel (%p1514) target = $region44
      $region43: #{a_call__.12} parent=39 // pred_region
        %p1517 = scmp.lt.s32.totalorder %s15, 3
        %s1518 = scalar_select %p1517, %s15, 3
        %s1519 = smul.addr %s1518, 10
        %s1520 = smul.addr %s1519, 4
        %s1521 = scalar_lea.vmem %s3, %s1520
      $region44: #{a_call__.12} parent=39 // pred_fallthru
        _
    $region40: #{a_call__.12} parent=5 // pred_fallthru
      _
  $region6: #{a_call__.12} parent=0 // loop_footer
    %s13 = sadd.s32 1, %s9
  $region7: #{a_call__.12} parent=0 // loop_footer_branch
    %8 = sbr.rel target = $region3
  $region8: #{a_call__.12} parent=0 // loop_exit
    _

// kernel: a_call__.17
$region0: #{a_call__.17}
  #allocation0 [shape = 'u32[]', space=smem, size = 0x4, offset = 0x4, fixed_abs, tag = 'smem constant byte address 0x4 - core index']
  #allocation1 [shape = 'u32[144,128]{1,0:T(1,128)}', space=vmem, size = 0x12000, scoped, tag = 'internal scratch']
  %s0 = inlined_call_operand.vmem [shape: bf16[2,64,16], index: 0, kind: input, shape index: {}]
  %s1 = inlined_call_operand.vmem [shape: bf16[2,64,16], index: 1, kind: input, shape index: {}]
  %s2 = inlined_call_operand.vmem [shape: f32[2,64,1], index: 2, kind: input, shape index: {}]
  %s3 = inlined_call_operand.vmem [shape: f32[2], index: 3, kind: output, shape index: {}]
  %s4 = sld [smem:[#allocation0]]
  $region49: #{a_call__.17} parent=0
    _
  %s6 = ssub.s32 1, %s4
  %s7 = scalar_select 0, %s6, %s4
  $region1: #{a_call__.17} parent=0
    #allocation2 [shape = 'u8[512]{0}', space=smem, size = 0x200, scoped, tag = 'output window, operand 0, single buffered']
    #allocation3 [shape = 's32[2]{0}', space=sflag, size = 0x8, scoped, tag = 'scoped memory for a_call__.17']
    %8 = vsyncpa [#allocation3], 0
    loop: start=0, step=1, limit=4
    $region2: #{a_call__.17} parent=1 // loop_pre_header
      _
    $region3: #{a_call__.17} parent=1 // loop_header
      %s10 = sphi 0, %s14
      %p11 = scmp.ge.s32.totalorder %s10, 4
      %s17 = sphi 0, %s29
      %s18 = sphi 0, %s25
      %s19 = sphi 0, %s17
      %s20 = sphi 0, %s18
      %s21 = sphi 0, %s19
      %s22 = sphi 0, %s20
      %s34 = sphi 0, %s36
      %s37 = sphi 0, %s34
      %s38 = sphi 0, %s37
      %s54 = sphi 0, %s38
      %s62 = sphi 0, %s64
      %s65 = sphi 0, %s62
      %s66 = sphi 0, %s65
      %s82 = sphi 0, %s66
      %s90 = sphi 0, %s92
      %s93 = sphi 0, %s90
      %s94 = sphi 0, %s93
      %s110 = sphi 0, %s94
      %s114 = sphi 0, %s114
      %s116 = sphi 0, %s114
      %s117 = sphi 0, %s116
      %s131 = sphi 0, %s117
    $region4: #{a_call__.17} parent=1 // loop_header_branch
      %13 = sbr.rel (%p11) target = $region8
    $region5: #{a_call__.17} parent=1 // loop_body
      %s15 = ssub.s32 %s10, 1
      %s16 = ssub.s32 %s10, 2
      %s23 = sadd.s32 1, %s18
      %p24 = scmp.ge.s32.totalorder %s23, 1
      %s25 = scalar_select %p24, 0, %s23
      %s26 = sadd.s32 1, %s17
      %s27 = scalar_select %p24, %s26, %s17
      %p28 = scmp.ge.s32.totalorder %s27, 2
      %s29 = scalar_select %p28, 0, %s27
      %s30 = ssub.s32 %s17, %s29
      %s31 = ssub.s32 %s18, %s25
      %s32 = sor.u32 %s30, %s31
      %p33 = scmp.eq.s32.totalorder %s32, 0
      %s35 = sadd.s32 %s34, 1
      %s36 = scalar_select %p33, %s34, %s35
      %p39 = pneg %p33
      %p40 = scmp.eq.s32.totalorder %s10, 1
      %p41 = por %p39, %p40
      %p42 = scmp.ne.s32.totalorder %s34, %s37
      %p43 = scmp.eq.s32.totalorder %s10, 0
      %p44 = por %p42, %p43
      %p45 = scmp.ne.s32.totalorder %s34, %s37
      %p46 = scmp.eq.s32.totalorder %s15, 1
      %p47 = por %p45, %p46
      %p48 = scmp.ne.s32.totalorder %s37, %s38
      %p49 = scmp.eq.s32.totalorder %s15, 0
      %p50 = por %p48, %p49
      %p51 = scmp.ne.s32.totalorder %s37, %s38
      %p52 = scmp.eq.s32.totalorder %s16, 1
      %p53 = por %p51, %p52
      %p55 = scmp.ne.s32.totalorder %s38, %s54
      %p56 = scmp.eq.s32.totalorder %s16, 0
      %p57 = por %p55, %p56
      %s58 = ssub.s32 %s17, %s29
      %s59 = ssub.s32 %s18, %s25
      %s60 = sor.u32 %s58, %s59
      %p61 = scmp.eq.s32.totalorder %s60, 0
      %s63 = sadd.s32 %s62, 1
      %s64 = scalar_select %p61, %s62, %s63
      %p67 = pneg %p61
      %p68 = scmp.eq.s32.totalorder %s10, 1
      %p69 = por %p67, %p68
      %p70 = scmp.ne.s32.totalorder %s62, %s65
      %p71 = scmp.eq.s32.totalorder %s10, 0
      %p72 = por %p70, %p71
      %p73 = scmp.ne.s32.totalorder %s62, %s65
      %p74 = scmp.eq.s32.totalorder %s15, 1
      %p75 = por %p73, %p74
      %p76 = scmp.ne.s32.totalorder %s65, %s66
      %p77 = scmp.eq.s32.totalorder %s15, 0
      %p78 = por %p76, %p77
      %p79 = scmp.ne.s32.totalorder %s65, %s66
      %p80 = scmp.eq.s32.totalorder %s16, 1
      %p81 = por %p79, %p80
      %p83 = scmp.ne.s32.totalorder %s66, %s82
      %p84 = scmp.eq.s32.totalorder %s16, 0
      %p85 = por %p83, %p84
      %s86 = ssub.s32 %s17, %s29
      %s87 = ssub.s32 %s18, %s25
      %s88 = sor.u32 %s86, %s87
      %p89 = scmp.eq.s32.totalorder %s88, 0
      %s91 = sadd.s32 %s90, 1
      %s92 = scalar_select %p89, %s90, %s91
      %p95 = pneg %p89
      %p96 = scmp.eq.s32.totalorder %s10, 1
      %p97 = por %p95, %p96
      %p98 = scmp.ne.s32.totalorder %s90, %s93
      %p99 = scmp.eq.s32.totalorder %s10, 0
      %p100 = por %p98, %p99
      %p101 = scmp.ne.s32.totalorder %s90, %s93
      %p102 = scmp.eq.s32.totalorder %s15, 1
      %p103 = por %p101, %p102
      %p104 = scmp.ne.s32.totalorder %s93, %s94
      %p105 = scmp.eq.s32.totalorder %s15, 0
      %p106 = por %p104, %p105
      %p107 = scmp.ne.s32.totalorder %s93, %s94
      %p108 = scmp.eq.s32.totalorder %s16, 1
      %p109 = por %p107, %p108
      %p111 = scmp.ne.s32.totalorder %s94, %s110
      %p112 = scmp.eq.s32.totalorder %s16, 0
      %p113 = por %p111, %p112
      %s115 = sadd.s32 %s114, 1
      %p118 = scmp.eq.s32.totalorder %s10, 1
      %p119 = scmp.ne.s32.totalorder %s114, %s116
      %p120 = scmp.eq.s32.totalorder %s10, 0
      %p121 = por %p119, %p120
      %p122 = scmp.ne.s32.totalorder %s114, %s116
      %p123 = scmp.eq.s32.totalorder %s15, 1
      %p124 = por %p122, %p123
      %p125 = scmp.ne.s32.totalorder %s116, %s117
      %p126 = scmp.eq.s32.totalorder %s15, 0
      %p127 = por %p125, %p126
      %p128 = scmp.ne.s32.totalorder %s116, %s117
      %p129 = scmp.eq.s32.totalorder %s16, 1
      %p130 = por %p128, %p129
      %p132 = scmp.ne.s32.totalorder %s117, %s131
      %p133 = scmp.eq.s32.totalorder %s16, 0
      %p134 = por %p132, %p133
      %p135 = scmp.le.s32.totalorder 1, %s10
      %p136 = scmp.lt.s32.totalorder %s10, 3
      %p137 = pnand %p135, %p136
      %p138 = pneg %p137
      // Predicated region
      $region9: #{a_call__.17} parent=5 // pred_check
        _
      $region10: #{a_call__.17} parent=5 // pred_check_branch
        %140 = sbr.rel (%p137) target = $region12
      $region11: #{a_call__.17} parent=5 // pred_region
        %s141 = ssub.s32 %s10, 1
      $region12: #{a_call__.17} parent=5 // pred_fallthru
        _
      %p142 = scmp.lt.s32.totalorder %s10, 2
      // Predicated region
      $region13: #{a_call__.17} parent=5 // pred_check
        %p143 = pneg %p142
      $region14: #{a_call__.17} parent=5 // pred_check_branch
        %145 = sbr.rel (%p143) target = $region16
      $region15: #{a_call__.17} parent=5 // pred_region
        // Predicated region
        $region17: #{a_call__.17} parent=15 // pred_check
          %p146 = pneg %p44
        $region18: #{a_call__.17} parent=15 // pred_check_branch
          %148 = sbr.rel (%p146) target = $region20
        $region19: #{a_call__.17} parent=15 // pred_region
          %s149 = smul.u32 8, %s18
          %p150 = scmp.lt.s32.totalorder %s17, 1
          %s151 = scalar_select %p150, %s17, 1
          %p152 = scmp.lt.s32.totalorder %s149, 7
          %s153 = scalar_select %p152, %s149, 7
          %s154 = smul.addr %s151, 8
          %s155 = sadd.s32 %s153, %s154
          %s156 = smul.addr %s155, 4
          %s157 = scalar_lea.vmem %s0, %s156
          %s158 = smul.u32 8, %s18
        $region20: #{a_call__.17} parent=15 // pred_fallthru
          _
        // Predicated region
        $region21: #{a_call__.17} parent=15 // pred_check
          %p159 = pneg %p72
        $region22: #{a_call__.17} parent=15 // pred_check_branch
          %161 = sbr.rel (%p159) target = $region24
        $region23: #{a_call__.17} parent=15 // pred_region
          %s162 = smul.u32 8, %s18
          %p163 = scmp.lt.s32.totalorder %s17, 1
          %s164 = scalar_select %p163, %s17, 1
          %p165 = scmp.lt.s32.totalorder %s162, 7
          %s166 = scalar_select %p165, %s162, 7
          %s167 = smul.addr %s164, 8
          %s168 = sadd.s32 %s166, %s167
          %s169 = smul.addr %s168, 4
          %s170 = scalar_lea.vmem %s1, %s169
          %s171 = smul.u32 8, %s18
        $region24: #{a_call__.17} parent=15 // pred_fallthru
          _
        // Predicated region
        $region25: #{a_call__.17} parent=15 // pred_check
          %p172 = pneg %p100
        $region26: #{a_call__.17} parent=15 // pred_check_branch
          %174 = sbr.rel (%p172) target = $region28
        $region27: #{a_call__.17} parent=15 // pred_region
          %s175 = smul.u32 8, %s18
          %p176 = scmp.lt.s32.totalorder %s17, 1
          %s177 = scalar_select %p176, %s17, 1
          %p178 = scmp.lt.s32.totalorder %s175, 7
          %s179 = scalar_select %p178, %s175, 7
          %s180 = smul.addr %s177, 8
          %s181 = sadd.s32 %s179, %s180
          %s182 = smul.addr %s181, 8
          %s183 = scalar_lea.vmem %s2, %s182
          %s184 = smul.u32 8, %s18
        $region28: #{a_call__.17} parent=15 // pred_fallthru
          _
      $region16: #{a_call__.17} parent=5 // pred_fallthru
        _
      %p185 = scmp.le.s32.totalorder 1, %s10
      %p186 = scmp.lt.s32.totalorder %s10, 3
      %p187 = pnand %p185, %p186
      %p188 = pneg %p187
      // Predicated region
      $region29: #{a_call__.17} parent=5 // pred_check
        _
      $region30: #{a_call__.17} parent=5 // pred_check_branch
        %190 = sbr.rel (%p187) target = $region32
      $region31: #{a_call__.17} parent=5 // pred_region
        %s191 = ssub.s32 %s10, 1
        %s192 = smul.u32 8, %s20
        %p193 = scmp.lt.s32.totalorder %s19, 1
        %s194 = scalar_select %p193, %s19, 1
        %p195 = scmp.lt.s32.totalorder %s192, 7
        %s196 = scalar_select %p195, %s192, 7
        %s197 = smul.addr %s194, 8
        %s198 = sadd.s32 %s196, %s197
        %s199 = smul.addr %s198, 4
        %s200 = scalar_lea.vmem %s0, %s199
        %p201 = pneg %p50
        %p202 = pneg %p47
        %s203 = smul.u32 8, %s20
        %p204 = scmp.lt.s32.totalorder %s19, 1
        %s205 = scalar_select %p204, %s19, 1
        %p206 = scmp.lt.s32.totalorder %s203, 7
        %s207 = scalar_select %p206, %s203, 7
        %s208 = smul.addr %s205, 8
        %s209 = sadd.s32 %s207, %s208
        %s210 = smul.addr %s209, 4
        %s211 = scalar_lea.vmem %s1, %s210
        %p212 = pneg %p78
        %p213 = pneg %p75
        %s214 = smul.u32 8, %s20
        %p215 = scmp.lt.s32.totalorder %s19, 1
        %s216 = scalar_select %p215, %s19, 1
        %p217 = scmp.lt.s32.totalorder %s214, 7
        %s218 = scalar_select %p217, %s214, 7
        %s219 = smul.addr %s216, 8
        %s220 = sadd.s32 %s218, %s219
        %s221 = smul.addr %s220, 8
        %s222 = scalar_lea.vmem %s2, %s221
        %p223 = pneg %p106
        %p224 = pneg %p103
        %p225 = pneg %p127
        %p226 = pneg %p124
        %s227 = smul.u32 8, %s20
        %p228 = scmp.lt.s32.totalorder %s19, 1
        %s229 = scalar_select %p228, %s19, 1
        %p230 = scmp.lt.s32.totalorder %s227, 7
        %s231 = scalar_select %p230, %s227, 7
        %s232 = smul.addr %s229, 8
        %s233 = sadd.s32 %s231, %s232
        %s234 = smul.addr %s233, 4
        %s235 = scalar_lea.vmem %s0, %s234
        %s236 = smul.u32 8, %s20
        %s237 = smul.u32 8, %s20
        %p238 = scmp.lt.s32.totalorder %s19, 1
        %s239 = scalar_select %p238, %s19, 1
        %p240 = scmp.lt.s32.totalorder %s237, 7
        %s241 = scalar_select %p240, %s237, 7
        %s242 = smul.addr %s239, 8
        %s243 = sadd.s32 %s241, %s242
        %s244 = smul.addr %s243, 4
        %s245 = scalar_lea.vmem %s1, %s244
        %s246 = smul.u32 8, %s20
        %s247 = smul.u32 8, %s20
        %p248 = scmp.lt.s32.totalorder %s19, 1
        %s249 = scalar_select %p248, %s19, 1
        %p250 = scmp.lt.s32.totalorder %s247, 7
        %s251 = scalar_select %p250, %s247, 7
        %s252 = smul.addr %s249, 8
        %s253 = sadd.s32 %s251, %s252
        %s254 = smul.addr %s253, 8
        %s255 = scalar_lea.vmem %s2, %s254
        %s256 = smul.u32 8, %s20
        %p257 = scmp.eq.s32.totalorder %s19, 0
        %p258 = scmp.eq.s32.totalorder %s20, 0
        %p259 = pnand %p257, %p258
        %p260 = pneg %p259
        // Predicated region
        $region33: #{a_call__.17} parent=31 // pred_check
          _
        $region34: #{a_call__.17} parent=31 // pred_check_branch
          %262 = sbr.rel (%p259) target = $region36
        $region35: #{a_call__.17} parent=31 // pred_region
          %s263 = scalar_lea.smem [#allocation2], 0
          %264 = sst [smem:[%s263]] 0.0
          %s265 = scalar_lea.smem [#allocation2], 1
          %266 = sst [smem:[%s265]] 0.0
        $region36: #{a_call__.17} parent=31 // pred_fallthru
          _
        %v267 = vld [vmem:[%s235] sm:$0xf]
        %v268 = vld [vmem:[%s235 + $0x4] sm:$0xf]
        %v269 = vld [vmem:[%s235 + $0x8] sm:$0xf]
        %v270 = vld [vmem:[%s235 + $0xc] sm:$0xf]
        %v271 = vld [vmem:[%s235 + $0x10] sm:$0xf]
        %v272 = vld [vmem:[%s235 + $0x14] sm:$0xf]
        %v273 = vld [vmem:[%s235 + $0x18] sm:$0xf]
        %v274 = vld [vmem:[%s235 + $0x1c] sm:$0xf]
        %v275 = vunpack.c.l.bf16 %v267
        %v276 = vunpack.c.l.bf16 %v268
        %v277 = vunpack.c.l.bf16 %v269
        %v278 = vunpack.c.l.bf16 %v270
        %v279 = vunpack.c.l.bf16 %v271
        %v280 = vunpack.c.l.bf16 %v272
        %v281 = vunpack.c.l.bf16 %v273
        %v282 = vunpack.c.l.bf16 %v274
        %v283 = vld [vmem:[%s245] sm:$0xf]
        %v284 = vld [vmem:[%s245 + $0x4] sm:$0xf]
        %v285 = vld [vmem:[%s245 + $0x8] sm:$0xf]
        %v286 = vld [vmem:[%s245 + $0xc] sm:$0xf]
        %v287 = vld [vmem:[%s245 + $0x10] sm:$0xf]
        %v288 = vld [vmem:[%s245 + $0x14] sm:$0xf]
        %v289 = vld [vmem:[%s245 + $0x18] sm:$0xf]
        %v290 = vld [vmem:[%s245 + $0x1c] sm:$0xf]
        %v291 = vunpack.c.l.bf16 %v283
        %v292 = vunpack.c.l.bf16 %v284
        %v293 = vunpack.c.l.bf16 %v285
        %v294 = vunpack.c.l.bf16 %v286
        %v295 = vunpack.c.l.bf16 %v287
        %v296 = vunpack.c.l.bf16 %v288
        %v297 = vunpack.c.l.bf16 %v289
        %v298 = vunpack.c.l.bf16 %v290
        %v299 = vsub.f32 %v275, %v291
        %v300 = vsub.f32 %v276, %v292
        %v301 = vsub.f32 %v277, %v293
        %v302 = vsub.f32 %v278, %v294
        %v303 = vsub.f32 %v279, %v295
        %v304 = vsub.f32 %v280, %v296
        %v305 = vsub.f32 %v281, %v297
        %v306 = vsub.f32 %v282, %v298
        %v307 = vld [vmem:[%s255] sm:$0xff]
        %v308 = vld [vmem:[%s255 + $0x8] sm:$0xff]
        %v309 = vld [vmem:[%s255 + $0x10] sm:$0xff]
        %v310 = vld [vmem:[%s255 + $0x18] sm:$0xff]
        %v311 = vld [vmem:[%s255 + $0x20] sm:$0xff]
        %v312 = vld [vmem:[%s255 + $0x28] sm:$0xff]
        %v313 = vld [vmem:[%s255 + $0x30] sm:$0xff]
        %v314 = vld [vmem:[%s255 + $0x38] sm:$0xff]
        %s315 = sld [smem:[#allocation2]]
        %v316 = vmul.f32 %v299, %v299
        %v317 = vmul.f32 %v300, %v300
        %v318 = vmul.f32 %v301, %v301
        %v319 = vmul.f32 %v302, %v302
        %v320 = vmul.f32 %v303, %v303
        %v321 = vmul.f32 %v304, %v304
        %v322 = vmul.f32 %v305, %v305
        %v323 = vmul.f32 %v306, %v306
        %325 = vset.pattern.permute.xlu0 0
        %326 = vperm.xlu0 %325, %v307
        %v327 = vpop.permute.xlu0 %326
        %330 = vset.pattern.permute.xlu0 0
        %331 = vperm.xlu0 %330, %v308
        %v332 = vpop.permute.xlu0 %331
        %335 = vset.pattern.permute.xlu0 0
        %336 = vperm.xlu0 %335, %v309
        %v337 = vpop.permute.xlu0 %336
        %340 = vset.pattern.permute.xlu0 0
        %341 = vperm.xlu0 %340, %v310
        %v342 = vpop.permute.xlu0 %341
        %345 = vset.pattern.permute.xlu0 0
        %346 = vperm.xlu0 %345, %v311
        %v347 = vpop.permute.xlu0 %346
        %350 = vset.pattern.permute.xlu0 0
        %351 = vperm.xlu0 %350, %v312
        %v352 = vpop.permute.xlu0 %351
        %355 = vset.pattern.permute.xlu0 0
        %356 = vperm.xlu0 %355, %v313
        %v357 = vpop.permute.xlu0 %356
        %360 = vset.pattern.permute.xlu0 0
        %361 = vperm.xlu0 %360, %v314
        %v362 = vpop.permute.xlu0 %361
        %v364 = vmul.f32 %v316, %v327
        %v365 = vmul.f32 %v317, %v332
        %v366 = vmul.f32 %v318, %v337
        %v367 = vmul.f32 %v319, %v342
        %v368 = vmul.f32 %v320, %v347
        %v369 = vmul.f32 %v321, %v352
        %v370 = vmul.f32 %v322, %v357
        %v371 = vmul.f32 %v323, %v362
        %vm372 = vcmask 130048
        %v373 = vsel %vm372, %v364, 0.0
        %v374 = vsel %vm372, %v365, 0.0
        %v375 = vadd.f32 %v373, %v374
        %v376 = vsel %vm372, %v366, 0.0
        %v377 = vadd.f32 %v375, %v376
        %v378 = vsel %vm372, %v367, 0.0
        %v379 = vadd.f32 %v377, %v378
        %v380 = vsel %vm372, %v368, 0.0
        %v381 = vadd.f32 %v379, %v380
        %v382 = vsel %vm372, %v369, 0.0
        %v383 = vadd.f32 %v381, %v382
        %v384 = vsel %vm372, %v370, 0.0
        %v385 = vadd.f32 %v383, %v384
        %v386 = vsel %vm372, %v371, 0.0
        %v387 = vadd.f32 %v385, %v386
        %388 = vadd.xlane.f32.xlu0 %v387
        %v389 = vpop.xlane.xlu0 %388
        %v390 = vrot.slane %v389, 4
        %v391 = vadd.f32 %v389, %v390
        %v392 = vrot.slane %v391, 2
        %v393 = vadd.f32 %v391, %v392
        %v394 = vrot.slane %v393, 1
        %v395 = vadd.f32 %v393, %v394
        %s396 = vtos %v395
        %s397 = sadd.f32 %s315, %s396
        %s398 = scalar_lea.smem [#allocation2], 0
        %399 = sst [smem:[%s398]] %s397
        %s400 = sld [smem:[#allocation2 + $0x1]]
        %vm401 = vcmask 7168
        %v402 = vsel %vm401, %v307, 0.0
        %v403 = vsel %vm401, %v308, 0.0
        %v404 = vadd.f32 %v402, %v403
        %v405 = vsel %vm401, %v309, 0.0
        %v406 = vadd.f32 %v404, %v405
        %v407 = vsel %vm401, %v310, 0.0
        %v408 = vadd.f32 %v406, %v407
        %v409 = vsel %vm401, %v311, 0.0
        %v410 = vadd.f32 %v408, %v409
        %v411 = vsel %vm401, %v312, 0.0
        %v412 = vadd.f32 %v410, %v411
        %v413 = vsel %vm401, %v313, 0.0
        %v414 = vadd.f32 %v412, %v413
        %v415 = vsel %vm401, %v314, 0.0
        %v416 = vadd.f32 %v414, %v415
        %417 = vadd.xlane.f32.xlu0 %v416
        %v418 = vpop.xlane.xlu0 %417
        %v419 = vrot.slane %v418, 4
        %v420 = vadd.f32 %v418, %v419
        %v421 = vrot.slane %v420, 2
        %v422 = vadd.f32 %v420, %v421
        %v423 = vrot.slane %v422, 1
        %v424 = vadd.f32 %v422, %v423
        %s425 = vtos %v424
        %s426 = sadd.f32 %s400, %s425
        %s427 = scalar_lea.smem [#allocation2], 1
        %428 = sst [smem:[%s427]] %s426
        // Predicated region
        $region37: #{a_call__.17} parent=31 // pred_check
          %p429 = pneg %p124
        $region38: #{a_call__.17} parent=31 // pred_check_branch
          %431 = sbr.rel (%p429) target = $region40
        $region39: #{a_call__.17} parent=31 // pred_region
          %s433 = ssub.s32 16, 16
          %434 = vsyncadd [#allocation3], %s433
          %s436 = sshll.u32 %s3, 4
          %s437 = int_to_ptr.vmem [resolvable:$true] %s436
          %439 = dma.smem_to_vmem [#allocation2], 16, %s437, [#allocation3]
        $region40: #{a_call__.17} parent=31 // pred_fallthru
          _
        // Predicated region
        $region41: #{a_call__.17} parent=31 // pred_check
          %p440 = pneg %p124
        $region42: #{a_call__.17} parent=31 // pred_check_branch
          %442 = sbr.rel (%p440) target = $region44
        $region43: #{a_call__.17} parent=31 // pred_region
          %443 = dma.done [#allocation3], 16
        $region44: #{a_call__.17} parent=31 // pred_fallthru
          _
        %444 = sfence
      $region32: #{a_call__.17} parent=5 // pred_fallthru
        _
      %p445 = scmp.le.s32.totalorder 2, %s10
      // Predicated region
      $region45: #{a_call__.17} parent=5 // pred_check
        %p446 = pneg %p445
      $region46: #{a_call__.17} parent=5 // pred_check_branch
        %448 = sbr.rel (%p446) target = $region48
      $region47: #{a_call__.17} parent=5 // pred_region
        %s449 = ssub.s32 %s10, 2
      $region48: #{a_call__.17} parent=5 // pred_fallthru
        _
    $region6: #{a_call__.17} parent=1 // loop_footer
      %s14 = sadd.s32 1, %s10
    $region7: #{a_call__.17} parent=1 // loop_footer_branch
      %9 = sbr.rel target = $region3
    $region8: #{a_call__.17} parent=1 // loop_exit
      _
    %450 = vsyncpa [#allocation3], 1
    %s451 = scalar_lea.sflag [#allocation3], 1
    %452 = vsyncpa %s451, 1

// kernel: a_call__.18
$region0: #{a_call__.18}
  #allocation0 [shape = 'u32[]', space=smem, size = 0x4, offset = 0x4, fixed_abs, tag = 'smem constant byte address 0x4 - core index']
  #allocation1 [shape = 'u32[144,128]{1,0:T(1,128)}', space=vmem, size = 0x12000, scoped, tag = 'internal scratch']
  %s0 = inlined_call_operand.vmem [shape: f32[2,36,36], index: 0, kind: input, shape index: {}]
  %s1 = inlined_call_operand.vmem [shape: f32[4,36], index: 1, kind: input, shape index: {}]
  %s2 = inlined_call_operand.vmem [shape: f32[36,4], index: 2, kind: input, shape index: {}]
  %s3 = inlined_call_operand.vmem [shape: f32[2,4,4], index: 3, kind: output, shape index: {}]
  %s4 = sld [smem:[#allocation0]]
  $region45: #{a_call__.18} parent=0
    _
  %s6 = ssub.s32 1, %s4
  %s7 = scalar_select 0, %s6, %s4
  loop: start=0, step=1, limit=4
  $region2: #{a_call__.18} parent=0 // loop_pre_header
    _
  $region3: #{a_call__.18} parent=0 // loop_header
    %s9 = sphi 0, %s13
    %p10 = scmp.ge.s32.totalorder %s9, 4
    %s19 = sphi 0, %s21
    %s22 = sphi 0, %s19
    %s23 = sphi 0, %s22
    %s39 = sphi 0, %s23
    %s43 = sphi 0, %s43
    %s45 = sphi 0, %s43
    %s46 = sphi 0, %s45
    %s60 = sphi 0, %s46
    %s64 = sphi 0, %s64
    %s66 = sphi 0, %s64
    %s67 = sphi 0, %s66
    %s81 = sphi 0, %s67
    %s87 = sphi 0, %s89
    %s90 = sphi 0, %s87
    %s91 = sphi 0, %s90
    %s107 = sphi 0, %s91
  $region4: #{a_call__.18} parent=0 // loop_header_branch
    %12 = sbr.rel (%p10) target = $region8
  $region5: #{a_call__.18} parent=0 // loop_body
    %s14 = ssub.s32 %s9, 1
    %s15 = ssub.s32 %s9, 2
    %s16 = sadd.s32 %s9, 1
    %s17 = ssub.s32 %s9, %s16
    %p18 = scmp.eq.s32.totalorder %s17, 0
    %s20 = sadd.s32 %s19, 1
    %s21 = scalar_select %p18, %s19, %s20
    %p24 = pneg %p18
    %p25 = scmp.eq.s32.totalorder %s9, 1
    %p26 = por %p24, %p25
    %p27 = scmp.ne.s32.totalorder %s19, %s22
    %p28 = scmp.eq.s32.totalorder %s9, 0
    %p29 = por %p27, %p28
    %p30 = scmp.ne.s32.totalorder %s19, %s22
    %p31 = scmp.eq.s32.totalorder %s14, 1
    %p32 = por %p30, %p31
    %p33 = scmp.ne.s32.totalorder %s22, %s23
    %p34 = scmp.eq.s32.totalorder %s14, 0
    %p35 = por %p33, %p34
    %p36 = scmp.ne.s32.totalorder %s22, %s23
    %p37 = scmp.eq.s32.totalorder %s15, 1
    %p38 = por %p36, %p37
    %p40 = scmp.ne.s32.totalorder %s23, %s39
    %p41 = scmp.eq.s32.totalorder %s15, 0
    %p42 = por %p40, %p41
    %s44 = sadd.s32 %s43, 1
    %p47 = scmp.eq.s32.totalorder %s9, 1
    %p48 = scmp.ne.s32.totalorder %s43, %s45
    %p49 = scmp.eq.s32.totalorder %s9, 0
    %p50 = por %p48, %p49
    %p51 = scmp.ne.s32.totalorder %s43, %s45
    %p52 = scmp.eq.s32.totalorder %s14, 1
    %p53 = por %p51, %p52
    %p54 = scmp.ne.s32.totalorder %s45, %s46
    %p55 = scmp.eq.s32.totalorder %s14, 0
    %p56 = por %p54, %p55
    %p57 = scmp.ne.s32.totalorder %s45, %s46
    %p58 = scmp.eq.s32.totalorder %s15, 1
    %p59 = por %p57, %p58
    %p61 = scmp.ne.s32.totalorder %s46, %s60
    %p62 = scmp.eq.s32.totalorder %s15, 0
    %p63 = por %p61, %p62
    %s65 = sadd.s32 %s64, 1
    %p68 = scmp.eq.s32.totalorder %s9, 1
    %p69 = scmp.ne.s32.totalorder %s64, %s66
    %p70 = scmp.eq.s32.totalorder %s9, 0
    %p71 = por %p69, %p70
    %p72 = scmp.ne.s32.totalorder %s64, %s66
    %p73 = scmp.eq.s32.totalorder %s14, 1
    %p74 = por %p72, %p73
    %p75 = scmp.ne.s32.totalorder %s66, %s67
    %p76 = scmp.eq.s32.totalorder %s14, 0
    %p77 = por %p75, %p76
    %p78 = scmp.ne.s32.totalorder %s66, %s67
    %p79 = scmp.eq.s32.totalorder %s15, 1
    %p80 = por %p78, %p79
    %p82 = scmp.ne.s32.totalorder %s67, %s81
    %p83 = scmp.eq.s32.totalorder %s15, 0
    %p84 = por %p82, %p83
    %s85 = ssub.s32 %s9, %s16
    %p86 = scmp.eq.s32.totalorder %s85, 0
    %s88 = sadd.s32 %s87, 1
    %s89 = scalar_select %p86, %s87, %s88
    %p92 = pneg %p86
    %p93 = scmp.eq.s32.totalorder %s9, 1
    %p94 = por %p92, %p93
    %p95 = scmp.ne.s32.totalorder %s87, %s90
    %p96 = scmp.eq.s32.totalorder %s9, 0
    %p97 = por %p95, %p96
    %p98 = scmp.ne.s32.totalorder %s87, %s90
    %p99 = scmp.eq.s32.totalorder %s14, 1
    %p100 = por %p98, %p99
    %p101 = scmp.ne.s32.totalorder %s90, %s91
    %p102 = scmp.eq.s32.totalorder %s14, 0
    %p103 = por %p101, %p102
    %p104 = scmp.ne.s32.totalorder %s90, %s91
    %p105 = scmp.eq.s32.totalorder %s15, 1
    %p106 = por %p104, %p105
    %p108 = scmp.ne.s32.totalorder %s91, %s107
    %p109 = scmp.eq.s32.totalorder %s15, 0
    %p110 = por %p108, %p109
    %p111 = scmp.le.s32.totalorder 1, %s9
    %p112 = scmp.lt.s32.totalorder %s9, 3
    %p113 = pnand %p111, %p112
    %p114 = pneg %p113
    // Predicated region
    $region9: #{a_call__.18} parent=5 // pred_check
      _
    $region10: #{a_call__.18} parent=5 // pred_check_branch
      %116 = sbr.rel (%p113) target = $region12
    $region11: #{a_call__.18} parent=5 // pred_region
      %s117 = ssub.s32 %s9, 1
      // Predicated region
      $region13: #{a_call__.18} parent=11 // pred_check
        %p118 = pneg %p56
      $region14: #{a_call__.18} parent=11 // pred_check_branch
        %120 = sbr.rel (%p118) target = $region16
      $region15: #{a_call__.18} parent=11 // pred_region
        _
      $region16: #{a_call__.18} parent=11 // pred_fallthru
        _
      // Predicated region
      $region17: #{a_call__.18} parent=11 // pred_check
        %p121 = pneg %p77
      $region18: #{a_call__.18} parent=11 // pred_check_branch
        %123 = sbr.rel (%p121) target = $region20
      $region19: #{a_call__.18} parent=11 // pred_region
        _
      $region20: #{a_call__.18} parent=11 // pred_fallthru
        _
    $region12: #{a_call__.18} parent=5 // pred_fallthru
      _
    %p124 = scmp.lt.s32.totalorder %s9, 2
    // Predicated region
    $region21: #{a_call__.18} parent=5 // pred_check
      %p125 = pneg %p124
    $region22: #{a_call__.18} parent=5 // pred_check_branch
      %127 = sbr.rel (%p125) target = $region24
    $region23: #{a_call__.18} parent=5 // pred_region
      // Predicated region
      $region25: #{a_call__.18} parent=23 // pred_check
        %p128 = pneg %p29
      $region26: #{a_call__.18} parent=23 // pred_check_branch
        %130 = sbr.rel (%p128) target = $region28
      $region27: #{a_call__.18} parent=23 // pred_region
        %p131 = scmp.lt.s32.totalorder %s9, 1
        %s132 = scalar_select %p131, %s9, 1
        %s133 = smul.addr %s132, 5
        %s134 = smul.addr %s133, 8
        %s135 = scalar_lea.vmem %s0, %s134
      $region28: #{a_call__.18} parent=23 // pred_fallthru
        _
    $region24: #{a_call__.18} parent=5 // pred_fallthru
      _
    %p136 = scmp.le.s32.totalorder 1, %s9
    %p137 = scmp.lt.s32.totalorder %s9, 3
    %p138 = pnand %p136, %p137
    %p139 = pneg %p138
    // Predicated region
    $region29: #{a_call__.18} parent=5 // pred_check
      _
    $region30: #{a_call__.18} parent=5 // pred_check_branch
      %141 = sbr.rel (%p138) target = $region32
    $region31: #{a_call__.18} parent=5 // pred_region
      %s142 = ssub.s32 %s9, 1
      %p143 = scmp.lt.s32.totalorder %s14, 1
      %s144 = scalar_select %p143, %s14, 1
      %s145 = smul.addr %s144, 5
      %s146 = smul.addr %s145, 8
      %s147 = scalar_lea.vmem %s0, %s146
      %p148 = pneg %p35
      %p149 = pneg %p32
      %p150 = pneg %p56
      %p151 = pneg %p53
      %p152 = pneg %p77
      %p153 = pneg %p74
      %p154 = pneg %p103
      %p155 = pneg %p100
      %p156 = scmp.lt.s32.totalorder %s14, 1
      %s157 = scalar_select %p156, %s14, 1
      %s158 = smul.addr %s157, 4
      %s159 = scalar_lea.vmem %s3, %s158
      %p160 = scmp.lt.s32.totalorder %s14, 1
      %s161 = scalar_select %p160, %s14, 1
      %s162 = smul.addr %s161, 5
      %s163 = smul.addr %s162, 8
      %s164 = scalar_lea.vmem %s0, %s163
      %p165 = scmp.lt.s32.totalorder %s14, 1
      %s166 = scalar_select %p165, %s14, 1
      %s167 = smul.addr %s166, 4
      %s168 = scalar_lea.vmem %s3, %s167
      %v169 = vld [vmem:[%s164] sm:$0xff]
      %v170 = vld [vmem:[%s164 + $0x8] sm:$0xff]
      %v171 = vld [vmem:[%s164 + $0x10] sm:$0xff]
      %v172 = vld [vmem:[%s164 + $0x18] sm:$0xff]
      %v173 = vld [vmem:[%s164 + $0x20] sm:$0xf]
      %v174 = vld [vmem:[%s1] sm:$0xf]
      %vm175 = vcmask 293888
      %v177 = vsel %vm175, %v174, 0
      %vm179 = vcmask 1043456
      %v181 = vsel %vm179, %v173, 0
      %183 = vmatprep.subr.mxu0 0.0
      %184 = vmatpush1.msra.mxu0 0.0
      %185 = vmatprep.subr.mxu0 0.0
      %186 = vmatpush1.msra.mxu0 0.0
      %187 = vmatprep.subr.mxu0 0.0
      %188 = vmatpush1.msra.mxu0 0.0
      %189 = vmatprep.subr.mxu0 0.0
      %190 = vmatpush1.msra.mxu0 0.0
      %191 = vmatprep.subr.mxu0 0.0
      %192 = vmatpush1.msra.mxu0 0.0
      %193 = vmatprep.subr.mxu0 0.0
      %194 = vmatpush1.msra.mxu0 0.0
      %195 = vmatprep.subr.mxu0 0.0
      %196 = vmatpush1.msra.mxu0 0.0
      %197 = vmatprep.subr.mxu0 0.0
      %198 = vmatpush1.msra.mxu0 0.0
      %199 = vmatprep.subr.mxu0 0.0
      %200 = vmatpush1.msra.mxu0 0.0
      %201 = vmatprep.subr.mxu0 0.0
      %202 = vmatpush1.msra.mxu0 0.0
      %203 = vmatprep.subr.mxu0 0.0
      %204 = vmatpush1.msra.mxu0 0.0
      %205 = vmatprep.subr.mxu0 0.0
      %206 = vmatpush1.msra.mxu0 %v181
      %207 = vmatprep.subr.mxu0 0.0
      %208 = vmatpush1.msra.mxu0 %v172
      %209 = vmatprep.subr.mxu0 0.0
      %210 = vmatpush1.msra.mxu0 %v171
      %211 = vmatprep.subr.mxu0 0.0
      %212 = vmatpush1.msra.mxu0 %v170
      %213 = vmatprep.subr.mxu0 0.0
      %214 = vmatpush1.msra.mxu0 %v169
      %215 = vmatprep.subr.mxu0 0.0
      %216 = vmatpush2.msra.mxu0 0.0
      %217 = vmatprep.subr.mxu0 0.0
      %218 = vmatpush2.msra.mxu0 0.0
      %219 = vmatprep.subr.mxu0 0.0
      %220 = vmatpush2.msra.mxu0 0.0
      %221 = vmatprep.subr.mxu0 0.0
      %222 = vmatpush2.msra.mxu0 0.0
      %223 = vmatprep.subr.mxu0 0.0
      %224 = vmatpush2.msra.mxu0 0.0
      %225 = vmatprep.subr.mxu0 0.0
      %226 = vmatpush2.msra.mxu0 0.0
      %227 = vmatprep.subr.mxu0 0.0
      %228 = vmatpush2.msra.mxu0 0.0
      %229 = vmatprep.subr.mxu0 0.0
      %230 = vmatpush2.msra.mxu0 0.0
      %231 = vmatprep.subr.mxu0 0.0
      %232 = vmatpush2.msra.mxu0 0.0
      %233 = vmatprep.subr.mxu0 0.0
      %234 = vmatpush2.msra.mxu0 0.0
      %235 = vmatprep.subr.mxu0 0.0
      %236 = vmatpush2.msra.mxu0 0.0
      %237 = vmatprep.subr.mxu0 0.0
      %238 = vmatpush2.msra.mxu0 0.0
      %239 = vmatprep.subr.mxu0 0.0
      %240 = vmatpush2.msra.mxu0 0.0
      %241 = vmatprep.subr.mxu0 0.0
      %242 = vmatpush2.msra.mxu0 0.0
      %243 = vmatprep.subr.mxu0 0.0
      %244 = vmatpush2.msra.mxu0 0.0
      %245 = vmatprep.subr.mxu0 0.0
      %246 = vmatpush2.msra.mxu0 0.0
      %247 = vmatprep.mubr.f32.mxu0 0.0
      %248 = vmatmul.mubr.f32.gmra.mxu0 %v177
      %v249 = vpop.f32.mrf.mxu0
      %v250 = vadd.f32 0.0, %v249
      %v251 = vpop.f32.mrf.mxu0
      %252 = vdwg.mxu0
      %v253 = vld [vmem:[%s2] sm:$0xff]
      %v254 = vld [vmem:[%s2 + $0x8] sm:$0xff]
      %v255 = vld [vmem:[%s2 + $0x10] sm:$0xff]
      %v256 = vld [vmem:[%s2 + $0x18] sm:$0xff]
      %v257 = vld [vmem:[%s2 + $0x20] sm:$0xf]
      %v259 = vsel %vm175, %v250, 0
      %v262 = vsel %vm179, %v257, 0
      %264 = vmatprep.subr.mxu0 0.0
      %265 = vmatpush1.msra.mxu0 0.0
      %266 = vmatprep.subr.mxu0 0.0
      %267 = vmatpush1.msra.mxu0 0.0
      %268 = vmatprep.subr.mxu0 0.0
      %269 = vmatpush1.msra.mxu0 0.0
      %270 = vmatprep.subr.mxu0 0.0
      %271 = vmatpush1.msra.mxu0 0.0
      %272 = vmatprep.subr.mxu0 0.0
      %273 = vmatpush1.msra.mxu0 0.0
      %274 = vmatprep.subr.mxu0 0.0
      %275 = vmatpush1.msra.mxu0 0.0
      %276 = vmatprep.subr.mxu0 0.0
      %277 = vmatpush1.msra.mxu0 0.0
      %278 = vmatprep.subr.mxu0 0.0
      %279 = vmatpush1.msra.mxu0 0.0
      %280 = vmatprep.subr.mxu0 0.0
      %281 = vmatpush1.msra.mxu0 0.0
      %282 = vmatprep.subr.mxu0 0.0
      %283 = vmatpush1.msra.mxu0 0.0
      %284 = vmatprep.subr.mxu0 0.0
      %285 = vmatpush1.msra.mxu0 0.0
      %286 = vmatprep.subr.mxu0 0.0
      %287 = vmatpush1.msra.mxu0 %v262
      %288 = vmatprep.subr.mxu0 0.0
      %289 = vmatpush1.msra.mxu0 %v256
      %290 = vmatprep.subr.mxu0 0.0
      %291 = vmatpush1.msra.mxu0 %v255
      %292 = vmatprep.subr.mxu0 0.0
      %293 = vmatpush1.msra.mxu0 %v254
      %294 = vmatprep.subr.mxu0 0.0
      %295 = vmatpush1.msra.mxu0 %v253
      %296 = vmatprep.subr.mxu0 0.0
      %297 = vmatpush2.msra.mxu0 0.0
      %298 = vmatprep.subr.mxu0 0.0
      %299 = vmatpush2.msra.mxu0 0.0
      %300 = vmatprep.subr.mxu0 0.0
      %301 = vmatpush2.msra.mxu0 0.0
      %302 = vmatprep.subr.mxu0 0.0
      %303 = vmatpush2.msra.mxu0 0.0
      %304 = vmatprep.subr.mxu0 0.0
      %305 = vmatpush2.msra.mxu0 0.0
      %306 = vmatprep.subr.mxu0 0.0
      %307 = vmatpush2.msra.mxu0 0.0
      %308 = vmatprep.subr.mxu0 0.0
      %309 = vmatpush2.msra.mxu0 0.0
      %310 = vmatprep.subr.mxu0 0.0
      %311 = vmatpush2.msra.mxu0 0.0
      %312 = vmatprep.subr.mxu0 0.0
      %313 = vmatpush2.msra.mxu0 0.0
      %314 = vmatprep.subr.mxu0 0.0
      %315 = vmatpush2.msra.mxu0 0.0
      %316 = vmatprep.subr.mxu0 0.0
      %317 = vmatpush2.msra.mxu0 0.0
      %318 = vmatprep.subr.mxu0 0.0
      %319 = vmatpush2.msra.mxu0 0.0
      %320 = vmatprep.subr.mxu0 0.0
      %321 = vmatpush2.msra.mxu0 0.0
      %322 = vmatprep.subr.mxu0 0.0
      %323 = vmatpush2.msra.mxu0 0.0
      %324 = vmatprep.subr.mxu0 0.0
      %325 = vmatpush2.msra.mxu0 0.0
      %326 = vmatprep.subr.mxu0 0.0
      %327 = vmatpush2.msra.mxu0 0.0
      %328 = vmatprep.mubr.f32.mxu0 0.0
      %329 = vmatmul.mubr.f32.gmra.mxu0 %v259
      %v330 = vpop.f32.mrf.mxu0
      %v331 = vadd.f32 0.0, %v330
      %v332 = vpop.f32.mrf.mxu0
      %333 = vdwg.mxu0
      %v334 = vmul.f32 %v331, -0.04
      %v335 = vadd.f32 %v334, 1.0
      %vm336 = vcmask 27648
      %337 = vst.msk [vmem:[%s168] sm:$0xf] %vm336, %v335
      %p338 = scmp.lt.s32.totalorder %s14, 1
      %s339 = scalar_select %p338, %s14, 1
      %s340 = smul.addr %s339, 4
      %s341 = scalar_lea.vmem %s3, %s340
      // Predicated region
      $region33: #{a_call__.18} parent=31 // pred_check
        %p342 = pneg %p100
      $region34: #{a_call__.18} parent=31 // pred_check_branch
        %344 = sbr.rel (%p342) target = $region36
      $region35: #{a_call__.18} parent=31 // pred_region
        _
      $region36: #{a_call__.18} parent=31 // pred_fallthru
        _
    $region32: #{a_call__.18} parent=5 // pred_fallthru
      _
    %p345 = scmp.le.s32.totalorder 2, %s9
    // Predicated region
    $region37: #{a_call__.18} parent=5 // pred_check
      %p346 = pneg %p345
    $region38: #{a_call__.18} parent=5 // pred_check_branch
      %348 = sbr.rel (%p346) target = $region40
    $region39: #{a_call__.18} parent=5 // pred_region
      %s349 = ssub.s32 %s9, 2
      // Predicated region
      $region41: #{a_call__.18} parent=39 // pred_check
        %p350 = pneg %p106
      $region42: #{a_call__.18} parent=39 // pred_check_branch
        %352 = sbr.rel (%p350) target = $region44
      $region43: #{a_call__.18} parent=39 // pred_region
        %p353 = scmp.lt.s32.totalorder %s15, 1
        %s354 = scalar_select %p353, %s15, 1
        %s355 = smul.addr %s354, 4
        %s356 = scalar_lea.vmem %s3, %s355
      $region44: #{a_call__.18} parent=39 // pred_fallthru
        _
    $region40: #{a_call__.18} parent=5 // pred_fallthru
      _
  $region6: #{a_call__.18} parent=0 // loop_footer
    %s13 = sadd.s32 1, %s9
  $region7: #{a_call__.18} parent=0 // loop_footer_branch
    %8 = sbr.rel target = $region3
  $region8: #{a_call__.18} parent=0 // loop_exit
    _

// kernel: a_call__.19
$region0: #{a_call__.19}
  #allocation0 [shape = 'u32[]', space=smem, size = 0x4, offset = 0x4, fixed_abs, tag = 'smem constant byte address 0x4 - core index']
  #allocation1 [shape = 'u32[144,128]{1,0:T(1,128)}', space=vmem, size = 0x12000, scoped, tag = 'internal scratch']
  %s0 = inlined_call_operand.vmem [shape: bf16[2,16,32], index: 0, kind: input, shape index: {}]
  %s1 = inlined_call_operand.vmem [shape: bf16[2,16,32], index: 1, kind: input, shape index: {}]
  %s2 = inlined_call_operand.vmem [shape: f32[2,16,1], index: 2, kind: input, shape index: {}]
  %s3 = inlined_call_operand.vmem [shape: f32[2], index: 3, kind: output, shape index: {}]
  %s4 = sld [smem:[#allocation0]]
  $region49: #{a_call__.19} parent=0
    _
  %s6 = ssub.s32 1, %s4
  %s7 = scalar_select 0, %s6, %s4
  $region1: #{a_call__.19} parent=0
    #allocation2 [shape = 'u8[512]{0}', space=smem, size = 0x200, scoped, tag = 'output window, operand 0, single buffered']
    #allocation3 [shape = 's32[2]{0}', space=sflag, size = 0x8, scoped, tag = 'scoped memory for a_call__.19']
    %8 = vsyncpa [#allocation3], 0
    loop: start=0, step=1, limit=4
    $region2: #{a_call__.19} parent=1 // loop_pre_header
      _
    $region3: #{a_call__.19} parent=1 // loop_header
      %s10 = sphi 0, %s14
      %p11 = scmp.ge.s32.totalorder %s10, 4
      %s17 = sphi 0, %s29
      %s18 = sphi 0, %s25
      %s19 = sphi 0, %s17
      %s20 = sphi 0, %s18
      %s21 = sphi 0, %s19
      %s22 = sphi 0, %s20
      %s34 = sphi 0, %s36
      %s37 = sphi 0, %s34
      %s38 = sphi 0, %s37
      %s54 = sphi 0, %s38
      %s62 = sphi 0, %s64
      %s65 = sphi 0, %s62
      %s66 = sphi 0, %s65
      %s82 = sphi 0, %s66
      %s90 = sphi 0, %s92
      %s93 = sphi 0, %s90
      %s94 = sphi 0, %s93
      %s110 = sphi 0, %s94
      %s114 = sphi 0, %s114
      %s116 = sphi 0, %s114
      %s117 = sphi 0, %s116
      %s131 = sphi 0, %s117
    $region4: #{a_call__.19} parent=1 // loop_header_branch
      %13 = sbr.rel (%p11) target = $region8
    $region5: #{a_call__.19} parent=1 // loop_body
      %s15 = ssub.s32 %s10, 1
      %s16 = ssub.s32 %s10, 2
      %s23 = sadd.s32 1, %s18
      %p24 = scmp.ge.s32.totalorder %s23, 1
      %s25 = scalar_select %p24, 0, %s23
      %s26 = sadd.s32 1, %s17
      %s27 = scalar_select %p24, %s26, %s17
      %p28 = scmp.ge.s32.totalorder %s27, 2
      %s29 = scalar_select %p28, 0, %s27
      %s30 = ssub.s32 %s17, %s29
      %s31 = ssub.s32 %s18, %s25
      %s32 = sor.u32 %s30, %s31
      %p33 = scmp.eq.s32.totalorder %s32, 0
      %s35 = sadd.s32 %s34, 1
      %s36 = scalar_select %p33, %s34, %s35
      %p39 = pneg %p33
      %p40 = scmp.eq.s32.totalorder %s10, 1
      %p41 = por %p39, %p40
      %p42 = scmp.ne.s32.totalorder %s34, %s37
      %p43 = scmp.eq.s32.totalorder %s10, 0
      %p44 = por %p42, %p43
      %p45 = scmp.ne.s32.totalorder %s34, %s37
      %p46 = scmp.eq.s32.totalorder %s15, 1
      %p47 = por %p45, %p46
      %p48 = scmp.ne.s32.totalorder %s37, %s38
      %p49 = scmp.eq.s32.totalorder %s15, 0
      %p50 = por %p48, %p49
      %p51 = scmp.ne.s32.totalorder %s37, %s38
      %p52 = scmp.eq.s32.totalorder %s16, 1
      %p53 = por %p51, %p52
      %p55 = scmp.ne.s32.totalorder %s38, %s54
      %p56 = scmp.eq.s32.totalorder %s16, 0
      %p57 = por %p55, %p56
      %s58 = ssub.s32 %s17, %s29
      %s59 = ssub.s32 %s18, %s25
      %s60 = sor.u32 %s58, %s59
      %p61 = scmp.eq.s32.totalorder %s60, 0
      %s63 = sadd.s32 %s62, 1
      %s64 = scalar_select %p61, %s62, %s63
      %p67 = pneg %p61
      %p68 = scmp.eq.s32.totalorder %s10, 1
      %p69 = por %p67, %p68
      %p70 = scmp.ne.s32.totalorder %s62, %s65
      %p71 = scmp.eq.s32.totalorder %s10, 0
      %p72 = por %p70, %p71
      %p73 = scmp.ne.s32.totalorder %s62, %s65
      %p74 = scmp.eq.s32.totalorder %s15, 1
      %p75 = por %p73, %p74
      %p76 = scmp.ne.s32.totalorder %s65, %s66
      %p77 = scmp.eq.s32.totalorder %s15, 0
      %p78 = por %p76, %p77
      %p79 = scmp.ne.s32.totalorder %s65, %s66
      %p80 = scmp.eq.s32.totalorder %s16, 1
      %p81 = por %p79, %p80
      %p83 = scmp.ne.s32.totalorder %s66, %s82
      %p84 = scmp.eq.s32.totalorder %s16, 0
      %p85 = por %p83, %p84
      %s86 = ssub.s32 %s17, %s29
      %s87 = ssub.s32 %s18, %s25
      %s88 = sor.u32 %s86, %s87
      %p89 = scmp.eq.s32.totalorder %s88, 0
      %s91 = sadd.s32 %s90, 1
      %s92 = scalar_select %p89, %s90, %s91
      %p95 = pneg %p89
      %p96 = scmp.eq.s32.totalorder %s10, 1
      %p97 = por %p95, %p96
      %p98 = scmp.ne.s32.totalorder %s90, %s93
      %p99 = scmp.eq.s32.totalorder %s10, 0
      %p100 = por %p98, %p99
      %p101 = scmp.ne.s32.totalorder %s90, %s93
      %p102 = scmp.eq.s32.totalorder %s15, 1
      %p103 = por %p101, %p102
      %p104 = scmp.ne.s32.totalorder %s93, %s94
      %p105 = scmp.eq.s32.totalorder %s15, 0
      %p106 = por %p104, %p105
      %p107 = scmp.ne.s32.totalorder %s93, %s94
      %p108 = scmp.eq.s32.totalorder %s16, 1
      %p109 = por %p107, %p108
      %p111 = scmp.ne.s32.totalorder %s94, %s110
      %p112 = scmp.eq.s32.totalorder %s16, 0
      %p113 = por %p111, %p112
      %s115 = sadd.s32 %s114, 1
      %p118 = scmp.eq.s32.totalorder %s10, 1
      %p119 = scmp.ne.s32.totalorder %s114, %s116
      %p120 = scmp.eq.s32.totalorder %s10, 0
      %p121 = por %p119, %p120
      %p122 = scmp.ne.s32.totalorder %s114, %s116
      %p123 = scmp.eq.s32.totalorder %s15, 1
      %p124 = por %p122, %p123
      %p125 = scmp.ne.s32.totalorder %s116, %s117
      %p126 = scmp.eq.s32.totalorder %s15, 0
      %p127 = por %p125, %p126
      %p128 = scmp.ne.s32.totalorder %s116, %s117
      %p129 = scmp.eq.s32.totalorder %s16, 1
      %p130 = por %p128, %p129
      %p132 = scmp.ne.s32.totalorder %s117, %s131
      %p133 = scmp.eq.s32.totalorder %s16, 0
      %p134 = por %p132, %p133
      %p135 = scmp.le.s32.totalorder 1, %s10
      %p136 = scmp.lt.s32.totalorder %s10, 3
      %p137 = pnand %p135, %p136
      %p138 = pneg %p137
      // Predicated region
      $region9: #{a_call__.19} parent=5 // pred_check
        _
      $region10: #{a_call__.19} parent=5 // pred_check_branch
        %140 = sbr.rel (%p137) target = $region12
      $region11: #{a_call__.19} parent=5 // pred_region
        %s141 = ssub.s32 %s10, 1
      $region12: #{a_call__.19} parent=5 // pred_fallthru
        _
      %p142 = scmp.lt.s32.totalorder %s10, 2
      // Predicated region
      $region13: #{a_call__.19} parent=5 // pred_check
        %p143 = pneg %p142
      $region14: #{a_call__.19} parent=5 // pred_check_branch
        %145 = sbr.rel (%p143) target = $region16
      $region15: #{a_call__.19} parent=5 // pred_region
        // Predicated region
        $region17: #{a_call__.19} parent=15 // pred_check
          %p146 = pneg %p44
        $region18: #{a_call__.19} parent=15 // pred_check_branch
          %148 = sbr.rel (%p146) target = $region20
        $region19: #{a_call__.19} parent=15 // pred_region
          %s149 = smul.u32 2, %s18
          %p150 = scmp.lt.s32.totalorder %s17, 1
          %s151 = scalar_select %p150, %s17, 1
          %p152 = scmp.lt.s32.totalorder %s149, 1
          %s153 = scalar_select %p152, %s149, 1
          %s154 = smul.addr %s151, 2
          %s155 = sadd.s32 %s153, %s154
          %s156 = smul.addr %s155, 4
          %s157 = scalar_lea.vmem %s0, %s156
          %s158 = smul.u32 2, %s18
        $region20: #{a_call__.19} parent=15 // pred_fallthru
          _
        // Predicated region
        $region21: #{a_call__.19} parent=15 // pred_check
          %p159 = pneg %p72
        $region22: #{a_call__.19} parent=15 // pred_check_branch
          %161 = sbr.rel (%p159) target = $region24
        $region23: #{a_call__.19} parent=15 // pred_region
          %s162 = smul.u32 2, %s18
          %p163 = scmp.lt.s32.totalorder %s17, 1
          %s164 = scalar_select %p163, %s17, 1
          %p165 = scmp.lt.s32.totalorder %s162, 1
          %s166 = scalar_select %p165, %s162, 1
          %s167 = smul.addr %s164, 2
          %s168 = sadd.s32 %s166, %s167
          %s169 = smul.addr %s168, 4
          %s170 = scalar_lea.vmem %s1, %s169
          %s171 = smul.u32 2, %s18
        $region24: #{a_call__.19} parent=15 // pred_fallthru
          _
        // Predicated region
        $region25: #{a_call__.19} parent=15 // pred_check
          %p172 = pneg %p100
        $region26: #{a_call__.19} parent=15 // pred_check_branch
          %174 = sbr.rel (%p172) target = $region28
        $region27: #{a_call__.19} parent=15 // pred_region
          %s175 = smul.u32 2, %s18
          %p176 = scmp.lt.s32.totalorder %s17, 1
          %s177 = scalar_select %p176, %s17, 1
          %p178 = scmp.lt.s32.totalorder %s175, 1
          %s179 = scalar_select %p178, %s175, 1
          %s180 = smul.addr %s177, 2
          %s181 = sadd.s32 %s179, %s180
          %s182 = smul.addr %s181, 8
          %s183 = scalar_lea.vmem %s2, %s182
          %s184 = smul.u32 2, %s18
        $region28: #{a_call__.19} parent=15 // pred_fallthru
          _
      $region16: #{a_call__.19} parent=5 // pred_fallthru
        _
      %p185 = scmp.le.s32.totalorder 1, %s10
      %p186 = scmp.lt.s32.totalorder %s10, 3
      %p187 = pnand %p185, %p186
      %p188 = pneg %p187
      // Predicated region
      $region29: #{a_call__.19} parent=5 // pred_check
        _
      $region30: #{a_call__.19} parent=5 // pred_check_branch
        %190 = sbr.rel (%p187) target = $region32
      $region31: #{a_call__.19} parent=5 // pred_region
        %s191 = ssub.s32 %s10, 1
        %s192 = smul.u32 2, %s20
        %p193 = scmp.lt.s32.totalorder %s19, 1
        %s194 = scalar_select %p193, %s19, 1
        %p195 = scmp.lt.s32.totalorder %s192, 1
        %s196 = scalar_select %p195, %s192, 1
        %s197 = smul.addr %s194, 2
        %s198 = sadd.s32 %s196, %s197
        %s199 = smul.addr %s198, 4
        %s200 = scalar_lea.vmem %s0, %s199
        %p201 = pneg %p50
        %p202 = pneg %p47
        %s203 = smul.u32 2, %s20
        %p204 = scmp.lt.s32.totalorder %s19, 1
        %s205 = scalar_select %p204, %s19, 1
        %p206 = scmp.lt.s32.totalorder %s203, 1
        %s207 = scalar_select %p206, %s203, 1
        %s208 = smul.addr %s205, 2
        %s209 = sadd.s32 %s207, %s208
        %s210 = smul.addr %s209, 4
        %s211 = scalar_lea.vmem %s1, %s210
        %p212 = pneg %p78
        %p213 = pneg %p75
        %s214 = smul.u32 2, %s20
        %p215 = scmp.lt.s32.totalorder %s19, 1
        %s216 = scalar_select %p215, %s19, 1
        %p217 = scmp.lt.s32.totalorder %s214, 1
        %s218 = scalar_select %p217, %s214, 1
        %s219 = smul.addr %s216, 2
        %s220 = sadd.s32 %s218, %s219
        %s221 = smul.addr %s220, 8
        %s222 = scalar_lea.vmem %s2, %s221
        %p223 = pneg %p106
        %p224 = pneg %p103
        %p225 = pneg %p127
        %p226 = pneg %p124
        %s227 = smul.u32 2, %s20
        %p228 = scmp.lt.s32.totalorder %s19, 1
        %s229 = scalar_select %p228, %s19, 1
        %p230 = scmp.lt.s32.totalorder %s227, 1
        %s231 = scalar_select %p230, %s227, 1
        %s232 = smul.addr %s229, 2
        %s233 = sadd.s32 %s231, %s232
        %s234 = smul.addr %s233, 4
        %s235 = scalar_lea.vmem %s0, %s234
        %s236 = smul.u32 2, %s20
        %s237 = smul.u32 2, %s20
        %p238 = scmp.lt.s32.totalorder %s19, 1
        %s239 = scalar_select %p238, %s19, 1
        %p240 = scmp.lt.s32.totalorder %s237, 1
        %s241 = scalar_select %p240, %s237, 1
        %s242 = smul.addr %s239, 2
        %s243 = sadd.s32 %s241, %s242
        %s244 = smul.addr %s243, 4
        %s245 = scalar_lea.vmem %s1, %s244
        %s246 = smul.u32 2, %s20
        %s247 = smul.u32 2, %s20
        %p248 = scmp.lt.s32.totalorder %s19, 1
        %s249 = scalar_select %p248, %s19, 1
        %p250 = scmp.lt.s32.totalorder %s247, 1
        %s251 = scalar_select %p250, %s247, 1
        %s252 = smul.addr %s249, 2
        %s253 = sadd.s32 %s251, %s252
        %s254 = smul.addr %s253, 8
        %s255 = scalar_lea.vmem %s2, %s254
        %s256 = smul.u32 2, %s20
        %p257 = scmp.eq.s32.totalorder %s19, 0
        %p258 = scmp.eq.s32.totalorder %s20, 0
        %p259 = pnand %p257, %p258
        %p260 = pneg %p259
        // Predicated region
        $region33: #{a_call__.19} parent=31 // pred_check
          _
        $region34: #{a_call__.19} parent=31 // pred_check_branch
          %262 = sbr.rel (%p259) target = $region36
        $region35: #{a_call__.19} parent=31 // pred_region
          %s263 = scalar_lea.smem [#allocation2], 0
          %264 = sst [smem:[%s263]] 0.0
          %s265 = scalar_lea.smem [#allocation2], 1
          %266 = sst [smem:[%s265]] 0.0
        $region36: #{a_call__.19} parent=31 // pred_fallthru
          _
        %v267 = vld [vmem:[%s235] sm:$0xf]
        %v268 = vld [vmem:[%s235 + $0x4] sm:$0xf]
        %v269 = vunpack.c.l.bf16 %v267
        %v270 = vunpack.c.l.bf16 %v268
        %v271 = vld [vmem:[%s245] sm:$0xf]
        %v272 = vld [vmem:[%s245 + $0x4] sm:$0xf]
        %v273 = vunpack.c.l.bf16 %v271
        %v274 = vunpack.c.l.bf16 %v272
        %v275 = vsub.f32 %v269, %v273
        %v276 = vsub.f32 %v270, %v274
        %v277 = vld [vmem:[%s255] sm:$0xff]
        %v278 = vld [vmem:[%s255 + $0x8] sm:$0xff]
        %s279 = sld [smem:[#allocation2]]
        %v280 = vmul.f32 %v275, %v275
        %v281 = vmul.f32 %v276, %v276
        %283 = vset.pattern.permute.xlu0 0
        %284 = vperm.xlu0 %283, %v277
        %v285 = vpop.permute.xlu0 %284
        %288 = vset.pattern.permute.xlu0 0
        %289 = vperm.xlu0 %288, %v278
        %v290 = vpop.permute.xlu0 %289
        %v292 = vmul.f32 %v280, %v285
        %v293 = vmul.f32 %v281, %v290
        %vm294 = vcmask 261120
        %v295 = vsel %vm294, %v292, 0.0
        %v296 = vsel %vm294, %v293, 0.0
        %v297 = vadd.f32 %v295, %v296
        %298 = vadd.xlane.f32.xlu0 %v297
        %v299 = vpop.xlane.xlu0 %298
        %v300 = vrot.slane %v299, 4
        %v301 = vadd.f32 %v299, %v300
        %v302 = vrot.slane %v301, 2
        %v303 = vadd.f32 %v301, %v302
        %v304 = vrot.slane %v303, 1
        %v305 = vadd.f32 %v303, %v304
        %s306 = vtos %v305
        %s307 = sadd.f32 %s279, %s306
        %s308 = scalar_lea.smem [#allocation2], 0
        %309 = sst [smem:[%s308]] %s307
        %s310 = sld [smem:[#allocation2 + $0x1]]
        %vm311 = vcmask 7168
        %v312 = vsel %vm311, %v277, 0.0
        %v313 = vsel %vm311, %v278, 0.0
        %v314 = vadd.f32 %v312, %v313
        %315 = vadd.xlane.f32.xlu0 %v314
        %v316 = vpop.xlane.xlu0 %315
        %v317 = vrot.slane %v316, 4
        %v318 = vadd.f32 %v316, %v317
        %v319 = vrot.slane %v318, 2
        %v320 = vadd.f32 %v318, %v319
        %v321 = vrot.slane %v320, 1
        %v322 = vadd.f32 %v320, %v321
        %s323 = vtos %v322
        %s324 = sadd.f32 %s310, %s323
        %s325 = scalar_lea.smem [#allocation2], 1
        %326 = sst [smem:[%s325]] %s324
        // Predicated region
        $region37: #{a_call__.19} parent=31 // pred_check
          %p327 = pneg %p124
        $region38: #{a_call__.19} parent=31 // pred_check_branch
          %329 = sbr.rel (%p327) target = $region40
        $region39: #{a_call__.19} parent=31 // pred_region
          %s331 = ssub.s32 16, 16
          %332 = vsyncadd [#allocation3], %s331
          %s334 = sshll.u32 %s3, 4
          %s335 = int_to_ptr.vmem [resolvable:$true] %s334
          %337 = dma.smem_to_vmem [#allocation2], 16, %s335, [#allocation3]
        $region40: #{a_call__.19} parent=31 // pred_fallthru
          _
        // Predicated region
        $region41: #{a_call__.19} parent=31 // pred_check
          %p338 = pneg %p124
        $region42: #{a_call__.19} parent=31 // pred_check_branch
          %340 = sbr.rel (%p338) target = $region44
        $region43: #{a_call__.19} parent=31 // pred_region
          %341 = dma.done [#allocation3], 16
        $region44: #{a_call__.19} parent=31 // pred_fallthru
          _
        %342 = sfence
      $region32: #{a_call__.19} parent=5 // pred_fallthru
        _
      %p343 = scmp.le.s32.totalorder 2, %s10
      // Predicated region
      $region45: #{a_call__.19} parent=5 // pred_check
        %p344 = pneg %p343
      $region46: #{a_call__.19} parent=5 // pred_check_branch
        %346 = sbr.rel (%p344) target = $region48
      $region47: #{a_call__.19} parent=5 // pred_region
        %s347 = ssub.s32 %s10, 2
      $region48: #{a_call__.19} parent=5 // pred_fallthru
        _
    $region6: #{a_call__.19} parent=1 // loop_footer
      %s14 = sadd.s32 1, %s10
    $region7: #{a_call__.19} parent=1 // loop_footer_branch
      %9 = sbr.rel target = $region3
    $region8: #{a_call__.19} parent=1 // loop_exit
      _
    %348 = vsyncpa [#allocation3], 1
    %s349 = scalar_lea.sflag [#allocation3], 1
    %350 = vsyncpa %s349, 1

// kernel: a_call__.13
$region0: #{a_call__.13}
  #allocation0 [shape = 'u32[]', space=smem, size = 0x4, offset = 0x4, fixed_abs, tag = 'smem constant byte address 0x4 - core index']
  #allocation1 [shape = 'u32[144,128]{1,0:T(1,128)}', space=vmem, size = 0x12000, scoped, tag = 'internal scratch']
  %s0 = inlined_call_operand.vmem [shape: bf16[9,4,16,16], index: 0, kind: input, shape index: {}]
  %s1 = inlined_call_operand.vmem [shape: bf16[9,16,32], index: 1, kind: input, shape index: {}]
  %s2 = inlined_call_operand.vmem [shape: f32[1,32], index: 2, kind: input, shape index: {}]
  %s3 = inlined_call_operand.vmem [shape: bf16[4,16,32], index: 3, kind: output, shape index: {}]
  %s4 = sld [smem:[#allocation0]]
  $region86: #{a_call__.13} parent=0
    _
  %s6 = ssub.s32 1, %s4
  %s7 = scalar_select 0, %s6, %s4
  $region1: #{a_call__.13} parent=0
    #allocation2 [shape = 'u8[73728]{0}', space=vmem, size = 0x12000, scoped, tag = 'input window, operand 0']
    loop: start=0, step=1, limit=6
    $region2: #{a_call__.13} parent=1 // loop_pre_header
      _
    $region3: #{a_call__.13} parent=1 // loop_header
      %s9 = sphi 0, %s13
      %p10 = scmp.ge.s32.totalorder %s9, 6
      %s19 = sphi 0, %s21
      %s22 = sphi 0, %s19
      %s23 = sphi 0, %s22
      %s39 = sphi 0, %s23
      %s43 = sphi 0, %s43
      %s45 = sphi 0, %s43
      %s46 = sphi 0, %s45
      %s60 = sphi 0, %s46
      %s64 = sphi 0, %s64
      %s66 = sphi 0, %s64
      %s67 = sphi 0, %s66
      %s81 = sphi 0, %s67
      %s87 = sphi 0, %s89
      %s90 = sphi 0, %s87
      %s91 = sphi 0, %s90
      %s107 = sphi 0, %s91
    $region4: #{a_call__.13} parent=1 // loop_header_branch
      %12 = sbr.rel (%p10) target = $region8
    $region5: #{a_call__.13} parent=1 // loop_body
      %s14 = ssub.s32 %s9, 1
      %s15 = ssub.s32 %s9, 2
      %s16 = sadd.s32 %s9, 1
      %s17 = ssub.s32 %s9, %s16
      %p18 = scmp.eq.s32.totalorder %s17, 0
      %s20 = sadd.s32 %s19, 1
      %s21 = scalar_select %p18, %s19, %s20
      %p24 = pneg %p18
      %p25 = scmp.eq.s32.totalorder %s9, 3
      %p26 = por %p24, %p25
      %p27 = scmp.ne.s32.totalorder %s19, %s22
      %p28 = scmp.eq.s32.totalorder %s9, 0
      %p29 = por %p27, %p28
      %p30 = scmp.ne.s32.totalorder %s19, %s22
      %p31 = scmp.eq.s32.totalorder %s14, 3
      %p32 = por %p30, %p31
      %p33 = scmp.ne.s32.totalorder %s22, %s23
      %p34 = scmp.eq.s32.totalorder %s14, 0
      %p35 = por %p33, %p34
      %p36 = scmp.ne.s32.totalorder %s22, %s23
      %p37 = scmp.eq.s32.totalorder %s15, 3
      %p38 = por %p36, %p37
      %p40 = scmp.ne.s32.totalorder %s23, %s39
      %p41 = scmp.eq.s32.totalorder %s15, 0
      %p42 = por %p40, %p41
      %s44 = sadd.s32 %s43, 1
      %p47 = scmp.eq.s32.totalorder %s9, 3
      %p48 = scmp.ne.s32.totalorder %s43, %s45
      %p49 = scmp.eq.s32.totalorder %s9, 0
      %p50 = por %p48, %p49
      %p51 = scmp.ne.s32.totalorder %s43, %s45
      %p52 = scmp.eq.s32.totalorder %s14, 3
      %p53 = por %p51, %p52
      %p54 = scmp.ne.s32.totalorder %s45, %s46
      %p55 = scmp.eq.s32.totalorder %s14, 0
      %p56 = por %p54, %p55
      %p57 = scmp.ne.s32.totalorder %s45, %s46
      %p58 = scmp.eq.s32.totalorder %s15, 3
      %p59 = por %p57, %p58
      %p61 = scmp.ne.s32.totalorder %s46, %s60
      %p62 = scmp.eq.s32.totalorder %s15, 0
      %p63 = por %p61, %p62
      %s65 = sadd.s32 %s64, 1
      %p68 = scmp.eq.s32.totalorder %s9, 3
      %p69 = scmp.ne.s32.totalorder %s64, %s66
      %p70 = scmp.eq.s32.totalorder %s9, 0
      %p71 = por %p69, %p70
      %p72 = scmp.ne.s32.totalorder %s64, %s66
      %p73 = scmp.eq.s32.totalorder %s14, 3
      %p74 = por %p72, %p73
      %p75 = scmp.ne.s32.totalorder %s66, %s67
      %p76 = scmp.eq.s32.totalorder %s14, 0
      %p77 = por %p75, %p76
      %p78 = scmp.ne.s32.totalorder %s66, %s67
      %p79 = scmp.eq.s32.totalorder %s15, 3
      %p80 = por %p78, %p79
      %p82 = scmp.ne.s32.totalorder %s67, %s81
      %p83 = scmp.eq.s32.totalorder %s15, 0
      %p84 = por %p82, %p83
      %s85 = ssub.s32 %s9, %s16
      %p86 = scmp.eq.s32.totalorder %s85, 0
      %s88 = sadd.s32 %s87, 1
      %s89 = scalar_select %p86, %s87, %s88
      %p92 = pneg %p86
      %p93 = scmp.eq.s32.totalorder %s9, 3
      %p94 = por %p92, %p93
      %p95 = scmp.ne.s32.totalorder %s87, %s90
      %p96 = scmp.eq.s32.totalorder %s9, 0
      %p97 = por %p95, %p96
      %p98 = scmp.ne.s32.totalorder %s87, %s90
      %p99 = scmp.eq.s32.totalorder %s14, 3
      %p100 = por %p98, %p99
      %p101 = scmp.ne.s32.totalorder %s90, %s91
      %p102 = scmp.eq.s32.totalorder %s14, 0
      %p103 = por %p101, %p102
      %p104 = scmp.ne.s32.totalorder %s90, %s91
      %p105 = scmp.eq.s32.totalorder %s15, 3
      %p106 = por %p104, %p105
      %p108 = scmp.ne.s32.totalorder %s91, %s107
      %p109 = scmp.eq.s32.totalorder %s15, 0
      %p110 = por %p108, %p109
      %p111 = scmp.le.s32.totalorder 1, %s9
      %p112 = scmp.lt.s32.totalorder %s9, 5
      %p113 = pnand %p111, %p112
      %p114 = pneg %p113
      // Predicated region
      $region9: #{a_call__.13} parent=5 // pred_check
        _
      $region10: #{a_call__.13} parent=5 // pred_check_branch
        %116 = sbr.rel (%p113) target = $region12
      $region11: #{a_call__.13} parent=5 // pred_region
        %s117 = ssub.s32 %s9, 1
        // Predicated region
        $region13: #{a_call__.13} parent=11 // pred_check
          %p118 = pneg %p56
        $region14: #{a_call__.13} parent=11 // pred_check_branch
          %120 = sbr.rel (%p118) target = $region16
        $region15: #{a_call__.13} parent=11 // pred_region
          _
        $region16: #{a_call__.13} parent=11 // pred_fallthru
          _
        // Predicated region
        $region17: #{a_call__.13} parent=11 // pred_check
          %p121 = pneg %p77
        $region18: #{a_call__.13} parent=11 // pred_check_branch
          %123 = sbr.rel (%p121) target = $region20
        $region19: #{a_call__.13} parent=11 // pred_region
          _
        $region20: #{a_call__.13} parent=11 // pred_fallthru
          _
      $region12: #{a_call__.13} parent=5 // pred_fallthru
        _
      %p124 = scmp.lt.s32.totalorder %s9, 4
      // Predicated region
      $region21: #{a_call__.13} parent=5 // pred_check
        %p125 = pneg %p124
      $region22: #{a_call__.13} parent=5 // pred_check_branch
        %127 = sbr.rel (%p125) target = $region24
      $region23: #{a_call__.13} parent=5 // pred_region
        // Predicated region
        $region25: #{a_call__.13} parent=23 // pred_check
          %p128 = pneg %p29
        $region26: #{a_call__.13} parent=23 // pred_check_branch
          %130 = sbr.rel (%p128) target = $region28
        $region27: #{a_call__.13} parent=23 // pred_region
          %s131 = sand.u32 %s19, 1
          %s132 = sand.u32 %s19, 1
          %s133 = smul.addr %s132, 72
          %s134 = scalar_lea.vmem [#allocation2], %s133
          %s135 = smul.addr %s9, 2
          %s136 = smul.addr %s135, 4
          %s137 = scalar_lea.vmem %s0, %s136
          // Predicated region
          $region29: #{a_call__.13} parent=27 // pred_check
            _
          $region30: #{a_call__.13} parent=27 // pred_check_branch
            %139 = sbr.rel (0) target = $region32
          $region31: #{a_call__.13} parent=27 // pred_region
            // Predicated region
            $region33: #{a_call__.13} parent=31 // pred_check
              _
            $region34: #{a_call__.13} parent=31 // pred_check_branch
              %141 = sbr.rel target = $region36
            $region35: #{a_call__.13} parent=31 // pred_region
              // Predicated region
              $region48: #{a_call__.13} parent=35 // pred_check
                _
              $region49: #{a_call__.13} parent=35 // pred_check_branch
                %191 = sbr.rel (0) target = $region51
              $region50: #{a_call__.13} parent=35 // pred_region
                loop: start=0, step=1, limit=1
                $region52: #{a_call__.13} parent=50 // loop_pre_header
                  _
                $region53: #{a_call__.13} parent=50 // loop_header
                  %s193 = sphi 0, %s197
                  %p194 = scmp.ge.s32.totalorder %s193, 1
                  %s198 = sphi %s137, %s137
                  %s199 = sphi %s134, %s134
                $region54: #{a_call__.13} parent=50 // loop_header_branch
                  %196 = sbr.rel (%p194) target = $region58
                $region55: #{a_call__.13} parent=50 // loop_body
                  _
                $region56: #{a_call__.13} parent=50 // loop_footer
                  %s197 = sadd.s32 1, %s193
                $region57: #{a_call__.13} parent=50 // loop_footer_branch
                  %192 = sbr.rel target = $region53
                $region58: #{a_call__.13} parent=50 // loop_exit
                  _
                %s201 = ssub.s32 16, 1
                loop: start=0, step=1, limit=1
                $region59: #{a_call__.13} parent=50 // loop_pre_header
                  _
                $region60: #{a_call__.13} parent=50 // loop_header
                  %s203 = sphi 0, %s207
                  %p204 = scmp.ge.s32.totalorder %s203, 1
                  %s208 = sphi %s137, %s137
                  %s209 = sphi %s134, %s134
                $region61: #{a_call__.13} parent=50 // loop_header_branch
                  %206 = sbr.rel (%p204) target = $region65
                $region62: #{a_call__.13} parent=50 // loop_body
                  %v210 = vld [vmem:[%s208] sm:%s201]
                  %211 = vst [vmem:[%s209] sm:%s201] %v210
                  %v212 = vld [vmem:[%s208 + $0x4] sm:%s201]
                  %213 = vst [vmem:[%s209 + $0x4] sm:%s201] %v212
                  %v214 = vld [vmem:[%s208 + $0x20] sm:%s201]
                  %215 = vst [vmem:[%s209 + $0x8] sm:%s201] %v214
                  %v216 = vld [vmem:[%s208 + $0x24] sm:%s201]
                  %217 = vst [vmem:[%s209 + $0xc] sm:%s201] %v216
                  %v218 = vld [vmem:[%s208 + $0x40] sm:%s201]
                  %219 = vst [vmem:[%s209 + $0x10] sm:%s201] %v218
                  %v220 = vld [vmem:[%s208 + $0x44] sm:%s201]
                  %221 = vst [vmem:[%s209 + $0x14] sm:%s201] %v220
                  %v222 = vld [vmem:[%s208 + $0x60] sm:%s201]
                  %223 = vst [vmem:[%s209 + $0x18] sm:%s201] %v222
                  %v224 = vld [vmem:[%s208 + $0x64] sm:%s201]
                  %225 = vst [vmem:[%s209 + $0x1c] sm:%s201] %v224
                  %v226 = vld [vmem:[%s208 + $0x80] sm:%s201]
                  %227 = vst [vmem:[%s209 + $0x20] sm:%s201] %v226
                  %v228 = vld [vmem:[%s208 + $0x84] sm:%s201]
                  %229 = vst [vmem:[%s209 + $0x24] sm:%s201] %v228
                  %v230 = vld [vmem:[%s208 + $0xa0] sm:%s201]
                  %231 = vst [vmem:[%s209 + $0x28] sm:%s201] %v230
                  %v232 = vld [vmem:[%s208 + $0xa4] sm:%s201]
                  %233 = vst [vmem:[%s209 + $0x2c] sm:%s201] %v232
                  %v234 = vld [vmem:[%s208 + $0xc0] sm:%s201]
                  %235 = vst [vmem:[%s209 + $0x30] sm:%s201] %v234
                  %v236 = vld [vmem:[%s208 + $0xc4] sm:%s201]
                  %237 = vst [vmem:[%s209 + $0x34] sm:%s201] %v236
                  %v238 = vld [vmem:[%s208 + $0xe0] sm:%s201]
                  %239 = vst [vmem:[%s209 + $0x38] sm:%s201] %v238
                  %v240 = vld [vmem:[%s208 + $0xe4] sm:%s201]
                  %241 = vst [vmem:[%s209 + $0x3c] sm:%s201] %v240
                  %v242 = vld [vmem:[%s208 + $0x100] sm:%s201]
                  %243 = vst [vmem:[%s209 + $0x40] sm:%s201] %v242
                  %v244 = vld [vmem:[%s208 + $0x104] sm:%s201]
                  %245 = vst [vmem:[%s209 + $0x44] sm:%s201] %v244
                $region63: #{a_call__.13} parent=50 // loop_footer
                  %s207 = sadd.s32 1, %s203
                $region64: #{a_call__.13} parent=50 // loop_footer_branch
                  %202 = sbr.rel target = $region60
                $region65: #{a_call__.13} parent=50 // loop_exit
                  _
              $region51: #{a_call__.13} parent=35 // pred_fallthru
                _
            $region36: #{a_call__.13} parent=31 // pred_fallthru
              _
            // Predicated region
            $region37: #{a_call__.13} parent=31 // pred_check
              _
            $region38: #{a_call__.13} parent=31 // pred_check_branch
              %143 = sbr.rel (0) target = $region40
            $region39: #{a_call__.13} parent=31 // pred_region
              %s145 = ssub.s32 16, 1
              loop: start=0, step=1, limit=1
              $region41: #{a_call__.13} parent=39 // loop_pre_header
                _
              $region42: #{a_call__.13} parent=39 // loop_header
                %s147 = sphi 0, %s151
                %p148 = scmp.ge.s32.totalorder %s147, 1
                %s152 = sphi %s137, %s137
                %s153 = sphi %s134, %s134
              $region43: #{a_call__.13} parent=39 // loop_header_branch
                %150 = sbr.rel (%p148) target = $region47
              $region44: #{a_call__.13} parent=39 // loop_body
                %v154 = vld [vmem:[%s152] sm:%s145]
                %155 = vst [vmem:[%s153] sm:%s145] %v154
                %v156 = vld [vmem:[%s152 + $0x4] sm:%s145]
                %157 = vst [vmem:[%s153 + $0x4] sm:%s145] %v156
                %v158 = vld [vmem:[%s152 + $0x20] sm:%s145]
                %159 = vst [vmem:[%s153 + $0x8] sm:%s145] %v158
                %v160 = vld [vmem:[%s152 + $0x24] sm:%s145]
                %161 = vst [vmem:[%s153 + $0xc] sm:%s145] %v160
                %v162 = vld [vmem:[%s152 + $0x40] sm:%s145]
                %163 = vst [vmem:[%s153 + $0x10] sm:%s145] %v162
                %v164 = vld [vmem:[%s152 + $0x44] sm:%s145]
                %165 = vst [vmem:[%s153 + $0x14] sm:%s145] %v164
                %v166 = vld [vmem:[%s152 + $0x60] sm:%s145]
                %167 = vst [vmem:[%s153 + $0x18] sm:%s145] %v166
                %v168 = vld [vmem:[%s152 + $0x64] sm:%s145]
                %169 = vst [vmem:[%s153 + $0x1c] sm:%s145] %v168
                %v170 = vld [vmem:[%s152 + $0x80] sm:%s145]
                %171 = vst [vmem:[%s153 + $0x20] sm:%s145] %v170
                %v172 = vld [vmem:[%s152 + $0x84] sm:%s145]
                %173 = vst [vmem:[%s153 + $0x24] sm:%s145] %v172
                %v174 = vld [vmem:[%s152 + $0xa0] sm:%s145]
                %175 = vst [vmem:[%s153 + $0x28] sm:%s145] %v174
                %v176 = vld [vmem:[%s152 + $0xa4] sm:%s145]
                %177 = vst [vmem:[%s153 + $0x2c] sm:%s145] %v176
                %v178 = vld [vmem:[%s152 + $0xc0] sm:%s145]
                %179 = vst [vmem:[%s153 + $0x30] sm:%s145] %v178
                %v180 = vld [vmem:[%s152 + $0xc4] sm:%s145]
                %181 = vst [vmem:[%s153 + $0x34] sm:%s145] %v180
                %v182 = vld [vmem:[%s152 + $0xe0] sm:%s145]
                %183 = vst [vmem:[%s153 + $0x38] sm:%s145] %v182
                %v184 = vld [vmem:[%s152 + $0xe4] sm:%s145]
                %185 = vst [vmem:[%s153 + $0x3c] sm:%s145] %v184
                %v186 = vld [vmem:[%s152 + $0x100] sm:%s145]
                %187 = vst [vmem:[%s153 + $0x40] sm:%s145] %v186
                %v188 = vld [vmem:[%s152 + $0x104] sm:%s145]
                %189 = vst [vmem:[%s153 + $0x44] sm:%s145] %v188
              $region45: #{a_call__.13} parent=39 // loop_footer
                %s151 = sadd.s32 1, %s147
              $region46: #{a_call__.13} parent=39 // loop_footer_branch
                %146 = sbr.rel target = $region42
              $region47: #{a_call__.13} parent=39 // loop_exit
                _
            $region40: #{a_call__.13} parent=31 // pred_fallthru
              _
          $region32: #{a_call__.13} parent=27 // pred_fallthru
            _
          %246 = vnop
        $region28: #{a_call__.13} parent=23 // pred_fallthru
          _
      $region24: #{a_call__.13} parent=5 // pred_fallthru
        _
      %p247 = scmp.le.s32.totalorder 1, %s9
      %p248 = scmp.lt.s32.totalorder %s9, 5
      %p249 = pnand %p247, %p248
      %p250 = pneg %p249
      // Predicated region
      $region66: #{a_call__.13} parent=5 // pred_check
        _
      $region67: #{a_call__.13} parent=5 // pred_check_branch
        %252 = sbr.rel (%p249) target = $region69
      $region68: #{a_call__.13} parent=5 // pred_region
        %s253 = ssub.s32 %s9, 1
        %s254 = sand.u32 %s22, 1
        %s255 = sand.u32 %s22, 1
        %s256 = smul.addr %s255, 72
        %s257 = scalar_lea.vmem [#allocation2], %s256
        // Predicated region
        $region70: #{a_call__.13} parent=68 // pred_check
          %p258 = pneg %p35
        $region71: #{a_call__.13} parent=68 // pred_check_branch
          %260 = sbr.rel (%p258) target = $region73
        $region72: #{a_call__.13} parent=68 // pred_region
          _
        $region73: #{a_call__.13} parent=68 // pred_fallthru
          _
        %s261 = sand.u32 %s22, 1
        %s262 = sand.u32 %s22, 1
        %s263 = smul.addr %s262, 72
        %s264 = scalar_lea.vmem [#allocation2], %s263
        %p265 = pneg %p35
        %p266 = pneg %p32
        %p267 = pneg %p56
        %p268 = pneg %p53
        %p269 = pneg %p77
        %p270 = pneg %p74
        %p271 = pneg %p103
        %p272 = pneg %p100
        %p273 = scmp.lt.s32.totalorder %s14, 3
        %s274 = scalar_select %p273, %s14, 3
        %s275 = smul.addr %s274, 2
        %s276 = smul.addr %s275, 4
        %s277 = scalar_lea.vmem %s3, %s276
        %p278 = scmp.lt.s32.totalorder %s14, 3
        %s279 = scalar_select %p278, %s14, 3
        %s280 = smul.addr %s279, 2
        %s281 = smul.addr %s280, 4
        %s282 = scalar_lea.vmem %s3, %s281
        %v284 = vld [vmem:[%s257] sm:$0xf]
        %v285 = vld [vmem:[%s257 + $0x4] sm:$0xf]
        %v286 = vld [vmem:[%s1] sm:$0xf]
        %v287 = vld [vmem:[%s1 + $0x4] sm:$0xf]
        %s288 = scalar_lea.vmem %s257, 8 [#allocation2]
        %v289 = vld [vmem:[%s288] sm:$0xf]
        %v290 = vld [vmem:[%s288 + $0x4] sm:$0xf]
        %s291 = scalar_lea.vmem %s1, 8
        %v292 = vld [vmem:[%s291] sm:$0xf]
        %v293 = vld [vmem:[%s291 + $0x4] sm:$0xf]
        %v296 = vunpack.c.l.b16 %v289
        %v297 = vunpack.c.l.b16 %v290
        %v298 = vpack.c.b16 %v297, %v296
        %v301 = vunpack.c.l.b16 %v292
        %v302 = vunpack.c.l.b16 %v293
        %v303 = vpack.c.b16 %v302, %v301
        %vm305 = vcmask 130048
        %v307 = vsel %vm305, %v298, 0
        %309 = vmatprep.subr.bf16.mxu0 0
        %310 = vmatpush1.bf16.msra.mxu0 0
        %311 = vmatprep.subr.bf16.mxu0 0
        %312 = vmatpush1.bf16.msra.mxu0 0
        %313 = vmatprep.subr.bf16.mxu0 0
        %314 = vmatpush1.bf16.msra.mxu0 0
        %315 = vmatprep.subr.bf16.mxu0 0
        %316 = vmatpush1.bf16.msra.mxu0 0
        %317 = vmatprep.subr.bf16.mxu0 0
        %318 = vmatpush1.bf16.msra.mxu0 0
        %319 = vmatprep.subr.bf16.mxu0 0
        %320 = vmatpush1.bf16.msra.mxu0 0
        %321 = vmatprep.subr.bf16.mxu0 0
        %322 = vmatpush1.bf16.msra.mxu0 0
        %323 = vmatprep.subr.bf16.mxu0 0
        %324 = vmatpush1.bf16.msra.mxu0 %v303
        %325 = vmatprep.subr.bf16.mxu0 0
        %326 = vmatpush2.bf16.msra.mxu0 0
        %327 = vmatprep.subr.bf16.mxu0 0
        %328 = vmatpush2.bf16.msra.mxu0 0
        %329 = vmatprep.subr.bf16.mxu0 0
        %330 = vmatpush2.bf16.msra.mxu0 0
        %331 = vmatprep.subr.bf16.mxu0 0
        %332 = vmatpush2.bf16.msra.mxu0 0
        %333 = vmatprep.subr.bf16.mxu0 0
        %334 = vmatpush2.bf16.msra.mxu0 0
        %335 = vmatprep.subr.bf16.mxu0 0
        %336 = vmatpush2.bf16.msra.mxu0 0
        %337 = vmatprep.subr.bf16.mxu0 0
        %338 = vmatpush2.bf16.msra.mxu0 0
        %339 = vmatprep.subr.bf16.mxu0 0
        %340 = vmatpush2.bf16.msra.mxu0 0
        %341 = vmatprep.mubr.bf16.mxu0 0
        %342 = vmatmul.mubr.bf16.gmra.mxu0 %v307
        %v343 = vpop.f32.mrf.mxu0
        %v344 = vadd.f32 0.0, %v343
        %v345 = vpop.f32.mrf.mxu0
        %v346 = vpop.f32.mrf.mxu0
        %v347 = vadd.f32 0.0, %v346
        %v348 = vpop.f32.mrf.mxu0
        %349 = vdwg.mxu0
        %v352 = vunpack.c.l.b16 %v284
        %v353 = vunpack.c.l.b16 %v285
        %v354 = vpack.c.b16 %v353, %v352
        %v357 = vunpack.c.l.b16 %v286
        %v358 = vunpack.c.l.b16 %v287
        %v359 = vpack.c.b16 %v358, %v357
        %v362 = vsel %vm305, %v354, 0
        %364 = vmatprep.subr.bf16.mxu0 0
        %365 = vmatpush1.bf16.msra.mxu0 0
        %366 = vmatprep.subr.bf16.mxu0 0
        %367 = vmatpush1.bf16.msra.mxu0 0
        %368 = vmatprep.subr.bf16.mxu0 0
        %369 = vmatpush1.bf16.msra.mxu0 0
        %370 = vmatprep.subr.bf16.mxu0 0
        %371 = vmatpush1.bf16.msra.mxu0 0
        %372 = vmatprep.subr.bf16.mxu0 0
        %373 = vmatpush1.bf16.msra.mxu0 0
        %374 = vmatprep.subr.bf16.mxu0 0
        %375 = vmatpush1.bf16.msra.mxu0 0
        %376 = vmatprep.subr.bf16.mxu0 0
        %377 = vmatpush1.bf16.msra.mxu0 0
        %378 = vmatprep.subr.bf16.mxu0 0
        %379 = vmatpush1.bf16.msra.mxu0 %v359
        %380 = vmatprep.subr.bf16.mxu0 0
        %381 = vmatpush2.bf16.msra.mxu0 0
        %382 = vmatprep.subr.bf16.mxu0 0
        %383 = vmatpush2.bf16.msra.mxu0 0
        %384 = vmatprep.subr.bf16.mxu0 0
        %385 = vmatpush2.bf16.msra.mxu0 0
        %386 = vmatprep.subr.bf16.mxu0 0
        %387 = vmatpush2.bf16.msra.mxu0 0
        %388 = vmatprep.subr.bf16.mxu0 0
        %389 = vmatpush2.bf16.msra.mxu0 0
        %390 = vmatprep.subr.bf16.mxu0 0
        %391 = vmatpush2.bf16.msra.mxu0 0
        %392 = vmatprep.subr.bf16.mxu0 0
        %393 = vmatpush2.bf16.msra.mxu0 0
        %394 = vmatprep.subr.bf16.mxu0 0
        %395 = vmatpush2.bf16.msra.mxu0 0
        %396 = vmatprep.mubr.bf16.mxu0 0
        %397 = vmatmul.mubr.bf16.gmra.mxu0 %v362
        %v398 = vpop.f32.mrf.mxu0
        %v399 = vadd.f32 %v344, %v398
        %v400 = vpop.f32.mrf.mxu0
        %v401 = vpop.f32.mrf.mxu0
        %v402 = vadd.f32 %v347, %v401
        %v403 = vpop.f32.mrf.mxu0
        %404 = vdwg.mxu0
        %s405 = scalar_lea.vmem %s257, 16 [#allocation2]
        %v406 = vld [vmem:[%s405] sm:$0xf]
        %v407 = vld [vmem:[%s405 + $0x4] sm:$0xf]
        %s408 = scalar_lea.vmem %s1, 16
        %v409 = vld [vmem:[%s408] sm:$0xf]
        %v410 = vld [vmem:[%s408 + $0x4] sm:$0xf]
        %v413 = vunpack.c.l.b16 %v406
        %v414 = vunpack.c.l.b16 %v407
        %v415 = vpack.c.b16 %v414, %v413
        %v418 = vunpack.c.l.b16 %v409
        %v419 = vunpack.c.l.b16 %v410
        %v420 = vpack.c.b16 %v419, %v418
        %v423 = vsel %vm305, %v415, 0
        %425 = vmatprep.subr.bf16.mxu0 0
        %426 = vmatpush1.bf16.msra.mxu0 0
        %427 = vmatprep.subr.bf16.mxu0 0
        %428 = vmatpush1.bf16.msra.mxu0 0
        %429 = vmatprep.subr.bf16.mxu0 0
        %430 = vmatpush1.bf16.msra.mxu0 0
        %431 = vmatprep.subr.bf16.mxu0 0
        %432 = vmatpush1.bf16.msra.mxu0 0
        %433 = vmatprep.subr.bf16.mxu0 0
        %434 = vmatpush1.bf16.msra.mxu0 0
        %435 = vmatprep.subr.bf16.mxu0 0
        %436 = vmatpush1.bf16.msra.mxu0 0
        %437 = vmatprep.subr.bf16.mxu0 0
        %438 = vmatpush1.bf16.msra.mxu0 0
        %439 = vmatprep.subr.bf16.mxu0 0
        %440 = vmatpush1.bf16.msra.mxu0 %v420
        %441 = vmatprep.subr.bf16.mxu0 0
        %442 = vmatpush2.bf16.msra.mxu0 0
        %443 = vmatprep.subr.bf16.mxu0 0
        %444 = vmatpush2.bf16.msra.mxu0 0
        %445 = vmatprep.subr.bf16.mxu0 0
        %446 = vmatpush2.bf16.msra.mxu0 0
        %447 = vmatprep.subr.bf16.mxu0 0
        %448 = vmatpush2.bf16.msra.mxu0 0
        %449 = vmatprep.subr.bf16.mxu0 0
        %450 = vmatpush2.bf16.msra.mxu0 0
        %451 = vmatprep.subr.bf16.mxu0 0
        %452 = vmatpush2.bf16.msra.mxu0 0
        %453 = vmatprep.subr.bf16.mxu0 0
        %454 = vmatpush2.bf16.msra.mxu0 0
        %455 = vmatprep.subr.bf16.mxu0 0
        %456 = vmatpush2.bf16.msra.mxu0 0
        %457 = vmatprep.mubr.bf16.mxu0 0
        %458 = vmatmul.mubr.bf16.gmra.mxu0 %v423
        %v459 = vpop.f32.mrf.mxu0
        %v460 = vadd.f32 0.0, %v459
        %v461 = vpop.f32.mrf.mxu0
        %v462 = vpop.f32.mrf.mxu0
        %v463 = vadd.f32 0.0, %v462
        %v464 = vpop.f32.mrf.mxu0
        %465 = vdwg.mxu0
        %v466 = vadd.f32 %v399, %v460
        %v467 = vadd.f32 %v402, %v463
        %s468 = scalar_lea.vmem %s257, 24 [#allocation2]
        %v469 = vld [vmem:[%s468] sm:$0xf]
        %v470 = vld [vmem:[%s468 + $0x4] sm:$0xf]
        %s471 = scalar_lea.vmem %s1, 24
        %v472 = vld [vmem:[%s471] sm:$0xf]
        %v473 = vld [vmem:[%s471 + $0x4] sm:$0xf]
        %v476 = vunpack.c.l.b16 %v469
        %v477 = vunpack.c.l.b16 %v470
        %v478 = vpack.c.b16 %v477, %v476
        %v481 = vunpack.c.l.b16 %v472
        %v482 = vunpack.c.l.b16 %v473
        %v483 = vpack.c.b16 %v482, %v481
        %v486 = vsel %vm305, %v478, 0
        %488 = vmatprep.subr.bf16.mxu0 0
        %489 = vmatpush1.bf16.msra.mxu0 0
        %490 = vmatprep.subr.bf16.mxu0 0
        %491 = vmatpush1.bf16.msra.mxu0 0
        %492 = vmatprep.subr.bf16.mxu0 0
        %493 = vmatpush1.bf16.msra.mxu0 0
        %494 = vmatprep.subr.bf16.mxu0 0
        %495 = vmatpush1.bf16.msra.mxu0 0
        %496 = vmatprep.subr.bf16.mxu0 0
        %497 = vmatpush1.bf16.msra.mxu0 0
        %498 = vmatprep.subr.bf16.mxu0 0
        %499 = vmatpush1.bf16.msra.mxu0 0
        %500 = vmatprep.subr.bf16.mxu0 0
        %501 = vmatpush1.bf16.msra.mxu0 0
        %502 = vmatprep.subr.bf16.mxu0 0
        %503 = vmatpush1.bf16.msra.mxu0 %v483
        %504 = vmatprep.subr.bf16.mxu0 0
        %505 = vmatpush2.bf16.msra.mxu0 0
        %506 = vmatprep.subr.bf16.mxu0 0
        %507 = vmatpush2.bf16.msra.mxu0 0
        %508 = vmatprep.subr.bf16.mxu0 0
        %509 = vmatpush2.bf16.msra.mxu0 0
        %510 = vmatprep.subr.bf16.mxu0 0
        %511 = vmatpush2.bf16.msra.mxu0 0
        %512 = vmatprep.subr.bf16.mxu0 0
        %513 = vmatpush2.bf16.msra.mxu0 0
        %514 = vmatprep.subr.bf16.mxu0 0
        %515 = vmatpush2.bf16.msra.mxu0 0
        %516 = vmatprep.subr.bf16.mxu0 0
        %517 = vmatpush2.bf16.msra.mxu0 0
        %518 = vmatprep.subr.bf16.mxu0 0
        %519 = vmatpush2.bf16.msra.mxu0 0
        %520 = vmatprep.mubr.bf16.mxu0 0
        %521 = vmatmul.mubr.bf16.gmra.mxu0 %v486
        %v522 = vpop.f32.mrf.mxu0
        %v523 = vadd.f32 0.0, %v522
        %v524 = vpop.f32.mrf.mxu0
        %v525 = vpop.f32.mrf.mxu0
        %v526 = vadd.f32 0.0, %v525
        %v527 = vpop.f32.mrf.mxu0
        %528 = vdwg.mxu0
        %v529 = vadd.f32 %v466, %v523
        %v530 = vadd.f32 %v467, %v526
        %s531 = scalar_lea.vmem %s257, 32 [#allocation2]
        %v532 = vld [vmem:[%s531] sm:$0xf]
        %v533 = vld [vmem:[%s531 + $0x4] sm:$0xf]
        %s534 = scalar_lea.vmem %s1, 32
        %v535 = vld [vmem:[%s534] sm:$0xf]
        %v536 = vld [vmem:[%s534 + $0x4] sm:$0xf]
        %v539 = vunpack.c.l.b16 %v532
        %v540 = vunpack.c.l.b16 %v533
        %v541 = vpack.c.b16 %v540, %v539
        %v544 = vunpack.c.l.b16 %v535
        %v545 = vunpack.c.l.b16 %v536
        %v546 = vpack.c.b16 %v545, %v544
        %v549 = vsel %vm305, %v541, 0
        %551 = vmatprep.subr.bf16.mxu0 0
        %552 = vmatpush1.bf16.msra.mxu0 0
        %553 = vmatprep.subr.bf16.mxu0 0
        %554 = vmatpush1.bf16.msra.mxu0 0
        %555 = vmatprep.subr.bf16.mxu0 0
        %556 = vmatpush1.bf16.msra.mxu0 0
        %557 = vmatprep.subr.bf16.mxu0 0
        %558 = vmatpush1.bf16.msra.mxu0 0
        %559 = vmatprep.subr.bf16.mxu0 0
        %560 = vmatpush1.bf16.msra.mxu0 0
        %561 = vmatprep.subr.bf16.mxu0 0
        %562 = vmatpush1.bf16.msra.mxu0 0
        %563 = vmatprep.subr.bf16.mxu0 0
        %564 = vmatpush1.bf16.msra.mxu0 0
        %565 = vmatprep.subr.bf16.mxu0 0
        %566 = vmatpush1.bf16.msra.mxu0 %v546
        %567 = vmatprep.subr.bf16.mxu0 0
        %568 = vmatpush2.bf16.msra.mxu0 0
        %569 = vmatprep.subr.bf16.mxu0 0
        %570 = vmatpush2.bf16.msra.mxu0 0
        %571 = vmatprep.subr.bf16.mxu0 0
        %572 = vmatpush2.bf16.msra.mxu0 0
        %573 = vmatprep.subr.bf16.mxu0 0
        %574 = vmatpush2.bf16.msra.mxu0 0
        %575 = vmatprep.subr.bf16.mxu0 0
        %576 = vmatpush2.bf16.msra.mxu0 0
        %577 = vmatprep.subr.bf16.mxu0 0
        %578 = vmatpush2.bf16.msra.mxu0 0
        %579 = vmatprep.subr.bf16.mxu0 0
        %580 = vmatpush2.bf16.msra.mxu0 0
        %581 = vmatprep.subr.bf16.mxu0 0
        %582 = vmatpush2.bf16.msra.mxu0 0
        %583 = vmatprep.mubr.bf16.mxu0 0
        %584 = vmatmul.mubr.bf16.gmra.mxu0 %v549
        %v585 = vpop.f32.mrf.mxu0
        %v586 = vadd.f32 0.0, %v585
        %v587 = vpop.f32.mrf.mxu0
        %v588 = vpop.f32.mrf.mxu0
        %v589 = vadd.f32 0.0, %v588
        %v590 = vpop.f32.mrf.mxu0
        %591 = vdwg.mxu0
        %v592 = vadd.f32 %v529, %v586
        %v593 = vadd.f32 %v530, %v589
        %s594 = scalar_lea.vmem %s257, 40 [#allocation2]
        %v595 = vld [vmem:[%s594] sm:$0xf]
        %v596 = vld [vmem:[%s594 + $0x4] sm:$0xf]
        %s597 = scalar_lea.vmem %s1, 40
        %v598 = vld [vmem:[%s597] sm:$0xf]
        %v599 = vld [vmem:[%s597 + $0x4] sm:$0xf]
        %v602 = vunpack.c.l.b16 %v595
        %v603 = vunpack.c.l.b16 %v596
        %v604 = vpack.c.b16 %v603, %v602
        %v607 = vunpack.c.l.b16 %v598
        %v608 = vunpack.c.l.b16 %v599
        %v609 = vpack.c.b16 %v608, %v607
        %v612 = vsel %vm305, %v604, 0
        %614 = vmatprep.subr.bf16.mxu0 0
        %615 = vmatpush1.bf16.msra.mxu0 0
        %616 = vmatprep.subr.bf16.mxu0 0
        %617 = vmatpush1.bf16.msra.mxu0 0
        %618 = vmatprep.subr.bf16.mxu0 0
        %619 = vmatpush1.bf16.msra.mxu0 0
        %620 = vmatprep.subr.bf16.mxu0 0
        %621 = vmatpush1.bf16.msra.mxu0 0
        %622 = vmatprep.subr.bf16.mxu0 0
        %623 = vmatpush1.bf16.msra.mxu0 0
        %624 = vmatprep.subr.bf16.mxu0 0
        %625 = vmatpush1.bf16.msra.mxu0 0
        %626 = vmatprep.subr.bf16.mxu0 0
        %627 = vmatpush1.bf16.msra.mxu0 0
        %628 = vmatprep.subr.bf16.mxu0 0
        %629 = vmatpush1.bf16.msra.mxu0 %v609
        %630 = vmatprep.subr.bf16.mxu0 0
        %631 = vmatpush2.bf16.msra.mxu0 0
        %632 = vmatprep.subr.bf16.mxu0 0
        %633 = vmatpush2.bf16.msra.mxu0 0
        %634 = vmatprep.subr.bf16.mxu0 0
        %635 = vmatpush2.bf16.msra.mxu0 0
        %636 = vmatprep.subr.bf16.mxu0 0
        %637 = vmatpush2.bf16.msra.mxu0 0
        %638 = vmatprep.subr.bf16.mxu0 0
        %639 = vmatpush2.bf16.msra.mxu0 0
        %640 = vmatprep.subr.bf16.mxu0 0
        %641 = vmatpush2.bf16.msra.mxu0 0
        %642 = vmatprep.subr.bf16.mxu0 0
        %643 = vmatpush2.bf16.msra.mxu0 0
        %644 = vmatprep.subr.bf16.mxu0 0
        %645 = vmatpush2.bf16.msra.mxu0 0
        %646 = vmatprep.mubr.bf16.mxu0 0
        %647 = vmatmul.mubr.bf16.gmra.mxu0 %v612
        %v648 = vpop.f32.mrf.mxu0
        %v649 = vadd.f32 0.0, %v648
        %v650 = vpop.f32.mrf.mxu0
        %v651 = vpop.f32.mrf.mxu0
        %v652 = vadd.f32 0.0, %v651
        %v653 = vpop.f32.mrf.mxu0
        %654 = vdwg.mxu0
        %v655 = vadd.f32 %v592, %v649
        %v656 = vadd.f32 %v593, %v652
        %s657 = scalar_lea.vmem %s257, 48 [#allocation2]
        %v658 = vld [vmem:[%s657] sm:$0xf]
        %v659 = vld [vmem:[%s657 + $0x4] sm:$0xf]
        %s660 = scalar_lea.vmem %s1, 48
        %v661 = vld [vmem:[%s660] sm:$0xf]
        %v662 = vld [vmem:[%s660 + $0x4] sm:$0xf]
        %v665 = vunpack.c.l.b16 %v658
        %v666 = vunpack.c.l.b16 %v659
        %v667 = vpack.c.b16 %v666, %v665
        %v670 = vunpack.c.l.b16 %v661
        %v671 = vunpack.c.l.b16 %v662
        %v672 = vpack.c.b16 %v671, %v670
        %v675 = vsel %vm305, %v667, 0
        %677 = vmatprep.subr.bf16.mxu0 0
        %678 = vmatpush1.bf16.msra.mxu0 0
        %679 = vmatprep.subr.bf16.mxu0 0
        %680 = vmatpush1.bf16.msra.mxu0 0
        %681 = vmatprep.subr.bf16.mxu0 0
        %682 = vmatpush1.bf16.msra.mxu0 0
        %683 = vmatprep.subr.bf16.mxu0 0
        %684 = vmatpush1.bf16.msra.mxu0 0
        %685 = vmatprep.subr.bf16.mxu0 0
        %686 = vmatpush1.bf16.msra.mxu0 0
        %687 = vmatprep.subr.bf16.mxu0 0
        %688 = vmatpush1.bf16.msra.mxu0 0
        %689 = vmatprep.subr.bf16.mxu0 0
        %690 = vmatpush1.bf16.msra.mxu0 0
        %691 = vmatprep.subr.bf16.mxu0 0
        %692 = vmatpush1.bf16.msra.mxu0 %v672
        %693 = vmatprep.subr.bf16.mxu0 0
        %694 = vmatpush2.bf16.msra.mxu0 0
        %695 = vmatprep.subr.bf16.mxu0 0
        %696 = vmatpush2.bf16.msra.mxu0 0
        %697 = vmatprep.subr.bf16.mxu0 0
        %698 = vmatpush2.bf16.msra.mxu0 0
        %699 = vmatprep.subr.bf16.mxu0 0
        %700 = vmatpush2.bf16.msra.mxu0 0
        %701 = vmatprep.subr.bf16.mxu0 0
        %702 = vmatpush2.bf16.msra.mxu0 0
        %703 = vmatprep.subr.bf16.mxu0 0
        %704 = vmatpush2.bf16.msra.mxu0 0
        %705 = vmatprep.subr.bf16.mxu0 0
        %706 = vmatpush2.bf16.msra.mxu0 0
        %707 = vmatprep.subr.bf16.mxu0 0
        %708 = vmatpush2.bf16.msra.mxu0 0
        %709 = vmatprep.mubr.bf16.mxu0 0
        %710 = vmatmul.mubr.bf16.gmra.mxu0 %v675
        %v711 = vpop.f32.mrf.mxu0
        %v712 = vadd.f32 0.0, %v711
        %v713 = vpop.f32.mrf.mxu0
        %v714 = vpop.f32.mrf.mxu0
        %v715 = vadd.f32 0.0, %v714
        %v716 = vpop.f32.mrf.mxu0
        %717 = vdwg.mxu0
        %v718 = vadd.f32 %v655, %v712
        %v719 = vadd.f32 %v656, %v715
        %s720 = scalar_lea.vmem %s257, 56 [#allocation2]
        %v721 = vld [vmem:[%s720] sm:$0xf]
        %v722 = vld [vmem:[%s720 + $0x4] sm:$0xf]
        %s723 = scalar_lea.vmem %s1, 56
        %v724 = vld [vmem:[%s723] sm:$0xf]
        %v725 = vld [vmem:[%s723 + $0x4] sm:$0xf]
        %v728 = vunpack.c.l.b16 %v721
        %v729 = vunpack.c.l.b16 %v722
        %v730 = vpack.c.b16 %v729, %v728
        %v733 = vunpack.c.l.b16 %v724
        %v734 = vunpack.c.l.b16 %v725
        %v735 = vpack.c.b16 %v734, %v733
        %v738 = vsel %vm305, %v730, 0
        %740 = vmatprep.subr.bf16.mxu0 0
        %741 = vmatpush1.bf16.msra.mxu0 0
        %742 = vmatprep.subr.bf16.mxu0 0
        %743 = vmatpush1.bf16.msra.mxu0 0
        %744 = vmatprep.subr.bf16.mxu0 0
        %745 = vmatpush1.bf16.msra.mxu0 0
        %746 = vmatprep.subr.bf16.mxu0 0
        %747 = vmatpush1.bf16.msra.mxu0 0
        %748 = vmatprep.subr.bf16.mxu0 0
        %749 = vmatpush1.bf16.msra.mxu0 0
        %750 = vmatprep.subr.bf16.mxu0 0
        %751 = vmatpush1.bf16.msra.mxu0 0
        %752 = vmatprep.subr.bf16.mxu0 0
        %753 = vmatpush1.bf16.msra.mxu0 0
        %754 = vmatprep.subr.bf16.mxu0 0
        %755 = vmatpush1.bf16.msra.mxu0 %v735
        %756 = vmatprep.subr.bf16.mxu0 0
        %757 = vmatpush2.bf16.msra.mxu0 0
        %758 = vmatprep.subr.bf16.mxu0 0
        %759 = vmatpush2.bf16.msra.mxu0 0
        %760 = vmatprep.subr.bf16.mxu0 0
        %761 = vmatpush2.bf16.msra.mxu0 0
        %762 = vmatprep.subr.bf16.mxu0 0
        %763 = vmatpush2.bf16.msra.mxu0 0
        %764 = vmatprep.subr.bf16.mxu0 0
        %765 = vmatpush2.bf16.msra.mxu0 0
        %766 = vmatprep.subr.bf16.mxu0 0
        %767 = vmatpush2.bf16.msra.mxu0 0
        %768 = vmatprep.subr.bf16.mxu0 0
        %769 = vmatpush2.bf16.msra.mxu0 0
        %770 = vmatprep.subr.bf16.mxu0 0
        %771 = vmatpush2.bf16.msra.mxu0 0
        %772 = vmatprep.mubr.bf16.mxu0 0
        %773 = vmatmul.mubr.bf16.gmra.mxu0 %v738
        %v774 = vpop.f32.mrf.mxu0
        %v775 = vadd.f32 0.0, %v774
        %v776 = vpop.f32.mrf.mxu0
        %v777 = vpop.f32.mrf.mxu0
        %v778 = vadd.f32 0.0, %v777
        %v779 = vpop.f32.mrf.mxu0
        %780 = vdwg.mxu0
        %v781 = vadd.f32 %v718, %v775
        %v782 = vadd.f32 %v719, %v778
        %s783 = scalar_lea.vmem %s257, 64 [#allocation2]
        %v784 = vld [vmem:[%s783] sm:$0xf]
        %v785 = vld [vmem:[%s783 + $0x4] sm:$0xf]
        %s786 = scalar_lea.vmem %s1, 64
        %v787 = vld [vmem:[%s786] sm:$0xf]
        %v788 = vld [vmem:[%s786 + $0x4] sm:$0xf]
        %v791 = vunpack.c.l.b16 %v784
        %v792 = vunpack.c.l.b16 %v785
        %v793 = vpack.c.b16 %v792, %v791
        %v796 = vunpack.c.l.b16 %v787
        %v797 = vunpack.c.l.b16 %v788
        %v798 = vpack.c.b16 %v797, %v796
        %v801 = vsel %vm305, %v793, 0
        %803 = vmatprep.subr.bf16.mxu0 0
        %804 = vmatpush1.bf16.msra.mxu0 0
        %805 = vmatprep.subr.bf16.mxu0 0
        %806 = vmatpush1.bf16.msra.mxu0 0
        %807 = vmatprep.subr.bf16.mxu0 0
        %808 = vmatpush1.bf16.msra.mxu0 0
        %809 = vmatprep.subr.bf16.mxu0 0
        %810 = vmatpush1.bf16.msra.mxu0 0
        %811 = vmatprep.subr.bf16.mxu0 0
        %812 = vmatpush1.bf16.msra.mxu0 0
        %813 = vmatprep.subr.bf16.mxu0 0
        %814 = vmatpush1.bf16.msra.mxu0 0
        %815 = vmatprep.subr.bf16.mxu0 0
        %816 = vmatpush1.bf16.msra.mxu0 0
        %817 = vmatprep.subr.bf16.mxu0 0
        %818 = vmatpush1.bf16.msra.mxu0 %v798
        %819 = vmatprep.subr.bf16.mxu0 0
        %820 = vmatpush2.bf16.msra.mxu0 0
        %821 = vmatprep.subr.bf16.mxu0 0
        %822 = vmatpush2.bf16.msra.mxu0 0
        %823 = vmatprep.subr.bf16.mxu0 0
        %824 = vmatpush2.bf16.msra.mxu0 0
        %825 = vmatprep.subr.bf16.mxu0 0
        %826 = vmatpush2.bf16.msra.mxu0 0
        %827 = vmatprep.subr.bf16.mxu0 0
        %828 = vmatpush2.bf16.msra.mxu0 0
        %829 = vmatprep.subr.bf16.mxu0 0
        %830 = vmatpush2.bf16.msra.mxu0 0
        %831 = vmatprep.subr.bf16.mxu0 0
        %832 = vmatpush2.bf16.msra.mxu0 0
        %833 = vmatprep.subr.bf16.mxu0 0
        %834 = vmatpush2.bf16.msra.mxu0 0
        %835 = vmatprep.mubr.bf16.mxu0 0
        %836 = vmatmul.mubr.bf16.gmra.mxu0 %v801
        %v837 = vpop.f32.mrf.mxu0
        %v838 = vadd.f32 0.0, %v837
        %v839 = vpop.f32.mrf.mxu0
        %v840 = vpop.f32.mrf.mxu0
        %v841 = vadd.f32 0.0, %v840
        %v842 = vpop.f32.mrf.mxu0
        %843 = vdwg.mxu0
        %v844 = vadd.f32 %v781, %v838
        %v845 = vadd.f32 %v782, %v841
        %v846 = vld [vmem:[%s2] sm:$0x1]
        %v848 = vlaneseq
        %v849 = vshrl.u32 %v848, 7
        %v850 = vsub.s32 0, %v849
        %v851 = vrot.slane %v846, %v850
        %v853 = vadd.f32 %v844, %v851
        %v854 = vadd.f32 %v845, %v851
        %v855 = vmax.f32 %v853, 0.0
        %v856 = vmax.f32 %v854, 0.0
        %v857 = vpack.c.bf16 %v856, %v855
        %v859 = vunpack.c.l.b16 %v857
        %v860 = vunpack.c.h.b16 %v857
        %v861 = vpack.c.b16 %v859, %v859
        %v862 = vpack.c.b16 %v860, %v860
        %vm865 = vcmask 257024
        %866 = vst.msk [vmem:[%s282] sm:$0xf] %vm865, %v861
        %867 = vst.msk [vmem:[%s282 + $0x4] sm:$0xf] %vm865, %v862
        %p868 = scmp.lt.s32.totalorder %s14, 3
        %s869 = scalar_select %p868, %s14, 3
        %s870 = smul.addr %s869, 2
        %s871 = smul.addr %s870, 4
        %s872 = scalar_lea.vmem %s3, %s871
        // Predicated region
        $region74: #{a_call__.13} parent=68 // pred_check
          %p873 = pneg %p100
        $region75: #{a_call__.13} parent=68 // pred_check_branch
          %875 = sbr.rel (%p873) target = $region77
        $region76: #{a_call__.13} parent=68 // pred_region
          _
        $region77: #{a_call__.13} parent=68 // pred_fallthru
          _
      $region69: #{a_call__.13} parent=5 // pred_fallthru
        _
      %p876 = scmp.le.s32.totalorder 2, %s9
      // Predicated region
      $region78: #{a_call__.13} parent=5 // pred_check
        %p877 = pneg %p876
      $region79: #{a_call__.13} parent=5 // pred_check_branch
        %879 = sbr.rel (%p877) target = $region81
      $region80: #{a_call__.13} parent=5 // pred_region
        %s880 = ssub.s32 %s9, 2
        // Predicated region
        $region82: #{a_call__.13} parent=80 // pred_check
          %p881 = pneg %p106
        $region83: #{a_call__.13} parent=80 // pred_check_branch
          %883 = sbr.rel (%p881) target = $region85
        $region84: #{a_call__.13} parent=80 // pred_region
          %p884 = scmp.lt.s32.totalorder %s15, 3
          %s885 = scalar_select %p884, %s15, 3
          %s886 = smul.addr %s885, 2
          %s887 = smul.addr %s886, 4
          %s888 = scalar_lea.vmem %s3, %s887
        $region85: #{a_call__.13} parent=80 // pred_fallthru
          _
      $region81: #{a_call__.13} parent=5 // pred_fallthru
        _
    $region6: #{a_call__.13} parent=1 // loop_footer
      %s13 = sadd.s32 1, %s9
    $region7: #{a_call__.13} parent=1 // loop_footer_branch
      %8 = sbr.rel target = $region3
    $region8: #{a_call__.13} parent=1 // loop_exit
      _

// kernel: a_call__.14
$region0: #{a_call__.14}
  #allocation0 [shape = 'u32[]', space=smem, size = 0x4, offset = 0x4, fixed_abs, tag = 'smem constant byte address 0x4 - core index']
  #allocation1 [shape = 'u32[144,128]{1,0:T(1,128)}', space=vmem, size = 0x12000, scoped, tag = 'internal scratch']
  %s0 = inlined_call_operand.vmem [shape: bf16[4,42,32], index: 0, kind: input, shape index: {}]
  %s1 = inlined_call_operand.vmem [shape: bf16[9,32,64], index: 1, kind: input, shape index: {}]
  %s2 = inlined_call_operand.vmem [shape: f32[1,64], index: 2, kind: input, shape index: {}]
  %s3 = inlined_call_operand.vmem [shape: bf16[4,24,64], index: 3, kind: output, shape index: {}]
  %s4 = sld [smem:[#allocation0]]
  $region45: #{a_call__.14} parent=0
    _
  %s6 = ssub.s32 1, %s4
  %s7 = scalar_select 0, %s6, %s4
  loop: start=0, step=1, limit=6
  $region2: #{a_call__.14} parent=0 // loop_pre_header
    _
  $region3: #{a_call__.14} parent=0 // loop_header
    %s9 = sphi 0, %s13
    %p10 = scmp.ge.s32.totalorder %s9, 6
    %s19 = sphi 0, %s21
    %s22 = sphi 0, %s19
    %s23 = sphi 0, %s22
    %s39 = sphi 0, %s23
    %s43 = sphi 0, %s43
    %s45 = sphi 0, %s43
    %s46 = sphi 0, %s45
    %s60 = sphi 0, %s46
    %s64 = sphi 0, %s64
    %s66 = sphi 0, %s64
    %s67 = sphi 0, %s66
    %s81 = sphi 0, %s67
    %s87 = sphi 0, %s89
    %s90 = sphi 0, %s87
    %s91 = sphi 0, %s90
    %s107 = sphi 0, %s91
  $region4: #{a_call__.14} parent=0 // loop_header_branch
    %12 = sbr.rel (%p10) target = $region8
  $region5: #{a_call__.14} parent=0 // loop_body
    %s14 = ssub.s32 %s9, 1
    %s15 = ssub.s32 %s9, 2
    %s16 = sadd.s32 %s9, 1
    %s17 = ssub.s32 %s9, %s16
    %p18 = scmp.eq.s32.totalorder %s17, 0
    %s20 = sadd.s32 %s19, 1
    %s21 = scalar_select %p18, %s19, %s20
    %p24 = pneg %p18
    %p25 = scmp.eq.s32.totalorder %s9, 3
    %p26 = por %p24, %p25
    %p27 = scmp.ne.s32.totalorder %s19, %s22
    %p28 = scmp.eq.s32.totalorder %s9, 0
    %p29 = por %p27, %p28
    %p30 = scmp.ne.s32.totalorder %s19, %s22
    %p31 = scmp.eq.s32.totalorder %s14, 3
    %p32 = por %p30, %p31
    %p33 = scmp.ne.s32.totalorder %s22, %s23
    %p34 = scmp.eq.s32.totalorder %s14, 0
    %p35 = por %p33, %p34
    %p36 = scmp.ne.s32.totalorder %s22, %s23
    %p37 = scmp.eq.s32.totalorder %s15, 3
    %p38 = por %p36, %p37
    %p40 = scmp.ne.s32.totalorder %s23, %s39
    %p41 = scmp.eq.s32.totalorder %s15, 0
    %p42 = por %p40, %p41
    %s44 = sadd.s32 %s43, 1
    %p47 = scmp.eq.s32.totalorder %s9, 3
    %p48 = scmp.ne.s32.totalorder %s43, %s45
    %p49 = scmp.eq.s32.totalorder %s9, 0
    %p50 = por %p48, %p49
    %p51 = scmp.ne.s32.totalorder %s43, %s45
    %p52 = scmp.eq.s32.totalorder %s14, 3
    %p53 = por %p51, %p52
    %p54 = scmp.ne.s32.totalorder %s45, %s46
    %p55 = scmp.eq.s32.totalorder %s14, 0
    %p56 = por %p54, %p55
    %p57 = scmp.ne.s32.totalorder %s45, %s46
    %p58 = scmp.eq.s32.totalorder %s15, 3
    %p59 = por %p57, %p58
    %p61 = scmp.ne.s32.totalorder %s46, %s60
    %p62 = scmp.eq.s32.totalorder %s15, 0
    %p63 = por %p61, %p62
    %s65 = sadd.s32 %s64, 1
    %p68 = scmp.eq.s32.totalorder %s9, 3
    %p69 = scmp.ne.s32.totalorder %s64, %s66
    %p70 = scmp.eq.s32.totalorder %s9, 0
    %p71 = por %p69, %p70
    %p72 = scmp.ne.s32.totalorder %s64, %s66
    %p73 = scmp.eq.s32.totalorder %s14, 3
    %p74 = por %p72, %p73
    %p75 = scmp.ne.s32.totalorder %s66, %s67
    %p76 = scmp.eq.s32.totalorder %s14, 0
    %p77 = por %p75, %p76
    %p78 = scmp.ne.s32.totalorder %s66, %s67
    %p79 = scmp.eq.s32.totalorder %s15, 3
    %p80 = por %p78, %p79
    %p82 = scmp.ne.s32.totalorder %s67, %s81
    %p83 = scmp.eq.s32.totalorder %s15, 0
    %p84 = por %p82, %p83
    %s85 = ssub.s32 %s9, %s16
    %p86 = scmp.eq.s32.totalorder %s85, 0
    %s88 = sadd.s32 %s87, 1
    %s89 = scalar_select %p86, %s87, %s88
    %p92 = pneg %p86
    %p93 = scmp.eq.s32.totalorder %s9, 3
    %p94 = por %p92, %p93
    %p95 = scmp.ne.s32.totalorder %s87, %s90
    %p96 = scmp.eq.s32.totalorder %s9, 0
    %p97 = por %p95, %p96
    %p98 = scmp.ne.s32.totalorder %s87, %s90
    %p99 = scmp.eq.s32.totalorder %s14, 3
    %p100 = por %p98, %p99
    %p101 = scmp.ne.s32.totalorder %s90, %s91
    %p102 = scmp.eq.s32.totalorder %s14, 0
    %p103 = por %p101, %p102
    %p104 = scmp.ne.s32.totalorder %s90, %s91
    %p105 = scmp.eq.s32.totalorder %s15, 3
    %p106 = por %p104, %p105
    %p108 = scmp.ne.s32.totalorder %s91, %s107
    %p109 = scmp.eq.s32.totalorder %s15, 0
    %p110 = por %p108, %p109
    %p111 = scmp.le.s32.totalorder 1, %s9
    %p112 = scmp.lt.s32.totalorder %s9, 5
    %p113 = pnand %p111, %p112
    %p114 = pneg %p113
    // Predicated region
    $region9: #{a_call__.14} parent=5 // pred_check
      _
    $region10: #{a_call__.14} parent=5 // pred_check_branch
      %116 = sbr.rel (%p113) target = $region12
    $region11: #{a_call__.14} parent=5 // pred_region
      %s117 = ssub.s32 %s9, 1
      // Predicated region
      $region13: #{a_call__.14} parent=11 // pred_check
        %p118 = pneg %p56
      $region14: #{a_call__.14} parent=11 // pred_check_branch
        %120 = sbr.rel (%p118) target = $region16
      $region15: #{a_call__.14} parent=11 // pred_region
        _
      $region16: #{a_call__.14} parent=11 // pred_fallthru
        _
      // Predicated region
      $region17: #{a_call__.14} parent=11 // pred_check
        %p121 = pneg %p77
      $region18: #{a_call__.14} parent=11 // pred_check_branch
        %123 = sbr.rel (%p121) target = $region20
      $region19: #{a_call__.14} parent=11 // pred_region
        _
      $region20: #{a_call__.14} parent=11 // pred_fallthru
        _
    $region12: #{a_call__.14} parent=5 // pred_fallthru
      _
    %p124 = scmp.lt.s32.totalorder %s9, 4
    // Predicated region
    $region21: #{a_call__.14} parent=5 // pred_check
      %p125 = pneg %p124
    $region22: #{a_call__.14} parent=5 // pred_check_branch
      %127 = sbr.rel (%p125) target = $region24
    $region23: #{a_call__.14} parent=5 // pred_region
      // Predicated region
      $region25: #{a_call__.14} parent=23 // pred_check
        %p128 = pneg %p29
      $region26: #{a_call__.14} parent=23 // pred_check_branch
        %130 = sbr.rel (%p128) target = $region28
      $region27: #{a_call__.14} parent=23 // pred_region
        %p131 = scmp.lt.s32.totalorder %s9, 3
        %s132 = scalar_select %p131, %s9, 3
        %s133 = smul.addr %s132, 6
        %s134 = smul.addr %s133, 4
        %s135 = scalar_lea.vmem %s0, %s134
      $region28: #{a_call__.14} parent=23 // pred_fallthru
        _
    $region24: #{a_call__.14} parent=5 // pred_fallthru
      _
    %p136 = scmp.le.s32.totalorder 1, %s9
    %p137 = scmp.lt.s32.totalorder %s9, 5
    %p138 = pnand %p136, %p137
    %p139 = pneg %p138
    // Predicated region
    $region29: #{a_call__.14} parent=5 // pred_check
      _
    $region30: #{a_call__.14} parent=5 // pred_check_branch
      %141 = sbr.rel (%p138) target = $region32
    $region31: #{a_call__.14} parent=5 // pred_region
      %s142 = ssub.s32 %s9, 1
      %p143 = scmp.lt.s32.totalorder %s14, 3
      %s144 = scalar_select %p143, %s14, 3
      %s145 = smul.addr %s144, 6
      %s146 = smul.addr %s145, 4
      %s147 = scalar_lea.vmem %s0, %s146
      %p148 = pneg %p35
      %p149 = pneg %p32
      %p150 = pneg %p56
      %p151 = pneg %p53
      %p152 = pneg %p77
      %p153 = pneg %p74
      %p154 = pneg %p103
      %p155 = pneg %p100
      %p156 = scmp.lt.s32.totalorder %s14, 3
      %s157 = scalar_select %p156, %s14, 3
      %s158 = smul.addr %s157, 3
      %s159 = smul.addr %s158, 4
      %s160 = scalar_lea.vmem %s3, %s159
      %p161 = scmp.lt.s32.totalorder %s14, 3
      %s162 = scalar_select %p161, %s14, 3
      %s163 = smul.addr %s162, 6
      %s164 = smul.addr %s163, 4
      %s165 = scalar_lea.vmem %s0, %s164
      %p166 = scmp.lt.s32.totalorder %s14, 3
      %s167 = scalar_select %p166, %s14, 3
      %s168 = smul.addr %s167, 3
      %s169 = smul.addr %s168, 4
      %s170 = scalar_lea.vmem %s3, %s169
      %v172 = vld [vmem:[%s165] sm:$0xf]
      %v173 = vld [vmem:[%s165 + $0x4] sm:$0xf]
      %v174 = vld [vmem:[%s165 + $0x8] sm:$0xf]
      %v175 = vld [vmem:[%s1] sm:$0xf]
      %v176 = vld [vmem:[%s1 + $0x4] sm:$0xf]
      %v177 = vld [vmem:[%s1 + $0x8] sm:$0xf]
      %v178 = vld [vmem:[%s1 + $0xc] sm:$0xf]
      %v179 = vld [vmem:[%s165 + $0xc] sm:$0x1]
      %s180 = scalar_lea.vmem %s1, 16
      %v181 = vld [vmem:[%s180] sm:$0xf]
      %v182 = vld [vmem:[%s180 + $0x4] sm:$0xf]
      %v183 = vld [vmem:[%s180 + $0x8] sm:$0xf]
      %v184 = vld [vmem:[%s180 + $0xc] sm:$0xf]
      %v189 = vunpack.c.l.b16 %v172
      %v190 = vunpack.c.l.b16 %v173
      %v191 = vunpack.c.l.b16 %v174
      %v192 = vunpack.c.l.b16 %v179
      %v193 = vpack.c.b16 %v190, %v189
      %v194 = vpack.c.b16 %v192, %v191
      %vm195 = vsmask.f32 7424
      %v197 = vshrl.u32 %v193, 16
      %v199 = vshll.u32 %v193, 16
      %v201 = vrot.slane %v199, 1
      %v202 = vor.u32 %v197, %v201
      %v204 = vshll.u32 %v194, 16
      %v206 = vrot.slane %v204, 1
      %v207 = vsel %vm195, %v202, %v206
      %v208 = vshrl.u32 %v194, 16
      %v210 = vor.u32 %v208, %v206
      %v215 = vunpack.c.l.b16 %v181
      %v216 = vunpack.c.l.b16 %v182
      %v217 = vunpack.c.l.b16 %v183
      %v218 = vunpack.c.l.b16 %v184
      %v219 = vpack.c.b16 %v216, %v215
      %v220 = vpack.c.b16 %v218, %v217
      %vm223 = vcmask 261120
      %v225 = vsel %vm223, %v207, 0
      %v228 = vsel %vm223, %v210, 0
      %230 = vmatprep.subr.bf16.mxu0 0
      %231 = vmatpush1.bf16.msra.mxu0 0
      %232 = vmatprep.subr.bf16.mxu0 0
      %233 = vmatpush1.bf16.msra.mxu0 0
      %234 = vmatprep.subr.bf16.mxu0 0
      %235 = vmatpush1.bf16.msra.mxu0 0
      %236 = vmatprep.subr.bf16.mxu0 0
      %237 = vmatpush1.bf16.msra.mxu0 0
      %238 = vmatprep.subr.bf16.mxu0 0
      %239 = vmatpush1.bf16.msra.mxu0 0
      %240 = vmatprep.subr.bf16.mxu0 0
      %241 = vmatpush1.bf16.msra.mxu0 0
      %242 = vmatprep.subr.bf16.mxu0 0
      %243 = vmatpush1.bf16.msra.mxu0 %v220
      %244 = vmatprep.subr.bf16.mxu0 0
      %245 = vmatpush1.bf16.msra.mxu0 %v219
      %246 = vmatprep.subr.bf16.mxu0 0
      %247 = vmatpush2.bf16.msra.mxu0 0
      %248 = vmatprep.subr.bf16.mxu0 0
      %249 = vmatpush2.bf16.msra.mxu0 0
      %250 = vmatprep.subr.bf16.mxu0 0
      %251 = vmatpush2.bf16.msra.mxu0 0
      %252 = vmatprep.subr.bf16.mxu0 0
      %253 = vmatpush2.bf16.msra.mxu0 0
      %254 = vmatprep.subr.bf16.mxu0 0
      %255 = vmatpush2.bf16.msra.mxu0 0
      %256 = vmatprep.subr.bf16.mxu0 0
      %257 = vmatpush2.bf16.msra.mxu0 0
      %258 = vmatprep.subr.bf16.mxu0 0
      %259 = vmatpush2.bf16.msra.mxu0 0
      %260 = vmatprep.subr.bf16.mxu0 0
      %261 = vmatpush2.bf16.msra.mxu0 0
      %262 = vmatprep.mubr.bf16.mxu0 0
      %263 = vmatmul.mubr.bf16.gmra.mxu0 %v225
      %v264 = vpop.f32.mrf.mxu0
      %v265 = vadd.f32 0.0, %v264
      %v266 = vpop.f32.mrf.mxu0
      %v267 = vpop.f32.mrf.mxu0
      %v268 = vadd.f32 0.0, %v267
      %v269 = vpop.f32.mrf.mxu0
      %270 = vmatprep.mubr.bf16.mxu0 0
      %271 = vmatmul.mubr.bf16.gmra.mxu0 %v228
      %v272 = vpop.f32.mrf.mxu0
      %v273 = vadd.f32 0.0, %v272
      %v274 = vpop.f32.mrf.mxu0
      %v275 = vpop.f32.mrf.mxu0
      %v276 = vpop.f32.mrf.mxu0
      %277 = vdwg.mxu0
      %v278 = vpack.c.b16 %v191, %v191
      %v283 = vunpack.c.l.b16 %v175
      %v284 = vunpack.c.l.b16 %v176
      %v285 = vunpack.c.l.b16 %v177
      %v286 = vunpack.c.l.b16 %v178
      %v287 = vpack.c.b16 %v284, %v283
      %v288 = vpack.c.b16 %v286, %v285
      %v291 = vsel %vm223, %v193, 0
      %v294 = vsel %vm223, %v278, 0
      %296 = vmatprep.subr.bf16.mxu0 0
      %297 = vmatpush1.bf16.msra.mxu0 0
      %298 = vmatprep.subr.bf16.mxu0 0
      %299 = vmatpush1.bf16.msra.mxu0 0
      %300 = vmatprep.subr.bf16.mxu0 0
      %301 = vmatpush1.bf16.msra.mxu0 0
      %302 = vmatprep.subr.bf16.mxu0 0
      %303 = vmatpush1.bf16.msra.mxu0 0
      %304 = vmatprep.subr.bf16.mxu0 0
      %305 = vmatpush1.bf16.msra.mxu0 0
      %306 = vmatprep.subr.bf16.mxu0 0
      %307 = vmatpush1.bf16.msra.mxu0 0
      %308 = vmatprep.subr.bf16.mxu0 0
      %309 = vmatpush1.bf16.msra.mxu0 %v288
      %310 = vmatprep.subr.bf16.mxu0 0
      %311 = vmatpush1.bf16.msra.mxu0 %v287
      %312 = vmatprep.subr.bf16.mxu0 0
      %313 = vmatpush2.bf16.msra.mxu0 0
      %314 = vmatprep.subr.bf16.mxu0 0
      %315 = vmatpush2.bf16.msra.mxu0 0
      %316 = vmatprep.subr.bf16.mxu0 0
      %317 = vmatpush2.bf16.msra.mxu0 0
      %318 = vmatprep.subr.bf16.mxu0 0
      %319 = vmatpush2.bf16.msra.mxu0 0
      %320 = vmatprep.subr.bf16.mxu0 0
      %321 = vmatpush2.bf16.msra.mxu0 0
      %322 = vmatprep.subr.bf16.mxu0 0
      %323 = vmatpush2.bf16.msra.mxu0 0
      %324 = vmatprep.subr.bf16.mxu0 0
      %325 = vmatpush2.bf16.msra.mxu0 0
      %326 = vmatprep.subr.bf16.mxu0 0
      %327 = vmatpush2.bf16.msra.mxu0 0
      %328 = vmatprep.mubr.bf16.mxu0 0
      %329 = vmatmul.mubr.bf16.gmra.mxu0 %v291
      %v330 = vpop.f32.mrf.mxu0
      %v331 = vadd.f32 %v265, %v330
      %v332 = vpop.f32.mrf.mxu0
      %v333 = vpop.f32.mrf.mxu0
      %v334 = vadd.f32 %v268, %v333
      %v335 = vpop.f32.mrf.mxu0
      %336 = vmatprep.mubr.bf16.mxu0 0
      %337 = vmatmul.mubr.bf16.gmra.mxu0 %v294
      %v338 = vpop.f32.mrf.mxu0
      %v339 = vadd.f32 %v273, %v338
      %v340 = vpop.f32.mrf.mxu0
      %v341 = vpop.f32.mrf.mxu0
      %v342 = vpop.f32.mrf.mxu0
      %343 = vdwg.mxu0
      %v344 = vld [vmem:[%s165] sm:$0xe]
      %s345 = scalar_lea.vmem %s1, 32
      %v346 = vld [vmem:[%s345] sm:$0xf]
      %v347 = vld [vmem:[%s345 + $0x4] sm:$0xf]
      %v348 = vld [vmem:[%s345 + $0x8] sm:$0xf]
      %v349 = vld [vmem:[%s345 + $0xc] sm:$0xf]
      %v351 = vunpack.c.l.b16 %v344
      %v352 = vpack.c.b16 %v190, %v351
      %vm353 = vcmask 1046528
      %v354 = vrot.slane %v352, 1
      %v355 = vrot.slane %v194, 1
      %v356 = vsel %vm353, %v354, %v355
      %v361 = vunpack.c.l.b16 %v346
      %v362 = vunpack.c.l.b16 %v347
      %v363 = vunpack.c.l.b16 %v348
      %v364 = vunpack.c.l.b16 %v349
      %v365 = vpack.c.b16 %v362, %v361
      %v366 = vpack.c.b16 %v364, %v363
      %v370 = vsel %vm223, %v356, 0
      %v373 = vsel %vm223, %v355, 0
      %375 = vmatprep.subr.bf16.mxu0 0
      %376 = vmatpush1.bf16.msra.mxu0 0
      %377 = vmatprep.subr.bf16.mxu0 0
      %378 = vmatpush1.bf16.msra.mxu0 0
      %379 = vmatprep.subr.bf16.mxu0 0
      %380 = vmatpush1.bf16.msra.mxu0 0
      %381 = vmatprep.subr.bf16.mxu0 0
      %382 = vmatpush1.bf16.msra.mxu0 0
      %383 = vmatprep.subr.bf16.mxu0 0
      %384 = vmatpush1.bf16.msra.mxu0 0
      %385 = vmatprep.subr.bf16.mxu0 0
      %386 = vmatpush1.bf16.msra.mxu0 0
      %387 = vmatprep.subr.bf16.mxu0 0
      %388 = vmatpush1.bf16.msra.mxu0 %v366
      %389 = vmatprep.subr.bf16.mxu0 0
      %390 = vmatpush1.bf16.msra.mxu0 %v365
      %391 = vmatprep.subr.bf16.mxu0 0
      %392 = vmatpush2.bf16.msra.mxu0 0
      %393 = vmatprep.subr.bf16.mxu0 0
      %394 = vmatpush2.bf16.msra.mxu0 0
      %395 = vmatprep.subr.bf16.mxu0 0
      %396 = vmatpush2.bf16.msra.mxu0 0
      %397 = vmatprep.subr.bf16.mxu0 0
      %398 = vmatpush2.bf16.msra.mxu0 0
      %399 = vmatprep.subr.bf16.mxu0 0
      %400 = vmatpush2.bf16.msra.mxu0 0
      %401 = vmatprep.subr.bf16.mxu0 0
      %402 = vmatpush2.bf16.msra.mxu0 0
      %403 = vmatprep.subr.bf16.mxu0 0
      %404 = vmatpush2.bf16.msra.mxu0 0
      %405 = vmatprep.subr.bf16.mxu0 0
      %406 = vmatpush2.bf16.msra.mxu0 0
      %407 = vmatprep.mubr.bf16.mxu0 0
      %408 = vmatmul.mubr.bf16.gmra.mxu0 %v370
      %v409 = vpop.f32.mrf.mxu0
      %v410 = vadd.f32 0.0, %v409
      %v411 = vpop.f32.mrf.mxu0
      %v412 = vpop.f32.mrf.mxu0
      %v413 = vadd.f32 0.0, %v412
      %v414 = vpop.f32.mrf.mxu0
      %415 = vmatprep.mubr.bf16.mxu0 0
      %416 = vmatmul.mubr.bf16.gmra.mxu0 %v373
      %v417 = vpop.f32.mrf.mxu0
      %v418 = vadd.f32 0.0, %v417
      %v419 = vpop.f32.mrf.mxu0
      %v420 = vpop.f32.mrf.mxu0
      %v421 = vpop.f32.mrf.mxu0
      %422 = vdwg.mxu0
      %v423 = vadd.f32 %v331, %v410
      %v424 = vadd.f32 %v334, %v413
      %v425 = vadd.f32 %v339, %v418
      %v426 = vld [vmem:[%s165] sm:$0x8]
      %v427 = vld [vmem:[%s165 + $0xc] sm:$0x7]
      %s428 = scalar_lea.vmem %s1, 48
      %v429 = vld [vmem:[%s428] sm:$0xf]
      %v430 = vld [vmem:[%s428 + $0x4] sm:$0xf]
      %v431 = vld [vmem:[%s428 + $0x8] sm:$0xf]
      %v432 = vld [vmem:[%s428 + $0xc] sm:$0xf]
      %v435 = vunpack.c.l.b16 %v426
      %v436 = vunpack.c.l.b16 %v427
      %v437 = vpack.c.b16 %v190, %v435
      %v438 = vpack.c.b16 %v436, %v191
      %vm439 = vcmask 1044480
      %v440 = vrot.slane %v437, 3
      %v441 = vrot.slane %v438, 3
      %v442 = vsel %vm439, %v440, %v441
      %v447 = vunpack.c.l.b16 %v429
      %v448 = vunpack.c.l.b16 %v430
      %v449 = vunpack.c.l.b16 %v431
      %v450 = vunpack.c.l.b16 %v432
      %v451 = vpack.c.b16 %v448, %v447
      %v452 = vpack.c.b16 %v450, %v449
      %v456 = vsel %vm223, %v442, 0
      %v459 = vsel %vm223, %v441, 0
      %461 = vmatprep.subr.bf16.mxu0 0
      %462 = vmatpush1.bf16.msra.mxu0 0
      %463 = vmatprep.subr.bf16.mxu0 0
      %464 = vmatpush1.bf16.msra.mxu0 0
      %465 = vmatprep.subr.bf16.mxu0 0
      %466 = vmatpush1.bf16.msra.mxu0 0
      %467 = vmatprep.subr.bf16.mxu0 0
      %468 = vmatpush1.bf16.msra.mxu0 0
      %469 = vmatprep.subr.bf16.mxu0 0
      %470 = vmatpush1.bf16.msra.mxu0 0
      %471 = vmatprep.subr.bf16.mxu0 0
      %472 = vmatpush1.bf16.msra.mxu0 0
      %473 = vmatprep.subr.bf16.mxu0 0
      %474 = vmatpush1.bf16.msra.mxu0 %v452
      %475 = vmatprep.subr.bf16.mxu0 0
      %476 = vmatpush1.bf16.msra.mxu0 %v451
      %477 = vmatprep.subr.bf16.mxu0 0
      %478 = vmatpush2.bf16.msra.mxu0 0
      %479 = vmatprep.subr.bf16.mxu0 0
      %480 = vmatpush2.bf16.msra.mxu0 0
      %481 = vmatprep.subr.bf16.mxu0 0
      %482 = vmatpush2.bf16.msra.mxu0 0
      %483 = vmatprep.subr.bf16.mxu0 0
      %484 = vmatpush2.bf16.msra.mxu0 0
      %485 = vmatprep.subr.bf16.mxu0 0
      %486 = vmatpush2.bf16.msra.mxu0 0
      %487 = vmatprep.subr.bf16.mxu0 0
      %488 = vmatpush2.bf16.msra.mxu0 0
      %489 = vmatprep.subr.bf16.mxu0 0
      %490 = vmatpush2.bf16.msra.mxu0 0
      %491 = vmatprep.subr.bf16.mxu0 0
      %492 = vmatpush2.bf16.msra.mxu0 0
      %493 = vmatprep.mubr.bf16.mxu0 0
      %494 = vmatmul.mubr.bf16.gmra.mxu0 %v456
      %v495 = vpop.f32.mrf.mxu0
      %v496 = vadd.f32 0.0, %v495
      %v497 = vpop.f32.mrf.mxu0
      %v498 = vpop.f32.mrf.mxu0
      %v499 = vadd.f32 0.0, %v498
      %v500 = vpop.f32.mrf.mxu0
      %501 = vmatprep.mubr.bf16.mxu0 0
      %502 = vmatmul.mubr.bf16.gmra.mxu0 %v459
      %v503 = vpop.f32.mrf.mxu0
      %v504 = vadd.f32 0.0, %v503
      %v505 = vpop.f32.mrf.mxu0
      %v506 = vpop.f32.mrf.mxu0
      %v507 = vpop.f32.mrf.mxu0
      %508 = vdwg.mxu0
      %v509 = vadd.f32 %v423, %v496
      %v510 = vadd.f32 %v424, %v499
      %v511 = vadd.f32 %v425, %v504
      %v512 = vld [vmem:[%s165 + $0xc] sm:$0xf]
      %s513 = scalar_lea.vmem %s1, 64
      %v514 = vld [vmem:[%s513] sm:$0xf]
      %v515 = vld [vmem:[%s513 + $0x4] sm:$0xf]
      %v516 = vld [vmem:[%s513 + $0x8] sm:$0xf]
      %v517 = vld [vmem:[%s513 + $0xc] sm:$0xf]
      %v519 = vunpack.c.l.b16 %v512
      %v520 = vpack.c.b16 %v519, %v191
      %vm521 = vsmask.f32 4352
      %v523 = vshrl.u32 %v437, 16
      %v525 = vrot.slane %v523, 3
      %v526 = vshll.u32 %v437, 16
      %v528 = vrot.slane %v526, 4
      %v529 = vor.u32 %v525, %v528
      %v531 = vshrl.u32 %v520, 16
      %v533 = vrot.slane %v531, 3
      %v534 = vshll.u32 %v520, 16
      %v536 = vrot.slane %v534, 4
      %v537 = vor.u32 %v533, %v536
      %v538 = vsel %vm521, %v529, %v537
      %v543 = vunpack.c.l.b16 %v514
      %v544 = vunpack.c.l.b16 %v515
      %v545 = vunpack.c.l.b16 %v516
      %v546 = vunpack.c.l.b16 %v517
      %v547 = vpack.c.b16 %v544, %v543
      %v548 = vpack.c.b16 %v546, %v545
      %v552 = vsel %vm223, %v538, 0
      %v555 = vsel %vm223, %v537, 0
      %557 = vmatprep.subr.bf16.mxu0 0
      %558 = vmatpush1.bf16.msra.mxu0 0
      %559 = vmatprep.subr.bf16.mxu0 0
      %560 = vmatpush1.bf16.msra.mxu0 0
      %561 = vmatprep.subr.bf16.mxu0 0
      %562 = vmatpush1.bf16.msra.mxu0 0
      %563 = vmatprep.subr.bf16.mxu0 0
      %564 = vmatpush1.bf16.msra.mxu0 0
      %565 = vmatprep.subr.bf16.mxu0 0
      %566 = vmatpush1.bf16.msra.mxu0 0
      %567 = vmatprep.subr.bf16.mxu0 0
      %568 = vmatpush1.bf16.msra.mxu0 0
      %569 = vmatprep.subr.bf16.mxu0 0
      %570 = vmatpush1.bf16.msra.mxu0 %v548
      %571 = vmatprep.subr.bf16.mxu0 0
      %572 = vmatpush1.bf16.msra.mxu0 %v547
      %573 = vmatprep.subr.bf16.mxu0 0
      %574 = vmatpush2.bf16.msra.mxu0 0
      %575 = vmatprep.subr.bf16.mxu0 0
      %576 = vmatpush2.bf16.msra.mxu0 0
      %577 = vmatprep.subr.bf16.mxu0 0
      %578 = vmatpush2.bf16.msra.mxu0 0
      %579 = vmatprep.subr.bf16.mxu0 0
      %580 = vmatpush2.bf16.msra.mxu0 0
      %581 = vmatprep.subr.bf16.mxu0 0
      %582 = vmatpush2.bf16.msra.mxu0 0
      %583 = vmatprep.subr.bf16.mxu0 0
      %584 = vmatpush2.bf16.msra.mxu0 0
      %585 = vmatprep.subr.bf16.mxu0 0
      %586 = vmatpush2.bf16.msra.mxu0 0
      %587 = vmatprep.subr.bf16.mxu0 0
      %588 = vmatpush2.bf16.msra.mxu0 0
      %589 = vmatprep.mubr.bf16.mxu0 0
      %590 = vmatmul.mubr.bf16.gmra.mxu0 %v552
      %v591 = vpop.f32.mrf.mxu0
      %v592 = vadd.f32 0.0, %v591
      %v593 = vpop.f32.mrf.mxu0
      %v594 = vpop.f32.mrf.mxu0
      %v595 = vadd.f32 0.0, %v594
      %v596 = vpop.f32.mrf.mxu0
      %597 = vmatprep.mubr.bf16.mxu0 0
      %598 = vmatmul.mubr.bf16.gmra.mxu0 %v555
      %v599 = vpop.f32.mrf.mxu0
      %v600 = vadd.f32 0.0, %v599
      %v601 = vpop.f32.mrf.mxu0
      %v602 = vpop.f32.mrf.mxu0
      %v603 = vpop.f32.mrf.mxu0
      %604 = vdwg.mxu0
      %v605 = vadd.f32 %v509, %v592
      %v606 = vadd.f32 %v510, %v595
      %v607 = vadd.f32 %v511, %v600
      %s608 = scalar_lea.vmem %s1, 80
      %v609 = vld [vmem:[%s608] sm:$0xf]
      %v610 = vld [vmem:[%s608 + $0x4] sm:$0xf]
      %v611 = vld [vmem:[%s608 + $0x8] sm:$0xf]
      %v612 = vld [vmem:[%s608 + $0xc] sm:$0xf]
      %v613 = vpack.c.b16 %v191, %v190
      %v614 = vpack.c.b16 %v519, %v519
      %v619 = vunpack.c.l.b16 %v609
      %v620 = vunpack.c.l.b16 %v610
      %v621 = vunpack.c.l.b16 %v611
      %v622 = vunpack.c.l.b16 %v612
      %v623 = vpack.c.b16 %v620, %v619
      %v624 = vpack.c.b16 %v622, %v621
      %v628 = vsel %vm223, %v613, 0
      %v631 = vsel %vm223, %v614, 0
      %633 = vmatprep.subr.bf16.mxu0 0
      %634 = vmatpush1.bf16.msra.mxu0 0
      %635 = vmatprep.subr.bf16.mxu0 0
      %636 = vmatpush1.bf16.msra.mxu0 0
      %637 = vmatprep.subr.bf16.mxu0 0
      %638 = vmatpush1.bf16.msra.mxu0 0
      %639 = vmatprep.subr.bf16.mxu0 0
      %640 = vmatpush1.bf16.msra.mxu0 0
      %641 = vmatprep.subr.bf16.mxu0 0
      %642 = vmatpush1.bf16.msra.mxu0 0
      %643 = vmatprep.subr.bf16.mxu0 0
      %644 = vmatpush1.bf16.msra.mxu0 0
      %645 = vmatprep.subr.bf16.mxu0 0
      %646 = vmatpush1.bf16.msra.mxu0 %v624
      %647 = vmatprep.subr.bf16.mxu0 0
      %648 = vmatpush1.bf16.msra.mxu0 %v623
      %649 = vmatprep.subr.bf16.mxu0 0
      %650 = vmatpush2.bf16.msra.mxu0 0
      %651 = vmatprep.subr.bf16.mxu0 0
      %652 = vmatpush2.bf16.msra.mxu0 0
      %653 = vmatprep.subr.bf16.mxu0 0
      %654 = vmatpush2.bf16.msra.mxu0 0
      %655 = vmatprep.subr.bf16.mxu0 0
      %656 = vmatpush2.bf16.msra.mxu0 0
      %657 = vmatprep.subr.bf16.mxu0 0
      %658 = vmatpush2.bf16.msra.mxu0 0
      %659 = vmatprep.subr.bf16.mxu0 0
      %660 = vmatpush2.bf16.msra.mxu0 0
      %661 = vmatprep.subr.bf16.mxu0 0
      %662 = vmatpush2.bf16.msra.mxu0 0
      %663 = vmatprep.subr.bf16.mxu0 0
      %664 = vmatpush2.bf16.msra.mxu0 0
      %665 = vmatprep.mubr.bf16.mxu0 0
      %666 = vmatmul.mubr.bf16.gmra.mxu0 %v628
      %v667 = vpop.f32.mrf.mxu0
      %v668 = vadd.f32 0.0, %v667
      %v669 = vpop.f32.mrf.mxu0
      %v670 = vpop.f32.mrf.mxu0
      %v671 = vadd.f32 0.0, %v670
      %v672 = vpop.f32.mrf.mxu0
      %673 = vmatprep.mubr.bf16.mxu0 0
      %674 = vmatmul.mubr.bf16.gmra.mxu0 %v631
      %v675 = vpop.f32.mrf.mxu0
      %v676 = vadd.f32 0.0, %v675
      %v677 = vpop.f32.mrf.mxu0
      %v678 = vpop.f32.mrf.mxu0
      %v679 = vpop.f32.mrf.mxu0
      %680 = vdwg.mxu0
      %v681 = vadd.f32 %v605, %v668
      %v682 = vadd.f32 %v606, %v671
      %v683 = vadd.f32 %v607, %v676
      %v684 = vld [vmem:[%s165 + $0x4] sm:$0xc]
      %v685 = vld [vmem:[%s165 + $0x8] sm:$0xf]
      %v686 = vld [vmem:[%s165 + $0xc] sm:$0xf]
      %v687 = vld [vmem:[%s165 + $0x10] sm:$0x3]
      %s688 = scalar_lea.vmem %s1, 96
      %v689 = vld [vmem:[%s688] sm:$0xf]
      %v690 = vld [vmem:[%s688 + $0x4] sm:$0xf]
      %v691 = vld [vmem:[%s688 + $0x8] sm:$0xf]
      %v692 = vld [vmem:[%s688 + $0xc] sm:$0xf]
      %v697 = vunpack.c.l.b16 %v684
      %v698 = vunpack.c.l.b16 %v685
      %v699 = vunpack.c.l.b16 %v686
      %v700 = vunpack.c.l.b16 %v687
      %v701 = vpack.c.b16 %v698, %v697
      %v702 = vpack.c.b16 %v700, %v699
      %vm703 = vcmask 1045504
      %v704 = vrot.slane %v701, 2
      %v705 = vrot.slane %v702, 2
      %v706 = vsel %vm703, %v704, %v705
      %v711 = vunpack.c.l.b16 %v689
      %v712 = vunpack.c.l.b16 %v690
      %v713 = vunpack.c.l.b16 %v691
      %v714 = vunpack.c.l.b16 %v692
      %v715 = vpack.c.b16 %v712, %v711
      %v716 = vpack.c.b16 %v714, %v713
      %v720 = vsel %vm223, %v706, 0
      %v723 = vsel %vm223, %v705, 0
      %725 = vmatprep.subr.bf16.mxu0 0
      %726 = vmatpush1.bf16.msra.mxu0 0
      %727 = vmatprep.subr.bf16.mxu0 0
      %728 = vmatpush1.bf16.msra.mxu0 0
      %729 = vmatprep.subr.bf16.mxu0 0
      %730 = vmatpush1.bf16.msra.mxu0 0
      %731 = vmatprep.subr.bf16.mxu0 0
      %732 = vmatpush1.bf16.msra.mxu0 0
      %733 = vmatprep.subr.bf16.mxu0 0
      %734 = vmatpush1.bf16.msra.mxu0 0
      %735 = vmatprep.subr.bf16.mxu0 0
      %736 = vmatpush1.bf16.msra.mxu0 0
      %737 = vmatprep.subr.bf16.mxu0 0
      %738 = vmatpush1.bf16.msra.mxu0 %v716
      %739 = vmatprep.subr.bf16.mxu0 0
      %740 = vmatpush1.bf16.msra.mxu0 %v715
      %741 = vmatprep.subr.bf16.mxu0 0
      %742 = vmatpush2.bf16.msra.mxu0 0
      %743 = vmatprep.subr.bf16.mxu0 0
      %744 = vmatpush2.bf16.msra.mxu0 0
      %745 = vmatprep.subr.bf16.mxu0 0
      %746 = vmatpush2.bf16.msra.mxu0 0
      %747 = vmatprep.subr.bf16.mxu0 0
      %748 = vmatpush2.bf16.msra.mxu0 0
      %749 = vmatprep.subr.bf16.mxu0 0
      %750 = vmatpush2.bf16.msra.mxu0 0
      %751 = vmatprep.subr.bf16.mxu0 0
      %752 = vmatpush2.bf16.msra.mxu0 0
      %753 = vmatprep.subr.bf16.mxu0 0
      %754 = vmatpush2.bf16.msra.mxu0 0
      %755 = vmatprep.subr.bf16.mxu0 0
      %756 = vmatpush2.bf16.msra.mxu0 0
      %757 = vmatprep.mubr.bf16.mxu0 0
      %758 = vmatmul.mubr.bf16.gmra.mxu0 %v720
      %v759 = vpop.f32.mrf.mxu0
      %v760 = vadd.f32 0.0, %v759
      %v761 = vpop.f32.mrf.mxu0
      %v762 = vpop.f32.mrf.mxu0
      %v763 = vadd.f32 0.0, %v762
      %v764 = vpop.f32.mrf.mxu0
      %765 = vmatprep.mubr.bf16.mxu0 0
      %766 = vmatmul.mubr.bf16.gmra.mxu0 %v723
      %v767 = vpop.f32.mrf.mxu0
      %v768 = vadd.f32 0.0, %v767
      %v769 = vpop.f32.mrf.mxu0
      %v770 = vpop.f32.mrf.mxu0
      %v771 = vpop.f32.mrf.mxu0
      %772 = vdwg.mxu0
      %v773 = vadd.f32 %v681, %v760
      %v774 = vadd.f32 %v682, %v763
      %v775 = vadd.f32 %v683, %v768
      %v776 = vld [vmem:[%s165 + $0x10] sm:$0x7]
      %s777 = scalar_lea.vmem %s1, 112
      %v778 = vld [vmem:[%s777] sm:$0xf]
      %v779 = vld [vmem:[%s777 + $0x4] sm:$0xf]
      %v780 = vld [vmem:[%s777 + $0x8] sm:$0xf]
      %v781 = vld [vmem:[%s777 + $0xc] sm:$0xf]
      %v783 = vunpack.c.l.b16 %v776
      %v784 = vpack.c.b16 %v783, %v699
      %vm785 = vsmask.f32 5376
      %v787 = vshrl.u32 %v701, 16
      %v789 = vrot.slane %v787, 2
      %v790 = vshll.u32 %v701, 16
      %v792 = vrot.slane %v790, 3
      %v793 = vor.u32 %v789, %v792
      %v795 = vshrl.u32 %v784, 16
      %v797 = vrot.slane %v795, 2
      %v798 = vshll.u32 %v784, 16
      %v800 = vrot.slane %v798, 3
      %v801 = vor.u32 %v797, %v800
      %v802 = vsel %vm785, %v793, %v801
      %v807 = vunpack.c.l.b16 %v778
      %v808 = vunpack.c.l.b16 %v779
      %v809 = vunpack.c.l.b16 %v780
      %v810 = vunpack.c.l.b16 %v781
      %v811 = vpack.c.b16 %v808, %v807
      %v812 = vpack.c.b16 %v810, %v809
      %v816 = vsel %vm223, %v802, 0
      %v819 = vsel %vm223, %v801, 0
      %821 = vmatprep.subr.bf16.mxu0 0
      %822 = vmatpush1.bf16.msra.mxu0 0
      %823 = vmatprep.subr.bf16.mxu0 0
      %824 = vmatpush1.bf16.msra.mxu0 0
      %825 = vmatprep.subr.bf16.mxu0 0
      %826 = vmatpush1.bf16.msra.mxu0 0
      %827 = vmatprep.subr.bf16.mxu0 0
      %828 = vmatpush1.bf16.msra.mxu0 0
      %829 = vmatprep.subr.bf16.mxu0 0
      %830 = vmatpush1.bf16.msra.mxu0 0
      %831 = vmatprep.subr.bf16.mxu0 0
      %832 = vmatpush1.bf16.msra.mxu0 0
      %833 = vmatprep.subr.bf16.mxu0 0
      %834 = vmatpush1.bf16.msra.mxu0 %v812
      %835 = vmatprep.subr.bf16.mxu0 0
      %836 = vmatpush1.bf16.msra.mxu0 %v811
      %837 = vmatprep.subr.bf16.mxu0 0
      %838 = vmatpush2.bf16.msra.mxu0 0
      %839 = vmatprep.subr.bf16.mxu0 0
      %840 = vmatpush2.bf16.msra.mxu0 0
      %841 = vmatprep.subr.bf16.mxu0 0
      %842 = vmatpush2.bf16.msra.mxu0 0
      %843 = vmatprep.subr.bf16.mxu0 0
      %844 = vmatpush2.bf16.msra.mxu0 0
      %845 = vmatprep.subr.bf16.mxu0 0
      %846 = vmatpush2.bf16.msra.mxu0 0
      %847 = vmatprep.subr.bf16.mxu0 0
      %848 = vmatpush2.bf16.msra.mxu0 0
      %849 = vmatprep.subr.bf16.mxu0 0
      %850 = vmatpush2.bf16.msra.mxu0 0
      %851 = vmatprep.subr.bf16.mxu0 0
      %852 = vmatpush2.bf16.msra.mxu0 0
      %853 = vmatprep.mubr.bf16.mxu0 0
      %854 = vmatmul.mubr.bf16.gmra.mxu0 %v816
      %v855 = vpop.f32.mrf.mxu0
      %v856 = vadd.f32 0.0, %v855
      %v857 = vpop.f32.mrf.mxu0
      %v858 = vpop.f32.mrf.mxu0
      %v859 = vadd.f32 0.0, %v858
      %v860 = vpop.f32.mrf.mxu0
      %861 = vmatprep.mubr.bf16.mxu0 0
      %862 = vmatmul.mubr.bf16.gmra.mxu0 %v819
      %v863 = vpop.f32.mrf.mxu0
      %v864 = vadd.f32 0.0, %v863
      %v865 = vpop.f32.mrf.mxu0
      %v866 = vpop.f32.mrf.mxu0
      %v867 = vpop.f32.mrf.mxu0
      %868 = vdwg.mxu0
      %v869 = vadd.f32 %v773, %v856
      %v870 = vadd.f32 %v774, %v859
      %v871 = vadd.f32 %v775, %v864
      %v872 = vld [vmem:[%s165 + $0x4] sm:$0x8]
      %s873 = scalar_lea.vmem %s1, 128
      %v874 = vld [vmem:[%s873] sm:$0xf]
      %v875 = vld [vmem:[%s873 + $0x4] sm:$0xf]
      %v876 = vld [vmem:[%s873 + $0x8] sm:$0xf]
      %v877 = vld [vmem:[%s873 + $0xc] sm:$0xf]
      %v879 = vunpack.c.l.b16 %v872
      %v880 = vpack.c.b16 %v698, %v879
      %v881 = vrot.slane %v880, 3
      %v882 = vrot.slane %v784, 3
      %v883 = vsel %vm439, %v881, %v882
      %v888 = vunpack.c.l.b16 %v874
      %v889 = vunpack.c.l.b16 %v875
      %v890 = vunpack.c.l.b16 %v876
      %v891 = vunpack.c.l.b16 %v877
      %v892 = vpack.c.b16 %v889, %v888
      %v893 = vpack.c.b16 %v891, %v890
      %v897 = vsel %vm223, %v883, 0
      %v900 = vsel %vm223, %v882, 0
      %902 = vmatprep.subr.bf16.mxu0 0
      %903 = vmatpush1.bf16.msra.mxu0 0
      %904 = vmatprep.subr.bf16.mxu0 0
      %905 = vmatpush1.bf16.msra.mxu0 0
      %906 = vmatprep.subr.bf16.mxu0 0
      %907 = vmatpush1.bf16.msra.mxu0 0
      %908 = vmatprep.subr.bf16.mxu0 0
      %909 = vmatpush1.bf16.msra.mxu0 0
      %910 = vmatprep.subr.bf16.mxu0 0
      %911 = vmatpush1.bf16.msra.mxu0 0
      %912 = vmatprep.subr.bf16.mxu0 0
      %913 = vmatpush1.bf16.msra.mxu0 0
      %914 = vmatprep.subr.bf16.mxu0 0
      %915 = vmatpush1.bf16.msra.mxu0 %v893
      %916 = vmatprep.subr.bf16.mxu0 0
      %917 = vmatpush1.bf16.msra.mxu0 %v892
      %918 = vmatprep.subr.bf16.mxu0 0
      %919 = vmatpush2.bf16.msra.mxu0 0
      %920 = vmatprep.subr.bf16.mxu0 0
      %921 = vmatpush2.bf16.msra.mxu0 0
      %922 = vmatprep.subr.bf16.mxu0 0
      %923 = vmatpush2.bf16.msra.mxu0 0
      %924 = vmatprep.subr.bf16.mxu0 0
      %925 = vmatpush2.bf16.msra.mxu0 0
      %926 = vmatprep.subr.bf16.mxu0 0
      %927 = vmatpush2.bf16.msra.mxu0 0
      %928 = vmatprep.subr.bf16.mxu0 0
      %929 = vmatpush2.bf16.msra.mxu0 0
      %930 = vmatprep.subr.bf16.mxu0 0
      %931 = vmatpush2.bf16.msra.mxu0 0
      %932 = vmatprep.subr.bf16.mxu0 0
      %933 = vmatpush2.bf16.msra.mxu0 0
      %934 = vmatprep.mubr.bf16.mxu0 0
      %935 = vmatmul.mubr.bf16.gmra.mxu0 %v897
      %v936 = vpop.f32.mrf.mxu0
      %v937 = vadd.f32 0.0, %v936
      %v938 = vpop.f32.mrf.mxu0
      %v939 = vpop.f32.mrf.mxu0
      %v940 = vadd.f32 0.0, %v939
      %v941 = vpop.f32.mrf.mxu0
      %942 = vmatprep.mubr.bf16.mxu0 0
      %943 = vmatmul.mubr.bf16.gmra.mxu0 %v900
      %v944 = vpop.f32.mrf.mxu0
      %v945 = vadd.f32 0.0, %v944
      %v946 = vpop.f32.mrf.mxu0
      %v947 = vpop.f32.mrf.mxu0
      %v948 = vpop.f32.mrf.mxu0
      %949 = vdwg.mxu0
      %v950 = vadd.f32 %v869, %v937
      %v951 = vadd.f32 %v870, %v940
      %v952 = vadd.f32 %v871, %v945
      %v953 = vld [vmem:[%s2] sm:$0x1]
      %v955 = vlaneseq
      %v956 = vshrl.u32 %v955, 7
      %v957 = vsub.s32 0, %v956
      %v958 = vrot.slane %v953, %v957
      %v960 = vadd.f32 %v950, %v958
      %v961 = vadd.f32 %v951, %v958
      %v962 = vadd.f32 %v952, %v958
      %v963 = vmax.f32 %v960, 0.0
      %v964 = vmax.f32 %v961, 0.0
      %v965 = vmax.f32 %v962, 0.0
      %v966 = vpack.c.bf16 %v964, %v963
      %v967 = vpack.c.bf16 %v965, %v965
      %v970 = vunpack.c.l.b16 %v966
      %v971 = vunpack.c.h.b16 %v966
      %v972 = vunpack.c.l.b16 %v967
      %v973 = vpack.c.b16 %v970, %v970
      %v974 = vpack.c.b16 %v971, %v971
      %v975 = vpack.c.b16 %v972, %v972
      %vm979 = vcmask 519168
      %980 = vst.msk [vmem:[%s170] sm:$0xf] %vm979, %v973
      %981 = vst.msk [vmem:[%s170 + $0x4] sm:$0xf] %vm979, %v974
      %982 = vst.msk [vmem:[%s170 + $0x8] sm:$0xf] %vm979, %v975
      %p983 = scmp.lt.s32.totalorder %s14, 3
      %s984 = scalar_select %p983, %s14, 3
      %s985 = smul.addr %s984, 3
      %s986 = smul.addr %s985, 4
      %s987 = scalar_lea.vmem %s3, %s986
      // Predicated region
      $region33: #{a_call__.14} parent=31 // pred_check
        %p988 = pneg %p100
      $region34: #{a_call__.14} parent=31 // pred_check_branch
        %990 = sbr.rel (%p988) target = $region36
      $region35: #{a_call__.14} parent=31 // pred_region
        _
      $region36: #{a_call__.14} parent=31 // pred_fallthru
        _
    $region32: #{a_call__.14} parent=5 // pred_fallthru
      _
    %p991 = scmp.le.s32.totalorder 2, %s9
    // Predicated region
    $region37: #{a_call__.14} parent=5 // pred_check
      %p992 = pneg %p991
    $region38: #{a_call__.14} parent=5 // pred_check_branch
      %994 = sbr.rel (%p992) target = $region40
    $region39: #{a_call__.14} parent=5 // pred_region
      %s995 = ssub.s32 %s9, 2
      // Predicated region
      $region41: #{a_call__.14} parent=39 // pred_check
        %p996 = pneg %p106
      $region42: #{a_call__.14} parent=39 // pred_check_branch
        %998 = sbr.rel (%p996) target = $region44
      $region43: #{a_call__.14} parent=39 // pred_region
        %p999 = scmp.lt.s32.totalorder %s15, 3
        %s1000 = scalar_select %p999, %s15, 3
        %s1001 = smul.addr %s1000, 3
        %s1002 = smul.addr %s1001, 4
        %s1003 = scalar_lea.vmem %s3, %s1002
      $region44: #{a_call__.14} parent=39 // pred_fallthru
        _
    $region40: #{a_call__.14} parent=5 // pred_fallthru
      _
  $region6: #{a_call__.14} parent=0 // loop_footer
    %s13 = sadd.s32 1, %s9
  $region7: #{a_call__.14} parent=0 // loop_footer_branch
    %8 = sbr.rel target = $region3
  $region8: #{a_call__.14} parent=0 // loop_exit
    _

// kernel: a_call__.20
$region0: #{a_call__.20}
  #allocation0 [shape = 'u32[]', space=smem, size = 0x4, offset = 0x4, fixed_abs, tag = 'smem constant byte address 0x4 - core index']
  #allocation1 [shape = 'u32[144,128]{1,0:T(1,128)}', space=vmem, size = 0x12000, scoped, tag = 'internal scratch']
  %s0 = inlined_call_operand.vmem [shape: bf16[2,16,64], index: 0, kind: input, shape index: {}]
  %s1 = inlined_call_operand.vmem [shape: bf16[2,16,64], index: 1, kind: input, shape index: {}]
  %s2 = inlined_call_operand.vmem [shape: f32[2,16,1], index: 2, kind: input, shape index: {}]
  %s3 = inlined_call_operand.vmem [shape: f32[2], index: 3, kind: output, shape index: {}]
  %s4 = sld [smem:[#allocation0]]
  $region49: #{a_call__.20} parent=0
    _
  %s6 = ssub.s32 1, %s4
  %s7 = scalar_select 0, %s6, %s4
  $region1: #{a_call__.20} parent=0
    #allocation2 [shape = 'u8[512]{0}', space=smem, size = 0x200, scoped, tag = 'output window, operand 0, single buffered']
    #allocation3 [shape = 's32[2]{0}', space=sflag, size = 0x8, scoped, tag = 'scoped memory for a_call__.20']
    %8 = vsyncpa [#allocation3], 0
    loop: start=0, step=1, limit=4
    $region2: #{a_call__.20} parent=1 // loop_pre_header
      _
    $region3: #{a_call__.20} parent=1 // loop_header
      %s10 = sphi 0, %s14
      %p11 = scmp.ge.s32.totalorder %s10, 4
      %s17 = sphi 0, %s29
      %s18 = sphi 0, %s25
      %s19 = sphi 0, %s17
      %s20 = sphi 0, %s18
      %s21 = sphi 0, %s19
      %s22 = sphi 0, %s20
      %s34 = sphi 0, %s36
      %s37 = sphi 0, %s34
      %s38 = sphi 0, %s37
      %s54 = sphi 0, %s38
      %s62 = sphi 0, %s64
      %s65 = sphi 0, %s62
      %s66 = sphi 0, %s65
      %s82 = sphi 0, %s66
      %s90 = sphi 0, %s92
      %s93 = sphi 0, %s90
      %s94 = sphi 0, %s93
      %s110 = sphi 0, %s94
      %s114 = sphi 0, %s114
      %s116 = sphi 0, %s114
      %s117 = sphi 0, %s116
      %s131 = sphi 0, %s117
    $region4: #{a_call__.20} parent=1 // loop_header_branch
      %13 = sbr.rel (%p11) target = $region8
    $region5: #{a_call__.20} parent=1 // loop_body
      %s15 = ssub.s32 %s10, 1
      %s16 = ssub.s32 %s10, 2
      %s23 = sadd.s32 1, %s18
      %p24 = scmp.ge.s32.totalorder %s23, 1
      %s25 = scalar_select %p24, 0, %s23
      %s26 = sadd.s32 1, %s17
      %s27 = scalar_select %p24, %s26, %s17
      %p28 = scmp.ge.s32.totalorder %s27, 2
      %s29 = scalar_select %p28, 0, %s27
      %s30 = ssub.s32 %s17, %s29
      %s31 = ssub.s32 %s18, %s25
      %s32 = sor.u32 %s30, %s31
      %p33 = scmp.eq.s32.totalorder %s32, 0
      %s35 = sadd.s32 %s34, 1
      %s36 = scalar_select %p33, %s34, %s35
      %p39 = pneg %p33
      %p40 = scmp.eq.s32.totalorder %s10, 1
      %p41 = por %p39, %p40
      %p42 = scmp.ne.s32.totalorder %s34, %s37
      %p43 = scmp.eq.s32.totalorder %s10, 0
      %p44 = por %p42, %p43
      %p45 = scmp.ne.s32.totalorder %s34, %s37
      %p46 = scmp.eq.s32.totalorder %s15, 1
      %p47 = por %p45, %p46
      %p48 = scmp.ne.s32.totalorder %s37, %s38
      %p49 = scmp.eq.s32.totalorder %s15, 0
      %p50 = por %p48, %p49
      %p51 = scmp.ne.s32.totalorder %s37, %s38
      %p52 = scmp.eq.s32.totalorder %s16, 1
      %p53 = por %p51, %p52
      %p55 = scmp.ne.s32.totalorder %s38, %s54
      %p56 = scmp.eq.s32.totalorder %s16, 0
      %p57 = por %p55, %p56
      %s58 = ssub.s32 %s17, %s29
      %s59 = ssub.s32 %s18, %s25
      %s60 = sor.u32 %s58, %s59
      %p61 = scmp.eq.s32.totalorder %s60, 0
      %s63 = sadd.s32 %s62, 1
      %s64 = scalar_select %p61, %s62, %s63
      %p67 = pneg %p61
      %p68 = scmp.eq.s32.totalorder %s10, 1
      %p69 = por %p67, %p68
      %p70 = scmp.ne.s32.totalorder %s62, %s65
      %p71 = scmp.eq.s32.totalorder %s10, 0
      %p72 = por %p70, %p71
      %p73 = scmp.ne.s32.totalorder %s62, %s65
      %p74 = scmp.eq.s32.totalorder %s15, 1
      %p75 = por %p73, %p74
      %p76 = scmp.ne.s32.totalorder %s65, %s66
      %p77 = scmp.eq.s32.totalorder %s15, 0
      %p78 = por %p76, %p77
      %p79 = scmp.ne.s32.totalorder %s65, %s66
      %p80 = scmp.eq.s32.totalorder %s16, 1
      %p81 = por %p79, %p80
      %p83 = scmp.ne.s32.totalorder %s66, %s82
      %p84 = scmp.eq.s32.totalorder %s16, 0
      %p85 = por %p83, %p84
      %s86 = ssub.s32 %s17, %s29
      %s87 = ssub.s32 %s18, %s25
      %s88 = sor.u32 %s86, %s87
      %p89 = scmp.eq.s32.totalorder %s88, 0
      %s91 = sadd.s32 %s90, 1
      %s92 = scalar_select %p89, %s90, %s91
      %p95 = pneg %p89
      %p96 = scmp.eq.s32.totalorder %s10, 1
      %p97 = por %p95, %p96
      %p98 = scmp.ne.s32.totalorder %s90, %s93
      %p99 = scmp.eq.s32.totalorder %s10, 0
      %p100 = por %p98, %p99
      %p101 = scmp.ne.s32.totalorder %s90, %s93
      %p102 = scmp.eq.s32.totalorder %s15, 1
      %p103 = por %p101, %p102
      %p104 = scmp.ne.s32.totalorder %s93, %s94
      %p105 = scmp.eq.s32.totalorder %s15, 0
      %p106 = por %p104, %p105
      %p107 = scmp.ne.s32.totalorder %s93, %s94
      %p108 = scmp.eq.s32.totalorder %s16, 1
      %p109 = por %p107, %p108
      %p111 = scmp.ne.s32.totalorder %s94, %s110
      %p112 = scmp.eq.s32.totalorder %s16, 0
      %p113 = por %p111, %p112
      %s115 = sadd.s32 %s114, 1
      %p118 = scmp.eq.s32.totalorder %s10, 1
      %p119 = scmp.ne.s32.totalorder %s114, %s116
      %p120 = scmp.eq.s32.totalorder %s10, 0
      %p121 = por %p119, %p120
      %p122 = scmp.ne.s32.totalorder %s114, %s116
      %p123 = scmp.eq.s32.totalorder %s15, 1
      %p124 = por %p122, %p123
      %p125 = scmp.ne.s32.totalorder %s116, %s117
      %p126 = scmp.eq.s32.totalorder %s15, 0
      %p127 = por %p125, %p126
      %p128 = scmp.ne.s32.totalorder %s116, %s117
      %p129 = scmp.eq.s32.totalorder %s16, 1
      %p130 = por %p128, %p129
      %p132 = scmp.ne.s32.totalorder %s117, %s131
      %p133 = scmp.eq.s32.totalorder %s16, 0
      %p134 = por %p132, %p133
      %p135 = scmp.le.s32.totalorder 1, %s10
      %p136 = scmp.lt.s32.totalorder %s10, 3
      %p137 = pnand %p135, %p136
      %p138 = pneg %p137
      // Predicated region
      $region9: #{a_call__.20} parent=5 // pred_check
        _
      $region10: #{a_call__.20} parent=5 // pred_check_branch
        %140 = sbr.rel (%p137) target = $region12
      $region11: #{a_call__.20} parent=5 // pred_region
        %s141 = ssub.s32 %s10, 1
      $region12: #{a_call__.20} parent=5 // pred_fallthru
        _
      %p142 = scmp.lt.s32.totalorder %s10, 2
      // Predicated region
      $region13: #{a_call__.20} parent=5 // pred_check
        %p143 = pneg %p142
      $region14: #{a_call__.20} parent=5 // pred_check_branch
        %145 = sbr.rel (%p143) target = $region16
      $region15: #{a_call__.20} parent=5 // pred_region
        // Predicated region
        $region17: #{a_call__.20} parent=15 // pred_check
          %p146 = pneg %p44
        $region18: #{a_call__.20} parent=15 // pred_check_branch
          %148 = sbr.rel (%p146) target = $region20
        $region19: #{a_call__.20} parent=15 // pred_region
          %s149 = smul.u32 2, %s18
          %p150 = scmp.lt.s32.totalorder %s17, 1
          %s151 = scalar_select %p150, %s17, 1
          %p152 = scmp.lt.s32.totalorder %s149, 1
          %s153 = scalar_select %p152, %s149, 1
          %s154 = smul.addr %s151, 2
          %s155 = sadd.s32 %s153, %s154
          %s156 = smul.addr %s155, 4
          %s157 = scalar_lea.vmem %s0, %s156
          %s158 = smul.u32 2, %s18
        $region20: #{a_call__.20} parent=15 // pred_fallthru
          _
        // Predicated region
        $region21: #{a_call__.20} parent=15 // pred_check
          %p159 = pneg %p72
        $region22: #{a_call__.20} parent=15 // pred_check_branch
          %161 = sbr.rel (%p159) target = $region24
        $region23: #{a_call__.20} parent=15 // pred_region
          %s162 = smul.u32 2, %s18
          %p163 = scmp.lt.s32.totalorder %s17, 1
          %s164 = scalar_select %p163, %s17, 1
          %p165 = scmp.lt.s32.totalorder %s162, 1
          %s166 = scalar_select %p165, %s162, 1
          %s167 = smul.addr %s164, 2
          %s168 = sadd.s32 %s166, %s167
          %s169 = smul.addr %s168, 4
          %s170 = scalar_lea.vmem %s1, %s169
          %s171 = smul.u32 2, %s18
        $region24: #{a_call__.20} parent=15 // pred_fallthru
          _
        // Predicated region
        $region25: #{a_call__.20} parent=15 // pred_check
          %p172 = pneg %p100
        $region26: #{a_call__.20} parent=15 // pred_check_branch
          %174 = sbr.rel (%p172) target = $region28
        $region27: #{a_call__.20} parent=15 // pred_region
          %s175 = smul.u32 2, %s18
          %p176 = scmp.lt.s32.totalorder %s17, 1
          %s177 = scalar_select %p176, %s17, 1
          %p178 = scmp.lt.s32.totalorder %s175, 1
          %s179 = scalar_select %p178, %s175, 1
          %s180 = smul.addr %s177, 2
          %s181 = sadd.s32 %s179, %s180
          %s182 = smul.addr %s181, 8
          %s183 = scalar_lea.vmem %s2, %s182
          %s184 = smul.u32 2, %s18
        $region28: #{a_call__.20} parent=15 // pred_fallthru
          _
      $region16: #{a_call__.20} parent=5 // pred_fallthru
        _
      %p185 = scmp.le.s32.totalorder 1, %s10
      %p186 = scmp.lt.s32.totalorder %s10, 3
      %p187 = pnand %p185, %p186
      %p188 = pneg %p187
      // Predicated region
      $region29: #{a_call__.20} parent=5 // pred_check
        _
      $region30: #{a_call__.20} parent=5 // pred_check_branch
        %190 = sbr.rel (%p187) target = $region32
      $region31: #{a_call__.20} parent=5 // pred_region
        %s191 = ssub.s32 %s10, 1
        %s192 = smul.u32 2, %s20
        %p193 = scmp.lt.s32.totalorder %s19, 1
        %s194 = scalar_select %p193, %s19, 1
        %p195 = scmp.lt.s32.totalorder %s192, 1
        %s196 = scalar_select %p195, %s192, 1
        %s197 = smul.addr %s194, 2
        %s198 = sadd.s32 %s196, %s197
        %s199 = smul.addr %s198, 4
        %s200 = scalar_lea.vmem %s0, %s199
        %p201 = pneg %p50
        %p202 = pneg %p47
        %s203 = smul.u32 2, %s20
        %p204 = scmp.lt.s32.totalorder %s19, 1
        %s205 = scalar_select %p204, %s19, 1
        %p206 = scmp.lt.s32.totalorder %s203, 1
        %s207 = scalar_select %p206, %s203, 1
        %s208 = smul.addr %s205, 2
        %s209 = sadd.s32 %s207, %s208
        %s210 = smul.addr %s209, 4
        %s211 = scalar_lea.vmem %s1, %s210
        %p212 = pneg %p78
        %p213 = pneg %p75
        %s214 = smul.u32 2, %s20
        %p215 = scmp.lt.s32.totalorder %s19, 1
        %s216 = scalar_select %p215, %s19, 1
        %p217 = scmp.lt.s32.totalorder %s214, 1
        %s218 = scalar_select %p217, %s214, 1
        %s219 = smul.addr %s216, 2
        %s220 = sadd.s32 %s218, %s219
        %s221 = smul.addr %s220, 8
        %s222 = scalar_lea.vmem %s2, %s221
        %p223 = pneg %p106
        %p224 = pneg %p103
        %p225 = pneg %p127
        %p226 = pneg %p124
        %s227 = smul.u32 2, %s20
        %p228 = scmp.lt.s32.totalorder %s19, 1
        %s229 = scalar_select %p228, %s19, 1
        %p230 = scmp.lt.s32.totalorder %s227, 1
        %s231 = scalar_select %p230, %s227, 1
        %s232 = smul.addr %s229, 2
        %s233 = sadd.s32 %s231, %s232
        %s234 = smul.addr %s233, 4
        %s235 = scalar_lea.vmem %s0, %s234
        %s236 = smul.u32 2, %s20
        %s237 = smul.u32 2, %s20
        %p238 = scmp.lt.s32.totalorder %s19, 1
        %s239 = scalar_select %p238, %s19, 1
        %p240 = scmp.lt.s32.totalorder %s237, 1
        %s241 = scalar_select %p240, %s237, 1
        %s242 = smul.addr %s239, 2
        %s243 = sadd.s32 %s241, %s242
        %s244 = smul.addr %s243, 4
        %s245 = scalar_lea.vmem %s1, %s244
        %s246 = smul.u32 2, %s20
        %s247 = smul.u32 2, %s20
        %p248 = scmp.lt.s32.totalorder %s19, 1
        %s249 = scalar_select %p248, %s19, 1
        %p250 = scmp.lt.s32.totalorder %s247, 1
        %s251 = scalar_select %p250, %s247, 1
        %s252 = smul.addr %s249, 2
        %s253 = sadd.s32 %s251, %s252
        %s254 = smul.addr %s253, 8
        %s255 = scalar_lea.vmem %s2, %s254
        %s256 = smul.u32 2, %s20
        %p257 = scmp.eq.s32.totalorder %s19, 0
        %p258 = scmp.eq.s32.totalorder %s20, 0
        %p259 = pnand %p257, %p258
        %p260 = pneg %p259
        // Predicated region
        $region33: #{a_call__.20} parent=31 // pred_check
          _
        $region34: #{a_call__.20} parent=31 // pred_check_branch
          %262 = sbr.rel (%p259) target = $region36
        $region35: #{a_call__.20} parent=31 // pred_region
          %s263 = scalar_lea.smem [#allocation2], 0
          %264 = sst [smem:[%s263]] 0.0
          %s265 = scalar_lea.smem [#allocation2], 1
          %266 = sst [smem:[%s265]] 0.0
        $region36: #{a_call__.20} parent=31 // pred_fallthru
          _
        %v267 = vld [vmem:[%s235] sm:$0xf]
        %v268 = vld [vmem:[%s235 + $0x4] sm:$0xf]
        %v269 = vunpack.c.l.bf16 %v267
        %v270 = vunpack.c.l.bf16 %v268
        %v271 = vld [vmem:[%s245] sm:$0xf]
        %v272 = vld [vmem:[%s245 + $0x4] sm:$0xf]
        %v273 = vunpack.c.l.bf16 %v271
        %v274 = vunpack.c.l.bf16 %v272
        %v275 = vsub.f32 %v269, %v273
        %v276 = vsub.f32 %v270, %v274
        %v277 = vld [vmem:[%s255] sm:$0xff]
        %v278 = vld [vmem:[%s255 + $0x8] sm:$0xff]
        %s279 = sld [smem:[#allocation2]]
        %v280 = vmul.f32 %v275, %v275
        %v281 = vmul.f32 %v276, %v276
        %283 = vset.pattern.permute.xlu0 0
        %284 = vperm.xlu0 %283, %v277
        %v285 = vpop.permute.xlu0 %284
        %288 = vset.pattern.permute.xlu0 0
        %289 = vperm.xlu0 %288, %v278
        %v290 = vpop.permute.xlu0 %289
        %v292 = vmul.f32 %v280, %v285
        %v293 = vmul.f32 %v281, %v290
        %vm294 = vcmask 523264
        %v295 = vsel %vm294, %v292, 0.0
        %v296 = vsel %vm294, %v293, 0.0
        %v297 = vadd.f32 %v295, %v296
        %298 = vadd.xlane.f32.xlu0 %v297
        %v299 = vpop.xlane.xlu0 %298
        %v300 = vrot.slane %v299, 4
        %v301 = vadd.f32 %v299, %v300
        %v302 = vrot.slane %v301, 2
        %v303 = vadd.f32 %v301, %v302
        %v304 = vrot.slane %v303, 1
        %v305 = vadd.f32 %v303, %v304
        %s306 = vtos %v305
        %s307 = sadd.f32 %s279, %s306
        %s308 = scalar_lea.smem [#allocation2], 0
        %309 = sst [smem:[%s308]] %s307
        %s310 = sld [smem:[#allocation2 + $0x1]]
        %vm311 = vcmask 7168
        %v312 = vsel %vm311, %v277, 0.0
        %v313 = vsel %vm311, %v278, 0.0
        %v314 = vadd.f32 %v312, %v313
        %315 = vadd.xlane.f32.xlu0 %v314
        %v316 = vpop.xlane.xlu0 %315
        %v317 = vrot.slane %v316, 4
        %v318 = vadd.f32 %v316, %v317
        %v319 = vrot.slane %v318, 2
        %v320 = vadd.f32 %v318, %v319
        %v321 = vrot.slane %v320, 1
        %v322 = vadd.f32 %v320, %v321
        %s323 = vtos %v322
        %s324 = sadd.f32 %s310, %s323
        %s325 = scalar_lea.smem [#allocation2], 1
        %326 = sst [smem:[%s325]] %s324
        // Predicated region
        $region37: #{a_call__.20} parent=31 // pred_check
          %p327 = pneg %p124
        $region38: #{a_call__.20} parent=31 // pred_check_branch
          %329 = sbr.rel (%p327) target = $region40
        $region39: #{a_call__.20} parent=31 // pred_region
          %s331 = ssub.s32 16, 16
          %332 = vsyncadd [#allocation3], %s331
          %s334 = sshll.u32 %s3, 4
          %s335 = int_to_ptr.vmem [resolvable:$true] %s334
          %337 = dma.smem_to_vmem [#allocation2], 16, %s335, [#allocation3]
        $region40: #{a_call__.20} parent=31 // pred_fallthru
          _
        // Predicated region
        $region41: #{a_call__.20} parent=31 // pred_check
          %p338 = pneg %p124
        $region42: #{a_call__.20} parent=31 // pred_check_branch
          %340 = sbr.rel (%p338) target = $region44
        $region43: #{a_call__.20} parent=31 // pred_region
          %341 = dma.done [#allocation3], 16
        $region44: #{a_call__.20} parent=31 // pred_fallthru
          _
        %342 = sfence
      $region32: #{a_call__.20} parent=5 // pred_fallthru
        _
      %p343 = scmp.le.s32.totalorder 2, %s10
      // Predicated region
      $region45: #{a_call__.20} parent=5 // pred_check
        %p344 = pneg %p343
      $region46: #{a_call__.20} parent=5 // pred_check_branch
        %346 = sbr.rel (%p344) target = $region48
      $region47: #{a_call__.20} parent=5 // pred_region
        %s347 = ssub.s32 %s10, 2
      $region48: #{a_call__.20} parent=5 // pred_fallthru
        _
    $region6: #{a_call__.20} parent=1 // loop_footer
      %s14 = sadd.s32 1, %s10
    $region7: #{a_call__.20} parent=1 // loop_footer_branch
      %9 = sbr.rel target = $region3
    $region8: #{a_call__.20} parent=1 // loop_exit
      _
    %348 = vsyncpa [#allocation3], 1
    %s349 = scalar_lea.sflag [#allocation3], 1
    %350 = vsyncpa %s349, 1

// kernel: a_call__.15
$region0: #{a_call__.15}
  #allocation0 [shape = 'u32[]', space=smem, size = 0x4, offset = 0x4, fixed_abs, tag = 'smem constant byte address 0x4 - core index']
  #allocation1 [shape = 'u32[144,128]{1,0:T(1,128)}', space=vmem, size = 0x12000, scoped, tag = 'internal scratch']
  %s0 = inlined_call_operand.vmem [shape: bf16[4,42,64], index: 0, kind: input, shape index: {}]
  %s1 = inlined_call_operand.vmem [shape: bf16[9,64,64], index: 1, kind: input, shape index: {}]
  %s2 = inlined_call_operand.vmem [shape: f32[1,64], index: 2, kind: input, shape index: {}]
  %s3 = inlined_call_operand.vmem [shape: bf16[4,24,64], index: 3, kind: output, shape index: {}]
  %s4 = sld [smem:[#allocation0]]
  $region45: #{a_call__.15} parent=0
    _
  %s6 = ssub.s32 1, %s4
  %s7 = scalar_select 0, %s6, %s4
  loop: start=0, step=1, limit=6
  $region2: #{a_call__.15} parent=0 // loop_pre_header
    _
  $region3: #{a_call__.15} parent=0 // loop_header
    %s9 = sphi 0, %s13
    %p10 = scmp.ge.s32.totalorder %s9, 6
    %s19 = sphi 0, %s21
    %s22 = sphi 0, %s19
    %s23 = sphi 0, %s22
    %s39 = sphi 0, %s23
    %s43 = sphi 0, %s43
    %s45 = sphi 0, %s43
    %s46 = sphi 0, %s45
    %s60 = sphi 0, %s46
    %s64 = sphi 0, %s64
    %s66 = sphi 0, %s64
    %s67 = sphi 0, %s66
    %s81 = sphi 0, %s67
    %s87 = sphi 0, %s89
    %s90 = sphi 0, %s87
    %s91 = sphi 0, %s90
    %s107 = sphi 0, %s91
  $region4: #{a_call__.15} parent=0 // loop_header_branch
    %12 = sbr.rel (%p10) target = $region8
  $region5: #{a_call__.15} parent=0 // loop_body
    %s14 = ssub.s32 %s9, 1
    %s15 = ssub.s32 %s9, 2
    %s16 = sadd.s32 %s9, 1
    %s17 = ssub.s32 %s9, %s16
    %p18 = scmp.eq.s32.totalorder %s17, 0
    %s20 = sadd.s32 %s19, 1
    %s21 = scalar_select %p18, %s19, %s20
    %p24 = pneg %p18
    %p25 = scmp.eq.s32.totalorder %s9, 3
    %p26 = por %p24, %p25
    %p27 = scmp.ne.s32.totalorder %s19, %s22
    %p28 = scmp.eq.s32.totalorder %s9, 0
    %p29 = por %p27, %p28
    %p30 = scmp.ne.s32.totalorder %s19, %s22
    %p31 = scmp.eq.s32.totalorder %s14, 3
    %p32 = por %p30, %p31
    %p33 = scmp.ne.s32.totalorder %s22, %s23
    %p34 = scmp.eq.s32.totalorder %s14, 0
    %p35 = por %p33, %p34
    %p36 = scmp.ne.s32.totalorder %s22, %s23
    %p37 = scmp.eq.s32.totalorder %s15, 3
    %p38 = por %p36, %p37
    %p40 = scmp.ne.s32.totalorder %s23, %s39
    %p41 = scmp.eq.s32.totalorder %s15, 0
    %p42 = por %p40, %p41
    %s44 = sadd.s32 %s43, 1
    %p47 = scmp.eq.s32.totalorder %s9, 3
    %p48 = scmp.ne.s32.totalorder %s43, %s45
    %p49 = scmp.eq.s32.totalorder %s9, 0
    %p50 = por %p48, %p49
    %p51 = scmp.ne.s32.totalorder %s43, %s45
    %p52 = scmp.eq.s32.totalorder %s14, 3
    %p53 = por %p51, %p52
    %p54 = scmp.ne.s32.totalorder %s45, %s46
    %p55 = scmp.eq.s32.totalorder %s14, 0
    %p56 = por %p54, %p55
    %p57 = scmp.ne.s32.totalorder %s45, %s46
    %p58 = scmp.eq.s32.totalorder %s15, 3
    %p59 = por %p57, %p58
    %p61 = scmp.ne.s32.totalorder %s46, %s60
    %p62 = scmp.eq.s32.totalorder %s15, 0
    %p63 = por %p61, %p62
    %s65 = sadd.s32 %s64, 1
    %p68 = scmp.eq.s32.totalorder %s9, 3
    %p69 = scmp.ne.s32.totalorder %s64, %s66
    %p70 = scmp.eq.s32.totalorder %s9, 0
    %p71 = por %p69, %p70
    %p72 = scmp.ne.s32.totalorder %s64, %s66
    %p73 = scmp.eq.s32.totalorder %s14, 3
    %p74 = por %p72, %p73
    %p75 = scmp.ne.s32.totalorder %s66, %s67
    %p76 = scmp.eq.s32.totalorder %s14, 0
    %p77 = por %p75, %p76
    %p78 = scmp.ne.s32.totalorder %s66, %s67
    %p79 = scmp.eq.s32.totalorder %s15, 3
    %p80 = por %p78, %p79
    %p82 = scmp.ne.s32.totalorder %s67, %s81
    %p83 = scmp.eq.s32.totalorder %s15, 0
    %p84 = por %p82, %p83
    %s85 = ssub.s32 %s9, %s16
    %p86 = scmp.eq.s32.totalorder %s85, 0
    %s88 = sadd.s32 %s87, 1
    %s89 = scalar_select %p86, %s87, %s88
    %p92 = pneg %p86
    %p93 = scmp.eq.s32.totalorder %s9, 3
    %p94 = por %p92, %p93
    %p95 = scmp.ne.s32.totalorder %s87, %s90
    %p96 = scmp.eq.s32.totalorder %s9, 0
    %p97 = por %p95, %p96
    %p98 = scmp.ne.s32.totalorder %s87, %s90
    %p99 = scmp.eq.s32.totalorder %s14, 3
    %p100 = por %p98, %p99
    %p101 = scmp.ne.s32.totalorder %s90, %s91
    %p102 = scmp.eq.s32.totalorder %s14, 0
    %p103 = por %p101, %p102
    %p104 = scmp.ne.s32.totalorder %s90, %s91
    %p105 = scmp.eq.s32.totalorder %s15, 3
    %p106 = por %p104, %p105
    %p108 = scmp.ne.s32.totalorder %s91, %s107
    %p109 = scmp.eq.s32.totalorder %s15, 0
    %p110 = por %p108, %p109
    %p111 = scmp.le.s32.totalorder 1, %s9
    %p112 = scmp.lt.s32.totalorder %s9, 5
    %p113 = pnand %p111, %p112
    %p114 = pneg %p113
    // Predicated region
    $region9: #{a_call__.15} parent=5 // pred_check
      _
    $region10: #{a_call__.15} parent=5 // pred_check_branch
      %116 = sbr.rel (%p113) target = $region12
    $region11: #{a_call__.15} parent=5 // pred_region
      %s117 = ssub.s32 %s9, 1
      // Predicated region
      $region13: #{a_call__.15} parent=11 // pred_check
        %p118 = pneg %p56
      $region14: #{a_call__.15} parent=11 // pred_check_branch
        %120 = sbr.rel (%p118) target = $region16
      $region15: #{a_call__.15} parent=11 // pred_region
        _
      $region16: #{a_call__.15} parent=11 // pred_fallthru
        _
      // Predicated region
      $region17: #{a_call__.15} parent=11 // pred_check
        %p121 = pneg %p77
      $region18: #{a_call__.15} parent=11 // pred_check_branch
        %123 = sbr.rel (%p121) target = $region20
      $region19: #{a_call__.15} parent=11 // pred_region
        _
      $region20: #{a_call__.15} parent=11 // pred_fallthru
        _
    $region12: #{a_call__.15} parent=5 // pred_fallthru
      _
    %p124 = scmp.lt.s32.totalorder %s9, 4
    // Predicated region
    $region21: #{a_call__.15} parent=5 // pred_check
      %p125 = pneg %p124
    $region22: #{a_call__.15} parent=5 // pred_check_branch
      %127 = sbr.rel (%p125) target = $region24
    $region23: #{a_call__.15} parent=5 // pred_region
      // Predicated region
      $region25: #{a_call__.15} parent=23 // pred_check
        %p128 = pneg %p29
      $region26: #{a_call__.15} parent=23 // pred_check_branch
        %130 = sbr.rel (%p128) target = $region28
      $region27: #{a_call__.15} parent=23 // pred_region
        %p131 = scmp.lt.s32.totalorder %s9, 3
        %s132 = scalar_select %p131, %s9, 3
        %s133 = smul.addr %s132, 6
        %s134 = smul.addr %s133, 4
        %s135 = scalar_lea.vmem %s0, %s134
      $region28: #{a_call__.15} parent=23 // pred_fallthru
        _
    $region24: #{a_call__.15} parent=5 // pred_fallthru
      _
    %p136 = scmp.le.s32.totalorder 1, %s9
    %p137 = scmp.lt.s32.totalorder %s9, 5
    %p138 = pnand %p136, %p137
    %p139 = pneg %p138
    // Predicated region
    $region29: #{a_call__.15} parent=5 // pred_check
      _
    $region30: #{a_call__.15} parent=5 // pred_check_branch
      %141 = sbr.rel (%p138) target = $region32
    $region31: #{a_call__.15} parent=5 // pred_region
      %s142 = ssub.s32 %s9, 1
      %p143 = scmp.lt.s32.totalorder %s14, 3
      %s144 = scalar_select %p143, %s14, 3
      %s145 = smul.addr %s144, 6
      %s146 = smul.addr %s145, 4
      %s147 = scalar_lea.vmem %s0, %s146
      %p148 = pneg %p35
      %p149 = pneg %p32
      %p150 = pneg %p56
      %p151 = pneg %p53
      %p152 = pneg %p77
      %p153 = pneg %p74
      %p154 = pneg %p103
      %p155 = pneg %p100
      %p156 = scmp.lt.s32.totalorder %s14, 3
      %s157 = scalar_select %p156, %s14, 3
      %s158 = smul.addr %s157, 3
      %s159 = smul.addr %s158, 4
      %s160 = scalar_lea.vmem %s3, %s159
      %p161 = scmp.lt.s32.totalorder %s14, 3
      %s162 = scalar_select %p161, %s14, 3
      %s163 = smul.addr %s162, 6
      %s164 = smul.addr %s163, 4
      %s165 = scalar_lea.vmem %s0, %s164
      %p166 = scmp.lt.s32.totalorder %s14, 3
      %s167 = scalar_select %p166, %s14, 3
      %s168 = smul.addr %s167, 3
      %s169 = smul.addr %s168, 4
      %s170 = scalar_lea.vmem %s3, %s169
      %v172 = vld [vmem:[%s165] sm:$0xf]
      %v173 = vld [vmem:[%s165 + $0x4] sm:$0xf]
      %v174 = vld [vmem:[%s165 + $0x8] sm:$0xf]
      %v175 = vld [vmem:[%s1] sm:$0xf]
      %v176 = vld [vmem:[%s1 + $0x4] sm:$0xf]
      %v177 = vld [vmem:[%s1 + $0x8] sm:$0xf]
      %v178 = vld [vmem:[%s1 + $0xc] sm:$0xf]
      %v179 = vld [vmem:[%s1 + $0x10] sm:$0xf]
      %v180 = vld [vmem:[%s1 + $0x14] sm:$0xf]
      %v181 = vld [vmem:[%s1 + $0x18] sm:$0xf]
      %v182 = vld [vmem:[%s1 + $0x1c] sm:$0xf]
      %v183 = vld [vmem:[%s165 + $0xc] sm:$0x1]
      %s184 = scalar_lea.vmem %s1, 32
      %v185 = vld [vmem:[%s184] sm:$0xf]
      %v186 = vld [vmem:[%s184 + $0x4] sm:$0xf]
      %v187 = vld [vmem:[%s184 + $0x8] sm:$0xf]
      %v188 = vld [vmem:[%s184 + $0xc] sm:$0xf]
      %v189 = vld [vmem:[%s184 + $0x10] sm:$0xf]
      %v190 = vld [vmem:[%s184 + $0x14] sm:$0xf]
      %v191 = vld [vmem:[%s184 + $0x18] sm:$0xf]
      %v192 = vld [vmem:[%s184 + $0x1c] sm:$0xf]
      %v197 = vunpack.c.l.b16 %v172
      %v198 = vunpack.c.l.b16 %v173
      %v199 = vunpack.c.l.b16 %v174
      %v200 = vunpack.c.l.b16 %v183
      %v201 = vpack.c.b16 %v198, %v197
      %v202 = vpack.c.b16 %v200, %v199
      %vm203 = vsmask.f32 7424
      %v205 = vshrl.u32 %v201, 16
      %v207 = vshll.u32 %v201, 16
      %v209 = vrot.slane %v207, 1
      %v210 = vor.u32 %v205, %v209
      %v212 = vshll.u32 %v202, 16
      %v214 = vrot.slane %v212, 1
      %v215 = vsel %vm203, %v210, %v214
      %v216 = vshrl.u32 %v202, 16
      %v218 = vor.u32 %v216, %v214
      %v227 = vunpack.c.l.b16 %v185
      %v228 = vunpack.c.l.b16 %v186
      %v229 = vunpack.c.l.b16 %v187
      %v230 = vunpack.c.l.b16 %v188
      %v231 = vunpack.c.l.b16 %v189
      %v232 = vunpack.c.l.b16 %v190
      %v233 = vunpack.c.l.b16 %v191
      %v234 = vunpack.c.l.b16 %v192
      %v235 = vpack.c.b16 %v228, %v227
      %v236 = vpack.c.b16 %v230, %v229
      %v237 = vpack.c.b16 %v232, %v231
      %v238 = vpack.c.b16 %v234, %v233
      %vm243 = vcmask 523264
      %v245 = vsel %vm243, %v215, 0
      %v248 = vsel %vm243, %v218, 0
      %250 = vmatprep.subr.bf16.mxu0 0
      %251 = vmatpush1.bf16.msra.mxu0 0
      %252 = vmatprep.subr.bf16.mxu0 0
      %253 = vmatpush1.bf16.msra.mxu0 0
      %254 = vmatprep.subr.bf16.mxu0 0
      %255 = vmatpush1.bf16.msra.mxu0 0
      %256 = vmatprep.subr.bf16.mxu0 0
      %257 = vmatpush1.bf16.msra.mxu0 0
      %258 = vmatprep.subr.bf16.mxu0 0
      %259 = vmatpush1.bf16.msra.mxu0 %v238
      %260 = vmatprep.subr.bf16.mxu0 0
      %261 = vmatpush1.bf16.msra.mxu0 %v237
      %262 = vmatprep.subr.bf16.mxu0 0
      %263 = vmatpush1.bf16.msra.mxu0 %v236
      %264 = vmatprep.subr.bf16.mxu0 0
      %265 = vmatpush1.bf16.msra.mxu0 %v235
      %266 = vmatprep.subr.bf16.mxu0 0
      %267 = vmatpush2.bf16.msra.mxu0 0
      %268 = vmatprep.subr.bf16.mxu0 0
      %269 = vmatpush2.bf16.msra.mxu0 0
      %270 = vmatprep.subr.bf16.mxu0 0
      %271 = vmatpush2.bf16.msra.mxu0 0
      %272 = vmatprep.subr.bf16.mxu0 0
      %273 = vmatpush2.bf16.msra.mxu0 0
      %274 = vmatprep.subr.bf16.mxu0 0
      %275 = vmatpush2.bf16.msra.mxu0 0
      %276 = vmatprep.subr.bf16.mxu0 0
      %277 = vmatpush2.bf16.msra.mxu0 0
      %278 = vmatprep.subr.bf16.mxu0 0
      %279 = vmatpush2.bf16.msra.mxu0 0
      %280 = vmatprep.subr.bf16.mxu0 0
      %281 = vmatpush2.bf16.msra.mxu0 0
      %282 = vmatprep.mubr.bf16.mxu0 0
      %283 = vmatmul.mubr.bf16.gmra.mxu0 %v245
      %v284 = vpop.f32.mrf.mxu0
      %v285 = vadd.f32 0.0, %v284
      %v286 = vpop.f32.mrf.mxu0
      %v287 = vpop.f32.mrf.mxu0
      %v288 = vadd.f32 0.0, %v287
      %v289 = vpop.f32.mrf.mxu0
      %290 = vmatprep.mubr.bf16.mxu0 0
      %291 = vmatmul.mubr.bf16.gmra.mxu0 %v248
      %v292 = vpop.f32.mrf.mxu0
      %v293 = vadd.f32 0.0, %v292
      %v294 = vpop.f32.mrf.mxu0
      %v295 = vpop.f32.mrf.mxu0
      %v296 = vpop.f32.mrf.mxu0
      %297 = vdwg.mxu0
      %v298 = vpack.c.b16 %v199, %v199
      %v307 = vunpack.c.l.b16 %v175
      %v308 = vunpack.c.l.b16 %v176
      %v309 = vunpack.c.l.b16 %v177
      %v310 = vunpack.c.l.b16 %v178
      %v311 = vunpack.c.l.b16 %v179
      %v312 = vunpack.c.l.b16 %v180
      %v313 = vunpack.c.l.b16 %v181
      %v314 = vunpack.c.l.b16 %v182
      %v315 = vpack.c.b16 %v308, %v307
      %v316 = vpack.c.b16 %v310, %v309
      %v317 = vpack.c.b16 %v312, %v311
      %v318 = vpack.c.b16 %v314, %v313
      %v323 = vsel %vm243, %v201, 0
      %v326 = vsel %vm243, %v298, 0
      %328 = vmatprep.subr.bf16.mxu0 0
      %329 = vmatpush1.bf16.msra.mxu0 0
      %330 = vmatprep.subr.bf16.mxu0 0
      %331 = vmatpush1.bf16.msra.mxu0 0
      %332 = vmatprep.subr.bf16.mxu0 0
      %333 = vmatpush1.bf16.msra.mxu0 0
      %334 = vmatprep.subr.bf16.mxu0 0
      %335 = vmatpush1.bf16.msra.mxu0 0
      %336 = vmatprep.subr.bf16.mxu0 0
      %337 = vmatpush1.bf16.msra.mxu0 %v318
      %338 = vmatprep.subr.bf16.mxu0 0
      %339 = vmatpush1.bf16.msra.mxu0 %v317
      %340 = vmatprep.subr.bf16.mxu0 0
      %341 = vmatpush1.bf16.msra.mxu0 %v316
      %342 = vmatprep.subr.bf16.mxu0 0
      %343 = vmatpush1.bf16.msra.mxu0 %v315
      %344 = vmatprep.subr.bf16.mxu0 0
      %345 = vmatpush2.bf16.msra.mxu0 0
      %346 = vmatprep.subr.bf16.mxu0 0
      %347 = vmatpush2.bf16.msra.mxu0 0
      %348 = vmatprep.subr.bf16.mxu0 0
      %349 = vmatpush2.bf16.msra.mxu0 0
      %350 = vmatprep.subr.bf16.mxu0 0
      %351 = vmatpush2.bf16.msra.mxu0 0
      %352 = vmatprep.subr.bf16.mxu0 0
      %353 = vmatpush2.bf16.msra.mxu0 0
      %354 = vmatprep.subr.bf16.mxu0 0
      %355 = vmatpush2.bf16.msra.mxu0 0
      %356 = vmatprep.subr.bf16.mxu0 0
      %357 = vmatpush2.bf16.msra.mxu0 0
      %358 = vmatprep.subr.bf16.mxu0 0
      %359 = vmatpush2.bf16.msra.mxu0 0
      %360 = vmatprep.mubr.bf16.mxu0 0
      %361 = vmatmul.mubr.bf16.gmra.mxu0 %v323
      %v362 = vpop.f32.mrf.mxu0
      %v363 = vadd.f32 %v285, %v362
      %v364 = vpop.f32.mrf.mxu0
      %v365 = vpop.f32.mrf.mxu0
      %v366 = vadd.f32 %v288, %v365
      %v367 = vpop.f32.mrf.mxu0
      %368 = vmatprep.mubr.bf16.mxu0 0
      %369 = vmatmul.mubr.bf16.gmra.mxu0 %v326
      %v370 = vpop.f32.mrf.mxu0
      %v371 = vadd.f32 %v293, %v370
      %v372 = vpop.f32.mrf.mxu0
      %v373 = vpop.f32.mrf.mxu0
      %v374 = vpop.f32.mrf.mxu0
      %375 = vdwg.mxu0
      %v376 = vld [vmem:[%s165] sm:$0xe]
      %s377 = scalar_lea.vmem %s1, 64
      %v378 = vld [vmem:[%s377] sm:$0xf]
      %v379 = vld [vmem:[%s377 + $0x4] sm:$0xf]
      %v380 = vld [vmem:[%s377 + $0x8] sm:$0xf]
      %v381 = vld [vmem:[%s377 + $0xc] sm:$0xf]
      %v382 = vld [vmem:[%s377 + $0x10] sm:$0xf]
      %v383 = vld [vmem:[%s377 + $0x14] sm:$0xf]
      %v384 = vld [vmem:[%s377 + $0x18] sm:$0xf]
      %v385 = vld [vmem:[%s377 + $0x1c] sm:$0xf]
      %v387 = vunpack.c.l.b16 %v376
      %v388 = vpack.c.b16 %v198, %v387
      %vm389 = vcmask 1046528
      %v390 = vrot.slane %v388, 1
      %v391 = vrot.slane %v202, 1
      %v392 = vsel %vm389, %v390, %v391
      %v401 = vunpack.c.l.b16 %v378
      %v402 = vunpack.c.l.b16 %v379
      %v403 = vunpack.c.l.b16 %v380
      %v404 = vunpack.c.l.b16 %v381
      %v405 = vunpack.c.l.b16 %v382
      %v406 = vunpack.c.l.b16 %v383
      %v407 = vunpack.c.l.b16 %v384
      %v408 = vunpack.c.l.b16 %v385
      %v409 = vpack.c.b16 %v402, %v401
      %v410 = vpack.c.b16 %v404, %v403
      %v411 = vpack.c.b16 %v406, %v405
      %v412 = vpack.c.b16 %v408, %v407
      %v418 = vsel %vm243, %v392, 0
      %v421 = vsel %vm243, %v391, 0
      %423 = vmatprep.subr.bf16.mxu0 0
      %424 = vmatpush1.bf16.msra.mxu0 0
      %425 = vmatprep.subr.bf16.mxu0 0
      %426 = vmatpush1.bf16.msra.mxu0 0
      %427 = vmatprep.subr.bf16.mxu0 0
      %428 = vmatpush1.bf16.msra.mxu0 0
      %429 = vmatprep.subr.bf16.mxu0 0
      %430 = vmatpush1.bf16.msra.mxu0 0
      %431 = vmatprep.subr.bf16.mxu0 0
      %432 = vmatpush1.bf16.msra.mxu0 %v412
      %433 = vmatprep.subr.bf16.mxu0 0
      %434 = vmatpush1.bf16.msra.mxu0 %v411
      %435 = vmatprep.subr.bf16.mxu0 0
      %436 = vmatpush1.bf16.msra.mxu0 %v410
      %437 = vmatprep.subr.bf16.mxu0 0
      %438 = vmatpush1.bf16.msra.mxu0 %v409
      %439 = vmatprep.subr.bf16.mxu0 0
      %440 = vmatpush2.bf16.msra.mxu0 0
      %441 = vmatprep.subr.bf16.mxu0 0
      %442 = vmatpush2.bf16.msra.mxu0 0
      %443 = vmatprep.subr.bf16.mxu0 0
      %444 = vmatpush2.bf16.msra.mxu0 0
      %445 = vmatprep.subr.bf16.mxu0 0
      %446 = vmatpush2.bf16.msra.mxu0 0
      %447 = vmatprep.subr.bf16.mxu0 0
      %448 = vmatpush2.bf16.msra.mxu0 0
      %449 = vmatprep.subr.bf16.mxu0 0
      %450 = vmatpush2.bf16.msra.mxu0 0
      %451 = vmatprep.subr.bf16.mxu0 0
      %452 = vmatpush2.bf16.msra.mxu0 0
      %453 = vmatprep.subr.bf16.mxu0 0
      %454 = vmatpush2.bf16.msra.mxu0 0
      %455 = vmatprep.mubr.bf16.mxu0 0
      %456 = vmatmul.mubr.bf16.gmra.mxu0 %v418
      %v457 = vpop.f32.mrf.mxu0
      %v458 = vadd.f32 0.0, %v457
      %v459 = vpop.f32.mrf.mxu0
      %v460 = vpop.f32.mrf.mxu0
      %v461 = vadd.f32 0.0, %v460
      %v462 = vpop.f32.mrf.mxu0
      %463 = vmatprep.mubr.bf16.mxu0 0
      %464 = vmatmul.mubr.bf16.gmra.mxu0 %v421
      %v465 = vpop.f32.mrf.mxu0
      %v466 = vadd.f32 0.0, %v465
      %v467 = vpop.f32.mrf.mxu0
      %v468 = vpop.f32.mrf.mxu0
      %v469 = vpop.f32.mrf.mxu0
      %470 = vdwg.mxu0
      %v471 = vadd.f32 %v363, %v458
      %v472 = vadd.f32 %v366, %v461
      %v473 = vadd.f32 %v371, %v466
      %v474 = vld [vmem:[%s165] sm:$0x8]
      %v475 = vld [vmem:[%s165 + $0xc] sm:$0x7]
      %s476 = scalar_lea.vmem %s1, 96
      %v477 = vld [vmem:[%s476] sm:$0xf]
      %v478 = vld [vmem:[%s476 + $0x4] sm:$0xf]
      %v479 = vld [vmem:[%s476 + $0x8] sm:$0xf]
      %v480 = vld [vmem:[%s476 + $0xc] sm:$0xf]
      %v481 = vld [vmem:[%s476 + $0x10] sm:$0xf]
      %v482 = vld [vmem:[%s476 + $0x14] sm:$0xf]
      %v483 = vld [vmem:[%s476 + $0x18] sm:$0xf]
      %v484 = vld [vmem:[%s476 + $0x1c] sm:$0xf]
      %v487 = vunpack.c.l.b16 %v474
      %v488 = vunpack.c.l.b16 %v475
      %v489 = vpack.c.b16 %v198, %v487
      %v490 = vpack.c.b16 %v488, %v199
      %vm491 = vcmask 1044480
      %v492 = vrot.slane %v489, 3
      %v493 = vrot.slane %v490, 3
      %v494 = vsel %vm491, %v492, %v493
      %v503 = vunpack.c.l.b16 %v477
      %v504 = vunpack.c.l.b16 %v478
      %v505 = vunpack.c.l.b16 %v479
      %v506 = vunpack.c.l.b16 %v480
      %v507 = vunpack.c.l.b16 %v481
      %v508 = vunpack.c.l.b16 %v482
      %v509 = vunpack.c.l.b16 %v483
      %v510 = vunpack.c.l.b16 %v484
      %v511 = vpack.c.b16 %v504, %v503
      %v512 = vpack.c.b16 %v506, %v505
      %v513 = vpack.c.b16 %v508, %v507
      %v514 = vpack.c.b16 %v510, %v509
      %v520 = vsel %vm243, %v494, 0
      %v523 = vsel %vm243, %v493, 0
      %525 = vmatprep.subr.bf16.mxu0 0
      %526 = vmatpush1.bf16.msra.mxu0 0
      %527 = vmatprep.subr.bf16.mxu0 0
      %528 = vmatpush1.bf16.msra.mxu0 0
      %529 = vmatprep.subr.bf16.mxu0 0
      %530 = vmatpush1.bf16.msra.mxu0 0
      %531 = vmatprep.subr.bf16.mxu0 0
      %532 = vmatpush1.bf16.msra.mxu0 0
      %533 = vmatprep.subr.bf16.mxu0 0
      %534 = vmatpush1.bf16.msra.mxu0 %v514
      %535 = vmatprep.subr.bf16.mxu0 0
      %536 = vmatpush1.bf16.msra.mxu0 %v513
      %537 = vmatprep.subr.bf16.mxu0 0
      %538 = vmatpush1.bf16.msra.mxu0 %v512
      %539 = vmatprep.subr.bf16.mxu0 0
      %540 = vmatpush1.bf16.msra.mxu0 %v511
      %541 = vmatprep.subr.bf16.mxu0 0
      %542 = vmatpush2.bf16.msra.mxu0 0
      %543 = vmatprep.subr.bf16.mxu0 0
      %544 = vmatpush2.bf16.msra.mxu0 0
      %545 = vmatprep.subr.bf16.mxu0 0
      %546 = vmatpush2.bf16.msra.mxu0 0
      %547 = vmatprep.subr.bf16.mxu0 0
      %548 = vmatpush2.bf16.msra.mxu0 0
      %549 = vmatprep.subr.bf16.mxu0 0
      %550 = vmatpush2.bf16.msra.mxu0 0
      %551 = vmatprep.subr.bf16.mxu0 0
      %552 = vmatpush2.bf16.msra.mxu0 0
      %553 = vmatprep.subr.bf16.mxu0 0
      %554 = vmatpush2.bf16.msra.mxu0 0
      %555 = vmatprep.subr.bf16.mxu0 0
      %556 = vmatpush2.bf16.msra.mxu0 0
      %557 = vmatprep.mubr.bf16.mxu0 0
      %558 = vmatmul.mubr.bf16.gmra.mxu0 %v520
      %v559 = vpop.f32.mrf.mxu0
      %v560 = vadd.f32 0.0, %v559
      %v561 = vpop.f32.mrf.mxu0
      %v562 = vpop.f32.mrf.mxu0
      %v563 = vadd.f32 0.0, %v562
      %v564 = vpop.f32.mrf.mxu0
      %565 = vmatprep.mubr.bf16.mxu0 0
      %566 = vmatmul.mubr.bf16.gmra.mxu0 %v523
      %v567 = vpop.f32.mrf.mxu0
      %v568 = vadd.f32 0.0, %v567
      %v569 = vpop.f32.mrf.mxu0
      %v570 = vpop.f32.mrf.mxu0
      %v571 = vpop.f32.mrf.mxu0
      %572 = vdwg.mxu0
      %v573 = vadd.f32 %v471, %v560
      %v574 = vadd.f32 %v472, %v563
      %v575 = vadd.f32 %v473, %v568
      %v576 = vld [vmem:[%s165 + $0xc] sm:$0xf]
      %s577 = scalar_lea.vmem %s1, 128
      %v578 = vld [vmem:[%s577] sm:$0xf]
      %v579 = vld [vmem:[%s577 + $0x4] sm:$0xf]
      %v580 = vld [vmem:[%s577 + $0x8] sm:$0xf]
      %v581 = vld [vmem:[%s577 + $0xc] sm:$0xf]
      %v582 = vld [vmem:[%s577 + $0x10] sm:$0xf]
      %v583 = vld [vmem:[%s577 + $0x14] sm:$0xf]
      %v584 = vld [vmem:[%s577 + $0x18] sm:$0xf]
      %v585 = vld [vmem:[%s577 + $0x1c] sm:$0xf]
      %v587 = vunpack.c.l.b16 %v576
      %v588 = vpack.c.b16 %v587, %v199
      %vm589 = vsmask.f32 4352
      %v591 = vshrl.u32 %v489, 16
      %v593 = vrot.slane %v591, 3
      %v594 = vshll.u32 %v489, 16
      %v596 = vrot.slane %v594, 4
      %v597 = vor.u32 %v593, %v596
      %v599 = vshrl.u32 %v588, 16
      %v601 = vrot.slane %v599, 3
      %v602 = vshll.u32 %v588, 16
      %v604 = vrot.slane %v602, 4
      %v605 = vor.u32 %v601, %v604
      %v606 = vsel %vm589, %v597, %v605
      %v615 = vunpack.c.l.b16 %v578
      %v616 = vunpack.c.l.b16 %v579
      %v617 = vunpack.c.l.b16 %v580
      %v618 = vunpack.c.l.b16 %v581
      %v619 = vunpack.c.l.b16 %v582
      %v620 = vunpack.c.l.b16 %v583
      %v621 = vunpack.c.l.b16 %v584
      %v622 = vunpack.c.l.b16 %v585
      %v623 = vpack.c.b16 %v616, %v615
      %v624 = vpack.c.b16 %v618, %v617
      %v625 = vpack.c.b16 %v620, %v619
      %v626 = vpack.c.b16 %v622, %v621
      %v632 = vsel %vm243, %v606, 0
      %v635 = vsel %vm243, %v605, 0
      %637 = vmatprep.subr.bf16.mxu0 0
      %638 = vmatpush1.bf16.msra.mxu0 0
      %639 = vmatprep.subr.bf16.mxu0 0
      %640 = vmatpush1.bf16.msra.mxu0 0
      %641 = vmatprep.subr.bf16.mxu0 0
      %642 = vmatpush1.bf16.msra.mxu0 0
      %643 = vmatprep.subr.bf16.mxu0 0
      %644 = vmatpush1.bf16.msra.mxu0 0
      %645 = vmatprep.subr.bf16.mxu0 0
      %646 = vmatpush1.bf16.msra.mxu0 %v626
      %647 = vmatprep.subr.bf16.mxu0 0
      %648 = vmatpush1.bf16.msra.mxu0 %v625
      %649 = vmatprep.subr.bf16.mxu0 0
      %650 = vmatpush1.bf16.msra.mxu0 %v624
      %651 = vmatprep.subr.bf16.mxu0 0
      %652 = vmatpush1.bf16.msra.mxu0 %v623
      %653 = vmatprep.subr.bf16.mxu0 0
      %654 = vmatpush2.bf16.msra.mxu0 0
      %655 = vmatprep.subr.bf16.mxu0 0
      %656 = vmatpush2.bf16.msra.mxu0 0
      %657 = vmatprep.subr.bf16.mxu0 0
      %658 = vmatpush2.bf16.msra.mxu0 0
      %659 = vmatprep.subr.bf16.mxu0 0
      %660 = vmatpush2.bf16.msra.mxu0 0
      %661 = vmatprep.subr.bf16.mxu0 0
      %662 = vmatpush2.bf16.msra.mxu0 0
      %663 = vmatprep.subr.bf16.mxu0 0
      %664 = vmatpush2.bf16.msra.mxu0 0
      %665 = vmatprep.subr.bf16.mxu0 0
      %666 = vmatpush2.bf16.msra.mxu0 0
      %667 = vmatprep.subr.bf16.mxu0 0
      %668 = vmatpush2.bf16.msra.mxu0 0
      %669 = vmatprep.mubr.bf16.mxu0 0
      %670 = vmatmul.mubr.bf16.gmra.mxu0 %v632
      %v671 = vpop.f32.mrf.mxu0
      %v672 = vadd.f32 0.0, %v671
      %v673 = vpop.f32.mrf.mxu0
      %v674 = vpop.f32.mrf.mxu0
      %v675 = vadd.f32 0.0, %v674
      %v676 = vpop.f32.mrf.mxu0
      %677 = vmatprep.mubr.bf16.mxu0 0
      %678 = vmatmul.mubr.bf16.gmra.mxu0 %v635
      %v679 = vpop.f32.mrf.mxu0
      %v680 = vadd.f32 0.0, %v679
      %v681 = vpop.f32.mrf.mxu0
      %v682 = vpop.f32.mrf.mxu0
      %v683 = vpop.f32.mrf.mxu0
      %684 = vdwg.mxu0
      %v685 = vadd.f32 %v573, %v672
      %v686 = vadd.f32 %v574, %v675
      %v687 = vadd.f32 %v575, %v680
      %s688 = scalar_lea.vmem %s1, 160
      %v689 = vld [vmem:[%s688] sm:$0xf]
      %v690 = vld [vmem:[%s688 + $0x4] sm:$0xf]
      %v691 = vld [vmem:[%s688 + $0x8] sm:$0xf]
      %v692 = vld [vmem:[%s688 + $0xc] sm:$0xf]
      %v693 = vld [vmem:[%s688 + $0x10] sm:$0xf]
      %v694 = vld [vmem:[%s688 + $0x14] sm:$0xf]
      %v695 = vld [vmem:[%s688 + $0x18] sm:$0xf]
      %v696 = vld [vmem:[%s688 + $0x1c] sm:$0xf]
      %v697 = vpack.c.b16 %v199, %v198
      %v698 = vpack.c.b16 %v587, %v587
      %v707 = vunpack.c.l.b16 %v689
      %v708 = vunpack.c.l.b16 %v690
      %v709 = vunpack.c.l.b16 %v691
      %v710 = vunpack.c.l.b16 %v692
      %v711 = vunpack.c.l.b16 %v693
      %v712 = vunpack.c.l.b16 %v694
      %v713 = vunpack.c.l.b16 %v695
      %v714 = vunpack.c.l.b16 %v696
      %v715 = vpack.c.b16 %v708, %v707
      %v716 = vpack.c.b16 %v710, %v709
      %v717 = vpack.c.b16 %v712, %v711
      %v718 = vpack.c.b16 %v714, %v713
      %v724 = vsel %vm243, %v697, 0
      %v727 = vsel %vm243, %v698, 0
      %729 = vmatprep.subr.bf16.mxu0 0
      %730 = vmatpush1.bf16.msra.mxu0 0
      %731 = vmatprep.subr.bf16.mxu0 0
      %732 = vmatpush1.bf16.msra.mxu0 0
      %733 = vmatprep.subr.bf16.mxu0 0
      %734 = vmatpush1.bf16.msra.mxu0 0
      %735 = vmatprep.subr.bf16.mxu0 0
      %736 = vmatpush1.bf16.msra.mxu0 0
      %737 = vmatprep.subr.bf16.mxu0 0
      %738 = vmatpush1.bf16.msra.mxu0 %v718
      %739 = vmatprep.subr.bf16.mxu0 0
      %740 = vmatpush1.bf16.msra.mxu0 %v717
      %741 = vmatprep.subr.bf16.mxu0 0
      %742 = vmatpush1.bf16.msra.mxu0 %v716
      %743 = vmatprep.subr.bf16.mxu0 0
      %744 = vmatpush1.bf16.msra.mxu0 %v715
      %745 = vmatprep.subr.bf16.mxu0 0
      %746 = vmatpush2.bf16.msra.mxu0 0
      %747 = vmatprep.subr.bf16.mxu0 0
      %748 = vmatpush2.bf16.msra.mxu0 0
      %749 = vmatprep.subr.bf16.mxu0 0
      %750 = vmatpush2.bf16.msra.mxu0 0
      %751 = vmatprep.subr.bf16.mxu0 0
      %752 = vmatpush2.bf16.msra.mxu0 0
      %753 = vmatprep.subr.bf16.mxu0 0
      %754 = vmatpush2.bf16.msra.mxu0 0
      %755 = vmatprep.subr.bf16.mxu0 0
      %756 = vmatpush2.bf16.msra.mxu0 0
      %757 = vmatprep.subr.bf16.mxu0 0
      %758 = vmatpush2.bf16.msra.mxu0 0
      %759 = vmatprep.subr.bf16.mxu0 0
      %760 = vmatpush2.bf16.msra.mxu0 0
      %761 = vmatprep.mubr.bf16.mxu0 0
      %762 = vmatmul.mubr.bf16.gmra.mxu0 %v724
      %v763 = vpop.f32.mrf.mxu0
      %v764 = vadd.f32 0.0, %v763
      %v765 = vpop.f32.mrf.mxu0
      %v766 = vpop.f32.mrf.mxu0
      %v767 = vadd.f32 0.0, %v766
      %v768 = vpop.f32.mrf.mxu0
      %769 = vmatprep.mubr.bf16.mxu0 0
      %770 = vmatmul.mubr.bf16.gmra.mxu0 %v727
      %v771 = vpop.f32.mrf.mxu0
      %v772 = vadd.f32 0.0, %v771
      %v773 = vpop.f32.mrf.mxu0
      %v774 = vpop.f32.mrf.mxu0
      %v775 = vpop.f32.mrf.mxu0
      %776 = vdwg.mxu0
      %v777 = vadd.f32 %v685, %v764
      %v778 = vadd.f32 %v686, %v767
      %v779 = vadd.f32 %v687, %v772
      %v780 = vld [vmem:[%s165 + $0x4] sm:$0xc]
      %v781 = vld [vmem:[%s165 + $0x8] sm:$0xf]
      %v782 = vld [vmem:[%s165 + $0xc] sm:$0xf]
      %v783 = vld [vmem:[%s165 + $0x10] sm:$0x3]
      %s784 = scalar_lea.vmem %s1, 192
      %v785 = vld [vmem:[%s784] sm:$0xf]
      %v786 = vld [vmem:[%s784 + $0x4] sm:$0xf]
      %v787 = vld [vmem:[%s784 + $0x8] sm:$0xf]
      %v788 = vld [vmem:[%s784 + $0xc] sm:$0xf]
      %v789 = vld [vmem:[%s784 + $0x10] sm:$0xf]
      %v790 = vld [vmem:[%s784 + $0x14] sm:$0xf]
      %v791 = vld [vmem:[%s784 + $0x18] sm:$0xf]
      %v792 = vld [vmem:[%s784 + $0x1c] sm:$0xf]
      %v797 = vunpack.c.l.b16 %v780
      %v798 = vunpack.c.l.b16 %v781
      %v799 = vunpack.c.l.b16 %v782
      %v800 = vunpack.c.l.b16 %v783
      %v801 = vpack.c.b16 %v798, %v797
      %v802 = vpack.c.b16 %v800, %v799
      %vm803 = vcmask 1045504
      %v804 = vrot.slane %v801, 2
      %v805 = vrot.slane %v802, 2
      %v806 = vsel %vm803, %v804, %v805
      %v815 = vunpack.c.l.b16 %v785
      %v816 = vunpack.c.l.b16 %v786
      %v817 = vunpack.c.l.b16 %v787
      %v818 = vunpack.c.l.b16 %v788
      %v819 = vunpack.c.l.b16 %v789
      %v820 = vunpack.c.l.b16 %v790
      %v821 = vunpack.c.l.b16 %v791
      %v822 = vunpack.c.l.b16 %v792
      %v823 = vpack.c.b16 %v816, %v815
      %v824 = vpack.c.b16 %v818, %v817
      %v825 = vpack.c.b16 %v820, %v819
      %v826 = vpack.c.b16 %v822, %v821
      %v832 = vsel %vm243, %v806, 0
      %v835 = vsel %vm243, %v805, 0
      %837 = vmatprep.subr.bf16.mxu0 0
      %838 = vmatpush1.bf16.msra.mxu0 0
      %839 = vmatprep.subr.bf16.mxu0 0
      %840 = vmatpush1.bf16.msra.mxu0 0
      %841 = vmatprep.subr.bf16.mxu0 0
      %842 = vmatpush1.bf16.msra.mxu0 0
      %843 = vmatprep.subr.bf16.mxu0 0
      %844 = vmatpush1.bf16.msra.mxu0 0
      %845 = vmatprep.subr.bf16.mxu0 0
      %846 = vmatpush1.bf16.msra.mxu0 %v826
      %847 = vmatprep.subr.bf16.mxu0 0
      %848 = vmatpush1.bf16.msra.mxu0 %v825
      %849 = vmatprep.subr.bf16.mxu0 0
      %850 = vmatpush1.bf16.msra.mxu0 %v824
      %851 = vmatprep.subr.bf16.mxu0 0
      %852 = vmatpush1.bf16.msra.mxu0 %v823
      %853 = vmatprep.subr.bf16.mxu0 0
      %854 = vmatpush2.bf16.msra.mxu0 0
      %855 = vmatprep.subr.bf16.mxu0 0
      %856 = vmatpush2.bf16.msra.mxu0 0
      %857 = vmatprep.subr.bf16.mxu0 0
      %858 = vmatpush2.bf16.msra.mxu0 0
      %859 = vmatprep.subr.bf16.mxu0 0
      %860 = vmatpush2.bf16.msra.mxu0 0
      %861 = vmatprep.subr.bf16.mxu0 0
      %862 = vmatpush2.bf16.msra.mxu0 0
      %863 = vmatprep.subr.bf16.mxu0 0
      %864 = vmatpush2.bf16.msra.mxu0 0
      %865 = vmatprep.subr.bf16.mxu0 0
      %866 = vmatpush2.bf16.msra.mxu0 0
      %867 = vmatprep.subr.bf16.mxu0 0
      %868 = vmatpush2.bf16.msra.mxu0 0
      %869 = vmatprep.mubr.bf16.mxu0 0
      %870 = vmatmul.mubr.bf16.gmra.mxu0 %v832
      %v871 = vpop.f32.mrf.mxu0
      %v872 = vadd.f32 0.0, %v871
      %v873 = vpop.f32.mrf.mxu0
      %v874 = vpop.f32.mrf.mxu0
      %v875 = vadd.f32 0.0, %v874
      %v876 = vpop.f32.mrf.mxu0
      %877 = vmatprep.mubr.bf16.mxu0 0
      %878 = vmatmul.mubr.bf16.gmra.mxu0 %v835
      %v879 = vpop.f32.mrf.mxu0
      %v880 = vadd.f32 0.0, %v879
      %v881 = vpop.f32.mrf.mxu0
      %v882 = vpop.f32.mrf.mxu0
      %v883 = vpop.f32.mrf.mxu0
      %884 = vdwg.mxu0
      %v885 = vadd.f32 %v777, %v872
      %v886 = vadd.f32 %v778, %v875
      %v887 = vadd.f32 %v779, %v880
      %v888 = vld [vmem:[%s165 + $0x10] sm:$0x7]
      %s889 = scalar_lea.vmem %s1, 224
      %v890 = vld [vmem:[%s889] sm:$0xf]
      %v891 = vld [vmem:[%s889 + $0x4] sm:$0xf]
      %v892 = vld [vmem:[%s889 + $0x8] sm:$0xf]
      %v893 = vld [vmem:[%s889 + $0xc] sm:$0xf]
      %v894 = vld [vmem:[%s889 + $0x10] sm:$0xf]
      %v895 = vld [vmem:[%s889 + $0x14] sm:$0xf]
      %v896 = vld [vmem:[%s889 + $0x18] sm:$0xf]
      %v897 = vld [vmem:[%s889 + $0x1c] sm:$0xf]
      %v899 = vunpack.c.l.b16 %v888
      %v900 = vpack.c.b16 %v899, %v799
      %vm901 = vsmask.f32 5376
      %v903 = vshrl.u32 %v801, 16
      %v905 = vrot.slane %v903, 2
      %v906 = vshll.u32 %v801, 16
      %v908 = vrot.slane %v906, 3
      %v909 = vor.u32 %v905, %v908
      %v911 = vshrl.u32 %v900, 16
      %v913 = vrot.slane %v911, 2
      %v914 = vshll.u32 %v900, 16
      %v916 = vrot.slane %v914, 3
      %v917 = vor.u32 %v913, %v916
      %v918 = vsel %vm901, %v909, %v917
      %v927 = vunpack.c.l.b16 %v890
      %v928 = vunpack.c.l.b16 %v891
      %v929 = vunpack.c.l.b16 %v892
      %v930 = vunpack.c.l.b16 %v893
      %v931 = vunpack.c.l.b16 %v894
      %v932 = vunpack.c.l.b16 %v895
      %v933 = vunpack.c.l.b16 %v896
      %v934 = vunpack.c.l.b16 %v897
      %v935 = vpack.c.b16 %v928, %v927
      %v936 = vpack.c.b16 %v930, %v929
      %v937 = vpack.c.b16 %v932, %v931
      %v938 = vpack.c.b16 %v934, %v933
      %v944 = vsel %vm243, %v918, 0
      %v947 = vsel %vm243, %v917, 0
      %949 = vmatprep.subr.bf16.mxu0 0
      %950 = vmatpush1.bf16.msra.mxu0 0
      %951 = vmatprep.subr.bf16.mxu0 0
      %952 = vmatpush1.bf16.msra.mxu0 0
      %953 = vmatprep.subr.bf16.mxu0 0
      %954 = vmatpush1.bf16.msra.mxu0 0
      %955 = vmatprep.subr.bf16.mxu0 0
      %956 = vmatpush1.bf16.msra.mxu0 0
      %957 = vmatprep.subr.bf16.mxu0 0
      %958 = vmatpush1.bf16.msra.mxu0 %v938
      %959 = vmatprep.subr.bf16.mxu0 0
      %960 = vmatpush1.bf16.msra.mxu0 %v937
      %961 = vmatprep.subr.bf16.mxu0 0
      %962 = vmatpush1.bf16.msra.mxu0 %v936
      %963 = vmatprep.subr.bf16.mxu0 0
      %964 = vmatpush1.bf16.msra.mxu0 %v935
      %965 = vmatprep.subr.bf16.mxu0 0
      %966 = vmatpush2.bf16.msra.mxu0 0
      %967 = vmatprep.subr.bf16.mxu0 0
      %968 = vmatpush2.bf16.msra.mxu0 0
      %969 = vmatprep.subr.bf16.mxu0 0
      %970 = vmatpush2.bf16.msra.mxu0 0
      %971 = vmatprep.subr.bf16.mxu0 0
      %972 = vmatpush2.bf16.msra.mxu0 0
      %973 = vmatprep.subr.bf16.mxu0 0
      %974 = vmatpush2.bf16.msra.mxu0 0
      %975 = vmatprep.subr.bf16.mxu0 0
      %976 = vmatpush2.bf16.msra.mxu0 0
      %977 = vmatprep.subr.bf16.mxu0 0
      %978 = vmatpush2.bf16.msra.mxu0 0
      %979 = vmatprep.subr.bf16.mxu0 0
      %980 = vmatpush2.bf16.msra.mxu0 0
      %981 = vmatprep.mubr.bf16.mxu0 0
      %982 = vmatmul.mubr.bf16.gmra.mxu0 %v944
      %v983 = vpop.f32.mrf.mxu0
      %v984 = vadd.f32 0.0, %v983
      %v985 = vpop.f32.mrf.mxu0
      %v986 = vpop.f32.mrf.mxu0
      %v987 = vadd.f32 0.0, %v986
      %v988 = vpop.f32.mrf.mxu0
      %989 = vmatprep.mubr.bf16.mxu0 0
      %990 = vmatmul.mubr.bf16.gmra.mxu0 %v947
      %v991 = vpop.f32.mrf.mxu0
      %v992 = vadd.f32 0.0, %v991
      %v993 = vpop.f32.mrf.mxu0
      %v994 = vpop.f32.mrf.mxu0
      %v995 = vpop.f32.mrf.mxu0
      %996 = vdwg.mxu0
      %v997 = vadd.f32 %v885, %v984
      %v998 = vadd.f32 %v886, %v987
      %v999 = vadd.f32 %v887, %v992
      %v1000 = vld [vmem:[%s165 + $0x4] sm:$0x8]
      %s1001 = scalar_lea.vmem %s1, 256
      %v1002 = vld [vmem:[%s1001] sm:$0xf]
      %v1003 = vld [vmem:[%s1001 + $0x4] sm:$0xf]
      %v1004 = vld [vmem:[%s1001 + $0x8] sm:$0xf]
      %v1005 = vld [vmem:[%s1001 + $0xc] sm:$0xf]
      %v1006 = vld [vmem:[%s1001 + $0x10] sm:$0xf]
      %v1007 = vld [vmem:[%s1001 + $0x14] sm:$0xf]
      %v1008 = vld [vmem:[%s1001 + $0x18] sm:$0xf]
      %v1009 = vld [vmem:[%s1001 + $0x1c] sm:$0xf]
      %v1011 = vunpack.c.l.b16 %v1000
      %v1012 = vpack.c.b16 %v798, %v1011
      %v1013 = vrot.slane %v1012, 3
      %v1014 = vrot.slane %v900, 3
      %v1015 = vsel %vm491, %v1013, %v1014
      %v1024 = vunpack.c.l.b16 %v1002
      %v1025 = vunpack.c.l.b16 %v1003
      %v1026 = vunpack.c.l.b16 %v1004
      %v1027 = vunpack.c.l.b16 %v1005
      %v1028 = vunpack.c.l.b16 %v1006
      %v1029 = vunpack.c.l.b16 %v1007
      %v1030 = vunpack.c.l.b16 %v1008
      %v1031 = vunpack.c.l.b16 %v1009
      %v1032 = vpack.c.b16 %v1025, %v1024
      %v1033 = vpack.c.b16 %v1027, %v1026
      %v1034 = vpack.c.b16 %v1029, %v1028
      %v1035 = vpack.c.b16 %v1031, %v1030
      %v1041 = vsel %vm243, %v1015, 0
      %v1044 = vsel %vm243, %v1014, 0
      %1046 = vmatprep.subr.bf16.mxu0 0
      %1047 = vmatpush1.bf16.msra.mxu0 0
      %1048 = vmatprep.subr.bf16.mxu0 0
      %1049 = vmatpush1.bf16.msra.mxu0 0
      %1050 = vmatprep.subr.bf16.mxu0 0
      %1051 = vmatpush1.bf16.msra.mxu0 0
      %1052 = vmatprep.subr.bf16.mxu0 0
      %1053 = vmatpush1.bf16.msra.mxu0 0
      %1054 = vmatprep.subr.bf16.mxu0 0
      %1055 = vmatpush1.bf16.msra.mxu0 %v1035
      %1056 = vmatprep.subr.bf16.mxu0 0
      %1057 = vmatpush1.bf16.msra.mxu0 %v1034
      %1058 = vmatprep.subr.bf16.mxu0 0
      %1059 = vmatpush1.bf16.msra.mxu0 %v1033
      %1060 = vmatprep.subr.bf16.mxu0 0
      %1061 = vmatpush1.bf16.msra.mxu0 %v1032
      %1062 = vmatprep.subr.bf16.mxu0 0
      %1063 = vmatpush2.bf16.msra.mxu0 0
      %1064 = vmatprep.subr.bf16.mxu0 0
      %1065 = vmatpush2.bf16.msra.mxu0 0
      %1066 = vmatprep.subr.bf16.mxu0 0
      %1067 = vmatpush2.bf16.msra.mxu0 0
      %1068 = vmatprep.subr.bf16.mxu0 0
      %1069 = vmatpush2.bf16.msra.mxu0 0
      %1070 = vmatprep.subr.bf16.mxu0 0
      %1071 = vmatpush2.bf16.msra.mxu0 0
      %1072 = vmatprep.subr.bf16.mxu0 0
      %1073 = vmatpush2.bf16.msra.mxu0 0
      %1074 = vmatprep.subr.bf16.mxu0 0
      %1075 = vmatpush2.bf16.msra.mxu0 0
      %1076 = vmatprep.subr.bf16.mxu0 0
      %1077 = vmatpush2.bf16.msra.mxu0 0
      %1078 = vmatprep.mubr.bf16.mxu0 0
      %1079 = vmatmul.mubr.bf16.gmra.mxu0 %v1041
      %v1080 = vpop.f32.mrf.mxu0
      %v1081 = vadd.f32 0.0, %v1080
      %v1082 = vpop.f32.mrf.mxu0
      %v1083 = vpop.f32.mrf.mxu0
      %v1084 = vadd.f32 0.0, %v1083
      %v1085 = vpop.f32.mrf.mxu0
      %1086 = vmatprep.mubr.bf16.mxu0 0
      %1087 = vmatmul.mubr.bf16.gmra.mxu0 %v1044
      %v1088 = vpop.f32.mrf.mxu0
      %v1089 = vadd.f32 0.0, %v1088
      %v1090 = vpop.f32.mrf.mxu0
      %v1091 = vpop.f32.mrf.mxu0
      %v1092 = vpop.f32.mrf.mxu0
      %1093 = vdwg.mxu0
      %v1094 = vadd.f32 %v997, %v1081
      %v1095 = vadd.f32 %v998, %v1084
      %v1096 = vadd.f32 %v999, %v1089
      %v1097 = vld [vmem:[%s2] sm:$0x1]
      %v1099 = vlaneseq
      %v1100 = vshrl.u32 %v1099, 7
      %v1101 = vsub.s32 0, %v1100
      %v1102 = vrot.slane %v1097, %v1101
      %v1104 = vadd.f32 %v1094, %v1102
      %v1105 = vadd.f32 %v1095, %v1102
      %v1106 = vadd.f32 %v1096, %v1102
      %v1107 = vmax.f32 %v1104, 0.0
      %v1108 = vmax.f32 %v1105, 0.0
      %v1109 = vmax.f32 %v1106, 0.0
      %v1110 = vpack.c.bf16 %v1108, %v1107
      %v1111 = vpack.c.bf16 %v1109, %v1109
      %v1114 = vunpack.c.l.b16 %v1110
      %v1115 = vunpack.c.h.b16 %v1110
      %v1116 = vunpack.c.l.b16 %v1111
      %v1117 = vpack.c.b16 %v1114, %v1114
      %v1118 = vpack.c.b16 %v1115, %v1115
      %v1119 = vpack.c.b16 %v1116, %v1116
      %vm1123 = vcmask 519168
      %1124 = vst.msk [vmem:[%s170] sm:$0xf] %vm1123, %v1117
      %1125 = vst.msk [vmem:[%s170 + $0x4] sm:$0xf] %vm1123, %v1118
      %1126 = vst.msk [vmem:[%s170 + $0x8] sm:$0xf] %vm1123, %v1119
      %p1127 = scmp.lt.s32.totalorder %s14, 3
      %s1128 = scalar_select %p1127, %s14, 3
      %s1129 = smul.addr %s1128, 3
      %s1130 = smul.addr %s1129, 4
      %s1131 = scalar_lea.vmem %s3, %s1130
      // Predicated region
      $region33: #{a_call__.15} parent=31 // pred_check
        %p1132 = pneg %p100
      $region34: #{a_call__.15} parent=31 // pred_check_branch
        %1134 = sbr.rel (%p1132) target = $region36
      $region35: #{a_call__.15} parent=31 // pred_region
        _
      $region36: #{a_call__.15} parent=31 // pred_fallthru
        _
    $region32: #{a_call__.15} parent=5 // pred_fallthru
      _
    %p1135 = scmp.le.s32.totalorder 2, %s9
    // Predicated region
    $region37: #{a_call__.15} parent=5 // pred_check
      %p1136 = pneg %p1135
    $region38: #{a_call__.15} parent=5 // pred_check_branch
      %1138 = sbr.rel (%p1136) target = $region40
    $region39: #{a_call__.15} parent=5 // pred_region
      %s1139 = ssub.s32 %s9, 2
      // Predicated region
      $region41: #{a_call__.15} parent=39 // pred_check
        %p1140 = pneg %p106
      $region42: #{a_call__.15} parent=39 // pred_check_branch
        %1142 = sbr.rel (%p1140) target = $region44
      $region43: #{a_call__.15} parent=39 // pred_region
        %p1143 = scmp.lt.s32.totalorder %s15, 3
        %s1144 = scalar_select %p1143, %s15, 3
        %s1145 = smul.addr %s1144, 3
        %s1146 = smul.addr %s1145, 4
        %s1147 = scalar_lea.vmem %s3, %s1146
      $region44: #{a_call__.15} parent=39 // pred_fallthru
        _
    $region40: #{a_call__.15} parent=5 // pred_fallthru
      _
  $region6: #{a_call__.15} parent=0 // loop_footer
    %s13 = sadd.s32 1, %s9
  $region7: #{a_call__.15} parent=0 // loop_footer_branch
    %8 = sbr.rel target = $region3
  $region8: #{a_call__.15} parent=0 // loop_exit
    _

</llo_original>
